<compile_context>
chip_gen: v5e
topology: v5e:2x2
jax: 0.10.0
libtpu: 0.0.40
codegen_flags: <defaults>
</compile_context>

<pallas_src>
import functools
import math
from typing import NamedTuple

import jax
import jax.numpy as jnp
import numpy as np
from jax.experimental import pallas as pl
from jax.experimental.pallas import tpu as pltpu

_EPS = 1e-5


class Config(NamedTuple):
    B: int
    c: int
    d: int
    K: int
    pad: int
    n_scale: int
    out_channels: int
    out_width: int


# --------------------------------------------------------------------------------------
# Host-built constant matrices (shift / pool / upsample / placement), built once.
# --------------------------------------------------------------------------------------
def _shift_matrices(n, seg_w, k, pad):
    # sh[kk][row, col] = 1  iff  row == col + (kk - pad)  and row, col are in the same
    # length-seg_w batch segment (per-batch zero padding is therefore implicit).
    m = np.zeros((k, n, n), np.float32)
    for kk in range(k):
        s = kk - pad
        for col in range(n):
            row = col + s
            if 0 <= row < n and (row // seg_w) == (col // seg_w):
                m[kk, row, col] = 1.0
    return jnp.asarray(m)


def _pool_matrices(n):
    # even / odd column selectors for MaxPool1d(2) on the (C, B*W) layout.
    half = n // 2
    m = np.zeros((2, n, half), np.float32)
    for j in range(half):
        m[0, 2 * j, j] = 1.0
        m[1, 2 * j + 1, j] = 1.0
    return jnp.asarray(m)


def _upsample_matrix(n):
    # nearest-neighbor x2 duplication on the (C, B*W) layout.
    m = np.zeros((n, 2 * n), np.float32)
    for j in range(2 * n):
        m[j // 2, j] = 1.0
    return jnp.asarray(m)


def _placement_matrix(b):
    # place[w][bi, :] is the one-hot lane row for column (4*bi + w) of the (c, 4*B) slab.
    m = np.zeros((4, b, 4 * b), np.float32)
    for w in range(4):
        for bi in range(b):
            m[w, bi, 4 * bi + w] = 1.0
    return jnp.asarray(m)


# --------------------------------------------------------------------------------------
# Deterministic parameter construction (synthetic weights, eval-mode BN folded in)
# --------------------------------------------------------------------------------------
def _bn_fold(key, cout, bias):
    k1, k2, k3, k4 = jax.random.split(key, 4)
    gamma = 1.0 + 0.1 * jax.random.normal(k1, (cout,), jnp.float32)
    beta = 0.1 * jax.random.normal(k2, (cout,), jnp.float32)
    mean = 0.1 * jax.random.normal(k3, (cout,), jnp.float32)
    var = 0.5 + jax.random.uniform(k4, (cout,), jnp.float32)
    scale = gamma / jnp.sqrt(var + _EPS)
    shift = beta + (bias - mean) * scale
    return scale, shift


def _make_linear(key, cin, cout, bn=True):
    kw, kb, kn = jax.random.split(key, 3)
    w = jax.random.normal(kw, (cin, cout), jnp.float32) / math.sqrt(cin)
    b = 0.1 * jax.random.normal(kb, (cout,), jnp.float32)
    if bn:
        s, sh = _bn_fold(kn, cout, b)
    else:
        s, sh = jnp.ones((cout,), jnp.float32), b
    return w, s, sh


def _make_conv(key, cin, cout, k=5, bn=True):
    kw, kb, kn = jax.random.split(key, 3)
    w = jax.random.normal(kw, (k, cout, cin), jnp.float32) / math.sqrt(cin * k)
    b = 0.1 * jax.random.normal(kb, (cout,), jnp.float32)
    if bn:
        s, sh = _bn_fold(kn, cout, b)
    else:
        s, sh = jnp.ones((cout,), jnp.float32), b
    return w, s.reshape(cout, 1), sh.reshape(cout, 1)


def build_params(master_key, c, out_channels, out_width, d=8, batch=2, k=5):
    counter = [0]

    def nk():
        counter[0] += 1
        return jax.random.fold_in(master_key, counter[0])

    n_scale = int(round(math.log2(out_width // 4)))
    assert 4 * (2 ** n_scale) == out_width
    pad = (k - 1) // 2

    tree = {}

    # ---- z_head: Linear(c,2c)+BN(+ReLU), Linear(2c,4c)+BN, Reshape(c,4), 4x Conv1dBlock(c,c)
    w, s, sh = _make_linear(nk(), c, 2 * c)
    tree["lin1"] = dict(w=w.T, scale=s.reshape(2 * c, 1), shift=sh.reshape(2 * c, 1))

    w, s, sh = _make_linear(nk(), 2 * c, 4 * c)
    tree["lin2"] = dict(                         # Reshape(c,4) folded: one slice per width pos
        w=jnp.stack([w[:, wi::4].T for wi in range(4)]),            # (4, c, 2c)
        scale=jnp.stack([s[wi::4].reshape(c, 1) for wi in range(4)]),
        shift=jnp.stack([sh[wi::4].reshape(c, 1) for wi in range(4)]))

    ws, ss, shs = zip(*[_make_conv(nk(), c, c, k) for _ in range(4)])
    tree["z_convs"] = dict(w=jnp.stack(ws), scale=jnp.stack(ss), shift=jnp.stack(shs))

    # ---- mask_head: Conv1d(1,d,5,1,2)+BN, then n_scale x (Conv1dBlock(d,d), MaxPool(2))
    w, s, sh = _make_conv(nk(), 1, d, k)
    tree["mask_head"] = dict(w=w, scale=s, shift=sh)
    ws, ss, shs = zip(*[_make_conv(nk(), d, d, k) for _ in range(n_scale)])
    tree["mask_blocks"] = dict(w=jnp.stack(ws), scale=jnp.stack(ss), shift=jnp.stack(shs))

    # ---- body: Conv1dBlock(c+d,c), Skip(Conv1dBlock(c,c)),
    #            n_scale x (Upsample, Conv1dBlock, Skip, Conv1dBlock, Skip), tail conv
    w, s, sh = _make_conv(nk(), c + d, c, k)
    tree["body_head0"] = dict(w_z=w[:, :, :c], w_m=w[:, :, c:], scale=s, shift=sh)
    w, s, sh = _make_conv(nk(), c, c, k)
    tree["body_head1"] = dict(w=w, scale=s, shift=sh)
    ws, ss, shs = zip(*[_make_conv(nk(), c, c, k) for _ in range(4 * n_scale)])
    tree["body_blocks"] = dict(w=jnp.stack(ws), scale=jnp.stack(ss), shift=jnp.stack(shs))
    w, s, sh = _make_conv(nk(), c, out_channels, k, bn=False)
    tree["tail"] = dict(w=w, scale=s, shift=sh)

    # ---- constant shift / pool / upsample / placement matrices
    consts = {"place": _placement_matrix(batch)}
    for i in range(n_scale + 1):
        n = batch * 4 * (2 ** i)
        consts[f"sh{n}"] = _shift_matrices(n, n // batch, k, pad)
    for i in range(1, n_scale + 1):
        n = batch * 4 * (2 ** i)
        consts[f"pool{n}"] = _pool_matrices(n)
    for i in range(n_scale):
        n = batch * 4 * (2 ** i)
        consts[f"up{n}"] = _upsample_matrix(n)
    tree["consts"] = consts

    cfg = Config(B=batch, c=c, d=d, K=k, pad=pad, n_scale=n_scale,
                 out_channels=out_channels, out_width=out_width)
    return tree, cfg


# --------------------------------------------------------------------------------------
# The single fused Pallas kernel
# --------------------------------------------------------------------------------------
def _generator_kernel(treedef, cfg, *refs):
    zt_ref, mask_ref = refs[0], refs[1]
    out_ref = refs[-1]
    p = jax.tree_util.tree_unflatten(treedef, refs[2:-1])
    consts = p["consts"]

    B, c, K = cfg.B, cfg.c, cfg.K
    n_scale, w_out = cfg.n_scale, cfg.out_width
    f32 = jnp.float32
    res_pat = (False, True, False, True)        # Conv1dBlock, Skip, Conv1dBlock, Skip

    def dot(a, b):
        return jnp.dot(a, b, preferred_element_type=f32)

    def conv_block(parts, sh_ref, scale, shift, *, pre_relu, residual_x=None):
        # parts  : list of (list of K (Co,Ci) weight tiles, (Ci, N) activation)
        # sh_ref : (K, N, N) batch-aware shift matrices (zero padding folded in)
        co = parts[0][0][0].shape[0]
        n = parts[0][1].shape[1]
        hs = [jnp.maximum(x, 0.0) if pre_relu else x for (_, x) in parts]
        acc = jnp.zeros((co, n), f32)
        for k in range(K):
            t = None
            for (wks, _), h in zip(parts, hs):
                wk = wks[k]
                contrib = wk * h if wk.shape[1] == 1 else dot(wk, h)
                t = contrib if t is None else t + contrib
            acc = acc + dot(t, sh_ref[k])
        y = acc * scale + shift                  # folded conv bias + BatchNorm
        if residual_x is not None:               # Skip(): add un-activated input
            y = y + residual_x
        return y

    # ---------------- z head ----------------
    zt = zt_ref[...]                                             # (c, B)
    h1 = dot(p["lin1"]["w"][...], zt)                            # Linear(c, 2c)
    h1 = jnp.maximum(h1 * p["lin1"]["scale"][...] + p["lin1"]["shift"][...], 0.0)

    # Linear(2c, 4c) + BN with Reshape(c, 4) folded in: build the (c, B*4) slab directly
    # (column for (b, w) placed at lane 4*b + w via one-hot outer products).
    h = jnp.zeros((c, 4 * B), f32)
    for wpos in range(4):
        cw = dot(p["lin2"]["w"][wpos], h1) * p["lin2"]["scale"][wpos] + p["lin2"]["shift"][wpos]
        pm = consts["place"][wpos]                               # (B, 4B)
        for b in range(B):
            h = h + cw[:, b:b + 1] * pm[b:b + 1, :]

    sh_w4 = consts[f"sh{4 * B}"]
    for i in range(4):
        wks = [p["z_convs"]["w"][i, k] for k in range(K)]
        h = conv_block([(wks, h)], sh_w4,
                       p["z_convs"]["scale"][i], p["z_convs"]["shift"][i],
                       pre_relu=True, residual_x=h if res_pat[i] else None)

    # ---------------- mask head ----------------
    m = mask_ref[...]                                            # (1, B*W_out)
    wm = w_out
    wks = [p["mask_head"]["w"][k] for k in range(K)]
    m = conv_block([(wks, m)], consts[f"sh{B * wm}"],
                   p["mask_head"]["scale"][...], p["mask_head"]["shift"][...],
                   pre_relu=False)
    for i in range(n_scale):
        n_cur = B * wm
        wks = [p["mask_blocks"]["w"][i, k] for k in range(K)]
        m = conv_block([(wks, m)], consts[f"sh{n_cur}"],
                       p["mask_blocks"]["scale"][i], p["mask_blocks"]["shift"][i],
                       pre_relu=True)
        po = consts[f"pool{n_cur}"]                              # MaxPool1d(2)
        m = jnp.maximum(dot(m, po[0]), dot(m, po[1]))
        wm //= 2

    # ---------------- body ----------------
    # torch.cat([z, mask], 1) folded into the first conv by splitting its weight.
    wks_z = [p["body_head0"]["w_z"][k] for k in range(K)]
    wks_m = [p["body_head0"]["w_m"][k] for k in range(K)]
    x = conv_block([(wks_z, h), (wks_m, m)], sh_w4,
                   p["body_head0"]["scale"][...], p["body_head0"]["shift"][...],
                   pre_relu=True)
    wks = [p["body_head1"]["w"][k] for k in range(K)]
    x = conv_block([(wks, x)], sh_w4,
                   p["body_head1"]["scale"][...], p["body_head1"]["shift"][...],
                   pre_relu=True, residual_x=x)

    wb = 4
    for lvl in range(n_scale):
        x = dot(x, consts[f"up{B * wb}"][...])                   # nearest x2 upsample
        wb *= 2
        sh_cur = consts[f"sh{B * wb}"]
        for j in range(4):
            idx = 4 * lvl + j
            wks = [p["body_blocks"]["w"][idx, k] for k in range(K)]
            x = conv_block([(wks, x)], sh_cur,
                           p["body_blocks"]["scale"][idx], p["body_blocks"]["shift"][idx],
                           pre_relu=True, residual_x=x if res_pat[j] else None)

    # tail: ReLU, Dropout(id), Conv1d(c, out_channels, 5, 1, 2)  (no BN)
    wks = [p["tail"]["w"][k] for k in range(K)]
    y = conv_block([(wks, x)], consts[f"sh{B * wb}"],
                   p["tail"]["scale"][...], p["tail"]["shift"][...],
                   pre_relu=True)                                # (out_channels, B*W_out)

    for b in range(B):
        out_ref[b] = y[:, b * w_out:(b + 1) * w_out]             # (out_channels, W_out)


# --------------------------------------------------------------------------------------
# Wrapper: two tiny layout ops (transpose / reshape) + ONE pallas_call
# --------------------------------------------------------------------------------------
def generator_forward(tree, cfg, z, mask):
    B = cfg.B
    assert z.shape == (B, cfg.c), z.shape
    assert mask.shape == (B, cfg.out_width), mask.shape

    leaves, treedef = jax.tree_util.tree_flatten(tree)
    kern = functools.partial(_generator_kernel, treedef, cfg)
    call = pl.pallas_call(
        kern,
        out_shape=jax.ShapeDtypeStruct((B, cfg.out_channels, cfg.out_width), jnp.float32),
        compiler_params=pltpu.CompilerParams(vmem_limit_bytes=32 * 1024 * 1024),
    )
    zt = jnp.transpose(z)                                # (c, B): channels on sublanes
    mr = jnp.reshape(mask, (1, B * cfg.out_width))       # (1, B*W): width/batch on lanes
    return call(zt, mr, *leaves)


# --------------------------------------------------------------------------------------
if __name__ == "__main__":
    B, z_dim, out_channels, out_width = 2, 8, 3, 16

    key = jax.random.PRNGKey(0)
    kz, km, kp = jax.random.split(key, 3)
    z = jax.random.normal(kz, (B, z_dim), jnp.float32)
    mask = jax.random.normal(km, (B, out_width), jnp.float32)

    tree, cfg = build_params(kp, z_dim, out_channels, out_width, batch=B)

    fwd = jax.jit(functools.partial(generator_forward, tree, cfg))
    y = jax.block_until_ready(fwd(z, mask))

    assert y.shape == (B, out_channels, out_width), y.shape
    assert bool(jnp.all(jnp.isfinite(y)))
    print("KERNEL_OK")
</pallas_src>

<mosaic_0001>
module attributes {stable_mosaic.version = 11 : i64} {
  func.func @_generator_kernel(%arg0: memref<8x2xf32, #tpu.memory_space<vmem>>, %arg1: memref<1x32xf32, #tpu.memory_space<vmem>>, %arg2: memref<8x8x1xf32, #tpu.memory_space<vmem>>, %arg3: memref<8x8x1xf32, #tpu.memory_space<vmem>>, %arg4: memref<8x5x8x8xf32, #tpu.memory_space<vmem>>, %arg5: memref<8x1xf32, #tpu.memory_space<vmem>>, %arg6: memref<8x1xf32, #tpu.memory_space<vmem>>, %arg7: memref<5x8x8xf32, #tpu.memory_space<vmem>>, %arg8: memref<5x8x8xf32, #tpu.memory_space<vmem>>, %arg9: memref<8x1xf32, #tpu.memory_space<vmem>>, %arg10: memref<8x1xf32, #tpu.memory_space<vmem>>, %arg11: memref<5x8x8xf32, #tpu.memory_space<vmem>>, %arg12: memref<4x2x8xf32, #tpu.memory_space<vmem>>, %arg13: memref<2x16x8xf32, #tpu.memory_space<vmem>>, %arg14: memref<2x32x16xf32, #tpu.memory_space<vmem>>, %arg15: memref<5x16x16xf32, #tpu.memory_space<vmem>>, %arg16: memref<5x32x32xf32, #tpu.memory_space<vmem>>, %arg17: memref<5x8x8xf32, #tpu.memory_space<vmem>>, %arg18: memref<16x32xf32, #tpu.memory_space<vmem>>, %arg19: memref<8x16xf32, #tpu.memory_space<vmem>>, %arg20: memref<16x1xf32, #tpu.memory_space<vmem>>, %arg21: memref<16x1xf32, #tpu.memory_space<vmem>>, %arg22: memref<16x8xf32, #tpu.memory_space<vmem>>, %arg23: memref<4x8x1xf32, #tpu.memory_space<vmem>>, %arg24: memref<4x8x1xf32, #tpu.memory_space<vmem>>, %arg25: memref<4x8x16xf32, #tpu.memory_space<vmem>>, %arg26: memref<2x8x1xf32, #tpu.memory_space<vmem>>, %arg27: memref<2x8x1xf32, #tpu.memory_space<vmem>>, %arg28: memref<2x5x8x8xf32, #tpu.memory_space<vmem>>, %arg29: memref<8x1xf32, #tpu.memory_space<vmem>>, %arg30: memref<8x1xf32, #tpu.memory_space<vmem>>, %arg31: memref<5x8x1xf32, #tpu.memory_space<vmem>>, %arg32: memref<3x1xf32, #tpu.memory_space<vmem>>, %arg33: memref<3x1xf32, #tpu.memory_space<vmem>>, %arg34: memref<5x3x8xf32, #tpu.memory_space<vmem>>, %arg35: memref<4x8x1xf32, #tpu.memory_space<vmem>>, %arg36: memref<4x8x1xf32, #tpu.memory_space<vmem>>, %arg37: memref<4x5x8x8xf32, #tpu.memory_space<vmem>>, %arg38: memref<2x3x16xf32, #tpu.memory_space<vmem>>) attributes {dimension_semantics = [], scalar_prefetch = 0 : i64, scratch_operands = 0 : i64, tpu.core_type = #tpu.core_type<tc>} {
    %c0 = arith.constant 0 : index
    %c0_0 = arith.constant 0 : index
    %0 = vector.load %arg0[%c0, %c0_0] : memref<8x2xf32, #tpu.memory_space<vmem>>, vector<8x2xf32>
    %c0_1 = arith.constant 0 : index
    %c0_2 = arith.constant 0 : index
    %1 = vector.load %arg22[%c0_1, %c0_2] : memref<16x8xf32, #tpu.memory_space<vmem>>, vector<16x8xf32>
    %cst = arith.constant dense<0.000000e+00> : vector<16x2xf32>
    %2 = tpu.matmul %1, %0, %cst {dimension_numbers = #tpu.dot_dimension_numbers<[1], [0], [0], [1], [0, 0, 1, 1], [], []>} : vector<16x8xf32>, vector<8x2xf32>, vector<16x2xf32> -> vector<16x2xf32>
    %c0_3 = arith.constant 0 : index
    %c0_4 = arith.constant 0 : index
    %3 = vector.load %arg20[%c0_3, %c0_4] : memref<16x1xf32, #tpu.memory_space<vmem>>, vector<16x1xf32>
    %4 = vector.broadcast %3 : vector<16x1xf32> to vector<16x2xf32>
    %5 = arith.mulf %2, %4 : vector<16x2xf32>
    %c0_5 = arith.constant 0 : index
    %c0_6 = arith.constant 0 : index
    %6 = vector.load %arg21[%c0_5, %c0_6] : memref<16x1xf32, #tpu.memory_space<vmem>>, vector<16x1xf32>
    %7 = vector.broadcast %6 : vector<16x1xf32> to vector<16x2xf32>
    %8 = arith.addf %5, %7 : vector<16x2xf32>
    %cst_7 = arith.constant 0.000000e+00 : f32
    %9 = vector.broadcast %cst_7 : f32 to vector<16x2xf32>
    %10 = arith.maximumf %8, %9 : vector<16x2xf32>
    %cst_8 = arith.constant 0.000000e+00 : f32
    %11 = vector.broadcast %cst_8 : f32 to vector<8x8xf32>
    %c0_9 = arith.constant 0 : index
    %c0_10 = arith.constant 0 : index
    %c0_11 = arith.constant 0 : index
    %12 = vector.load %arg25[%c0_9, %c0_10, %c0_11] : memref<4x8x16xf32, #tpu.memory_space<vmem>>, vector<1x8x16xf32>
    %13 = vector.shape_cast %12 : vector<1x8x16xf32> to vector<8x16xf32>
    %cst_12 = arith.constant dense<0.000000e+00> : vector<8x2xf32>
    %14 = tpu.matmul %13, %10, %cst_12 {dimension_numbers = #tpu.dot_dimension_numbers<[1], [0], [0], [1], [0, 0, 1, 1], [], []>} : vector<8x16xf32>, vector<16x2xf32>, vector<8x2xf32> -> vector<8x2xf32>
    %c0_13 = arith.constant 0 : index
    %c0_14 = arith.constant 0 : index
    %c0_15 = arith.constant 0 : index
    %15 = vector.load %arg23[%c0_13, %c0_14, %c0_15] : memref<4x8x1xf32, #tpu.memory_space<vmem>>, vector<1x8x1xf32>
    %16 = vector.shape_cast %15 : vector<1x8x1xf32> to vector<8x1xf32>
    %17 = vector.broadcast %16 : vector<8x1xf32> to vector<8x2xf32>
    %18 = arith.mulf %14, %17 : vector<8x2xf32>
    %c0_16 = arith.constant 0 : index
    %c0_17 = arith.constant 0 : index
    %c0_18 = arith.constant 0 : index
    %19 = vector.load %arg24[%c0_16, %c0_17, %c0_18] : memref<4x8x1xf32, #tpu.memory_space<vmem>>, vector<1x8x1xf32>
    %20 = vector.shape_cast %19 : vector<1x8x1xf32> to vector<8x1xf32>
    %21 = vector.broadcast %20 : vector<8x1xf32> to vector<8x2xf32>
    %22 = arith.addf %18, %21 : vector<8x2xf32>
    %c0_19 = arith.constant 0 : index
    %c0_20 = arith.constant 0 : index
    %c0_21 = arith.constant 0 : index
    %23 = vector.load %arg12[%c0_19, %c0_20, %c0_21] : memref<4x2x8xf32, #tpu.memory_space<vmem>>, vector<1x2x8xf32>
    %24 = vector.shape_cast %23 : vector<1x2x8xf32> to vector<2x8xf32>
    %25 = vector.extract_strided_slice %22 {offsets = [0, 0], sizes = [8, 1], strides = [1, 1]} : vector<8x2xf32> to vector<8x1xf32>
    %26 = vector.extract_strided_slice %24 {offsets = [0, 0], sizes = [1, 8], strides = [1, 1]} : vector<2x8xf32> to vector<1x8xf32>
    %27 = vector.broadcast %25 : vector<8x1xf32> to vector<8x8xf32>
    %28 = vector.broadcast %26 : vector<1x8xf32> to vector<8x8xf32>
    %29 = arith.mulf %27, %28 : vector<8x8xf32>
    %30 = arith.addf %11, %29 : vector<8x8xf32>
    %31 = vector.extract_strided_slice %22 {offsets = [0, 1], sizes = [8, 1], strides = [1, 1]} : vector<8x2xf32> to vector<8x1xf32>
    %32 = vector.extract_strided_slice %24 {offsets = [1, 0], sizes = [1, 8], strides = [1, 1]} : vector<2x8xf32> to vector<1x8xf32>
    %33 = vector.broadcast %31 : vector<8x1xf32> to vector<8x8xf32>
    %34 = vector.broadcast %32 : vector<1x8xf32> to vector<8x8xf32>
    %35 = arith.mulf %33, %34 : vector<8x8xf32>
    %36 = arith.addf %30, %35 : vector<8x8xf32>
    %c1 = arith.constant 1 : index
    %c0_22 = arith.constant 0 : index
    %c0_23 = arith.constant 0 : index
    %37 = vector.load %arg25[%c1, %c0_22, %c0_23] : memref<4x8x16xf32, #tpu.memory_space<vmem>>, vector<1x8x16xf32>
    %38 = vector.shape_cast %37 : vector<1x8x16xf32> to vector<8x16xf32>
    %cst_24 = arith.constant dense<0.000000e+00> : vector<8x2xf32>
    %39 = tpu.matmul %38, %10, %cst_24 {dimension_numbers = #tpu.dot_dimension_numbers<[1], [0], [0], [1], [0, 0, 1, 1], [], []>} : vector<8x16xf32>, vector<16x2xf32>, vector<8x2xf32> -> vector<8x2xf32>
    %c1_25 = arith.constant 1 : index
    %c0_26 = arith.constant 0 : index
    %c0_27 = arith.constant 0 : index
    %40 = vector.load %arg23[%c1_25, %c0_26, %c0_27] : memref<4x8x1xf32, #tpu.memory_space<vmem>>, vector<1x8x1xf32>
    %41 = vector.shape_cast %40 : vector<1x8x1xf32> to vector<8x1xf32>
    %42 = vector.broadcast %41 : vector<8x1xf32> to vector<8x2xf32>
    %43 = arith.mulf %39, %42 : vector<8x2xf32>
    %c1_28 = arith.constant 1 : index
    %c0_29 = arith.constant 0 : index
    %c0_30 = arith.constant 0 : index
    %44 = vector.load %arg24[%c1_28, %c0_29, %c0_30] : memref<4x8x1xf32, #tpu.memory_space<vmem>>, vector<1x8x1xf32>
    %45 = vector.shape_cast %44 : vector<1x8x1xf32> to vector<8x1xf32>
    %46 = vector.broadcast %45 : vector<8x1xf32> to vector<8x2xf32>
    %47 = arith.addf %43, %46 : vector<8x2xf32>
    %c1_31 = arith.constant 1 : index
    %c0_32 = arith.constant 0 : index
    %c0_33 = arith.constant 0 : index
    %48 = vector.load %arg12[%c1_31, %c0_32, %c0_33] : memref<4x2x8xf32, #tpu.memory_space<vmem>>, vector<1x2x8xf32>
    %49 = vector.shape_cast %48 : vector<1x2x8xf32> to vector<2x8xf32>
    %50 = vector.extract_strided_slice %47 {offsets = [0, 0], sizes = [8, 1], strides = [1, 1]} : vector<8x2xf32> to vector<8x1xf32>
    %51 = vector.extract_strided_slice %49 {offsets = [0, 0], sizes = [1, 8], strides = [1, 1]} : vector<2x8xf32> to vector<1x8xf32>
    %52 = vector.broadcast %50 : vector<8x1xf32> to vector<8x8xf32>
    %53 = vector.broadcast %51 : vector<1x8xf32> to vector<8x8xf32>
    %54 = arith.mulf %52, %53 : vector<8x8xf32>
    %55 = arith.addf %36, %54 : vector<8x8xf32>
    %56 = vector.extract_strided_slice %47 {offsets = [0, 1], sizes = [8, 1], strides = [1, 1]} : vector<8x2xf32> to vector<8x1xf32>
    %57 = vector.extract_strided_slice %49 {offsets = [1, 0], sizes = [1, 8], strides = [1, 1]} : vector<2x8xf32> to vector<1x8xf32>
    %58 = vector.broadcast %56 : vector<8x1xf32> to vector<8x8xf32>
    %59 = vector.broadcast %57 : vector<1x8xf32> to vector<8x8xf32>
    %60 = arith.mulf %58, %59 : vector<8x8xf32>
    %61 = arith.addf %55, %60 : vector<8x8xf32>
    %c2 = arith.constant 2 : index
    %c0_34 = arith.constant 0 : index
    %c0_35 = arith.constant 0 : index
    %62 = vector.load %arg25[%c2, %c0_34, %c0_35] : memref<4x8x16xf32, #tpu.memory_space<vmem>>, vector<1x8x16xf32>
    %63 = vector.shape_cast %62 : vector<1x8x16xf32> to vector<8x16xf32>
    %cst_36 = arith.constant dense<0.000000e+00> : vector<8x2xf32>
    %64 = tpu.matmul %63, %10, %cst_36 {dimension_numbers = #tpu.dot_dimension_numbers<[1], [0], [0], [1], [0, 0, 1, 1], [], []>} : vector<8x16xf32>, vector<16x2xf32>, vector<8x2xf32> -> vector<8x2xf32>
    %c2_37 = arith.constant 2 : index
    %c0_38 = arith.constant 0 : index
    %c0_39 = arith.constant 0 : index
    %65 = vector.load %arg23[%c2_37, %c0_38, %c0_39] : memref<4x8x1xf32, #tpu.memory_space<vmem>>, vector<1x8x1xf32>
    %66 = vector.shape_cast %65 : vector<1x8x1xf32> to vector<8x1xf32>
    %67 = vector.broadcast %66 : vector<8x1xf32> to vector<8x2xf32>
    %68 = arith.mulf %64, %67 : vector<8x2xf32>
    %c2_40 = arith.constant 2 : index
    %c0_41 = arith.constant 0 : index
    %c0_42 = arith.constant 0 : index
    %69 = vector.load %arg24[%c2_40, %c0_41, %c0_42] : memref<4x8x1xf32, #tpu.memory_space<vmem>>, vector<1x8x1xf32>
    %70 = vector.shape_cast %69 : vector<1x8x1xf32> to vector<8x1xf32>
    %71 = vector.broadcast %70 : vector<8x1xf32> to vector<8x2xf32>
    %72 = arith.addf %68, %71 : vector<8x2xf32>
    %c2_43 = arith.constant 2 : index
    %c0_44 = arith.constant 0 : index
    %c0_45 = arith.constant 0 : index
    %73 = vector.load %arg12[%c2_43, %c0_44, %c0_45] : memref<4x2x8xf32, #tpu.memory_space<vmem>>, vector<1x2x8xf32>
    %74 = vector.shape_cast %73 : vector<1x2x8xf32> to vector<2x8xf32>
    %75 = vector.extract_strided_slice %72 {offsets = [0, 0], sizes = [8, 1], strides = [1, 1]} : vector<8x2xf32> to vector<8x1xf32>
    %76 = vector.extract_strided_slice %74 {offsets = [0, 0], sizes = [1, 8], strides = [1, 1]} : vector<2x8xf32> to vector<1x8xf32>
    %77 = vector.broadcast %75 : vector<8x1xf32> to vector<8x8xf32>
    %78 = vector.broadcast %76 : vector<1x8xf32> to vector<8x8xf32>
    %79 = arith.mulf %77, %78 : vector<8x8xf32>
    %80 = arith.addf %61, %79 : vector<8x8xf32>
    %81 = vector.extract_strided_slice %72 {offsets = [0, 1], sizes = [8, 1], strides = [1, 1]} : vector<8x2xf32> to vector<8x1xf32>
    %82 = vector.extract_strided_slice %74 {offsets = [1, 0], sizes = [1, 8], strides = [1, 1]} : vector<2x8xf32> to vector<1x8xf32>
    %83 = vector.broadcast %81 : vector<8x1xf32> to vector<8x8xf32>
    %84 = vector.broadcast %82 : vector<1x8xf32> to vector<8x8xf32>
    %85 = arith.mulf %83, %84 : vector<8x8xf32>
    %86 = arith.addf %80, %85 : vector<8x8xf32>
    %c3 = arith.constant 3 : index
    %c0_46 = arith.constant 0 : index
    %c0_47 = arith.constant 0 : index
    %87 = vector.load %arg25[%c3, %c0_46, %c0_47] : memref<4x8x16xf32, #tpu.memory_space<vmem>>, vector<1x8x16xf32>
    %88 = vector.shape_cast %87 : vector<1x8x16xf32> to vector<8x16xf32>
    %cst_48 = arith.constant dense<0.000000e+00> : vector<8x2xf32>
    %89 = tpu.matmul %88, %10, %cst_48 {dimension_numbers = #tpu.dot_dimension_numbers<[1], [0], [0], [1], [0, 0, 1, 1], [], []>} : vector<8x16xf32>, vector<16x2xf32>, vector<8x2xf32> -> vector<8x2xf32>
    %c3_49 = arith.constant 3 : index
    %c0_50 = arith.constant 0 : index
    %c0_51 = arith.constant 0 : index
    %90 = vector.load %arg23[%c3_49, %c0_50, %c0_51] : memref<4x8x1xf32, #tpu.memory_space<vmem>>, vector<1x8x1xf32>
    %91 = vector.shape_cast %90 : vector<1x8x1xf32> to vector<8x1xf32>
    %92 = vector.broadcast %91 : vector<8x1xf32> to vector<8x2xf32>
    %93 = arith.mulf %89, %92 : vector<8x2xf32>
    %c3_52 = arith.constant 3 : index
    %c0_53 = arith.constant 0 : index
    %c0_54 = arith.constant 0 : index
    %94 = vector.load %arg24[%c3_52, %c0_53, %c0_54] : memref<4x8x1xf32, #tpu.memory_space<vmem>>, vector<1x8x1xf32>
    %95 = vector.shape_cast %94 : vector<1x8x1xf32> to vector<8x1xf32>
    %96 = vector.broadcast %95 : vector<8x1xf32> to vector<8x2xf32>
    %97 = arith.addf %93, %96 : vector<8x2xf32>
    %c3_55 = arith.constant 3 : index
    %c0_56 = arith.constant 0 : index
    %c0_57 = arith.constant 0 : index
    %98 = vector.load %arg12[%c3_55, %c0_56, %c0_57] : memref<4x2x8xf32, #tpu.memory_space<vmem>>, vector<1x2x8xf32>
    %99 = vector.shape_cast %98 : vector<1x2x8xf32> to vector<2x8xf32>
    %100 = vector.extract_strided_slice %97 {offsets = [0, 0], sizes = [8, 1], strides = [1, 1]} : vector<8x2xf32> to vector<8x1xf32>
    %101 = vector.extract_strided_slice %99 {offsets = [0, 0], sizes = [1, 8], strides = [1, 1]} : vector<2x8xf32> to vector<1x8xf32>
    %102 = vector.broadcast %100 : vector<8x1xf32> to vector<8x8xf32>
    %103 = vector.broadcast %101 : vector<1x8xf32> to vector<8x8xf32>
    %104 = arith.mulf %102, %103 : vector<8x8xf32>
    %105 = arith.addf %86, %104 : vector<8x8xf32>
    %106 = vector.extract_strided_slice %97 {offsets = [0, 1], sizes = [8, 1], strides = [1, 1]} : vector<8x2xf32> to vector<8x1xf32>
    %107 = vector.extract_strided_slice %99 {offsets = [1, 0], sizes = [1, 8], strides = [1, 1]} : vector<2x8xf32> to vector<1x8xf32>
    %108 = vector.broadcast %106 : vector<8x1xf32> to vector<8x8xf32>
    %109 = vector.broadcast %107 : vector<1x8xf32> to vector<8x8xf32>
    %110 = arith.mulf %108, %109 : vector<8x8xf32>
    %111 = arith.addf %105, %110 : vector<8x8xf32>
    %c0_58 = arith.constant 0 : index
    %c0_59 = arith.constant 0 : index
    %c0_60 = arith.constant 0 : index
    %c0_61 = arith.constant 0 : index
    %112 = vector.load %arg37[%c0_58, %c0_59, %c0_60, %c0_61] : memref<4x5x8x8xf32, #tpu.memory_space<vmem>>, vector<1x1x8x8xf32>
    %113 = vector.shape_cast %112 : vector<1x1x8x8xf32> to vector<8x8xf32>
    %c0_62 = arith.constant 0 : index
    %c1_63 = arith.constant 1 : index
    %c0_64 = arith.constant 0 : index
    %c0_65 = arith.constant 0 : index
    %114 = vector.load %arg37[%c0_62, %c1_63, %c0_64, %c0_65] : memref<4x5x8x8xf32, #tpu.memory_space<vmem>>, vector<1x1x8x8xf32>
    %115 = vector.shape_cast %114 : vector<1x1x8x8xf32> to vector<8x8xf32>
    %c0_66 = arith.constant 0 : index
    %c2_67 = arith.constant 2 : index
    %c0_68 = arith.constant 0 : index
    %c0_69 = arith.constant 0 : index
    %116 = vector.load %arg37[%c0_66, %c2_67, %c0_68, %c0_69] : memref<4x5x8x8xf32, #tpu.memory_space<vmem>>, vector<1x1x8x8xf32>
    %117 = vector.shape_cast %116 : vector<1x1x8x8xf32> to vector<8x8xf32>
    %c0_70 = arith.constant 0 : index
    %c3_71 = arith.constant 3 : index
    %c0_72 = arith.constant 0 : index
    %c0_73 = arith.constant 0 : index
    %118 = vector.load %arg37[%c0_70, %c3_71, %c0_72, %c0_73] : memref<4x5x8x8xf32, #tpu.memory_space<vmem>>, vector<1x1x8x8xf32>
    %119 = vector.shape_cast %118 : vector<1x1x8x8xf32> to vector<8x8xf32>
    %c0_74 = arith.constant 0 : index
    %c4 = arith.constant 4 : index
    %c0_75 = arith.constant 0 : index
    %c0_76 = arith.constant 0 : index
    %120 = vector.load %arg37[%c0_74, %c4, %c0_75, %c0_76] : memref<4x5x8x8xf32, #tpu.memory_space<vmem>>, vector<1x1x8x8xf32>
    %121 = vector.shape_cast %120 : vector<1x1x8x8xf32> to vector<8x8xf32>
    %c0_77 = arith.constant 0 : index
    %c0_78 = arith.constant 0 : index
    %c0_79 = arith.constant 0 : index
    %122 = vector.load %arg35[%c0_77, %c0_78, %c0_79] : memref<4x8x1xf32, #tpu.memory_space<vmem>>, vector<1x8x1xf32>
    %123 = vector.shape_cast %122 : vector<1x8x1xf32> to vector<8x1xf32>
    %c0_80 = arith.constant 0 : index
    %c0_81 = arith.constant 0 : index
    %c0_82 = arith.constant 0 : index
    %124 = vector.load %arg36[%c0_80, %c0_81, %c0_82] : memref<4x8x1xf32, #tpu.memory_space<vmem>>, vector<1x8x1xf32>
    %125 = vector.shape_cast %124 : vector<1x8x1xf32> to vector<8x1xf32>
    %cst_83 = arith.constant 0.000000e+00 : f32
    %126 = vector.broadcast %cst_83 : f32 to vector<8x8xf32>
    %127 = arith.maximumf %111, %126 : vector<8x8xf32>
    %cst_84 = arith.constant 0.000000e+00 : f32
    %128 = vector.broadcast %cst_84 : f32 to vector<8x8xf32>
    %cst_85 = arith.constant dense<0.000000e+00> : vector<8x8xf32>
    %129 = tpu.matmul %113, %127, %cst_85 {dimension_numbers = #tpu.dot_dimension_numbers<[1], [0], [0], [1], [0, 0, 1, 1], [], []>} : vector<8x8xf32>, vector<8x8xf32>, vector<8x8xf32> -> vector<8x8xf32>
    %c0_86 = arith.constant 0 : index
    %c0_87 = arith.constant 0 : index
    %c0_88 = arith.constant 0 : index
    %130 = vector.load %arg17[%c0_86, %c0_87, %c0_88] : memref<5x8x8xf32, #tpu.memory_space<vmem>>, vector<1x8x8xf32>
    %131 = vector.shape_cast %130 : vector<1x8x8xf32> to vector<8x8xf32>
    %cst_89 = arith.constant dense<0.000000e+00> : vector<8x8xf32>
    %132 = tpu.matmul %129, %131, %cst_89 {dimension_numbers = #tpu.dot_dimension_numbers<[1], [0], [0], [1], [0, 0, 1, 1], [], []>} : vector<8x8xf32>, vector<8x8xf32>, vector<8x8xf32> -> vector<8x8xf32>
    %133 = arith.addf %128, %132 : vector<8x8xf32>
    %cst_90 = arith.constant dense<0.000000e+00> : vector<8x8xf32>
    %134 = tpu.matmul %115, %127, %cst_90 {dimension_numbers = #tpu.dot_dimension_numbers<[1], [0], [0], [1], [0, 0, 1, 1], [], []>} : vector<8x8xf32>, vector<8x8xf32>, vector<8x8xf32> -> vector<8x8xf32>
    %c1_91 = arith.constant 1 : index
    %c0_92 = arith.constant 0 : index
    %c0_93 = arith.constant 0 : index
    %135 = vector.load %arg17[%c1_91, %c0_92, %c0_93] : memref<5x8x8xf32, #tpu.memory_space<vmem>>, vector<1x8x8xf32>
    %136 = vector.shape_cast %135 : vector<1x8x8xf32> to vector<8x8xf32>
    %cst_94 = arith.constant dense<0.000000e+00> : vector<8x8xf32>
    %137 = tpu.matmul %134, %136, %cst_94 {dimension_numbers = #tpu.dot_dimension_numbers<[1], [0], [0], [1], [0, 0, 1, 1], [], []>} : vector<8x8xf32>, vector<8x8xf32>, vector<8x8xf32> -> vector<8x8xf32>
    %138 = arith.addf %133, %137 : vector<8x8xf32>
    %cst_95 = arith.constant dense<0.000000e+00> : vector<8x8xf32>
    %139 = tpu.matmul %117, %127, %cst_95 {dimension_numbers = #tpu.dot_dimension_numbers<[1], [0], [0], [1], [0, 0, 1, 1], [], []>} : vector<8x8xf32>, vector<8x8xf32>, vector<8x8xf32> -> vector<8x8xf32>
    %c2_96 = arith.constant 2 : index
    %c0_97 = arith.constant 0 : index
    %c0_98 = arith.constant 0 : index
    %140 = vector.load %arg17[%c2_96, %c0_97, %c0_98] : memref<5x8x8xf32, #tpu.memory_space<vmem>>, vector<1x8x8xf32>
    %141 = vector.shape_cast %140 : vector<1x8x8xf32> to vector<8x8xf32>
    %cst_99 = arith.constant dense<0.000000e+00> : vector<8x8xf32>
    %142 = tpu.matmul %139, %141, %cst_99 {dimension_numbers = #tpu.dot_dimension_numbers<[1], [0], [0], [1], [0, 0, 1, 1], [], []>} : vector<8x8xf32>, vector<8x8xf32>, vector<8x8xf32> -> vector<8x8xf32>
    %143 = arith.addf %138, %142 : vector<8x8xf32>
    %cst_100 = arith.constant dense<0.000000e+00> : vector<8x8xf32>
    %144 = tpu.matmul %119, %127, %cst_100 {dimension_numbers = #tpu.dot_dimension_numbers<[1], [0], [0], [1], [0, 0, 1, 1], [], []>} : vector<8x8xf32>, vector<8x8xf32>, vector<8x8xf32> -> vector<8x8xf32>
    %c3_101 = arith.constant 3 : index
    %c0_102 = arith.constant 0 : index
    %c0_103 = arith.constant 0 : index
    %145 = vector.load %arg17[%c3_101, %c0_102, %c0_103] : memref<5x8x8xf32, #tpu.memory_space<vmem>>, vector<1x8x8xf32>
    %146 = vector.shape_cast %145 : vector<1x8x8xf32> to vector<8x8xf32>
    %cst_104 = arith.constant dense<0.000000e+00> : vector<8x8xf32>
    %147 = tpu.matmul %144, %146, %cst_104 {dimension_numbers = #tpu.dot_dimension_numbers<[1], [0], [0], [1], [0, 0, 1, 1], [], []>} : vector<8x8xf32>, vector<8x8xf32>, vector<8x8xf32> -> vector<8x8xf32>
    %148 = arith.addf %143, %147 : vector<8x8xf32>
    %cst_105 = arith.constant dense<0.000000e+00> : vector<8x8xf32>
    %149 = tpu.matmul %121, %127, %cst_105 {dimension_numbers = #tpu.dot_dimension_numbers<[1], [0], [0], [1], [0, 0, 1, 1], [], []>} : vector<8x8xf32>, vector<8x8xf32>, vector<8x8xf32> -> vector<8x8xf32>
    %c4_106 = arith.constant 4 : index
    %c0_107 = arith.constant 0 : index
    %c0_108 = arith.constant 0 : index
    %150 = vector.load %arg17[%c4_106, %c0_107, %c0_108] : memref<5x8x8xf32, #tpu.memory_space<vmem>>, vector<1x8x8xf32>
    %151 = vector.shape_cast %150 : vector<1x8x8xf32> to vector<8x8xf32>
    %cst_109 = arith.constant dense<0.000000e+00> : vector<8x8xf32>
    %152 = tpu.matmul %149, %151, %cst_109 {dimension_numbers = #tpu.dot_dimension_numbers<[1], [0], [0], [1], [0, 0, 1, 1], [], []>} : vector<8x8xf32>, vector<8x8xf32>, vector<8x8xf32> -> vector<8x8xf32>
    %153 = arith.addf %148, %152 : vector<8x8xf32>
    %154 = vector.broadcast %123 : vector<8x1xf32> to vector<8x8xf32>
    %155 = arith.mulf %153, %154 : vector<8x8xf32>
    %156 = vector.broadcast %125 : vector<8x1xf32> to vector<8x8xf32>
    %157 = arith.addf %155, %156 : vector<8x8xf32>
    %c1_110 = arith.constant 1 : index
    %c0_111 = arith.constant 0 : index
    %c0_112 = arith.constant 0 : index
    %c0_113 = arith.constant 0 : index
    %158 = vector.load %arg37[%c1_110, %c0_111, %c0_112, %c0_113] : memref<4x5x8x8xf32, #tpu.memory_space<vmem>>, vector<1x1x8x8xf32>
    %159 = vector.shape_cast %158 : vector<1x1x8x8xf32> to vector<8x8xf32>
    %c1_114 = arith.constant 1 : index
    %c1_115 = arith.constant 1 : index
    %c0_116 = arith.constant 0 : index
    %c0_117 = arith.constant 0 : index
    %160 = vector.load %arg37[%c1_114, %c1_115, %c0_116, %c0_117] : memref<4x5x8x8xf32, #tpu.memory_space<vmem>>, vector<1x1x8x8xf32>
    %161 = vector.shape_cast %160 : vector<1x1x8x8xf32> to vector<8x8xf32>
    %c1_118 = arith.constant 1 : index
    %c2_119 = arith.constant 2 : index
    %c0_120 = arith.constant 0 : index
    %c0_121 = arith.constant 0 : index
    %162 = vector.load %arg37[%c1_118, %c2_119, %c0_120, %c0_121] : memref<4x5x8x8xf32, #tpu.memory_space<vmem>>, vector<1x1x8x8xf32>
    %163 = vector.shape_cast %162 : vector<1x1x8x8xf32> to vector<8x8xf32>
    %c1_122 = arith.constant 1 : index
    %c3_123 = arith.constant 3 : index
    %c0_124 = arith.constant 0 : index
    %c0_125 = arith.constant 0 : index
    %164 = vector.load %arg37[%c1_122, %c3_123, %c0_124, %c0_125] : memref<4x5x8x8xf32, #tpu.memory_space<vmem>>, vector<1x1x8x8xf32>
    %165 = vector.shape_cast %164 : vector<1x1x8x8xf32> to vector<8x8xf32>
    %c1_126 = arith.constant 1 : index
    %c4_127 = arith.constant 4 : index
    %c0_128 = arith.constant 0 : index
    %c0_129 = arith.constant 0 : index
    %166 = vector.load %arg37[%c1_126, %c4_127, %c0_128, %c0_129] : memref<4x5x8x8xf32, #tpu.memory_space<vmem>>, vector<1x1x8x8xf32>
    %167 = vector.shape_cast %166 : vector<1x1x8x8xf32> to vector<8x8xf32>
    %c1_130 = arith.constant 1 : index
    %c0_131 = arith.constant 0 : index
    %c0_132 = arith.constant 0 : index
    %168 = vector.load %arg35[%c1_130, %c0_131, %c0_132] : memref<4x8x1xf32, #tpu.memory_space<vmem>>, vector<1x8x1xf32>
    %169 = vector.shape_cast %168 : vector<1x8x1xf32> to vector<8x1xf32>
    %c1_133 = arith.constant 1 : index
    %c0_134 = arith.constant 0 : index
    %c0_135 = arith.constant 0 : index
    %170 = vector.load %arg36[%c1_133, %c0_134, %c0_135] : memref<4x8x1xf32, #tpu.memory_space<vmem>>, vector<1x8x1xf32>
    %171 = vector.shape_cast %170 : vector<1x8x1xf32> to vector<8x1xf32>
    %cst_136 = arith.constant 0.000000e+00 : f32
    %172 = vector.broadcast %cst_136 : f32 to vector<8x8xf32>
    %173 = arith.maximumf %157, %172 : vector<8x8xf32>
    %cst_137 = arith.constant 0.000000e+00 : f32
    %174 = vector.broadcast %cst_137 : f32 to vector<8x8xf32>
    %cst_138 = arith.constant dense<0.000000e+00> : vector<8x8xf32>
    %175 = tpu.matmul %159, %173, %cst_138 {dimension_numbers = #tpu.dot_dimension_numbers<[1], [0], [0], [1], [0, 0, 1, 1], [], []>} : vector<8x8xf32>, vector<8x8xf32>, vector<8x8xf32> -> vector<8x8xf32>
    %c0_139 = arith.constant 0 : index
    %c0_140 = arith.constant 0 : index
    %c0_141 = arith.constant 0 : index
    %176 = vector.load %arg17[%c0_139, %c0_140, %c0_141] : memref<5x8x8xf32, #tpu.memory_space<vmem>>, vector<1x8x8xf32>
    %177 = vector.shape_cast %176 : vector<1x8x8xf32> to vector<8x8xf32>
    %cst_142 = arith.constant dense<0.000000e+00> : vector<8x8xf32>
    %178 = tpu.matmul %175, %177, %cst_142 {dimension_numbers = #tpu.dot_dimension_numbers<[1], [0], [0], [1], [0, 0, 1, 1], [], []>} : vector<8x8xf32>, vector<8x8xf32>, vector<8x8xf32> -> vector<8x8xf32>
    %179 = arith.addf %174, %178 : vector<8x8xf32>
    %cst_143 = arith.constant dense<0.000000e+00> : vector<8x8xf32>
    %180 = tpu.matmul %161, %173, %cst_143 {dimension_numbers = #tpu.dot_dimension_numbers<[1], [0], [0], [1], [0, 0, 1, 1], [], []>} : vector<8x8xf32>, vector<8x8xf32>, vector<8x8xf32> -> vector<8x8xf32>
    %c1_144 = arith.constant 1 : index
    %c0_145 = arith.constant 0 : index
    %c0_146 = arith.constant 0 : index
    %181 = vector.load %arg17[%c1_144, %c0_145, %c0_146] : memref<5x8x8xf32, #tpu.memory_space<vmem>>, vector<1x8x8xf32>
    %182 = vector.shape_cast %181 : vector<1x8x8xf32> to vector<8x8xf32>
    %cst_147 = arith.constant dense<0.000000e+00> : vector<8x8xf32>
    %183 = tpu.matmul %180, %182, %cst_147 {dimension_numbers = #tpu.dot_dimension_numbers<[1], [0], [0], [1], [0, 0, 1, 1], [], []>} : vector<8x8xf32>, vector<8x8xf32>, vector<8x8xf32> -> vector<8x8xf32>
    %184 = arith.addf %179, %183 : vector<8x8xf32>
    %cst_148 = arith.constant dense<0.000000e+00> : vector<8x8xf32>
    %185 = tpu.matmul %163, %173, %cst_148 {dimension_numbers = #tpu.dot_dimension_numbers<[1], [0], [0], [1], [0, 0, 1, 1], [], []>} : vector<8x8xf32>, vector<8x8xf32>, vector<8x8xf32> -> vector<8x8xf32>
    %c2_149 = arith.constant 2 : index
    %c0_150 = arith.constant 0 : index
    %c0_151 = arith.constant 0 : index
    %186 = vector.load %arg17[%c2_149, %c0_150, %c0_151] : memref<5x8x8xf32, #tpu.memory_space<vmem>>, vector<1x8x8xf32>
    %187 = vector.shape_cast %186 : vector<1x8x8xf32> to vector<8x8xf32>
    %cst_152 = arith.constant dense<0.000000e+00> : vector<8x8xf32>
    %188 = tpu.matmul %185, %187, %cst_152 {dimension_numbers = #tpu.dot_dimension_numbers<[1], [0], [0], [1], [0, 0, 1, 1], [], []>} : vector<8x8xf32>, vector<8x8xf32>, vector<8x8xf32> -> vector<8x8xf32>
    %189 = arith.addf %184, %188 : vector<8x8xf32>
    %cst_153 = arith.constant dense<0.000000e+00> : vector<8x8xf32>
    %190 = tpu.matmul %165, %173, %cst_153 {dimension_numbers = #tpu.dot_dimension_numbers<[1], [0], [0], [1], [0, 0, 1, 1], [], []>} : vector<8x8xf32>, vector<8x8xf32>, vector<8x8xf32> -> vector<8x8xf32>
    %c3_154 = arith.constant 3 : index
    %c0_155 = arith.constant 0 : index
    %c0_156 = arith.constant 0 : index
    %191 = vector.load %arg17[%c3_154, %c0_155, %c0_156] : memref<5x8x8xf32, #tpu.memory_space<vmem>>, vector<1x8x8xf32>
    %192 = vector.shape_cast %191 : vector<1x8x8xf32> to vector<8x8xf32>
    %cst_157 = arith.constant dense<0.000000e+00> : vector<8x8xf32>
    %193 = tpu.matmul %190, %192, %cst_157 {dimension_numbers = #tpu.dot_dimension_numbers<[1], [0], [0], [1], [0, 0, 1, 1], [], []>} : vector<8x8xf32>, vector<8x8xf32>, vector<8x8xf32> -> vector<8x8xf32>
    %194 = arith.addf %189, %193 : vector<8x8xf32>
    %cst_158 = arith.constant dense<0.000000e+00> : vector<8x8xf32>
    %195 = tpu.matmul %167, %173, %cst_158 {dimension_numbers = #tpu.dot_dimension_numbers<[1], [0], [0], [1], [0, 0, 1, 1], [], []>} : vector<8x8xf32>, vector<8x8xf32>, vector<8x8xf32> -> vector<8x8xf32>
    %c4_159 = arith.constant 4 : index
    %c0_160 = arith.constant 0 : index
    %c0_161 = arith.constant 0 : index
    %196 = vector.load %arg17[%c4_159, %c0_160, %c0_161] : memref<5x8x8xf32, #tpu.memory_space<vmem>>, vector<1x8x8xf32>
    %197 = vector.shape_cast %196 : vector<1x8x8xf32> to vector<8x8xf32>
    %cst_162 = arith.constant dense<0.000000e+00> : vector<8x8xf32>
    %198 = tpu.matmul %195, %197, %cst_162 {dimension_numbers = #tpu.dot_dimension_numbers<[1], [0], [0], [1], [0, 0, 1, 1], [], []>} : vector<8x8xf32>, vector<8x8xf32>, vector<8x8xf32> -> vector<8x8xf32>
    %199 = arith.addf %194, %198 : vector<8x8xf32>
    %200 = vector.broadcast %169 : vector<8x1xf32> to vector<8x8xf32>
    %201 = arith.mulf %199, %200 : vector<8x8xf32>
    %202 = vector.broadcast %171 : vector<8x1xf32> to vector<8x8xf32>
    %203 = arith.addf %201, %202 : vector<8x8xf32>
    %204 = arith.addf %203, %157 : vector<8x8xf32>
    %c2_163 = arith.constant 2 : index
    %c0_164 = arith.constant 0 : index
    %c0_165 = arith.constant 0 : index
    %c0_166 = arith.constant 0 : index
    %205 = vector.load %arg37[%c2_163, %c0_164, %c0_165, %c0_166] : memref<4x5x8x8xf32, #tpu.memory_space<vmem>>, vector<1x1x8x8xf32>
    %206 = vector.shape_cast %205 : vector<1x1x8x8xf32> to vector<8x8xf32>
    %c2_167 = arith.constant 2 : index
    %c1_168 = arith.constant 1 : index
    %c0_169 = arith.constant 0 : index
    %c0_170 = arith.constant 0 : index
    %207 = vector.load %arg37[%c2_167, %c1_168, %c0_169, %c0_170] : memref<4x5x8x8xf32, #tpu.memory_space<vmem>>, vector<1x1x8x8xf32>
    %208 = vector.shape_cast %207 : vector<1x1x8x8xf32> to vector<8x8xf32>
    %c2_171 = arith.constant 2 : index
    %c2_172 = arith.constant 2 : index
    %c0_173 = arith.constant 0 : index
    %c0_174 = arith.constant 0 : index
    %209 = vector.load %arg37[%c2_171, %c2_172, %c0_173, %c0_174] : memref<4x5x8x8xf32, #tpu.memory_space<vmem>>, vector<1x1x8x8xf32>
    %210 = vector.shape_cast %209 : vector<1x1x8x8xf32> to vector<8x8xf32>
    %c2_175 = arith.constant 2 : index
    %c3_176 = arith.constant 3 : index
    %c0_177 = arith.constant 0 : index
    %c0_178 = arith.constant 0 : index
    %211 = vector.load %arg37[%c2_175, %c3_176, %c0_177, %c0_178] : memref<4x5x8x8xf32, #tpu.memory_space<vmem>>, vector<1x1x8x8xf32>
    %212 = vector.shape_cast %211 : vector<1x1x8x8xf32> to vector<8x8xf32>
    %c2_179 = arith.constant 2 : index
    %c4_180 = arith.constant 4 : index
    %c0_181 = arith.constant 0 : index
    %c0_182 = arith.constant 0 : index
    %213 = vector.load %arg37[%c2_179, %c4_180, %c0_181, %c0_182] : memref<4x5x8x8xf32, #tpu.memory_space<vmem>>, vector<1x1x8x8xf32>
    %214 = vector.shape_cast %213 : vector<1x1x8x8xf32> to vector<8x8xf32>
    %c2_183 = arith.constant 2 : index
    %c0_184 = arith.constant 0 : index
    %c0_185 = arith.constant 0 : index
    %215 = vector.load %arg35[%c2_183, %c0_184, %c0_185] : memref<4x8x1xf32, #tpu.memory_space<vmem>>, vector<1x8x1xf32>
    %216 = vector.shape_cast %215 : vector<1x8x1xf32> to vector<8x1xf32>
    %c2_186 = arith.constant 2 : index
    %c0_187 = arith.constant 0 : index
    %c0_188 = arith.constant 0 : index
    %217 = vector.load %arg36[%c2_186, %c0_187, %c0_188] : memref<4x8x1xf32, #tpu.memory_space<vmem>>, vector<1x8x1xf32>
    %218 = vector.shape_cast %217 : vector<1x8x1xf32> to vector<8x1xf32>
    %cst_189 = arith.constant 0.000000e+00 : f32
    %219 = vector.broadcast %cst_189 : f32 to vector<8x8xf32>
    %220 = arith.maximumf %204, %219 : vector<8x8xf32>
    %cst_190 = arith.constant 0.000000e+00 : f32
    %221 = vector.broadcast %cst_190 : f32 to vector<8x8xf32>
    %cst_191 = arith.constant dense<0.000000e+00> : vector<8x8xf32>
    %222 = tpu.matmul %206, %220, %cst_191 {dimension_numbers = #tpu.dot_dimension_numbers<[1], [0], [0], [1], [0, 0, 1, 1], [], []>} : vector<8x8xf32>, vector<8x8xf32>, vector<8x8xf32> -> vector<8x8xf32>
    %c0_192 = arith.constant 0 : index
    %c0_193 = arith.constant 0 : index
    %c0_194 = arith.constant 0 : index
    %223 = vector.load %arg17[%c0_192, %c0_193, %c0_194] : memref<5x8x8xf32, #tpu.memory_space<vmem>>, vector<1x8x8xf32>
    %224 = vector.shape_cast %223 : vector<1x8x8xf32> to vector<8x8xf32>
    %cst_195 = arith.constant dense<0.000000e+00> : vector<8x8xf32>
    %225 = tpu.matmul %222, %224, %cst_195 {dimension_numbers = #tpu.dot_dimension_numbers<[1], [0], [0], [1], [0, 0, 1, 1], [], []>} : vector<8x8xf32>, vector<8x8xf32>, vector<8x8xf32> -> vector<8x8xf32>
    %226 = arith.addf %221, %225 : vector<8x8xf32>
    %cst_196 = arith.constant dense<0.000000e+00> : vector<8x8xf32>
    %227 = tpu.matmul %208, %220, %cst_196 {dimension_numbers = #tpu.dot_dimension_numbers<[1], [0], [0], [1], [0, 0, 1, 1], [], []>} : vector<8x8xf32>, vector<8x8xf32>, vector<8x8xf32> -> vector<8x8xf32>
    %c1_197 = arith.constant 1 : index
    %c0_198 = arith.constant 0 : index
    %c0_199 = arith.constant 0 : index
    %228 = vector.load %arg17[%c1_197, %c0_198, %c0_199] : memref<5x8x8xf32, #tpu.memory_space<vmem>>, vector<1x8x8xf32>
    %229 = vector.shape_cast %228 : vector<1x8x8xf32> to vector<8x8xf32>
    %cst_200 = arith.constant dense<0.000000e+00> : vector<8x8xf32>
    %230 = tpu.matmul %227, %229, %cst_200 {dimension_numbers = #tpu.dot_dimension_numbers<[1], [0], [0], [1], [0, 0, 1, 1], [], []>} : vector<8x8xf32>, vector<8x8xf32>, vector<8x8xf32> -> vector<8x8xf32>
    %231 = arith.addf %226, %230 : vector<8x8xf32>
    %cst_201 = arith.constant dense<0.000000e+00> : vector<8x8xf32>
    %232 = tpu.matmul %210, %220, %cst_201 {dimension_numbers = #tpu.dot_dimension_numbers<[1], [0], [0], [1], [0, 0, 1, 1], [], []>} : vector<8x8xf32>, vector<8x8xf32>, vector<8x8xf32> -> vector<8x8xf32>
    %c2_202 = arith.constant 2 : index
    %c0_203 = arith.constant 0 : index
    %c0_204 = arith.constant 0 : index
    %233 = vector.load %arg17[%c2_202, %c0_203, %c0_204] : memref<5x8x8xf32, #tpu.memory_space<vmem>>, vector<1x8x8xf32>
    %234 = vector.shape_cast %233 : vector<1x8x8xf32> to vector<8x8xf32>
    %cst_205 = arith.constant dense<0.000000e+00> : vector<8x8xf32>
    %235 = tpu.matmul %232, %234, %cst_205 {dimension_numbers = #tpu.dot_dimension_numbers<[1], [0], [0], [1], [0, 0, 1, 1], [], []>} : vector<8x8xf32>, vector<8x8xf32>, vector<8x8xf32> -> vector<8x8xf32>
    %236 = arith.addf %231, %235 : vector<8x8xf32>
    %cst_206 = arith.constant dense<0.000000e+00> : vector<8x8xf32>
    %237 = tpu.matmul %212, %220, %cst_206 {dimension_numbers = #tpu.dot_dimension_numbers<[1], [0], [0], [1], [0, 0, 1, 1], [], []>} : vector<8x8xf32>, vector<8x8xf32>, vector<8x8xf32> -> vector<8x8xf32>
    %c3_207 = arith.constant 3 : index
    %c0_208 = arith.constant 0 : index
    %c0_209 = arith.constant 0 : index
    %238 = vector.load %arg17[%c3_207, %c0_208, %c0_209] : memref<5x8x8xf32, #tpu.memory_space<vmem>>, vector<1x8x8xf32>
    %239 = vector.shape_cast %238 : vector<1x8x8xf32> to vector<8x8xf32>
    %cst_210 = arith.constant dense<0.000000e+00> : vector<8x8xf32>
    %240 = tpu.matmul %237, %239, %cst_210 {dimension_numbers = #tpu.dot_dimension_numbers<[1], [0], [0], [1], [0, 0, 1, 1], [], []>} : vector<8x8xf32>, vector<8x8xf32>, vector<8x8xf32> -> vector<8x8xf32>
    %241 = arith.addf %236, %240 : vector<8x8xf32>
    %cst_211 = arith.constant dense<0.000000e+00> : vector<8x8xf32>
    %242 = tpu.matmul %214, %220, %cst_211 {dimension_numbers = #tpu.dot_dimension_numbers<[1], [0], [0], [1], [0, 0, 1, 1], [], []>} : vector<8x8xf32>, vector<8x8xf32>, vector<8x8xf32> -> vector<8x8xf32>
    %c4_212 = arith.constant 4 : index
    %c0_213 = arith.constant 0 : index
    %c0_214 = arith.constant 0 : index
    %243 = vector.load %arg17[%c4_212, %c0_213, %c0_214] : memref<5x8x8xf32, #tpu.memory_space<vmem>>, vector<1x8x8xf32>
    %244 = vector.shape_cast %243 : vector<1x8x8xf32> to vector<8x8xf32>
    %cst_215 = arith.constant dense<0.000000e+00> : vector<8x8xf32>
    %245 = tpu.matmul %242, %244, %cst_215 {dimension_numbers = #tpu.dot_dimension_numbers<[1], [0], [0], [1], [0, 0, 1, 1], [], []>} : vector<8x8xf32>, vector<8x8xf32>, vector<8x8xf32> -> vector<8x8xf32>
    %246 = arith.addf %241, %245 : vector<8x8xf32>
    %247 = vector.broadcast %216 : vector<8x1xf32> to vector<8x8xf32>
    %248 = arith.mulf %246, %247 : vector<8x8xf32>
    %249 = vector.broadcast %218 : vector<8x1xf32> to vector<8x8xf32>
    %250 = arith.addf %248, %249 : vector<8x8xf32>
    %c3_216 = arith.constant 3 : index
    %c0_217 = arith.constant 0 : index
    %c0_218 = arith.constant 0 : index
    %c0_219 = arith.constant 0 : index
    %251 = vector.load %arg37[%c3_216, %c0_217, %c0_218, %c0_219] : memref<4x5x8x8xf32, #tpu.memory_space<vmem>>, vector<1x1x8x8xf32>
    %252 = vector.shape_cast %251 : vector<1x1x8x8xf32> to vector<8x8xf32>
    %c3_220 = arith.constant 3 : index
    %c1_221 = arith.constant 1 : index
    %c0_222 = arith.constant 0 : index
    %c0_223 = arith.constant 0 : index
    %253 = vector.load %arg37[%c3_220, %c1_221, %c0_222, %c0_223] : memref<4x5x8x8xf32, #tpu.memory_space<vmem>>, vector<1x1x8x8xf32>
    %254 = vector.shape_cast %253 : vector<1x1x8x8xf32> to vector<8x8xf32>
    %c3_224 = arith.constant 3 : index
    %c2_225 = arith.constant 2 : index
    %c0_226 = arith.constant 0 : index
    %c0_227 = arith.constant 0 : index
    %255 = vector.load %arg37[%c3_224, %c2_225, %c0_226, %c0_227] : memref<4x5x8x8xf32, #tpu.memory_space<vmem>>, vector<1x1x8x8xf32>
    %256 = vector.shape_cast %255 : vector<1x1x8x8xf32> to vector<8x8xf32>
    %c3_228 = arith.constant 3 : index
    %c3_229 = arith.constant 3 : index
    %c0_230 = arith.constant 0 : index
    %c0_231 = arith.constant 0 : index
    %257 = vector.load %arg37[%c3_228, %c3_229, %c0_230, %c0_231] : memref<4x5x8x8xf32, #tpu.memory_space<vmem>>, vector<1x1x8x8xf32>
    %258 = vector.shape_cast %257 : vector<1x1x8x8xf32> to vector<8x8xf32>
    %c3_232 = arith.constant 3 : index
    %c4_233 = arith.constant 4 : index
    %c0_234 = arith.constant 0 : index
    %c0_235 = arith.constant 0 : index
    %259 = vector.load %arg37[%c3_232, %c4_233, %c0_234, %c0_235] : memref<4x5x8x8xf32, #tpu.memory_space<vmem>>, vector<1x1x8x8xf32>
    %260 = vector.shape_cast %259 : vector<1x1x8x8xf32> to vector<8x8xf32>
    %c3_236 = arith.constant 3 : index
    %c0_237 = arith.constant 0 : index
    %c0_238 = arith.constant 0 : index
    %261 = vector.load %arg35[%c3_236, %c0_237, %c0_238] : memref<4x8x1xf32, #tpu.memory_space<vmem>>, vector<1x8x1xf32>
    %262 = vector.shape_cast %261 : vector<1x8x1xf32> to vector<8x1xf32>
    %c3_239 = arith.constant 3 : index
    %c0_240 = arith.constant 0 : index
    %c0_241 = arith.constant 0 : index
    %263 = vector.load %arg36[%c3_239, %c0_240, %c0_241] : memref<4x8x1xf32, #tpu.memory_space<vmem>>, vector<1x8x1xf32>
    %264 = vector.shape_cast %263 : vector<1x8x1xf32> to vector<8x1xf32>
    %cst_242 = arith.constant 0.000000e+00 : f32
    %265 = vector.broadcast %cst_242 : f32 to vector<8x8xf32>
    %266 = arith.maximumf %250, %265 : vector<8x8xf32>
    %cst_243 = arith.constant 0.000000e+00 : f32
    %267 = vector.broadcast %cst_243 : f32 to vector<8x8xf32>
    %cst_244 = arith.constant dense<0.000000e+00> : vector<8x8xf32>
    %268 = tpu.matmul %252, %266, %cst_244 {dimension_numbers = #tpu.dot_dimension_numbers<[1], [0], [0], [1], [0, 0, 1, 1], [], []>} : vector<8x8xf32>, vector<8x8xf32>, vector<8x8xf32> -> vector<8x8xf32>
    %c0_245 = arith.constant 0 : index
    %c0_246 = arith.constant 0 : index
    %c0_247 = arith.constant 0 : index
    %269 = vector.load %arg17[%c0_245, %c0_246, %c0_247] : memref<5x8x8xf32, #tpu.memory_space<vmem>>, vector<1x8x8xf32>
    %270 = vector.shape_cast %269 : vector<1x8x8xf32> to vector<8x8xf32>
    %cst_248 = arith.constant dense<0.000000e+00> : vector<8x8xf32>
    %271 = tpu.matmul %268, %270, %cst_248 {dimension_numbers = #tpu.dot_dimension_numbers<[1], [0], [0], [1], [0, 0, 1, 1], [], []>} : vector<8x8xf32>, vector<8x8xf32>, vector<8x8xf32> -> vector<8x8xf32>
    %272 = arith.addf %267, %271 : vector<8x8xf32>
    %cst_249 = arith.constant dense<0.000000e+00> : vector<8x8xf32>
    %273 = tpu.matmul %254, %266, %cst_249 {dimension_numbers = #tpu.dot_dimension_numbers<[1], [0], [0], [1], [0, 0, 1, 1], [], []>} : vector<8x8xf32>, vector<8x8xf32>, vector<8x8xf32> -> vector<8x8xf32>
    %c1_250 = arith.constant 1 : index
    %c0_251 = arith.constant 0 : index
    %c0_252 = arith.constant 0 : index
    %274 = vector.load %arg17[%c1_250, %c0_251, %c0_252] : memref<5x8x8xf32, #tpu.memory_space<vmem>>, vector<1x8x8xf32>
    %275 = vector.shape_cast %274 : vector<1x8x8xf32> to vector<8x8xf32>
    %cst_253 = arith.constant dense<0.000000e+00> : vector<8x8xf32>
    %276 = tpu.matmul %273, %275, %cst_253 {dimension_numbers = #tpu.dot_dimension_numbers<[1], [0], [0], [1], [0, 0, 1, 1], [], []>} : vector<8x8xf32>, vector<8x8xf32>, vector<8x8xf32> -> vector<8x8xf32>
    %277 = arith.addf %272, %276 : vector<8x8xf32>
    %cst_254 = arith.constant dense<0.000000e+00> : vector<8x8xf32>
    %278 = tpu.matmul %256, %266, %cst_254 {dimension_numbers = #tpu.dot_dimension_numbers<[1], [0], [0], [1], [0, 0, 1, 1], [], []>} : vector<8x8xf32>, vector<8x8xf32>, vector<8x8xf32> -> vector<8x8xf32>
    %c2_255 = arith.constant 2 : index
    %c0_256 = arith.constant 0 : index
    %c0_257 = arith.constant 0 : index
    %279 = vector.load %arg17[%c2_255, %c0_256, %c0_257] : memref<5x8x8xf32, #tpu.memory_space<vmem>>, vector<1x8x8xf32>
    %280 = vector.shape_cast %279 : vector<1x8x8xf32> to vector<8x8xf32>
    %cst_258 = arith.constant dense<0.000000e+00> : vector<8x8xf32>
    %281 = tpu.matmul %278, %280, %cst_258 {dimension_numbers = #tpu.dot_dimension_numbers<[1], [0], [0], [1], [0, 0, 1, 1], [], []>} : vector<8x8xf32>, vector<8x8xf32>, vector<8x8xf32> -> vector<8x8xf32>
    %282 = arith.addf %277, %281 : vector<8x8xf32>
    %cst_259 = arith.constant dense<0.000000e+00> : vector<8x8xf32>
    %283 = tpu.matmul %258, %266, %cst_259 {dimension_numbers = #tpu.dot_dimension_numbers<[1], [0], [0], [1], [0, 0, 1, 1], [], []>} : vector<8x8xf32>, vector<8x8xf32>, vector<8x8xf32> -> vector<8x8xf32>
    %c3_260 = arith.constant 3 : index
    %c0_261 = arith.constant 0 : index
    %c0_262 = arith.constant 0 : index
    %284 = vector.load %arg17[%c3_260, %c0_261, %c0_262] : memref<5x8x8xf32, #tpu.memory_space<vmem>>, vector<1x8x8xf32>
    %285 = vector.shape_cast %284 : vector<1x8x8xf32> to vector<8x8xf32>
    %cst_263 = arith.constant dense<0.000000e+00> : vector<8x8xf32>
    %286 = tpu.matmul %283, %285, %cst_263 {dimension_numbers = #tpu.dot_dimension_numbers<[1], [0], [0], [1], [0, 0, 1, 1], [], []>} : vector<8x8xf32>, vector<8x8xf32>, vector<8x8xf32> -> vector<8x8xf32>
    %287 = arith.addf %282, %286 : vector<8x8xf32>
    %cst_264 = arith.constant dense<0.000000e+00> : vector<8x8xf32>
    %288 = tpu.matmul %260, %266, %cst_264 {dimension_numbers = #tpu.dot_dimension_numbers<[1], [0], [0], [1], [0, 0, 1, 1], [], []>} : vector<8x8xf32>, vector<8x8xf32>, vector<8x8xf32> -> vector<8x8xf32>
    %c4_265 = arith.constant 4 : index
    %c0_266 = arith.constant 0 : index
    %c0_267 = arith.constant 0 : index
    %289 = vector.load %arg17[%c4_265, %c0_266, %c0_267] : memref<5x8x8xf32, #tpu.memory_space<vmem>>, vector<1x8x8xf32>
    %290 = vector.shape_cast %289 : vector<1x8x8xf32> to vector<8x8xf32>
    %cst_268 = arith.constant dense<0.000000e+00> : vector<8x8xf32>
    %291 = tpu.matmul %288, %290, %cst_268 {dimension_numbers = #tpu.dot_dimension_numbers<[1], [0], [0], [1], [0, 0, 1, 1], [], []>} : vector<8x8xf32>, vector<8x8xf32>, vector<8x8xf32> -> vector<8x8xf32>
    %292 = arith.addf %287, %291 : vector<8x8xf32>
    %293 = vector.broadcast %262 : vector<8x1xf32> to vector<8x8xf32>
    %294 = arith.mulf %292, %293 : vector<8x8xf32>
    %295 = vector.broadcast %264 : vector<8x1xf32> to vector<8x8xf32>
    %296 = arith.addf %294, %295 : vector<8x8xf32>
    %297 = arith.addf %296, %250 : vector<8x8xf32>
    %c0_269 = arith.constant 0 : index
    %c0_270 = arith.constant 0 : index
    %298 = vector.load %arg1[%c0_269, %c0_270] : memref<1x32xf32, #tpu.memory_space<vmem>>, vector<1x32xf32>
    %c0_271 = arith.constant 0 : index
    %c0_272 = arith.constant 0 : index
    %c0_273 = arith.constant 0 : index
    %299 = vector.load %arg31[%c0_271, %c0_272, %c0_273] : memref<5x8x1xf32, #tpu.memory_space<vmem>>, vector<1x8x1xf32>
    %300 = vector.shape_cast %299 : vector<1x8x1xf32> to vector<8x1xf32>
    %c1_274 = arith.constant 1 : index
    %c0_275 = arith.constant 0 : index
    %c0_276 = arith.constant 0 : index
    %301 = vector.load %arg31[%c1_274, %c0_275, %c0_276] : memref<5x8x1xf32, #tpu.memory_space<vmem>>, vector<1x8x1xf32>
    %302 = vector.shape_cast %301 : vector<1x8x1xf32> to vector<8x1xf32>
    %c2_277 = arith.constant 2 : index
    %c0_278 = arith.constant 0 : index
    %c0_279 = arith.constant 0 : index
    %303 = vector.load %arg31[%c2_277, %c0_278, %c0_279] : memref<5x8x1xf32, #tpu.memory_space<vmem>>, vector<1x8x1xf32>
    %304 = vector.shape_cast %303 : vector<1x8x1xf32> to vector<8x1xf32>
    %c3_280 = arith.constant 3 : index
    %c0_281 = arith.constant 0 : index
    %c0_282 = arith.constant 0 : index
    %305 = vector.load %arg31[%c3_280, %c0_281, %c0_282] : memref<5x8x1xf32, #tpu.memory_space<vmem>>, vector<1x8x1xf32>
    %306 = vector.shape_cast %305 : vector<1x8x1xf32> to vector<8x1xf32>
    %c4_283 = arith.constant 4 : index
    %c0_284 = arith.constant 0 : index
    %c0_285 = arith.constant 0 : index
    %307 = vector.load %arg31[%c4_283, %c0_284, %c0_285] : memref<5x8x1xf32, #tpu.memory_space<vmem>>, vector<1x8x1xf32>
    %308 = vector.shape_cast %307 : vector<1x8x1xf32> to vector<8x1xf32>
    %c0_286 = arith.constant 0 : index
    %c0_287 = arith.constant 0 : index
    %309 = vector.load %arg29[%c0_286, %c0_287] : memref<8x1xf32, #tpu.memory_space<vmem>>, vector<8x1xf32>
    %c0_288 = arith.constant 0 : index
    %c0_289 = arith.constant 0 : index
    %310 = vector.load %arg30[%c0_288, %c0_289] : memref<8x1xf32, #tpu.memory_space<vmem>>, vector<8x1xf32>
    %cst_290 = arith.constant 0.000000e+00 : f32
    %311 = vector.broadcast %cst_290 : f32 to vector<8x32xf32>
    %312 = vector.broadcast %300 : vector<8x1xf32> to vector<8x32xf32>
    %313 = vector.broadcast %298 : vector<1x32xf32> to vector<8x32xf32>
    %314 = arith.mulf %312, %313 : vector<8x32xf32>
    %c0_291 = arith.constant 0 : index
    %c0_292 = arith.constant 0 : index
    %c0_293 = arith.constant 0 : index
    %315 = vector.load %arg16[%c0_291, %c0_292, %c0_293] : memref<5x32x32xf32, #tpu.memory_space<vmem>>, vector<1x32x32xf32>
    %316 = vector.shape_cast %315 : vector<1x32x32xf32> to vector<32x32xf32>
    %cst_294 = arith.constant dense<0.000000e+00> : vector<8x32xf32>
    %317 = tpu.matmul %314, %316, %cst_294 {dimension_numbers = #tpu.dot_dimension_numbers<[1], [0], [0], [1], [0, 0, 1, 1], [], []>} : vector<8x32xf32>, vector<32x32xf32>, vector<8x32xf32> -> vector<8x32xf32>
    %318 = arith.addf %311, %317 : vector<8x32xf32>
    %319 = vector.broadcast %302 : vector<8x1xf32> to vector<8x32xf32>
    %320 = vector.broadcast %298 : vector<1x32xf32> to vector<8x32xf32>
    %321 = arith.mulf %319, %320 : vector<8x32xf32>
    %c1_295 = arith.constant 1 : index
    %c0_296 = arith.constant 0 : index
    %c0_297 = arith.constant 0 : index
    %322 = vector.load %arg16[%c1_295, %c0_296, %c0_297] : memref<5x32x32xf32, #tpu.memory_space<vmem>>, vector<1x32x32xf32>
    %323 = vector.shape_cast %322 : vector<1x32x32xf32> to vector<32x32xf32>
    %cst_298 = arith.constant dense<0.000000e+00> : vector<8x32xf32>
    %324 = tpu.matmul %321, %323, %cst_298 {dimension_numbers = #tpu.dot_dimension_numbers<[1], [0], [0], [1], [0, 0, 1, 1], [], []>} : vector<8x32xf32>, vector<32x32xf32>, vector<8x32xf32> -> vector<8x32xf32>
    %325 = arith.addf %318, %324 : vector<8x32xf32>
    %326 = vector.broadcast %304 : vector<8x1xf32> to vector<8x32xf32>
    %327 = vector.broadcast %298 : vector<1x32xf32> to vector<8x32xf32>
    %328 = arith.mulf %326, %327 : vector<8x32xf32>
    %c2_299 = arith.constant 2 : index
    %c0_300 = arith.constant 0 : index
    %c0_301 = arith.constant 0 : index
    %329 = vector.load %arg16[%c2_299, %c0_300, %c0_301] : memref<5x32x32xf32, #tpu.memory_space<vmem>>, vector<1x32x32xf32>
    %330 = vector.shape_cast %329 : vector<1x32x32xf32> to vector<32x32xf32>
    %cst_302 = arith.constant dense<0.000000e+00> : vector<8x32xf32>
    %331 = tpu.matmul %328, %330, %cst_302 {dimension_numbers = #tpu.dot_dimension_numbers<[1], [0], [0], [1], [0, 0, 1, 1], [], []>} : vector<8x32xf32>, vector<32x32xf32>, vector<8x32xf32> -> vector<8x32xf32>
    %332 = arith.addf %325, %331 : vector<8x32xf32>
    %333 = vector.broadcast %306 : vector<8x1xf32> to vector<8x32xf32>
    %334 = vector.broadcast %298 : vector<1x32xf32> to vector<8x32xf32>
    %335 = arith.mulf %333, %334 : vector<8x32xf32>
    %c3_303 = arith.constant 3 : index
    %c0_304 = arith.constant 0 : index
    %c0_305 = arith.constant 0 : index
    %336 = vector.load %arg16[%c3_303, %c0_304, %c0_305] : memref<5x32x32xf32, #tpu.memory_space<vmem>>, vector<1x32x32xf32>
    %337 = vector.shape_cast %336 : vector<1x32x32xf32> to vector<32x32xf32>
    %cst_306 = arith.constant dense<0.000000e+00> : vector<8x32xf32>
    %338 = tpu.matmul %335, %337, %cst_306 {dimension_numbers = #tpu.dot_dimension_numbers<[1], [0], [0], [1], [0, 0, 1, 1], [], []>} : vector<8x32xf32>, vector<32x32xf32>, vector<8x32xf32> -> vector<8x32xf32>
    %339 = arith.addf %332, %338 : vector<8x32xf32>
    %340 = vector.broadcast %308 : vector<8x1xf32> to vector<8x32xf32>
    %341 = vector.broadcast %298 : vector<1x32xf32> to vector<8x32xf32>
    %342 = arith.mulf %340, %341 : vector<8x32xf32>
    %c4_307 = arith.constant 4 : index
    %c0_308 = arith.constant 0 : index
    %c0_309 = arith.constant 0 : index
    %343 = vector.load %arg16[%c4_307, %c0_308, %c0_309] : memref<5x32x32xf32, #tpu.memory_space<vmem>>, vector<1x32x32xf32>
    %344 = vector.shape_cast %343 : vector<1x32x32xf32> to vector<32x32xf32>
    %cst_310 = arith.constant dense<0.000000e+00> : vector<8x32xf32>
    %345 = tpu.matmul %342, %344, %cst_310 {dimension_numbers = #tpu.dot_dimension_numbers<[1], [0], [0], [1], [0, 0, 1, 1], [], []>} : vector<8x32xf32>, vector<32x32xf32>, vector<8x32xf32> -> vector<8x32xf32>
    %346 = arith.addf %339, %345 : vector<8x32xf32>
    %347 = vector.broadcast %309 : vector<8x1xf32> to vector<8x32xf32>
    %348 = arith.mulf %346, %347 : vector<8x32xf32>
    %349 = vector.broadcast %310 : vector<8x1xf32> to vector<8x32xf32>
    %350 = arith.addf %348, %349 : vector<8x32xf32>
    %c0_311 = arith.constant 0 : index
    %c0_312 = arith.constant 0 : index
    %c0_313 = arith.constant 0 : index
    %c0_314 = arith.constant 0 : index
    %351 = vector.load %arg28[%c0_311, %c0_312, %c0_313, %c0_314] : memref<2x5x8x8xf32, #tpu.memory_space<vmem>>, vector<1x1x8x8xf32>
    %352 = vector.shape_cast %351 : vector<1x1x8x8xf32> to vector<8x8xf32>
    %c0_315 = arith.constant 0 : index
    %c1_316 = arith.constant 1 : index
    %c0_317 = arith.constant 0 : index
    %c0_318 = arith.constant 0 : index
    %353 = vector.load %arg28[%c0_315, %c1_316, %c0_317, %c0_318] : memref<2x5x8x8xf32, #tpu.memory_space<vmem>>, vector<1x1x8x8xf32>
    %354 = vector.shape_cast %353 : vector<1x1x8x8xf32> to vector<8x8xf32>
    %c0_319 = arith.constant 0 : index
    %c2_320 = arith.constant 2 : index
    %c0_321 = arith.constant 0 : index
    %c0_322 = arith.constant 0 : index
    %355 = vector.load %arg28[%c0_319, %c2_320, %c0_321, %c0_322] : memref<2x5x8x8xf32, #tpu.memory_space<vmem>>, vector<1x1x8x8xf32>
    %356 = vector.shape_cast %355 : vector<1x1x8x8xf32> to vector<8x8xf32>
    %c0_323 = arith.constant 0 : index
    %c3_324 = arith.constant 3 : index
    %c0_325 = arith.constant 0 : index
    %c0_326 = arith.constant 0 : index
    %357 = vector.load %arg28[%c0_323, %c3_324, %c0_325, %c0_326] : memref<2x5x8x8xf32, #tpu.memory_space<vmem>>, vector<1x1x8x8xf32>
    %358 = vector.shape_cast %357 : vector<1x1x8x8xf32> to vector<8x8xf32>
    %c0_327 = arith.constant 0 : index
    %c4_328 = arith.constant 4 : index
    %c0_329 = arith.constant 0 : index
    %c0_330 = arith.constant 0 : index
    %359 = vector.load %arg28[%c0_327, %c4_328, %c0_329, %c0_330] : memref<2x5x8x8xf32, #tpu.memory_space<vmem>>, vector<1x1x8x8xf32>
    %360 = vector.shape_cast %359 : vector<1x1x8x8xf32> to vector<8x8xf32>
    %c0_331 = arith.constant 0 : index
    %c0_332 = arith.constant 0 : index
    %c0_333 = arith.constant 0 : index
    %361 = vector.load %arg26[%c0_331, %c0_332, %c0_333] : memref<2x8x1xf32, #tpu.memory_space<vmem>>, vector<1x8x1xf32>
    %362 = vector.shape_cast %361 : vector<1x8x1xf32> to vector<8x1xf32>
    %c0_334 = arith.constant 0 : index
    %c0_335 = arith.constant 0 : index
    %c0_336 = arith.constant 0 : index
    %363 = vector.load %arg27[%c0_334, %c0_335, %c0_336] : memref<2x8x1xf32, #tpu.memory_space<vmem>>, vector<1x8x1xf32>
    %364 = vector.shape_cast %363 : vector<1x8x1xf32> to vector<8x1xf32>
    %cst_337 = arith.constant 0.000000e+00 : f32
    %365 = vector.broadcast %cst_337 : f32 to vector<8x32xf32>
    %366 = arith.maximumf %350, %365 : vector<8x32xf32>
    %cst_338 = arith.constant 0.000000e+00 : f32
    %367 = vector.broadcast %cst_338 : f32 to vector<8x32xf32>
    %cst_339 = arith.constant dense<0.000000e+00> : vector<8x32xf32>
    %368 = tpu.matmul %352, %366, %cst_339 {dimension_numbers = #tpu.dot_dimension_numbers<[1], [0], [0], [1], [0, 0, 1, 1], [], []>} : vector<8x8xf32>, vector<8x32xf32>, vector<8x32xf32> -> vector<8x32xf32>
    %c0_340 = arith.constant 0 : index
    %c0_341 = arith.constant 0 : index
    %c0_342 = arith.constant 0 : index
    %369 = vector.load %arg16[%c0_340, %c0_341, %c0_342] : memref<5x32x32xf32, #tpu.memory_space<vmem>>, vector<1x32x32xf32>
    %370 = vector.shape_cast %369 : vector<1x32x32xf32> to vector<32x32xf32>
    %cst_343 = arith.constant dense<0.000000e+00> : vector<8x32xf32>
    %371 = tpu.matmul %368, %370, %cst_343 {dimension_numbers = #tpu.dot_dimension_numbers<[1], [0], [0], [1], [0, 0, 1, 1], [], []>} : vector<8x32xf32>, vector<32x32xf32>, vector<8x32xf32> -> vector<8x32xf32>
    %372 = arith.addf %367, %371 : vector<8x32xf32>
    %cst_344 = arith.constant dense<0.000000e+00> : vector<8x32xf32>
    %373 = tpu.matmul %354, %366, %cst_344 {dimension_numbers = #tpu.dot_dimension_numbers<[1], [0], [0], [1], [0, 0, 1, 1], [], []>} : vector<8x8xf32>, vector<8x32xf32>, vector<8x32xf32> -> vector<8x32xf32>
    %c1_345 = arith.constant 1 : index
    %c0_346 = arith.constant 0 : index
    %c0_347 = arith.constant 0 : index
    %374 = vector.load %arg16[%c1_345, %c0_346, %c0_347] : memref<5x32x32xf32, #tpu.memory_space<vmem>>, vector<1x32x32xf32>
    %375 = vector.shape_cast %374 : vector<1x32x32xf32> to vector<32x32xf32>
    %cst_348 = arith.constant dense<0.000000e+00> : vector<8x32xf32>
    %376 = tpu.matmul %373, %375, %cst_348 {dimension_numbers = #tpu.dot_dimension_numbers<[1], [0], [0], [1], [0, 0, 1, 1], [], []>} : vector<8x32xf32>, vector<32x32xf32>, vector<8x32xf32> -> vector<8x32xf32>
    %377 = arith.addf %372, %376 : vector<8x32xf32>
    %cst_349 = arith.constant dense<0.000000e+00> : vector<8x32xf32>
    %378 = tpu.matmul %356, %366, %cst_349 {dimension_numbers = #tpu.dot_dimension_numbers<[1], [0], [0], [1], [0, 0, 1, 1], [], []>} : vector<8x8xf32>, vector<8x32xf32>, vector<8x32xf32> -> vector<8x32xf32>
    %c2_350 = arith.constant 2 : index
    %c0_351 = arith.constant 0 : index
    %c0_352 = arith.constant 0 : index
    %379 = vector.load %arg16[%c2_350, %c0_351, %c0_352] : memref<5x32x32xf32, #tpu.memory_space<vmem>>, vector<1x32x32xf32>
    %380 = vector.shape_cast %379 : vector<1x32x32xf32> to vector<32x32xf32>
    %cst_353 = arith.constant dense<0.000000e+00> : vector<8x32xf32>
    %381 = tpu.matmul %378, %380, %cst_353 {dimension_numbers = #tpu.dot_dimension_numbers<[1], [0], [0], [1], [0, 0, 1, 1], [], []>} : vector<8x32xf32>, vector<32x32xf32>, vector<8x32xf32> -> vector<8x32xf32>
    %382 = arith.addf %377, %381 : vector<8x32xf32>
    %cst_354 = arith.constant dense<0.000000e+00> : vector<8x32xf32>
    %383 = tpu.matmul %358, %366, %cst_354 {dimension_numbers = #tpu.dot_dimension_numbers<[1], [0], [0], [1], [0, 0, 1, 1], [], []>} : vector<8x8xf32>, vector<8x32xf32>, vector<8x32xf32> -> vector<8x32xf32>
    %c3_355 = arith.constant 3 : index
    %c0_356 = arith.constant 0 : index
    %c0_357 = arith.constant 0 : index
    %384 = vector.load %arg16[%c3_355, %c0_356, %c0_357] : memref<5x32x32xf32, #tpu.memory_space<vmem>>, vector<1x32x32xf32>
    %385 = vector.shape_cast %384 : vector<1x32x32xf32> to vector<32x32xf32>
    %cst_358 = arith.constant dense<0.000000e+00> : vector<8x32xf32>
    %386 = tpu.matmul %383, %385, %cst_358 {dimension_numbers = #tpu.dot_dimension_numbers<[1], [0], [0], [1], [0, 0, 1, 1], [], []>} : vector<8x32xf32>, vector<32x32xf32>, vector<8x32xf32> -> vector<8x32xf32>
    %387 = arith.addf %382, %386 : vector<8x32xf32>
    %cst_359 = arith.constant dense<0.000000e+00> : vector<8x32xf32>
    %388 = tpu.matmul %360, %366, %cst_359 {dimension_numbers = #tpu.dot_dimension_numbers<[1], [0], [0], [1], [0, 0, 1, 1], [], []>} : vector<8x8xf32>, vector<8x32xf32>, vector<8x32xf32> -> vector<8x32xf32>
    %c4_360 = arith.constant 4 : index
    %c0_361 = arith.constant 0 : index
    %c0_362 = arith.constant 0 : index
    %389 = vector.load %arg16[%c4_360, %c0_361, %c0_362] : memref<5x32x32xf32, #tpu.memory_space<vmem>>, vector<1x32x32xf32>
    %390 = vector.shape_cast %389 : vector<1x32x32xf32> to vector<32x32xf32>
    %cst_363 = arith.constant dense<0.000000e+00> : vector<8x32xf32>
    %391 = tpu.matmul %388, %390, %cst_363 {dimension_numbers = #tpu.dot_dimension_numbers<[1], [0], [0], [1], [0, 0, 1, 1], [], []>} : vector<8x32xf32>, vector<32x32xf32>, vector<8x32xf32> -> vector<8x32xf32>
    %392 = arith.addf %387, %391 : vector<8x32xf32>
    %393 = vector.broadcast %362 : vector<8x1xf32> to vector<8x32xf32>
    %394 = arith.mulf %392, %393 : vector<8x32xf32>
    %395 = vector.broadcast %364 : vector<8x1xf32> to vector<8x32xf32>
    %396 = arith.addf %394, %395 : vector<8x32xf32>
    %c0_364 = arith.constant 0 : index
    %c0_365 = arith.constant 0 : index
    %c0_366 = arith.constant 0 : index
    %397 = vector.load %arg14[%c0_364, %c0_365, %c0_366] : memref<2x32x16xf32, #tpu.memory_space<vmem>>, vector<1x32x16xf32>
    %398 = vector.shape_cast %397 : vector<1x32x16xf32> to vector<32x16xf32>
    %cst_367 = arith.constant dense<0.000000e+00> : vector<8x16xf32>
    %399 = tpu.matmul %396, %398, %cst_367 {dimension_numbers = #tpu.dot_dimension_numbers<[1], [0], [0], [1], [0, 0, 1, 1], [], []>} : vector<8x32xf32>, vector<32x16xf32>, vector<8x16xf32> -> vector<8x16xf32>
    %c1_368 = arith.constant 1 : index
    %c0_369 = arith.constant 0 : index
    %c0_370 = arith.constant 0 : index
    %400 = vector.load %arg14[%c1_368, %c0_369, %c0_370] : memref<2x32x16xf32, #tpu.memory_space<vmem>>, vector<1x32x16xf32>
    %401 = vector.shape_cast %400 : vector<1x32x16xf32> to vector<32x16xf32>
    %cst_371 = arith.constant dense<0.000000e+00> : vector<8x16xf32>
    %402 = tpu.matmul %396, %401, %cst_371 {dimension_numbers = #tpu.dot_dimension_numbers<[1], [0], [0], [1], [0, 0, 1, 1], [], []>} : vector<8x32xf32>, vector<32x16xf32>, vector<8x16xf32> -> vector<8x16xf32>
    %403 = arith.maximumf %399, %402 : vector<8x16xf32>
    %c1_372 = arith.constant 1 : index
    %c0_373 = arith.constant 0 : index
    %c0_374 = arith.constant 0 : index
    %c0_375 = arith.constant 0 : index
    %404 = vector.load %arg28[%c1_372, %c0_373, %c0_374, %c0_375] : memref<2x5x8x8xf32, #tpu.memory_space<vmem>>, vector<1x1x8x8xf32>
    %405 = vector.shape_cast %404 : vector<1x1x8x8xf32> to vector<8x8xf32>
    %c1_376 = arith.constant 1 : index
    %c1_377 = arith.constant 1 : index
    %c0_378 = arith.constant 0 : index
    %c0_379 = arith.constant 0 : index
    %406 = vector.load %arg28[%c1_376, %c1_377, %c0_378, %c0_379] : memref<2x5x8x8xf32, #tpu.memory_space<vmem>>, vector<1x1x8x8xf32>
    %407 = vector.shape_cast %406 : vector<1x1x8x8xf32> to vector<8x8xf32>
    %c1_380 = arith.constant 1 : index
    %c2_381 = arith.constant 2 : index
    %c0_382 = arith.constant 0 : index
    %c0_383 = arith.constant 0 : index
    %408 = vector.load %arg28[%c1_380, %c2_381, %c0_382, %c0_383] : memref<2x5x8x8xf32, #tpu.memory_space<vmem>>, vector<1x1x8x8xf32>
    %409 = vector.shape_cast %408 : vector<1x1x8x8xf32> to vector<8x8xf32>
    %c1_384 = arith.constant 1 : index
    %c3_385 = arith.constant 3 : index
    %c0_386 = arith.constant 0 : index
    %c0_387 = arith.constant 0 : index
    %410 = vector.load %arg28[%c1_384, %c3_385, %c0_386, %c0_387] : memref<2x5x8x8xf32, #tpu.memory_space<vmem>>, vector<1x1x8x8xf32>
    %411 = vector.shape_cast %410 : vector<1x1x8x8xf32> to vector<8x8xf32>
    %c1_388 = arith.constant 1 : index
    %c4_389 = arith.constant 4 : index
    %c0_390 = arith.constant 0 : index
    %c0_391 = arith.constant 0 : index
    %412 = vector.load %arg28[%c1_388, %c4_389, %c0_390, %c0_391] : memref<2x5x8x8xf32, #tpu.memory_space<vmem>>, vector<1x1x8x8xf32>
    %413 = vector.shape_cast %412 : vector<1x1x8x8xf32> to vector<8x8xf32>
    %c1_392 = arith.constant 1 : index
    %c0_393 = arith.constant 0 : index
    %c0_394 = arith.constant 0 : index
    %414 = vector.load %arg26[%c1_392, %c0_393, %c0_394] : memref<2x8x1xf32, #tpu.memory_space<vmem>>, vector<1x8x1xf32>
    %415 = vector.shape_cast %414 : vector<1x8x1xf32> to vector<8x1xf32>
    %c1_395 = arith.constant 1 : index
    %c0_396 = arith.constant 0 : index
    %c0_397 = arith.constant 0 : index
    %416 = vector.load %arg27[%c1_395, %c0_396, %c0_397] : memref<2x8x1xf32, #tpu.memory_space<vmem>>, vector<1x8x1xf32>
    %417 = vector.shape_cast %416 : vector<1x8x1xf32> to vector<8x1xf32>
    %cst_398 = arith.constant 0.000000e+00 : f32
    %418 = vector.broadcast %cst_398 : f32 to vector<8x16xf32>
    %419 = arith.maximumf %403, %418 : vector<8x16xf32>
    %cst_399 = arith.constant 0.000000e+00 : f32
    %420 = vector.broadcast %cst_399 : f32 to vector<8x16xf32>
    %cst_400 = arith.constant dense<0.000000e+00> : vector<8x16xf32>
    %421 = tpu.matmul %405, %419, %cst_400 {dimension_numbers = #tpu.dot_dimension_numbers<[1], [0], [0], [1], [0, 0, 1, 1], [], []>} : vector<8x8xf32>, vector<8x16xf32>, vector<8x16xf32> -> vector<8x16xf32>
    %c0_401 = arith.constant 0 : index
    %c0_402 = arith.constant 0 : index
    %c0_403 = arith.constant 0 : index
    %422 = vector.load %arg15[%c0_401, %c0_402, %c0_403] : memref<5x16x16xf32, #tpu.memory_space<vmem>>, vector<1x16x16xf32>
    %423 = vector.shape_cast %422 : vector<1x16x16xf32> to vector<16x16xf32>
    %cst_404 = arith.constant dense<0.000000e+00> : vector<8x16xf32>
    %424 = tpu.matmul %421, %423, %cst_404 {dimension_numbers = #tpu.dot_dimension_numbers<[1], [0], [0], [1], [0, 0, 1, 1], [], []>} : vector<8x16xf32>, vector<16x16xf32>, vector<8x16xf32> -> vector<8x16xf32>
    %425 = arith.addf %420, %424 : vector<8x16xf32>
    %cst_405 = arith.constant dense<0.000000e+00> : vector<8x16xf32>
    %426 = tpu.matmul %407, %419, %cst_405 {dimension_numbers = #tpu.dot_dimension_numbers<[1], [0], [0], [1], [0, 0, 1, 1], [], []>} : vector<8x8xf32>, vector<8x16xf32>, vector<8x16xf32> -> vector<8x16xf32>
    %c1_406 = arith.constant 1 : index
    %c0_407 = arith.constant 0 : index
    %c0_408 = arith.constant 0 : index
    %427 = vector.load %arg15[%c1_406, %c0_407, %c0_408] : memref<5x16x16xf32, #tpu.memory_space<vmem>>, vector<1x16x16xf32>
    %428 = vector.shape_cast %427 : vector<1x16x16xf32> to vector<16x16xf32>
    %cst_409 = arith.constant dense<0.000000e+00> : vector<8x16xf32>
    %429 = tpu.matmul %426, %428, %cst_409 {dimension_numbers = #tpu.dot_dimension_numbers<[1], [0], [0], [1], [0, 0, 1, 1], [], []>} : vector<8x16xf32>, vector<16x16xf32>, vector<8x16xf32> -> vector<8x16xf32>
    %430 = arith.addf %425, %429 : vector<8x16xf32>
    %cst_410 = arith.constant dense<0.000000e+00> : vector<8x16xf32>
    %431 = tpu.matmul %409, %419, %cst_410 {dimension_numbers = #tpu.dot_dimension_numbers<[1], [0], [0], [1], [0, 0, 1, 1], [], []>} : vector<8x8xf32>, vector<8x16xf32>, vector<8x16xf32> -> vector<8x16xf32>
    %c2_411 = arith.constant 2 : index
    %c0_412 = arith.constant 0 : index
    %c0_413 = arith.constant 0 : index
    %432 = vector.load %arg15[%c2_411, %c0_412, %c0_413] : memref<5x16x16xf32, #tpu.memory_space<vmem>>, vector<1x16x16xf32>
    %433 = vector.shape_cast %432 : vector<1x16x16xf32> to vector<16x16xf32>
    %cst_414 = arith.constant dense<0.000000e+00> : vector<8x16xf32>
    %434 = tpu.matmul %431, %433, %cst_414 {dimension_numbers = #tpu.dot_dimension_numbers<[1], [0], [0], [1], [0, 0, 1, 1], [], []>} : vector<8x16xf32>, vector<16x16xf32>, vector<8x16xf32> -> vector<8x16xf32>
    %435 = arith.addf %430, %434 : vector<8x16xf32>
    %cst_415 = arith.constant dense<0.000000e+00> : vector<8x16xf32>
    %436 = tpu.matmul %411, %419, %cst_415 {dimension_numbers = #tpu.dot_dimension_numbers<[1], [0], [0], [1], [0, 0, 1, 1], [], []>} : vector<8x8xf32>, vector<8x16xf32>, vector<8x16xf32> -> vector<8x16xf32>
    %c3_416 = arith.constant 3 : index
    %c0_417 = arith.constant 0 : index
    %c0_418 = arith.constant 0 : index
    %437 = vector.load %arg15[%c3_416, %c0_417, %c0_418] : memref<5x16x16xf32, #tpu.memory_space<vmem>>, vector<1x16x16xf32>
    %438 = vector.shape_cast %437 : vector<1x16x16xf32> to vector<16x16xf32>
    %cst_419 = arith.constant dense<0.000000e+00> : vector<8x16xf32>
    %439 = tpu.matmul %436, %438, %cst_419 {dimension_numbers = #tpu.dot_dimension_numbers<[1], [0], [0], [1], [0, 0, 1, 1], [], []>} : vector<8x16xf32>, vector<16x16xf32>, vector<8x16xf32> -> vector<8x16xf32>
    %440 = arith.addf %435, %439 : vector<8x16xf32>
    %cst_420 = arith.constant dense<0.000000e+00> : vector<8x16xf32>
    %441 = tpu.matmul %413, %419, %cst_420 {dimension_numbers = #tpu.dot_dimension_numbers<[1], [0], [0], [1], [0, 0, 1, 1], [], []>} : vector<8x8xf32>, vector<8x16xf32>, vector<8x16xf32> -> vector<8x16xf32>
    %c4_421 = arith.constant 4 : index
    %c0_422 = arith.constant 0 : index
    %c0_423 = arith.constant 0 : index
    %442 = vector.load %arg15[%c4_421, %c0_422, %c0_423] : memref<5x16x16xf32, #tpu.memory_space<vmem>>, vector<1x16x16xf32>
    %443 = vector.shape_cast %442 : vector<1x16x16xf32> to vector<16x16xf32>
    %cst_424 = arith.constant dense<0.000000e+00> : vector<8x16xf32>
    %444 = tpu.matmul %441, %443, %cst_424 {dimension_numbers = #tpu.dot_dimension_numbers<[1], [0], [0], [1], [0, 0, 1, 1], [], []>} : vector<8x16xf32>, vector<16x16xf32>, vector<8x16xf32> -> vector<8x16xf32>
    %445 = arith.addf %440, %444 : vector<8x16xf32>
    %446 = vector.broadcast %415 : vector<8x1xf32> to vector<8x16xf32>
    %447 = arith.mulf %445, %446 : vector<8x16xf32>
    %448 = vector.broadcast %417 : vector<8x1xf32> to vector<8x16xf32>
    %449 = arith.addf %447, %448 : vector<8x16xf32>
    %c0_425 = arith.constant 0 : index
    %c0_426 = arith.constant 0 : index
    %c0_427 = arith.constant 0 : index
    %450 = vector.load %arg13[%c0_425, %c0_426, %c0_427] : memref<2x16x8xf32, #tpu.memory_space<vmem>>, vector<1x16x8xf32>
    %451 = vector.shape_cast %450 : vector<1x16x8xf32> to vector<16x8xf32>
    %cst_428 = arith.constant dense<0.000000e+00> : vector<8x8xf32>
    %452 = tpu.matmul %449, %451, %cst_428 {dimension_numbers = #tpu.dot_dimension_numbers<[1], [0], [0], [1], [0, 0, 1, 1], [], []>} : vector<8x16xf32>, vector<16x8xf32>, vector<8x8xf32> -> vector<8x8xf32>
    %c1_429 = arith.constant 1 : index
    %c0_430 = arith.constant 0 : index
    %c0_431 = arith.constant 0 : index
    %453 = vector.load %arg13[%c1_429, %c0_430, %c0_431] : memref<2x16x8xf32, #tpu.memory_space<vmem>>, vector<1x16x8xf32>
    %454 = vector.shape_cast %453 : vector<1x16x8xf32> to vector<16x8xf32>
    %cst_432 = arith.constant dense<0.000000e+00> : vector<8x8xf32>
    %455 = tpu.matmul %449, %454, %cst_432 {dimension_numbers = #tpu.dot_dimension_numbers<[1], [0], [0], [1], [0, 0, 1, 1], [], []>} : vector<8x16xf32>, vector<16x8xf32>, vector<8x8xf32> -> vector<8x8xf32>
    %456 = arith.maximumf %452, %455 : vector<8x8xf32>
    %c0_433 = arith.constant 0 : index
    %c0_434 = arith.constant 0 : index
    %c0_435 = arith.constant 0 : index
    %457 = vector.load %arg8[%c0_433, %c0_434, %c0_435] : memref<5x8x8xf32, #tpu.memory_space<vmem>>, vector<1x8x8xf32>
    %458 = vector.shape_cast %457 : vector<1x8x8xf32> to vector<8x8xf32>
    %c1_436 = arith.constant 1 : index
    %c0_437 = arith.constant 0 : index
    %c0_438 = arith.constant 0 : index
    %459 = vector.load %arg8[%c1_436, %c0_437, %c0_438] : memref<5x8x8xf32, #tpu.memory_space<vmem>>, vector<1x8x8xf32>
    %460 = vector.shape_cast %459 : vector<1x8x8xf32> to vector<8x8xf32>
    %c2_439 = arith.constant 2 : index
    %c0_440 = arith.constant 0 : index
    %c0_441 = arith.constant 0 : index
    %461 = vector.load %arg8[%c2_439, %c0_440, %c0_441] : memref<5x8x8xf32, #tpu.memory_space<vmem>>, vector<1x8x8xf32>
    %462 = vector.shape_cast %461 : vector<1x8x8xf32> to vector<8x8xf32>
    %c3_442 = arith.constant 3 : index
    %c0_443 = arith.constant 0 : index
    %c0_444 = arith.constant 0 : index
    %463 = vector.load %arg8[%c3_442, %c0_443, %c0_444] : memref<5x8x8xf32, #tpu.memory_space<vmem>>, vector<1x8x8xf32>
    %464 = vector.shape_cast %463 : vector<1x8x8xf32> to vector<8x8xf32>
    %c4_445 = arith.constant 4 : index
    %c0_446 = arith.constant 0 : index
    %c0_447 = arith.constant 0 : index
    %465 = vector.load %arg8[%c4_445, %c0_446, %c0_447] : memref<5x8x8xf32, #tpu.memory_space<vmem>>, vector<1x8x8xf32>
    %466 = vector.shape_cast %465 : vector<1x8x8xf32> to vector<8x8xf32>
    %c0_448 = arith.constant 0 : index
    %c0_449 = arith.constant 0 : index
    %c0_450 = arith.constant 0 : index
    %467 = vector.load %arg7[%c0_448, %c0_449, %c0_450] : memref<5x8x8xf32, #tpu.memory_space<vmem>>, vector<1x8x8xf32>
    %468 = vector.shape_cast %467 : vector<1x8x8xf32> to vector<8x8xf32>
    %c1_451 = arith.constant 1 : index
    %c0_452 = arith.constant 0 : index
    %c0_453 = arith.constant 0 : index
    %469 = vector.load %arg7[%c1_451, %c0_452, %c0_453] : memref<5x8x8xf32, #tpu.memory_space<vmem>>, vector<1x8x8xf32>
    %470 = vector.shape_cast %469 : vector<1x8x8xf32> to vector<8x8xf32>
    %c2_454 = arith.constant 2 : index
    %c0_455 = arith.constant 0 : index
    %c0_456 = arith.constant 0 : index
    %471 = vector.load %arg7[%c2_454, %c0_455, %c0_456] : memref<5x8x8xf32, #tpu.memory_space<vmem>>, vector<1x8x8xf32>
    %472 = vector.shape_cast %471 : vector<1x8x8xf32> to vector<8x8xf32>
    %c3_457 = arith.constant 3 : index
    %c0_458 = arith.constant 0 : index
    %c0_459 = arith.constant 0 : index
    %473 = vector.load %arg7[%c3_457, %c0_458, %c0_459] : memref<5x8x8xf32, #tpu.memory_space<vmem>>, vector<1x8x8xf32>
    %474 = vector.shape_cast %473 : vector<1x8x8xf32> to vector<8x8xf32>
    %c4_460 = arith.constant 4 : index
    %c0_461 = arith.constant 0 : index
    %c0_462 = arith.constant 0 : index
    %475 = vector.load %arg7[%c4_460, %c0_461, %c0_462] : memref<5x8x8xf32, #tpu.memory_space<vmem>>, vector<1x8x8xf32>
    %476 = vector.shape_cast %475 : vector<1x8x8xf32> to vector<8x8xf32>
    %c0_463 = arith.constant 0 : index
    %c0_464 = arith.constant 0 : index
    %477 = vector.load %arg5[%c0_463, %c0_464] : memref<8x1xf32, #tpu.memory_space<vmem>>, vector<8x1xf32>
    %c0_465 = arith.constant 0 : index
    %c0_466 = arith.constant 0 : index
    %478 = vector.load %arg6[%c0_465, %c0_466] : memref<8x1xf32, #tpu.memory_space<vmem>>, vector<8x1xf32>
    %cst_467 = arith.constant 0.000000e+00 : f32
    %479 = vector.broadcast %cst_467 : f32 to vector<8x8xf32>
    %480 = arith.maximumf %297, %479 : vector<8x8xf32>
    %cst_468 = arith.constant 0.000000e+00 : f32
    %481 = vector.broadcast %cst_468 : f32 to vector<8x8xf32>
    %482 = arith.maximumf %456, %481 : vector<8x8xf32>
    %cst_469 = arith.constant 0.000000e+00 : f32
    %483 = vector.broadcast %cst_469 : f32 to vector<8x8xf32>
    %cst_470 = arith.constant dense<0.000000e+00> : vector<8x8xf32>
    %484 = tpu.matmul %458, %480, %cst_470 {dimension_numbers = #tpu.dot_dimension_numbers<[1], [0], [0], [1], [0, 0, 1, 1], [], []>} : vector<8x8xf32>, vector<8x8xf32>, vector<8x8xf32> -> vector<8x8xf32>
    %cst_471 = arith.constant dense<0.000000e+00> : vector<8x8xf32>
    %485 = tpu.matmul %468, %482, %cst_471 {dimension_numbers = #tpu.dot_dimension_numbers<[1], [0], [0], [1], [0, 0, 1, 1], [], []>} : vector<8x8xf32>, vector<8x8xf32>, vector<8x8xf32> -> vector<8x8xf32>
    %486 = arith.addf %484, %485 : vector<8x8xf32>
    %c0_472 = arith.constant 0 : index
    %c0_473 = arith.constant 0 : index
    %c0_474 = arith.constant 0 : index
    %487 = vector.load %arg17[%c0_472, %c0_473, %c0_474] : memref<5x8x8xf32, #tpu.memory_space<vmem>>, vector<1x8x8xf32>
    %488 = vector.shape_cast %487 : vector<1x8x8xf32> to vector<8x8xf32>
    %cst_475 = arith.constant dense<0.000000e+00> : vector<8x8xf32>
    %489 = tpu.matmul %486, %488, %cst_475 {dimension_numbers = #tpu.dot_dimension_numbers<[1], [0], [0], [1], [0, 0, 1, 1], [], []>} : vector<8x8xf32>, vector<8x8xf32>, vector<8x8xf32> -> vector<8x8xf32>
    %490 = arith.addf %483, %489 : vector<8x8xf32>
    %cst_476 = arith.constant dense<0.000000e+00> : vector<8x8xf32>
    %491 = tpu.matmul %460, %480, %cst_476 {dimension_numbers = #tpu.dot_dimension_numbers<[1], [0], [0], [1], [0, 0, 1, 1], [], []>} : vector<8x8xf32>, vector<8x8xf32>, vector<8x8xf32> -> vector<8x8xf32>
    %cst_477 = arith.constant dense<0.000000e+00> : vector<8x8xf32>
    %492 = tpu.matmul %470, %482, %cst_477 {dimension_numbers = #tpu.dot_dimension_numbers<[1], [0], [0], [1], [0, 0, 1, 1], [], []>} : vector<8x8xf32>, vector<8x8xf32>, vector<8x8xf32> -> vector<8x8xf32>
    %493 = arith.addf %491, %492 : vector<8x8xf32>
    %c1_478 = arith.constant 1 : index
    %c0_479 = arith.constant 0 : index
    %c0_480 = arith.constant 0 : index
    %494 = vector.load %arg17[%c1_478, %c0_479, %c0_480] : memref<5x8x8xf32, #tpu.memory_space<vmem>>, vector<1x8x8xf32>
    %495 = vector.shape_cast %494 : vector<1x8x8xf32> to vector<8x8xf32>
    %cst_481 = arith.constant dense<0.000000e+00> : vector<8x8xf32>
    %496 = tpu.matmul %493, %495, %cst_481 {dimension_numbers = #tpu.dot_dimension_numbers<[1], [0], [0], [1], [0, 0, 1, 1], [], []>} : vector<8x8xf32>, vector<8x8xf32>, vector<8x8xf32> -> vector<8x8xf32>
    %497 = arith.addf %490, %496 : vector<8x8xf32>
    %cst_482 = arith.constant dense<0.000000e+00> : vector<8x8xf32>
    %498 = tpu.matmul %462, %480, %cst_482 {dimension_numbers = #tpu.dot_dimension_numbers<[1], [0], [0], [1], [0, 0, 1, 1], [], []>} : vector<8x8xf32>, vector<8x8xf32>, vector<8x8xf32> -> vector<8x8xf32>
    %cst_483 = arith.constant dense<0.000000e+00> : vector<8x8xf32>
    %499 = tpu.matmul %472, %482, %cst_483 {dimension_numbers = #tpu.dot_dimension_numbers<[1], [0], [0], [1], [0, 0, 1, 1], [], []>} : vector<8x8xf32>, vector<8x8xf32>, vector<8x8xf32> -> vector<8x8xf32>
    %500 = arith.addf %498, %499 : vector<8x8xf32>
    %c2_484 = arith.constant 2 : index
    %c0_485 = arith.constant 0 : index
    %c0_486 = arith.constant 0 : index
    %501 = vector.load %arg17[%c2_484, %c0_485, %c0_486] : memref<5x8x8xf32, #tpu.memory_space<vmem>>, vector<1x8x8xf32>
    %502 = vector.shape_cast %501 : vector<1x8x8xf32> to vector<8x8xf32>
    %cst_487 = arith.constant dense<0.000000e+00> : vector<8x8xf32>
    %503 = tpu.matmul %500, %502, %cst_487 {dimension_numbers = #tpu.dot_dimension_numbers<[1], [0], [0], [1], [0, 0, 1, 1], [], []>} : vector<8x8xf32>, vector<8x8xf32>, vector<8x8xf32> -> vector<8x8xf32>
    %504 = arith.addf %497, %503 : vector<8x8xf32>
    %cst_488 = arith.constant dense<0.000000e+00> : vector<8x8xf32>
    %505 = tpu.matmul %464, %480, %cst_488 {dimension_numbers = #tpu.dot_dimension_numbers<[1], [0], [0], [1], [0, 0, 1, 1], [], []>} : vector<8x8xf32>, vector<8x8xf32>, vector<8x8xf32> -> vector<8x8xf32>
    %cst_489 = arith.constant dense<0.000000e+00> : vector<8x8xf32>
    %506 = tpu.matmul %474, %482, %cst_489 {dimension_numbers = #tpu.dot_dimension_numbers<[1], [0], [0], [1], [0, 0, 1, 1], [], []>} : vector<8x8xf32>, vector<8x8xf32>, vector<8x8xf32> -> vector<8x8xf32>
    %507 = arith.addf %505, %506 : vector<8x8xf32>
    %c3_490 = arith.constant 3 : index
    %c0_491 = arith.constant 0 : index
    %c0_492 = arith.constant 0 : index
    %508 = vector.load %arg17[%c3_490, %c0_491, %c0_492] : memref<5x8x8xf32, #tpu.memory_space<vmem>>, vector<1x8x8xf32>
    %509 = vector.shape_cast %508 : vector<1x8x8xf32> to vector<8x8xf32>
    %cst_493 = arith.constant dense<0.000000e+00> : vector<8x8xf32>
    %510 = tpu.matmul %507, %509, %cst_493 {dimension_numbers = #tpu.dot_dimension_numbers<[1], [0], [0], [1], [0, 0, 1, 1], [], []>} : vector<8x8xf32>, vector<8x8xf32>, vector<8x8xf32> -> vector<8x8xf32>
    %511 = arith.addf %504, %510 : vector<8x8xf32>
    %cst_494 = arith.constant dense<0.000000e+00> : vector<8x8xf32>
    %512 = tpu.matmul %466, %480, %cst_494 {dimension_numbers = #tpu.dot_dimension_numbers<[1], [0], [0], [1], [0, 0, 1, 1], [], []>} : vector<8x8xf32>, vector<8x8xf32>, vector<8x8xf32> -> vector<8x8xf32>
    %cst_495 = arith.constant dense<0.000000e+00> : vector<8x8xf32>
    %513 = tpu.matmul %476, %482, %cst_495 {dimension_numbers = #tpu.dot_dimension_numbers<[1], [0], [0], [1], [0, 0, 1, 1], [], []>} : vector<8x8xf32>, vector<8x8xf32>, vector<8x8xf32> -> vector<8x8xf32>
    %514 = arith.addf %512, %513 : vector<8x8xf32>
    %c4_496 = arith.constant 4 : index
    %c0_497 = arith.constant 0 : index
    %c0_498 = arith.constant 0 : index
    %515 = vector.load %arg17[%c4_496, %c0_497, %c0_498] : memref<5x8x8xf32, #tpu.memory_space<vmem>>, vector<1x8x8xf32>
    %516 = vector.shape_cast %515 : vector<1x8x8xf32> to vector<8x8xf32>
    %cst_499 = arith.constant dense<0.000000e+00> : vector<8x8xf32>
    %517 = tpu.matmul %514, %516, %cst_499 {dimension_numbers = #tpu.dot_dimension_numbers<[1], [0], [0], [1], [0, 0, 1, 1], [], []>} : vector<8x8xf32>, vector<8x8xf32>, vector<8x8xf32> -> vector<8x8xf32>
    %518 = arith.addf %511, %517 : vector<8x8xf32>
    %519 = vector.broadcast %477 : vector<8x1xf32> to vector<8x8xf32>
    %520 = arith.mulf %518, %519 : vector<8x8xf32>
    %521 = vector.broadcast %478 : vector<8x1xf32> to vector<8x8xf32>
    %522 = arith.addf %520, %521 : vector<8x8xf32>
    %c0_500 = arith.constant 0 : index
    %c0_501 = arith.constant 0 : index
    %c0_502 = arith.constant 0 : index
    %523 = vector.load %arg11[%c0_500, %c0_501, %c0_502] : memref<5x8x8xf32, #tpu.memory_space<vmem>>, vector<1x8x8xf32>
    %524 = vector.shape_cast %523 : vector<1x8x8xf32> to vector<8x8xf32>
    %c1_503 = arith.constant 1 : index
    %c0_504 = arith.constant 0 : index
    %c0_505 = arith.constant 0 : index
    %525 = vector.load %arg11[%c1_503, %c0_504, %c0_505] : memref<5x8x8xf32, #tpu.memory_space<vmem>>, vector<1x8x8xf32>
    %526 = vector.shape_cast %525 : vector<1x8x8xf32> to vector<8x8xf32>
    %c2_506 = arith.constant 2 : index
    %c0_507 = arith.constant 0 : index
    %c0_508 = arith.constant 0 : index
    %527 = vector.load %arg11[%c2_506, %c0_507, %c0_508] : memref<5x8x8xf32, #tpu.memory_space<vmem>>, vector<1x8x8xf32>
    %528 = vector.shape_cast %527 : vector<1x8x8xf32> to vector<8x8xf32>
    %c3_509 = arith.constant 3 : index
    %c0_510 = arith.constant 0 : index
    %c0_511 = arith.constant 0 : index
    %529 = vector.load %arg11[%c3_509, %c0_510, %c0_511] : memref<5x8x8xf32, #tpu.memory_space<vmem>>, vector<1x8x8xf32>
    %530 = vector.shape_cast %529 : vector<1x8x8xf32> to vector<8x8xf32>
    %c4_512 = arith.constant 4 : index
    %c0_513 = arith.constant 0 : index
    %c0_514 = arith.constant 0 : index
    %531 = vector.load %arg11[%c4_512, %c0_513, %c0_514] : memref<5x8x8xf32, #tpu.memory_space<vmem>>, vector<1x8x8xf32>
    %532 = vector.shape_cast %531 : vector<1x8x8xf32> to vector<8x8xf32>
    %c0_515 = arith.constant 0 : index
    %c0_516 = arith.constant 0 : index
    %533 = vector.load %arg9[%c0_515, %c0_516] : memref<8x1xf32, #tpu.memory_space<vmem>>, vector<8x1xf32>
    %c0_517 = arith.constant 0 : index
    %c0_518 = arith.constant 0 : index
    %534 = vector.load %arg10[%c0_517, %c0_518] : memref<8x1xf32, #tpu.memory_space<vmem>>, vector<8x1xf32>
    %cst_519 = arith.constant 0.000000e+00 : f32
    %535 = vector.broadcast %cst_519 : f32 to vector<8x8xf32>
    %536 = arith.maximumf %522, %535 : vector<8x8xf32>
    %cst_520 = arith.constant 0.000000e+00 : f32
    %537 = vector.broadcast %cst_520 : f32 to vector<8x8xf32>
    %cst_521 = arith.constant dense<0.000000e+00> : vector<8x8xf32>
    %538 = tpu.matmul %524, %536, %cst_521 {dimension_numbers = #tpu.dot_dimension_numbers<[1], [0], [0], [1], [0, 0, 1, 1], [], []>} : vector<8x8xf32>, vector<8x8xf32>, vector<8x8xf32> -> vector<8x8xf32>
    %c0_522 = arith.constant 0 : index
    %c0_523 = arith.constant 0 : index
    %c0_524 = arith.constant 0 : index
    %539 = vector.load %arg17[%c0_522, %c0_523, %c0_524] : memref<5x8x8xf32, #tpu.memory_space<vmem>>, vector<1x8x8xf32>
    %540 = vector.shape_cast %539 : vector<1x8x8xf32> to vector<8x8xf32>
    %cst_525 = arith.constant dense<0.000000e+00> : vector<8x8xf32>
    %541 = tpu.matmul %538, %540, %cst_525 {dimension_numbers = #tpu.dot_dimension_numbers<[1], [0], [0], [1], [0, 0, 1, 1], [], []>} : vector<8x8xf32>, vector<8x8xf32>, vector<8x8xf32> -> vector<8x8xf32>
    %542 = arith.addf %537, %541 : vector<8x8xf32>
    %cst_526 = arith.constant dense<0.000000e+00> : vector<8x8xf32>
    %543 = tpu.matmul %526, %536, %cst_526 {dimension_numbers = #tpu.dot_dimension_numbers<[1], [0], [0], [1], [0, 0, 1, 1], [], []>} : vector<8x8xf32>, vector<8x8xf32>, vector<8x8xf32> -> vector<8x8xf32>
    %c1_527 = arith.constant 1 : index
    %c0_528 = arith.constant 0 : index
    %c0_529 = arith.constant 0 : index
    %544 = vector.load %arg17[%c1_527, %c0_528, %c0_529] : memref<5x8x8xf32, #tpu.memory_space<vmem>>, vector<1x8x8xf32>
    %545 = vector.shape_cast %544 : vector<1x8x8xf32> to vector<8x8xf32>
    %cst_530 = arith.constant dense<0.000000e+00> : vector<8x8xf32>
    %546 = tpu.matmul %543, %545, %cst_530 {dimension_numbers = #tpu.dot_dimension_numbers<[1], [0], [0], [1], [0, 0, 1, 1], [], []>} : vector<8x8xf32>, vector<8x8xf32>, vector<8x8xf32> -> vector<8x8xf32>
    %547 = arith.addf %542, %546 : vector<8x8xf32>
    %cst_531 = arith.constant dense<0.000000e+00> : vector<8x8xf32>
    %548 = tpu.matmul %528, %536, %cst_531 {dimension_numbers = #tpu.dot_dimension_numbers<[1], [0], [0], [1], [0, 0, 1, 1], [], []>} : vector<8x8xf32>, vector<8x8xf32>, vector<8x8xf32> -> vector<8x8xf32>
    %c2_532 = arith.constant 2 : index
    %c0_533 = arith.constant 0 : index
    %c0_534 = arith.constant 0 : index
    %549 = vector.load %arg17[%c2_532, %c0_533, %c0_534] : memref<5x8x8xf32, #tpu.memory_space<vmem>>, vector<1x8x8xf32>
    %550 = vector.shape_cast %549 : vector<1x8x8xf32> to vector<8x8xf32>
    %cst_535 = arith.constant dense<0.000000e+00> : vector<8x8xf32>
    %551 = tpu.matmul %548, %550, %cst_535 {dimension_numbers = #tpu.dot_dimension_numbers<[1], [0], [0], [1], [0, 0, 1, 1], [], []>} : vector<8x8xf32>, vector<8x8xf32>, vector<8x8xf32> -> vector<8x8xf32>
    %552 = arith.addf %547, %551 : vector<8x8xf32>
    %cst_536 = arith.constant dense<0.000000e+00> : vector<8x8xf32>
    %553 = tpu.matmul %530, %536, %cst_536 {dimension_numbers = #tpu.dot_dimension_numbers<[1], [0], [0], [1], [0, 0, 1, 1], [], []>} : vector<8x8xf32>, vector<8x8xf32>, vector<8x8xf32> -> vector<8x8xf32>
    %c3_537 = arith.constant 3 : index
    %c0_538 = arith.constant 0 : index
    %c0_539 = arith.constant 0 : index
    %554 = vector.load %arg17[%c3_537, %c0_538, %c0_539] : memref<5x8x8xf32, #tpu.memory_space<vmem>>, vector<1x8x8xf32>
    %555 = vector.shape_cast %554 : vector<1x8x8xf32> to vector<8x8xf32>
    %cst_540 = arith.constant dense<0.000000e+00> : vector<8x8xf32>
    %556 = tpu.matmul %553, %555, %cst_540 {dimension_numbers = #tpu.dot_dimension_numbers<[1], [0], [0], [1], [0, 0, 1, 1], [], []>} : vector<8x8xf32>, vector<8x8xf32>, vector<8x8xf32> -> vector<8x8xf32>
    %557 = arith.addf %552, %556 : vector<8x8xf32>
    %cst_541 = arith.constant dense<0.000000e+00> : vector<8x8xf32>
    %558 = tpu.matmul %532, %536, %cst_541 {dimension_numbers = #tpu.dot_dimension_numbers<[1], [0], [0], [1], [0, 0, 1, 1], [], []>} : vector<8x8xf32>, vector<8x8xf32>, vector<8x8xf32> -> vector<8x8xf32>
    %c4_542 = arith.constant 4 : index
    %c0_543 = arith.constant 0 : index
    %c0_544 = arith.constant 0 : index
    %559 = vector.load %arg17[%c4_542, %c0_543, %c0_544] : memref<5x8x8xf32, #tpu.memory_space<vmem>>, vector<1x8x8xf32>
    %560 = vector.shape_cast %559 : vector<1x8x8xf32> to vector<8x8xf32>
    %cst_545 = arith.constant dense<0.000000e+00> : vector<8x8xf32>
    %561 = tpu.matmul %558, %560, %cst_545 {dimension_numbers = #tpu.dot_dimension_numbers<[1], [0], [0], [1], [0, 0, 1, 1], [], []>} : vector<8x8xf32>, vector<8x8xf32>, vector<8x8xf32> -> vector<8x8xf32>
    %562 = arith.addf %557, %561 : vector<8x8xf32>
    %563 = vector.broadcast %533 : vector<8x1xf32> to vector<8x8xf32>
    %564 = arith.mulf %562, %563 : vector<8x8xf32>
    %565 = vector.broadcast %534 : vector<8x1xf32> to vector<8x8xf32>
    %566 = arith.addf %564, %565 : vector<8x8xf32>
    %567 = arith.addf %566, %522 : vector<8x8xf32>
    %c0_546 = arith.constant 0 : index
    %c0_547 = arith.constant 0 : index
    %568 = vector.load %arg19[%c0_546, %c0_547] : memref<8x16xf32, #tpu.memory_space<vmem>>, vector<8x16xf32>
    %cst_548 = arith.constant dense<0.000000e+00> : vector<8x16xf32>
    %569 = tpu.matmul %567, %568, %cst_548 {dimension_numbers = #tpu.dot_dimension_numbers<[1], [0], [0], [1], [0, 0, 1, 1], [], []>} : vector<8x8xf32>, vector<8x16xf32>, vector<8x16xf32> -> vector<8x16xf32>
    %c0_549 = arith.constant 0 : index
    %c0_550 = arith.constant 0 : index
    %c0_551 = arith.constant 0 : index
    %c0_552 = arith.constant 0 : index
    %570 = vector.load %arg4[%c0_549, %c0_550, %c0_551, %c0_552] : memref<8x5x8x8xf32, #tpu.memory_space<vmem>>, vector<1x1x8x8xf32>
    %571 = vector.shape_cast %570 : vector<1x1x8x8xf32> to vector<8x8xf32>
    %c0_553 = arith.constant 0 : index
    %c1_554 = arith.constant 1 : index
    %c0_555 = arith.constant 0 : index
    %c0_556 = arith.constant 0 : index
    %572 = vector.load %arg4[%c0_553, %c1_554, %c0_555, %c0_556] : memref<8x5x8x8xf32, #tpu.memory_space<vmem>>, vector<1x1x8x8xf32>
    %573 = vector.shape_cast %572 : vector<1x1x8x8xf32> to vector<8x8xf32>
    %c0_557 = arith.constant 0 : index
    %c2_558 = arith.constant 2 : index
    %c0_559 = arith.constant 0 : index
    %c0_560 = arith.constant 0 : index
    %574 = vector.load %arg4[%c0_557, %c2_558, %c0_559, %c0_560] : memref<8x5x8x8xf32, #tpu.memory_space<vmem>>, vector<1x1x8x8xf32>
    %575 = vector.shape_cast %574 : vector<1x1x8x8xf32> to vector<8x8xf32>
    %c0_561 = arith.constant 0 : index
    %c3_562 = arith.constant 3 : index
    %c0_563 = arith.constant 0 : index
    %c0_564 = arith.constant 0 : index
    %576 = vector.load %arg4[%c0_561, %c3_562, %c0_563, %c0_564] : memref<8x5x8x8xf32, #tpu.memory_space<vmem>>, vector<1x1x8x8xf32>
    %577 = vector.shape_cast %576 : vector<1x1x8x8xf32> to vector<8x8xf32>
    %c0_565 = arith.constant 0 : index
    %c4_566 = arith.constant 4 : index
    %c0_567 = arith.constant 0 : index
    %c0_568 = arith.constant 0 : index
    %578 = vector.load %arg4[%c0_565, %c4_566, %c0_567, %c0_568] : memref<8x5x8x8xf32, #tpu.memory_space<vmem>>, vector<1x1x8x8xf32>
    %579 = vector.shape_cast %578 : vector<1x1x8x8xf32> to vector<8x8xf32>
    %c0_569 = arith.constant 0 : index
    %c0_570 = arith.constant 0 : index
    %c0_571 = arith.constant 0 : index
    %580 = vector.load %arg2[%c0_569, %c0_570, %c0_571] : memref<8x8x1xf32, #tpu.memory_space<vmem>>, vector<1x8x1xf32>
    %581 = vector.shape_cast %580 : vector<1x8x1xf32> to vector<8x1xf32>
    %c0_572 = arith.constant 0 : index
    %c0_573 = arith.constant 0 : index
    %c0_574 = arith.constant 0 : index
    %582 = vector.load %arg3[%c0_572, %c0_573, %c0_574] : memref<8x8x1xf32, #tpu.memory_space<vmem>>, vector<1x8x1xf32>
    %583 = vector.shape_cast %582 : vector<1x8x1xf32> to vector<8x1xf32>
    %cst_575 = arith.constant 0.000000e+00 : f32
    %584 = vector.broadcast %cst_575 : f32 to vector<8x16xf32>
    %585 = arith.maximumf %569, %584 : vector<8x16xf32>
    %cst_576 = arith.constant 0.000000e+00 : f32
    %586 = vector.broadcast %cst_576 : f32 to vector<8x16xf32>
    %cst_577 = arith.constant dense<0.000000e+00> : vector<8x16xf32>
    %587 = tpu.matmul %571, %585, %cst_577 {dimension_numbers = #tpu.dot_dimension_numbers<[1], [0], [0], [1], [0, 0, 1, 1], [], []>} : vector<8x8xf32>, vector<8x16xf32>, vector<8x16xf32> -> vector<8x16xf32>
    %c0_578 = arith.constant 0 : index
    %c0_579 = arith.constant 0 : index
    %c0_580 = arith.constant 0 : index
    %588 = vector.load %arg15[%c0_578, %c0_579, %c0_580] : memref<5x16x16xf32, #tpu.memory_space<vmem>>, vector<1x16x16xf32>
    %589 = vector.shape_cast %588 : vector<1x16x16xf32> to vector<16x16xf32>
    %cst_581 = arith.constant dense<0.000000e+00> : vector<8x16xf32>
    %590 = tpu.matmul %587, %589, %cst_581 {dimension_numbers = #tpu.dot_dimension_numbers<[1], [0], [0], [1], [0, 0, 1, 1], [], []>} : vector<8x16xf32>, vector<16x16xf32>, vector<8x16xf32> -> vector<8x16xf32>
    %591 = arith.addf %586, %590 : vector<8x16xf32>
    %cst_582 = arith.constant dense<0.000000e+00> : vector<8x16xf32>
    %592 = tpu.matmul %573, %585, %cst_582 {dimension_numbers = #tpu.dot_dimension_numbers<[1], [0], [0], [1], [0, 0, 1, 1], [], []>} : vector<8x8xf32>, vector<8x16xf32>, vector<8x16xf32> -> vector<8x16xf32>
    %c1_583 = arith.constant 1 : index
    %c0_584 = arith.constant 0 : index
    %c0_585 = arith.constant 0 : index
    %593 = vector.load %arg15[%c1_583, %c0_584, %c0_585] : memref<5x16x16xf32, #tpu.memory_space<vmem>>, vector<1x16x16xf32>
    %594 = vector.shape_cast %593 : vector<1x16x16xf32> to vector<16x16xf32>
    %cst_586 = arith.constant dense<0.000000e+00> : vector<8x16xf32>
    %595 = tpu.matmul %592, %594, %cst_586 {dimension_numbers = #tpu.dot_dimension_numbers<[1], [0], [0], [1], [0, 0, 1, 1], [], []>} : vector<8x16xf32>, vector<16x16xf32>, vector<8x16xf32> -> vector<8x16xf32>
    %596 = arith.addf %591, %595 : vector<8x16xf32>
    %cst_587 = arith.constant dense<0.000000e+00> : vector<8x16xf32>
    %597 = tpu.matmul %575, %585, %cst_587 {dimension_numbers = #tpu.dot_dimension_numbers<[1], [0], [0], [1], [0, 0, 1, 1], [], []>} : vector<8x8xf32>, vector<8x16xf32>, vector<8x16xf32> -> vector<8x16xf32>
    %c2_588 = arith.constant 2 : index
    %c0_589 = arith.constant 0 : index
    %c0_590 = arith.constant 0 : index
    %598 = vector.load %arg15[%c2_588, %c0_589, %c0_590] : memref<5x16x16xf32, #tpu.memory_space<vmem>>, vector<1x16x16xf32>
    %599 = vector.shape_cast %598 : vector<1x16x16xf32> to vector<16x16xf32>
    %cst_591 = arith.constant dense<0.000000e+00> : vector<8x16xf32>
    %600 = tpu.matmul %597, %599, %cst_591 {dimension_numbers = #tpu.dot_dimension_numbers<[1], [0], [0], [1], [0, 0, 1, 1], [], []>} : vector<8x16xf32>, vector<16x16xf32>, vector<8x16xf32> -> vector<8x16xf32>
    %601 = arith.addf %596, %600 : vector<8x16xf32>
    %cst_592 = arith.constant dense<0.000000e+00> : vector<8x16xf32>
    %602 = tpu.matmul %577, %585, %cst_592 {dimension_numbers = #tpu.dot_dimension_numbers<[1], [0], [0], [1], [0, 0, 1, 1], [], []>} : vector<8x8xf32>, vector<8x16xf32>, vector<8x16xf32> -> vector<8x16xf32>
    %c3_593 = arith.constant 3 : index
    %c0_594 = arith.constant 0 : index
    %c0_595 = arith.constant 0 : index
    %603 = vector.load %arg15[%c3_593, %c0_594, %c0_595] : memref<5x16x16xf32, #tpu.memory_space<vmem>>, vector<1x16x16xf32>
    %604 = vector.shape_cast %603 : vector<1x16x16xf32> to vector<16x16xf32>
    %cst_596 = arith.constant dense<0.000000e+00> : vector<8x16xf32>
    %605 = tpu.matmul %602, %604, %cst_596 {dimension_numbers = #tpu.dot_dimension_numbers<[1], [0], [0], [1], [0, 0, 1, 1], [], []>} : vector<8x16xf32>, vector<16x16xf32>, vector<8x16xf32> -> vector<8x16xf32>
    %606 = arith.addf %601, %605 : vector<8x16xf32>
    %cst_597 = arith.constant dense<0.000000e+00> : vector<8x16xf32>
    %607 = tpu.matmul %579, %585, %cst_597 {dimension_numbers = #tpu.dot_dimension_numbers<[1], [0], [0], [1], [0, 0, 1, 1], [], []>} : vector<8x8xf32>, vector<8x16xf32>, vector<8x16xf32> -> vector<8x16xf32>
    %c4_598 = arith.constant 4 : index
    %c0_599 = arith.constant 0 : index
    %c0_600 = arith.constant 0 : index
    %608 = vector.load %arg15[%c4_598, %c0_599, %c0_600] : memref<5x16x16xf32, #tpu.memory_space<vmem>>, vector<1x16x16xf32>
    %609 = vector.shape_cast %608 : vector<1x16x16xf32> to vector<16x16xf32>
    %cst_601 = arith.constant dense<0.000000e+00> : vector<8x16xf32>
    %610 = tpu.matmul %607, %609, %cst_601 {dimension_numbers = #tpu.dot_dimension_numbers<[1], [0], [0], [1], [0, 0, 1, 1], [], []>} : vector<8x16xf32>, vector<16x16xf32>, vector<8x16xf32> -> vector<8x16xf32>
    %611 = arith.addf %606, %610 : vector<8x16xf32>
    %612 = vector.broadcast %581 : vector<8x1xf32> to vector<8x16xf32>
    %613 = arith.mulf %611, %612 : vector<8x16xf32>
    %614 = vector.broadcast %583 : vector<8x1xf32> to vector<8x16xf32>
    %615 = arith.addf %613, %614 : vector<8x16xf32>
    %c1_602 = arith.constant 1 : index
    %c0_603 = arith.constant 0 : index
    %c0_604 = arith.constant 0 : index
    %c0_605 = arith.constant 0 : index
    %616 = vector.load %arg4[%c1_602, %c0_603, %c0_604, %c0_605] : memref<8x5x8x8xf32, #tpu.memory_space<vmem>>, vector<1x1x8x8xf32>
    %617 = vector.shape_cast %616 : vector<1x1x8x8xf32> to vector<8x8xf32>
    %c1_606 = arith.constant 1 : index
    %c1_607 = arith.constant 1 : index
    %c0_608 = arith.constant 0 : index
    %c0_609 = arith.constant 0 : index
    %618 = vector.load %arg4[%c1_606, %c1_607, %c0_608, %c0_609] : memref<8x5x8x8xf32, #tpu.memory_space<vmem>>, vector<1x1x8x8xf32>
    %619 = vector.shape_cast %618 : vector<1x1x8x8xf32> to vector<8x8xf32>
    %c1_610 = arith.constant 1 : index
    %c2_611 = arith.constant 2 : index
    %c0_612 = arith.constant 0 : index
    %c0_613 = arith.constant 0 : index
    %620 = vector.load %arg4[%c1_610, %c2_611, %c0_612, %c0_613] : memref<8x5x8x8xf32, #tpu.memory_space<vmem>>, vector<1x1x8x8xf32>
    %621 = vector.shape_cast %620 : vector<1x1x8x8xf32> to vector<8x8xf32>
    %c1_614 = arith.constant 1 : index
    %c3_615 = arith.constant 3 : index
    %c0_616 = arith.constant 0 : index
    %c0_617 = arith.constant 0 : index
    %622 = vector.load %arg4[%c1_614, %c3_615, %c0_616, %c0_617] : memref<8x5x8x8xf32, #tpu.memory_space<vmem>>, vector<1x1x8x8xf32>
    %623 = vector.shape_cast %622 : vector<1x1x8x8xf32> to vector<8x8xf32>
    %c1_618 = arith.constant 1 : index
    %c4_619 = arith.constant 4 : index
    %c0_620 = arith.constant 0 : index
    %c0_621 = arith.constant 0 : index
    %624 = vector.load %arg4[%c1_618, %c4_619, %c0_620, %c0_621] : memref<8x5x8x8xf32, #tpu.memory_space<vmem>>, vector<1x1x8x8xf32>
    %625 = vector.shape_cast %624 : vector<1x1x8x8xf32> to vector<8x8xf32>
    %c1_622 = arith.constant 1 : index
    %c0_623 = arith.constant 0 : index
    %c0_624 = arith.constant 0 : index
    %626 = vector.load %arg2[%c1_622, %c0_623, %c0_624] : memref<8x8x1xf32, #tpu.memory_space<vmem>>, vector<1x8x1xf32>
    %627 = vector.shape_cast %626 : vector<1x8x1xf32> to vector<8x1xf32>
    %c1_625 = arith.constant 1 : index
    %c0_626 = arith.constant 0 : index
    %c0_627 = arith.constant 0 : index
    %628 = vector.load %arg3[%c1_625, %c0_626, %c0_627] : memref<8x8x1xf32, #tpu.memory_space<vmem>>, vector<1x8x1xf32>
    %629 = vector.shape_cast %628 : vector<1x8x1xf32> to vector<8x1xf32>
    %cst_628 = arith.constant 0.000000e+00 : f32
    %630 = vector.broadcast %cst_628 : f32 to vector<8x16xf32>
    %631 = arith.maximumf %615, %630 : vector<8x16xf32>
    %cst_629 = arith.constant 0.000000e+00 : f32
    %632 = vector.broadcast %cst_629 : f32 to vector<8x16xf32>
    %cst_630 = arith.constant dense<0.000000e+00> : vector<8x16xf32>
    %633 = tpu.matmul %617, %631, %cst_630 {dimension_numbers = #tpu.dot_dimension_numbers<[1], [0], [0], [1], [0, 0, 1, 1], [], []>} : vector<8x8xf32>, vector<8x16xf32>, vector<8x16xf32> -> vector<8x16xf32>
    %c0_631 = arith.constant 0 : index
    %c0_632 = arith.constant 0 : index
    %c0_633 = arith.constant 0 : index
    %634 = vector.load %arg15[%c0_631, %c0_632, %c0_633] : memref<5x16x16xf32, #tpu.memory_space<vmem>>, vector<1x16x16xf32>
    %635 = vector.shape_cast %634 : vector<1x16x16xf32> to vector<16x16xf32>
    %cst_634 = arith.constant dense<0.000000e+00> : vector<8x16xf32>
    %636 = tpu.matmul %633, %635, %cst_634 {dimension_numbers = #tpu.dot_dimension_numbers<[1], [0], [0], [1], [0, 0, 1, 1], [], []>} : vector<8x16xf32>, vector<16x16xf32>, vector<8x16xf32> -> vector<8x16xf32>
    %637 = arith.addf %632, %636 : vector<8x16xf32>
    %cst_635 = arith.constant dense<0.000000e+00> : vector<8x16xf32>
    %638 = tpu.matmul %619, %631, %cst_635 {dimension_numbers = #tpu.dot_dimension_numbers<[1], [0], [0], [1], [0, 0, 1, 1], [], []>} : vector<8x8xf32>, vector<8x16xf32>, vector<8x16xf32> -> vector<8x16xf32>
    %c1_636 = arith.constant 1 : index
    %c0_637 = arith.constant 0 : index
    %c0_638 = arith.constant 0 : index
    %639 = vector.load %arg15[%c1_636, %c0_637, %c0_638] : memref<5x16x16xf32, #tpu.memory_space<vmem>>, vector<1x16x16xf32>
    %640 = vector.shape_cast %639 : vector<1x16x16xf32> to vector<16x16xf32>
    %cst_639 = arith.constant dense<0.000000e+00> : vector<8x16xf32>
    %641 = tpu.matmul %638, %640, %cst_639 {dimension_numbers = #tpu.dot_dimension_numbers<[1], [0], [0], [1], [0, 0, 1, 1], [], []>} : vector<8x16xf32>, vector<16x16xf32>, vector<8x16xf32> -> vector<8x16xf32>
    %642 = arith.addf %637, %641 : vector<8x16xf32>
    %cst_640 = arith.constant dense<0.000000e+00> : vector<8x16xf32>
    %643 = tpu.matmul %621, %631, %cst_640 {dimension_numbers = #tpu.dot_dimension_numbers<[1], [0], [0], [1], [0, 0, 1, 1], [], []>} : vector<8x8xf32>, vector<8x16xf32>, vector<8x16xf32> -> vector<8x16xf32>
    %c2_641 = arith.constant 2 : index
    %c0_642 = arith.constant 0 : index
    %c0_643 = arith.constant 0 : index
    %644 = vector.load %arg15[%c2_641, %c0_642, %c0_643] : memref<5x16x16xf32, #tpu.memory_space<vmem>>, vector<1x16x16xf32>
    %645 = vector.shape_cast %644 : vector<1x16x16xf32> to vector<16x16xf32>
    %cst_644 = arith.constant dense<0.000000e+00> : vector<8x16xf32>
    %646 = tpu.matmul %643, %645, %cst_644 {dimension_numbers = #tpu.dot_dimension_numbers<[1], [0], [0], [1], [0, 0, 1, 1], [], []>} : vector<8x16xf32>, vector<16x16xf32>, vector<8x16xf32> -> vector<8x16xf32>
    %647 = arith.addf %642, %646 : vector<8x16xf32>
    %cst_645 = arith.constant dense<0.000000e+00> : vector<8x16xf32>
    %648 = tpu.matmul %623, %631, %cst_645 {dimension_numbers = #tpu.dot_dimension_numbers<[1], [0], [0], [1], [0, 0, 1, 1], [], []>} : vector<8x8xf32>, vector<8x16xf32>, vector<8x16xf32> -> vector<8x16xf32>
    %c3_646 = arith.constant 3 : index
    %c0_647 = arith.constant 0 : index
    %c0_648 = arith.constant 0 : index
    %649 = vector.load %arg15[%c3_646, %c0_647, %c0_648] : memref<5x16x16xf32, #tpu.memory_space<vmem>>, vector<1x16x16xf32>
    %650 = vector.shape_cast %649 : vector<1x16x16xf32> to vector<16x16xf32>
    %cst_649 = arith.constant dense<0.000000e+00> : vector<8x16xf32>
    %651 = tpu.matmul %648, %650, %cst_649 {dimension_numbers = #tpu.dot_dimension_numbers<[1], [0], [0], [1], [0, 0, 1, 1], [], []>} : vector<8x16xf32>, vector<16x16xf32>, vector<8x16xf32> -> vector<8x16xf32>
    %652 = arith.addf %647, %651 : vector<8x16xf32>
    %cst_650 = arith.constant dense<0.000000e+00> : vector<8x16xf32>
    %653 = tpu.matmul %625, %631, %cst_650 {dimension_numbers = #tpu.dot_dimension_numbers<[1], [0], [0], [1], [0, 0, 1, 1], [], []>} : vector<8x8xf32>, vector<8x16xf32>, vector<8x16xf32> -> vector<8x16xf32>
    %c4_651 = arith.constant 4 : index
    %c0_652 = arith.constant 0 : index
    %c0_653 = arith.constant 0 : index
    %654 = vector.load %arg15[%c4_651, %c0_652, %c0_653] : memref<5x16x16xf32, #tpu.memory_space<vmem>>, vector<1x16x16xf32>
    %655 = vector.shape_cast %654 : vector<1x16x16xf32> to vector<16x16xf32>
    %cst_654 = arith.constant dense<0.000000e+00> : vector<8x16xf32>
    %656 = tpu.matmul %653, %655, %cst_654 {dimension_numbers = #tpu.dot_dimension_numbers<[1], [0], [0], [1], [0, 0, 1, 1], [], []>} : vector<8x16xf32>, vector<16x16xf32>, vector<8x16xf32> -> vector<8x16xf32>
    %657 = arith.addf %652, %656 : vector<8x16xf32>
    %658 = vector.broadcast %627 : vector<8x1xf32> to vector<8x16xf32>
    %659 = arith.mulf %657, %658 : vector<8x16xf32>
    %660 = vector.broadcast %629 : vector<8x1xf32> to vector<8x16xf32>
    %661 = arith.addf %659, %660 : vector<8x16xf32>
    %662 = arith.addf %661, %615 : vector<8x16xf32>
    %c2_655 = arith.constant 2 : index
    %c0_656 = arith.constant 0 : index
    %c0_657 = arith.constant 0 : index
    %c0_658 = arith.constant 0 : index
    %663 = vector.load %arg4[%c2_655, %c0_656, %c0_657, %c0_658] : memref<8x5x8x8xf32, #tpu.memory_space<vmem>>, vector<1x1x8x8xf32>
    %664 = vector.shape_cast %663 : vector<1x1x8x8xf32> to vector<8x8xf32>
    %c2_659 = arith.constant 2 : index
    %c1_660 = arith.constant 1 : index
    %c0_661 = arith.constant 0 : index
    %c0_662 = arith.constant 0 : index
    %665 = vector.load %arg4[%c2_659, %c1_660, %c0_661, %c0_662] : memref<8x5x8x8xf32, #tpu.memory_space<vmem>>, vector<1x1x8x8xf32>
    %666 = vector.shape_cast %665 : vector<1x1x8x8xf32> to vector<8x8xf32>
    %c2_663 = arith.constant 2 : index
    %c2_664 = arith.constant 2 : index
    %c0_665 = arith.constant 0 : index
    %c0_666 = arith.constant 0 : index
    %667 = vector.load %arg4[%c2_663, %c2_664, %c0_665, %c0_666] : memref<8x5x8x8xf32, #tpu.memory_space<vmem>>, vector<1x1x8x8xf32>
    %668 = vector.shape_cast %667 : vector<1x1x8x8xf32> to vector<8x8xf32>
    %c2_667 = arith.constant 2 : index
    %c3_668 = arith.constant 3 : index
    %c0_669 = arith.constant 0 : index
    %c0_670 = arith.constant 0 : index
    %669 = vector.load %arg4[%c2_667, %c3_668, %c0_669, %c0_670] : memref<8x5x8x8xf32, #tpu.memory_space<vmem>>, vector<1x1x8x8xf32>
    %670 = vector.shape_cast %669 : vector<1x1x8x8xf32> to vector<8x8xf32>
    %c2_671 = arith.constant 2 : index
    %c4_672 = arith.constant 4 : index
    %c0_673 = arith.constant 0 : index
    %c0_674 = arith.constant 0 : index
    %671 = vector.load %arg4[%c2_671, %c4_672, %c0_673, %c0_674] : memref<8x5x8x8xf32, #tpu.memory_space<vmem>>, vector<1x1x8x8xf32>
    %672 = vector.shape_cast %671 : vector<1x1x8x8xf32> to vector<8x8xf32>
    %c2_675 = arith.constant 2 : index
    %c0_676 = arith.constant 0 : index
    %c0_677 = arith.constant 0 : index
    %673 = vector.load %arg2[%c2_675, %c0_676, %c0_677] : memref<8x8x1xf32, #tpu.memory_space<vmem>>, vector<1x8x1xf32>
    %674 = vector.shape_cast %673 : vector<1x8x1xf32> to vector<8x1xf32>
    %c2_678 = arith.constant 2 : index
    %c0_679 = arith.constant 0 : index
    %c0_680 = arith.constant 0 : index
    %675 = vector.load %arg3[%c2_678, %c0_679, %c0_680] : memref<8x8x1xf32, #tpu.memory_space<vmem>>, vector<1x8x1xf32>
    %676 = vector.shape_cast %675 : vector<1x8x1xf32> to vector<8x1xf32>
    %cst_681 = arith.constant 0.000000e+00 : f32
    %677 = vector.broadcast %cst_681 : f32 to vector<8x16xf32>
    %678 = arith.maximumf %662, %677 : vector<8x16xf32>
    %cst_682 = arith.constant 0.000000e+00 : f32
    %679 = vector.broadcast %cst_682 : f32 to vector<8x16xf32>
    %cst_683 = arith.constant dense<0.000000e+00> : vector<8x16xf32>
    %680 = tpu.matmul %664, %678, %cst_683 {dimension_numbers = #tpu.dot_dimension_numbers<[1], [0], [0], [1], [0, 0, 1, 1], [], []>} : vector<8x8xf32>, vector<8x16xf32>, vector<8x16xf32> -> vector<8x16xf32>
    %c0_684 = arith.constant 0 : index
    %c0_685 = arith.constant 0 : index
    %c0_686 = arith.constant 0 : index
    %681 = vector.load %arg15[%c0_684, %c0_685, %c0_686] : memref<5x16x16xf32, #tpu.memory_space<vmem>>, vector<1x16x16xf32>
    %682 = vector.shape_cast %681 : vector<1x16x16xf32> to vector<16x16xf32>
    %cst_687 = arith.constant dense<0.000000e+00> : vector<8x16xf32>
    %683 = tpu.matmul %680, %682, %cst_687 {dimension_numbers = #tpu.dot_dimension_numbers<[1], [0], [0], [1], [0, 0, 1, 1], [], []>} : vector<8x16xf32>, vector<16x16xf32>, vector<8x16xf32> -> vector<8x16xf32>
    %684 = arith.addf %679, %683 : vector<8x16xf32>
    %cst_688 = arith.constant dense<0.000000e+00> : vector<8x16xf32>
    %685 = tpu.matmul %666, %678, %cst_688 {dimension_numbers = #tpu.dot_dimension_numbers<[1], [0], [0], [1], [0, 0, 1, 1], [], []>} : vector<8x8xf32>, vector<8x16xf32>, vector<8x16xf32> -> vector<8x16xf32>
    %c1_689 = arith.constant 1 : index
    %c0_690 = arith.constant 0 : index
    %c0_691 = arith.constant 0 : index
    %686 = vector.load %arg15[%c1_689, %c0_690, %c0_691] : memref<5x16x16xf32, #tpu.memory_space<vmem>>, vector<1x16x16xf32>
    %687 = vector.shape_cast %686 : vector<1x16x16xf32> to vector<16x16xf32>
    %cst_692 = arith.constant dense<0.000000e+00> : vector<8x16xf32>
    %688 = tpu.matmul %685, %687, %cst_692 {dimension_numbers = #tpu.dot_dimension_numbers<[1], [0], [0], [1], [0, 0, 1, 1], [], []>} : vector<8x16xf32>, vector<16x16xf32>, vector<8x16xf32> -> vector<8x16xf32>
    %689 = arith.addf %684, %688 : vector<8x16xf32>
    %cst_693 = arith.constant dense<0.000000e+00> : vector<8x16xf32>
    %690 = tpu.matmul %668, %678, %cst_693 {dimension_numbers = #tpu.dot_dimension_numbers<[1], [0], [0], [1], [0, 0, 1, 1], [], []>} : vector<8x8xf32>, vector<8x16xf32>, vector<8x16xf32> -> vector<8x16xf32>
    %c2_694 = arith.constant 2 : index
    %c0_695 = arith.constant 0 : index
    %c0_696 = arith.constant 0 : index
    %691 = vector.load %arg15[%c2_694, %c0_695, %c0_696] : memref<5x16x16xf32, #tpu.memory_space<vmem>>, vector<1x16x16xf32>
    %692 = vector.shape_cast %691 : vector<1x16x16xf32> to vector<16x16xf32>
    %cst_697 = arith.constant dense<0.000000e+00> : vector<8x16xf32>
    %693 = tpu.matmul %690, %692, %cst_697 {dimension_numbers = #tpu.dot_dimension_numbers<[1], [0], [0], [1], [0, 0, 1, 1], [], []>} : vector<8x16xf32>, vector<16x16xf32>, vector<8x16xf32> -> vector<8x16xf32>
    %694 = arith.addf %689, %693 : vector<8x16xf32>
    %cst_698 = arith.constant dense<0.000000e+00> : vector<8x16xf32>
    %695 = tpu.matmul %670, %678, %cst_698 {dimension_numbers = #tpu.dot_dimension_numbers<[1], [0], [0], [1], [0, 0, 1, 1], [], []>} : vector<8x8xf32>, vector<8x16xf32>, vector<8x16xf32> -> vector<8x16xf32>
    %c3_699 = arith.constant 3 : index
    %c0_700 = arith.constant 0 : index
    %c0_701 = arith.constant 0 : index
    %696 = vector.load %arg15[%c3_699, %c0_700, %c0_701] : memref<5x16x16xf32, #tpu.memory_space<vmem>>, vector<1x16x16xf32>
    %697 = vector.shape_cast %696 : vector<1x16x16xf32> to vector<16x16xf32>
    %cst_702 = arith.constant dense<0.000000e+00> : vector<8x16xf32>
    %698 = tpu.matmul %695, %697, %cst_702 {dimension_numbers = #tpu.dot_dimension_numbers<[1], [0], [0], [1], [0, 0, 1, 1], [], []>} : vector<8x16xf32>, vector<16x16xf32>, vector<8x16xf32> -> vector<8x16xf32>
    %699 = arith.addf %694, %698 : vector<8x16xf32>
    %cst_703 = arith.constant dense<0.000000e+00> : vector<8x16xf32>
    %700 = tpu.matmul %672, %678, %cst_703 {dimension_numbers = #tpu.dot_dimension_numbers<[1], [0], [0], [1], [0, 0, 1, 1], [], []>} : vector<8x8xf32>, vector<8x16xf32>, vector<8x16xf32> -> vector<8x16xf32>
    %c4_704 = arith.constant 4 : index
    %c0_705 = arith.constant 0 : index
    %c0_706 = arith.constant 0 : index
    %701 = vector.load %arg15[%c4_704, %c0_705, %c0_706] : memref<5x16x16xf32, #tpu.memory_space<vmem>>, vector<1x16x16xf32>
    %702 = vector.shape_cast %701 : vector<1x16x16xf32> to vector<16x16xf32>
    %cst_707 = arith.constant dense<0.000000e+00> : vector<8x16xf32>
    %703 = tpu.matmul %700, %702, %cst_707 {dimension_numbers = #tpu.dot_dimension_numbers<[1], [0], [0], [1], [0, 0, 1, 1], [], []>} : vector<8x16xf32>, vector<16x16xf32>, vector<8x16xf32> -> vector<8x16xf32>
    %704 = arith.addf %699, %703 : vector<8x16xf32>
    %705 = vector.broadcast %674 : vector<8x1xf32> to vector<8x16xf32>
    %706 = arith.mulf %704, %705 : vector<8x16xf32>
    %707 = vector.broadcast %676 : vector<8x1xf32> to vector<8x16xf32>
    %708 = arith.addf %706, %707 : vector<8x16xf32>
    %c3_708 = arith.constant 3 : index
    %c0_709 = arith.constant 0 : index
    %c0_710 = arith.constant 0 : index
    %c0_711 = arith.constant 0 : index
    %709 = vector.load %arg4[%c3_708, %c0_709, %c0_710, %c0_711] : memref<8x5x8x8xf32, #tpu.memory_space<vmem>>, vector<1x1x8x8xf32>
    %710 = vector.shape_cast %709 : vector<1x1x8x8xf32> to vector<8x8xf32>
    %c3_712 = arith.constant 3 : index
    %c1_713 = arith.constant 1 : index
    %c0_714 = arith.constant 0 : index
    %c0_715 = arith.constant 0 : index
    %711 = vector.load %arg4[%c3_712, %c1_713, %c0_714, %c0_715] : memref<8x5x8x8xf32, #tpu.memory_space<vmem>>, vector<1x1x8x8xf32>
    %712 = vector.shape_cast %711 : vector<1x1x8x8xf32> to vector<8x8xf32>
    %c3_716 = arith.constant 3 : index
    %c2_717 = arith.constant 2 : index
    %c0_718 = arith.constant 0 : index
    %c0_719 = arith.constant 0 : index
    %713 = vector.load %arg4[%c3_716, %c2_717, %c0_718, %c0_719] : memref<8x5x8x8xf32, #tpu.memory_space<vmem>>, vector<1x1x8x8xf32>
    %714 = vector.shape_cast %713 : vector<1x1x8x8xf32> to vector<8x8xf32>
    %c3_720 = arith.constant 3 : index
    %c3_721 = arith.constant 3 : index
    %c0_722 = arith.constant 0 : index
    %c0_723 = arith.constant 0 : index
    %715 = vector.load %arg4[%c3_720, %c3_721, %c0_722, %c0_723] : memref<8x5x8x8xf32, #tpu.memory_space<vmem>>, vector<1x1x8x8xf32>
    %716 = vector.shape_cast %715 : vector<1x1x8x8xf32> to vector<8x8xf32>
    %c3_724 = arith.constant 3 : index
    %c4_725 = arith.constant 4 : index
    %c0_726 = arith.constant 0 : index
    %c0_727 = arith.constant 0 : index
    %717 = vector.load %arg4[%c3_724, %c4_725, %c0_726, %c0_727] : memref<8x5x8x8xf32, #tpu.memory_space<vmem>>, vector<1x1x8x8xf32>
    %718 = vector.shape_cast %717 : vector<1x1x8x8xf32> to vector<8x8xf32>
    %c3_728 = arith.constant 3 : index
    %c0_729 = arith.constant 0 : index
    %c0_730 = arith.constant 0 : index
    %719 = vector.load %arg2[%c3_728, %c0_729, %c0_730] : memref<8x8x1xf32, #tpu.memory_space<vmem>>, vector<1x8x1xf32>
    %720 = vector.shape_cast %719 : vector<1x8x1xf32> to vector<8x1xf32>
    %c3_731 = arith.constant 3 : index
    %c0_732 = arith.constant 0 : index
    %c0_733 = arith.constant 0 : index
    %721 = vector.load %arg3[%c3_731, %c0_732, %c0_733] : memref<8x8x1xf32, #tpu.memory_space<vmem>>, vector<1x8x1xf32>
    %722 = vector.shape_cast %721 : vector<1x8x1xf32> to vector<8x1xf32>
    %cst_734 = arith.constant 0.000000e+00 : f32
    %723 = vector.broadcast %cst_734 : f32 to vector<8x16xf32>
    %724 = arith.maximumf %708, %723 : vector<8x16xf32>
    %cst_735 = arith.constant 0.000000e+00 : f32
    %725 = vector.broadcast %cst_735 : f32 to vector<8x16xf32>
    %cst_736 = arith.constant dense<0.000000e+00> : vector<8x16xf32>
    %726 = tpu.matmul %710, %724, %cst_736 {dimension_numbers = #tpu.dot_dimension_numbers<[1], [0], [0], [1], [0, 0, 1, 1], [], []>} : vector<8x8xf32>, vector<8x16xf32>, vector<8x16xf32> -> vector<8x16xf32>
    %c0_737 = arith.constant 0 : index
    %c0_738 = arith.constant 0 : index
    %c0_739 = arith.constant 0 : index
    %727 = vector.load %arg15[%c0_737, %c0_738, %c0_739] : memref<5x16x16xf32, #tpu.memory_space<vmem>>, vector<1x16x16xf32>
    %728 = vector.shape_cast %727 : vector<1x16x16xf32> to vector<16x16xf32>
    %cst_740 = arith.constant dense<0.000000e+00> : vector<8x16xf32>
    %729 = tpu.matmul %726, %728, %cst_740 {dimension_numbers = #tpu.dot_dimension_numbers<[1], [0], [0], [1], [0, 0, 1, 1], [], []>} : vector<8x16xf32>, vector<16x16xf32>, vector<8x16xf32> -> vector<8x16xf32>
    %730 = arith.addf %725, %729 : vector<8x16xf32>
    %cst_741 = arith.constant dense<0.000000e+00> : vector<8x16xf32>
    %731 = tpu.matmul %712, %724, %cst_741 {dimension_numbers = #tpu.dot_dimension_numbers<[1], [0], [0], [1], [0, 0, 1, 1], [], []>} : vector<8x8xf32>, vector<8x16xf32>, vector<8x16xf32> -> vector<8x16xf32>
    %c1_742 = arith.constant 1 : index
    %c0_743 = arith.constant 0 : index
    %c0_744 = arith.constant 0 : index
    %732 = vector.load %arg15[%c1_742, %c0_743, %c0_744] : memref<5x16x16xf32, #tpu.memory_space<vmem>>, vector<1x16x16xf32>
    %733 = vector.shape_cast %732 : vector<1x16x16xf32> to vector<16x16xf32>
    %cst_745 = arith.constant dense<0.000000e+00> : vector<8x16xf32>
    %734 = tpu.matmul %731, %733, %cst_745 {dimension_numbers = #tpu.dot_dimension_numbers<[1], [0], [0], [1], [0, 0, 1, 1], [], []>} : vector<8x16xf32>, vector<16x16xf32>, vector<8x16xf32> -> vector<8x16xf32>
    %735 = arith.addf %730, %734 : vector<8x16xf32>
    %cst_746 = arith.constant dense<0.000000e+00> : vector<8x16xf32>
    %736 = tpu.matmul %714, %724, %cst_746 {dimension_numbers = #tpu.dot_dimension_numbers<[1], [0], [0], [1], [0, 0, 1, 1], [], []>} : vector<8x8xf32>, vector<8x16xf32>, vector<8x16xf32> -> vector<8x16xf32>
    %c2_747 = arith.constant 2 : index
    %c0_748 = arith.constant 0 : index
    %c0_749 = arith.constant 0 : index
    %737 = vector.load %arg15[%c2_747, %c0_748, %c0_749] : memref<5x16x16xf32, #tpu.memory_space<vmem>>, vector<1x16x16xf32>
    %738 = vector.shape_cast %737 : vector<1x16x16xf32> to vector<16x16xf32>
    %cst_750 = arith.constant dense<0.000000e+00> : vector<8x16xf32>
    %739 = tpu.matmul %736, %738, %cst_750 {dimension_numbers = #tpu.dot_dimension_numbers<[1], [0], [0], [1], [0, 0, 1, 1], [], []>} : vector<8x16xf32>, vector<16x16xf32>, vector<8x16xf32> -> vector<8x16xf32>
    %740 = arith.addf %735, %739 : vector<8x16xf32>
    %cst_751 = arith.constant dense<0.000000e+00> : vector<8x16xf32>
    %741 = tpu.matmul %716, %724, %cst_751 {dimension_numbers = #tpu.dot_dimension_numbers<[1], [0], [0], [1], [0, 0, 1, 1], [], []>} : vector<8x8xf32>, vector<8x16xf32>, vector<8x16xf32> -> vector<8x16xf32>
    %c3_752 = arith.constant 3 : index
    %c0_753 = arith.constant 0 : index
    %c0_754 = arith.constant 0 : index
    %742 = vector.load %arg15[%c3_752, %c0_753, %c0_754] : memref<5x16x16xf32, #tpu.memory_space<vmem>>, vector<1x16x16xf32>
    %743 = vector.shape_cast %742 : vector<1x16x16xf32> to vector<16x16xf32>
    %cst_755 = arith.constant dense<0.000000e+00> : vector<8x16xf32>
    %744 = tpu.matmul %741, %743, %cst_755 {dimension_numbers = #tpu.dot_dimension_numbers<[1], [0], [0], [1], [0, 0, 1, 1], [], []>} : vector<8x16xf32>, vector<16x16xf32>, vector<8x16xf32> -> vector<8x16xf32>
    %745 = arith.addf %740, %744 : vector<8x16xf32>
    %cst_756 = arith.constant dense<0.000000e+00> : vector<8x16xf32>
    %746 = tpu.matmul %718, %724, %cst_756 {dimension_numbers = #tpu.dot_dimension_numbers<[1], [0], [0], [1], [0, 0, 1, 1], [], []>} : vector<8x8xf32>, vector<8x16xf32>, vector<8x16xf32> -> vector<8x16xf32>
    %c4_757 = arith.constant 4 : index
    %c0_758 = arith.constant 0 : index
    %c0_759 = arith.constant 0 : index
    %747 = vector.load %arg15[%c4_757, %c0_758, %c0_759] : memref<5x16x16xf32, #tpu.memory_space<vmem>>, vector<1x16x16xf32>
    %748 = vector.shape_cast %747 : vector<1x16x16xf32> to vector<16x16xf32>
    %cst_760 = arith.constant dense<0.000000e+00> : vector<8x16xf32>
    %749 = tpu.matmul %746, %748, %cst_760 {dimension_numbers = #tpu.dot_dimension_numbers<[1], [0], [0], [1], [0, 0, 1, 1], [], []>} : vector<8x16xf32>, vector<16x16xf32>, vector<8x16xf32> -> vector<8x16xf32>
    %750 = arith.addf %745, %749 : vector<8x16xf32>
    %751 = vector.broadcast %720 : vector<8x1xf32> to vector<8x16xf32>
    %752 = arith.mulf %750, %751 : vector<8x16xf32>
    %753 = vector.broadcast %722 : vector<8x1xf32> to vector<8x16xf32>
    %754 = arith.addf %752, %753 : vector<8x16xf32>
    %755 = arith.addf %754, %708 : vector<8x16xf32>
    %c0_761 = arith.constant 0 : index
    %c0_762 = arith.constant 0 : index
    %756 = vector.load %arg18[%c0_761, %c0_762] : memref<16x32xf32, #tpu.memory_space<vmem>>, vector<16x32xf32>
    %cst_763 = arith.constant dense<0.000000e+00> : vector<8x32xf32>
    %757 = tpu.matmul %755, %756, %cst_763 {dimension_numbers = #tpu.dot_dimension_numbers<[1], [0], [0], [1], [0, 0, 1, 1], [], []>} : vector<8x16xf32>, vector<16x32xf32>, vector<8x32xf32> -> vector<8x32xf32>
    %c4_764 = arith.constant 4 : index
    %c0_765 = arith.constant 0 : index
    %c0_766 = arith.constant 0 : index
    %c0_767 = arith.constant 0 : index
    %758 = vector.load %arg4[%c4_764, %c0_765, %c0_766, %c0_767] : memref<8x5x8x8xf32, #tpu.memory_space<vmem>>, vector<1x1x8x8xf32>
    %759 = vector.shape_cast %758 : vector<1x1x8x8xf32> to vector<8x8xf32>
    %c4_768 = arith.constant 4 : index
    %c1_769 = arith.constant 1 : index
    %c0_770 = arith.constant 0 : index
    %c0_771 = arith.constant 0 : index
    %760 = vector.load %arg4[%c4_768, %c1_769, %c0_770, %c0_771] : memref<8x5x8x8xf32, #tpu.memory_space<vmem>>, vector<1x1x8x8xf32>
    %761 = vector.shape_cast %760 : vector<1x1x8x8xf32> to vector<8x8xf32>
    %c4_772 = arith.constant 4 : index
    %c2_773 = arith.constant 2 : index
    %c0_774 = arith.constant 0 : index
    %c0_775 = arith.constant 0 : index
    %762 = vector.load %arg4[%c4_772, %c2_773, %c0_774, %c0_775] : memref<8x5x8x8xf32, #tpu.memory_space<vmem>>, vector<1x1x8x8xf32>
    %763 = vector.shape_cast %762 : vector<1x1x8x8xf32> to vector<8x8xf32>
    %c4_776 = arith.constant 4 : index
    %c3_777 = arith.constant 3 : index
    %c0_778 = arith.constant 0 : index
    %c0_779 = arith.constant 0 : index
    %764 = vector.load %arg4[%c4_776, %c3_777, %c0_778, %c0_779] : memref<8x5x8x8xf32, #tpu.memory_space<vmem>>, vector<1x1x8x8xf32>
    %765 = vector.shape_cast %764 : vector<1x1x8x8xf32> to vector<8x8xf32>
    %c4_780 = arith.constant 4 : index
    %c4_781 = arith.constant 4 : index
    %c0_782 = arith.constant 0 : index
    %c0_783 = arith.constant 0 : index
    %766 = vector.load %arg4[%c4_780, %c4_781, %c0_782, %c0_783] : memref<8x5x8x8xf32, #tpu.memory_space<vmem>>, vector<1x1x8x8xf32>
    %767 = vector.shape_cast %766 : vector<1x1x8x8xf32> to vector<8x8xf32>
    %c4_784 = arith.constant 4 : index
    %c0_785 = arith.constant 0 : index
    %c0_786 = arith.constant 0 : index
    %768 = vector.load %arg2[%c4_784, %c0_785, %c0_786] : memref<8x8x1xf32, #tpu.memory_space<vmem>>, vector<1x8x1xf32>
    %769 = vector.shape_cast %768 : vector<1x8x1xf32> to vector<8x1xf32>
    %c4_787 = arith.constant 4 : index
    %c0_788 = arith.constant 0 : index
    %c0_789 = arith.constant 0 : index
    %770 = vector.load %arg3[%c4_787, %c0_788, %c0_789] : memref<8x8x1xf32, #tpu.memory_space<vmem>>, vector<1x8x1xf32>
    %771 = vector.shape_cast %770 : vector<1x8x1xf32> to vector<8x1xf32>
    %cst_790 = arith.constant 0.000000e+00 : f32
    %772 = vector.broadcast %cst_790 : f32 to vector<8x32xf32>
    %773 = arith.maximumf %757, %772 : vector<8x32xf32>
    %cst_791 = arith.constant 0.000000e+00 : f32
    %774 = vector.broadcast %cst_791 : f32 to vector<8x32xf32>
    %cst_792 = arith.constant dense<0.000000e+00> : vector<8x32xf32>
    %775 = tpu.matmul %759, %773, %cst_792 {dimension_numbers = #tpu.dot_dimension_numbers<[1], [0], [0], [1], [0, 0, 1, 1], [], []>} : vector<8x8xf32>, vector<8x32xf32>, vector<8x32xf32> -> vector<8x32xf32>
    %c0_793 = arith.constant 0 : index
    %c0_794 = arith.constant 0 : index
    %c0_795 = arith.constant 0 : index
    %776 = vector.load %arg16[%c0_793, %c0_794, %c0_795] : memref<5x32x32xf32, #tpu.memory_space<vmem>>, vector<1x32x32xf32>
    %777 = vector.shape_cast %776 : vector<1x32x32xf32> to vector<32x32xf32>
    %cst_796 = arith.constant dense<0.000000e+00> : vector<8x32xf32>
    %778 = tpu.matmul %775, %777, %cst_796 {dimension_numbers = #tpu.dot_dimension_numbers<[1], [0], [0], [1], [0, 0, 1, 1], [], []>} : vector<8x32xf32>, vector<32x32xf32>, vector<8x32xf32> -> vector<8x32xf32>
    %779 = arith.addf %774, %778 : vector<8x32xf32>
    %cst_797 = arith.constant dense<0.000000e+00> : vector<8x32xf32>
    %780 = tpu.matmul %761, %773, %cst_797 {dimension_numbers = #tpu.dot_dimension_numbers<[1], [0], [0], [1], [0, 0, 1, 1], [], []>} : vector<8x8xf32>, vector<8x32xf32>, vector<8x32xf32> -> vector<8x32xf32>
    %c1_798 = arith.constant 1 : index
    %c0_799 = arith.constant 0 : index
    %c0_800 = arith.constant 0 : index
    %781 = vector.load %arg16[%c1_798, %c0_799, %c0_800] : memref<5x32x32xf32, #tpu.memory_space<vmem>>, vector<1x32x32xf32>
    %782 = vector.shape_cast %781 : vector<1x32x32xf32> to vector<32x32xf32>
    %cst_801 = arith.constant dense<0.000000e+00> : vector<8x32xf32>
    %783 = tpu.matmul %780, %782, %cst_801 {dimension_numbers = #tpu.dot_dimension_numbers<[1], [0], [0], [1], [0, 0, 1, 1], [], []>} : vector<8x32xf32>, vector<32x32xf32>, vector<8x32xf32> -> vector<8x32xf32>
    %784 = arith.addf %779, %783 : vector<8x32xf32>
    %cst_802 = arith.constant dense<0.000000e+00> : vector<8x32xf32>
    %785 = tpu.matmul %763, %773, %cst_802 {dimension_numbers = #tpu.dot_dimension_numbers<[1], [0], [0], [1], [0, 0, 1, 1], [], []>} : vector<8x8xf32>, vector<8x32xf32>, vector<8x32xf32> -> vector<8x32xf32>
    %c2_803 = arith.constant 2 : index
    %c0_804 = arith.constant 0 : index
    %c0_805 = arith.constant 0 : index
    %786 = vector.load %arg16[%c2_803, %c0_804, %c0_805] : memref<5x32x32xf32, #tpu.memory_space<vmem>>, vector<1x32x32xf32>
    %787 = vector.shape_cast %786 : vector<1x32x32xf32> to vector<32x32xf32>
    %cst_806 = arith.constant dense<0.000000e+00> : vector<8x32xf32>
    %788 = tpu.matmul %785, %787, %cst_806 {dimension_numbers = #tpu.dot_dimension_numbers<[1], [0], [0], [1], [0, 0, 1, 1], [], []>} : vector<8x32xf32>, vector<32x32xf32>, vector<8x32xf32> -> vector<8x32xf32>
    %789 = arith.addf %784, %788 : vector<8x32xf32>
    %cst_807 = arith.constant dense<0.000000e+00> : vector<8x32xf32>
    %790 = tpu.matmul %765, %773, %cst_807 {dimension_numbers = #tpu.dot_dimension_numbers<[1], [0], [0], [1], [0, 0, 1, 1], [], []>} : vector<8x8xf32>, vector<8x32xf32>, vector<8x32xf32> -> vector<8x32xf32>
    %c3_808 = arith.constant 3 : index
    %c0_809 = arith.constant 0 : index
    %c0_810 = arith.constant 0 : index
    %791 = vector.load %arg16[%c3_808, %c0_809, %c0_810] : memref<5x32x32xf32, #tpu.memory_space<vmem>>, vector<1x32x32xf32>
    %792 = vector.shape_cast %791 : vector<1x32x32xf32> to vector<32x32xf32>
    %cst_811 = arith.constant dense<0.000000e+00> : vector<8x32xf32>
    %793 = tpu.matmul %790, %792, %cst_811 {dimension_numbers = #tpu.dot_dimension_numbers<[1], [0], [0], [1], [0, 0, 1, 1], [], []>} : vector<8x32xf32>, vector<32x32xf32>, vector<8x32xf32> -> vector<8x32xf32>
    %794 = arith.addf %789, %793 : vector<8x32xf32>
    %cst_812 = arith.constant dense<0.000000e+00> : vector<8x32xf32>
    %795 = tpu.matmul %767, %773, %cst_812 {dimension_numbers = #tpu.dot_dimension_numbers<[1], [0], [0], [1], [0, 0, 1, 1], [], []>} : vector<8x8xf32>, vector<8x32xf32>, vector<8x32xf32> -> vector<8x32xf32>
    %c4_813 = arith.constant 4 : index
    %c0_814 = arith.constant 0 : index
    %c0_815 = arith.constant 0 : index
    %796 = vector.load %arg16[%c4_813, %c0_814, %c0_815] : memref<5x32x32xf32, #tpu.memory_space<vmem>>, vector<1x32x32xf32>
    %797 = vector.shape_cast %796 : vector<1x32x32xf32> to vector<32x32xf32>
    %cst_816 = arith.constant dense<0.000000e+00> : vector<8x32xf32>
    %798 = tpu.matmul %795, %797, %cst_816 {dimension_numbers = #tpu.dot_dimension_numbers<[1], [0], [0], [1], [0, 0, 1, 1], [], []>} : vector<8x32xf32>, vector<32x32xf32>, vector<8x32xf32> -> vector<8x32xf32>
    %799 = arith.addf %794, %798 : vector<8x32xf32>
    %800 = vector.broadcast %769 : vector<8x1xf32> to vector<8x32xf32>
    %801 = arith.mulf %799, %800 : vector<8x32xf32>
    %802 = vector.broadcast %771 : vector<8x1xf32> to vector<8x32xf32>
    %803 = arith.addf %801, %802 : vector<8x32xf32>
    %c5 = arith.constant 5 : index
    %c0_817 = arith.constant 0 : index
    %c0_818 = arith.constant 0 : index
    %c0_819 = arith.constant 0 : index
    %804 = vector.load %arg4[%c5, %c0_817, %c0_818, %c0_819] : memref<8x5x8x8xf32, #tpu.memory_space<vmem>>, vector<1x1x8x8xf32>
    %805 = vector.shape_cast %804 : vector<1x1x8x8xf32> to vector<8x8xf32>
    %c5_820 = arith.constant 5 : index
    %c1_821 = arith.constant 1 : index
    %c0_822 = arith.constant 0 : index
    %c0_823 = arith.constant 0 : index
    %806 = vector.load %arg4[%c5_820, %c1_821, %c0_822, %c0_823] : memref<8x5x8x8xf32, #tpu.memory_space<vmem>>, vector<1x1x8x8xf32>
    %807 = vector.shape_cast %806 : vector<1x1x8x8xf32> to vector<8x8xf32>
    %c5_824 = arith.constant 5 : index
    %c2_825 = arith.constant 2 : index
    %c0_826 = arith.constant 0 : index
    %c0_827 = arith.constant 0 : index
    %808 = vector.load %arg4[%c5_824, %c2_825, %c0_826, %c0_827] : memref<8x5x8x8xf32, #tpu.memory_space<vmem>>, vector<1x1x8x8xf32>
    %809 = vector.shape_cast %808 : vector<1x1x8x8xf32> to vector<8x8xf32>
    %c5_828 = arith.constant 5 : index
    %c3_829 = arith.constant 3 : index
    %c0_830 = arith.constant 0 : index
    %c0_831 = arith.constant 0 : index
    %810 = vector.load %arg4[%c5_828, %c3_829, %c0_830, %c0_831] : memref<8x5x8x8xf32, #tpu.memory_space<vmem>>, vector<1x1x8x8xf32>
    %811 = vector.shape_cast %810 : vector<1x1x8x8xf32> to vector<8x8xf32>
    %c5_832 = arith.constant 5 : index
    %c4_833 = arith.constant 4 : index
    %c0_834 = arith.constant 0 : index
    %c0_835 = arith.constant 0 : index
    %812 = vector.load %arg4[%c5_832, %c4_833, %c0_834, %c0_835] : memref<8x5x8x8xf32, #tpu.memory_space<vmem>>, vector<1x1x8x8xf32>
    %813 = vector.shape_cast %812 : vector<1x1x8x8xf32> to vector<8x8xf32>
    %c5_836 = arith.constant 5 : index
    %c0_837 = arith.constant 0 : index
    %c0_838 = arith.constant 0 : index
    %814 = vector.load %arg2[%c5_836, %c0_837, %c0_838] : memref<8x8x1xf32, #tpu.memory_space<vmem>>, vector<1x8x1xf32>
    %815 = vector.shape_cast %814 : vector<1x8x1xf32> to vector<8x1xf32>
    %c5_839 = arith.constant 5 : index
    %c0_840 = arith.constant 0 : index
    %c0_841 = arith.constant 0 : index
    %816 = vector.load %arg3[%c5_839, %c0_840, %c0_841] : memref<8x8x1xf32, #tpu.memory_space<vmem>>, vector<1x8x1xf32>
    %817 = vector.shape_cast %816 : vector<1x8x1xf32> to vector<8x1xf32>
    %cst_842 = arith.constant 0.000000e+00 : f32
    %818 = vector.broadcast %cst_842 : f32 to vector<8x32xf32>
    %819 = arith.maximumf %803, %818 : vector<8x32xf32>
    %cst_843 = arith.constant 0.000000e+00 : f32
    %820 = vector.broadcast %cst_843 : f32 to vector<8x32xf32>
    %cst_844 = arith.constant dense<0.000000e+00> : vector<8x32xf32>
    %821 = tpu.matmul %805, %819, %cst_844 {dimension_numbers = #tpu.dot_dimension_numbers<[1], [0], [0], [1], [0, 0, 1, 1], [], []>} : vector<8x8xf32>, vector<8x32xf32>, vector<8x32xf32> -> vector<8x32xf32>
    %c0_845 = arith.constant 0 : index
    %c0_846 = arith.constant 0 : index
    %c0_847 = arith.constant 0 : index
    %822 = vector.load %arg16[%c0_845, %c0_846, %c0_847] : memref<5x32x32xf32, #tpu.memory_space<vmem>>, vector<1x32x32xf32>
    %823 = vector.shape_cast %822 : vector<1x32x32xf32> to vector<32x32xf32>
    %cst_848 = arith.constant dense<0.000000e+00> : vector<8x32xf32>
    %824 = tpu.matmul %821, %823, %cst_848 {dimension_numbers = #tpu.dot_dimension_numbers<[1], [0], [0], [1], [0, 0, 1, 1], [], []>} : vector<8x32xf32>, vector<32x32xf32>, vector<8x32xf32> -> vector<8x32xf32>
    %825 = arith.addf %820, %824 : vector<8x32xf32>
    %cst_849 = arith.constant dense<0.000000e+00> : vector<8x32xf32>
    %826 = tpu.matmul %807, %819, %cst_849 {dimension_numbers = #tpu.dot_dimension_numbers<[1], [0], [0], [1], [0, 0, 1, 1], [], []>} : vector<8x8xf32>, vector<8x32xf32>, vector<8x32xf32> -> vector<8x32xf32>
    %c1_850 = arith.constant 1 : index
    %c0_851 = arith.constant 0 : index
    %c0_852 = arith.constant 0 : index
    %827 = vector.load %arg16[%c1_850, %c0_851, %c0_852] : memref<5x32x32xf32, #tpu.memory_space<vmem>>, vector<1x32x32xf32>
    %828 = vector.shape_cast %827 : vector<1x32x32xf32> to vector<32x32xf32>
    %cst_853 = arith.constant dense<0.000000e+00> : vector<8x32xf32>
    %829 = tpu.matmul %826, %828, %cst_853 {dimension_numbers = #tpu.dot_dimension_numbers<[1], [0], [0], [1], [0, 0, 1, 1], [], []>} : vector<8x32xf32>, vector<32x32xf32>, vector<8x32xf32> -> vector<8x32xf32>
    %830 = arith.addf %825, %829 : vector<8x32xf32>
    %cst_854 = arith.constant dense<0.000000e+00> : vector<8x32xf32>
    %831 = tpu.matmul %809, %819, %cst_854 {dimension_numbers = #tpu.dot_dimension_numbers<[1], [0], [0], [1], [0, 0, 1, 1], [], []>} : vector<8x8xf32>, vector<8x32xf32>, vector<8x32xf32> -> vector<8x32xf32>
    %c2_855 = arith.constant 2 : index
    %c0_856 = arith.constant 0 : index
    %c0_857 = arith.constant 0 : index
    %832 = vector.load %arg16[%c2_855, %c0_856, %c0_857] : memref<5x32x32xf32, #tpu.memory_space<vmem>>, vector<1x32x32xf32>
    %833 = vector.shape_cast %832 : vector<1x32x32xf32> to vector<32x32xf32>
    %cst_858 = arith.constant dense<0.000000e+00> : vector<8x32xf32>
    %834 = tpu.matmul %831, %833, %cst_858 {dimension_numbers = #tpu.dot_dimension_numbers<[1], [0], [0], [1], [0, 0, 1, 1], [], []>} : vector<8x32xf32>, vector<32x32xf32>, vector<8x32xf32> -> vector<8x32xf32>
    %835 = arith.addf %830, %834 : vector<8x32xf32>
    %cst_859 = arith.constant dense<0.000000e+00> : vector<8x32xf32>
    %836 = tpu.matmul %811, %819, %cst_859 {dimension_numbers = #tpu.dot_dimension_numbers<[1], [0], [0], [1], [0, 0, 1, 1], [], []>} : vector<8x8xf32>, vector<8x32xf32>, vector<8x32xf32> -> vector<8x32xf32>
    %c3_860 = arith.constant 3 : index
    %c0_861 = arith.constant 0 : index
    %c0_862 = arith.constant 0 : index
    %837 = vector.load %arg16[%c3_860, %c0_861, %c0_862] : memref<5x32x32xf32, #tpu.memory_space<vmem>>, vector<1x32x32xf32>
    %838 = vector.shape_cast %837 : vector<1x32x32xf32> to vector<32x32xf32>
    %cst_863 = arith.constant dense<0.000000e+00> : vector<8x32xf32>
    %839 = tpu.matmul %836, %838, %cst_863 {dimension_numbers = #tpu.dot_dimension_numbers<[1], [0], [0], [1], [0, 0, 1, 1], [], []>} : vector<8x32xf32>, vector<32x32xf32>, vector<8x32xf32> -> vector<8x32xf32>
    %840 = arith.addf %835, %839 : vector<8x32xf32>
    %cst_864 = arith.constant dense<0.000000e+00> : vector<8x32xf32>
    %841 = tpu.matmul %813, %819, %cst_864 {dimension_numbers = #tpu.dot_dimension_numbers<[1], [0], [0], [1], [0, 0, 1, 1], [], []>} : vector<8x8xf32>, vector<8x32xf32>, vector<8x32xf32> -> vector<8x32xf32>
    %c4_865 = arith.constant 4 : index
    %c0_866 = arith.constant 0 : index
    %c0_867 = arith.constant 0 : index
    %842 = vector.load %arg16[%c4_865, %c0_866, %c0_867] : memref<5x32x32xf32, #tpu.memory_space<vmem>>, vector<1x32x32xf32>
    %843 = vector.shape_cast %842 : vector<1x32x32xf32> to vector<32x32xf32>
    %cst_868 = arith.constant dense<0.000000e+00> : vector<8x32xf32>
    %844 = tpu.matmul %841, %843, %cst_868 {dimension_numbers = #tpu.dot_dimension_numbers<[1], [0], [0], [1], [0, 0, 1, 1], [], []>} : vector<8x32xf32>, vector<32x32xf32>, vector<8x32xf32> -> vector<8x32xf32>
    %845 = arith.addf %840, %844 : vector<8x32xf32>
    %846 = vector.broadcast %815 : vector<8x1xf32> to vector<8x32xf32>
    %847 = arith.mulf %845, %846 : vector<8x32xf32>
    %848 = vector.broadcast %817 : vector<8x1xf32> to vector<8x32xf32>
    %849 = arith.addf %847, %848 : vector<8x32xf32>
    %850 = arith.addf %849, %803 : vector<8x32xf32>
    %c6 = arith.constant 6 : index
    %c0_869 = arith.constant 0 : index
    %c0_870 = arith.constant 0 : index
    %c0_871 = arith.constant 0 : index
    %851 = vector.load %arg4[%c6, %c0_869, %c0_870, %c0_871] : memref<8x5x8x8xf32, #tpu.memory_space<vmem>>, vector<1x1x8x8xf32>
    %852 = vector.shape_cast %851 : vector<1x1x8x8xf32> to vector<8x8xf32>
    %c6_872 = arith.constant 6 : index
    %c1_873 = arith.constant 1 : index
    %c0_874 = arith.constant 0 : index
    %c0_875 = arith.constant 0 : index
    %853 = vector.load %arg4[%c6_872, %c1_873, %c0_874, %c0_875] : memref<8x5x8x8xf32, #tpu.memory_space<vmem>>, vector<1x1x8x8xf32>
    %854 = vector.shape_cast %853 : vector<1x1x8x8xf32> to vector<8x8xf32>
    %c6_876 = arith.constant 6 : index
    %c2_877 = arith.constant 2 : index
    %c0_878 = arith.constant 0 : index
    %c0_879 = arith.constant 0 : index
    %855 = vector.load %arg4[%c6_876, %c2_877, %c0_878, %c0_879] : memref<8x5x8x8xf32, #tpu.memory_space<vmem>>, vector<1x1x8x8xf32>
    %856 = vector.shape_cast %855 : vector<1x1x8x8xf32> to vector<8x8xf32>
    %c6_880 = arith.constant 6 : index
    %c3_881 = arith.constant 3 : index
    %c0_882 = arith.constant 0 : index
    %c0_883 = arith.constant 0 : index
    %857 = vector.load %arg4[%c6_880, %c3_881, %c0_882, %c0_883] : memref<8x5x8x8xf32, #tpu.memory_space<vmem>>, vector<1x1x8x8xf32>
    %858 = vector.shape_cast %857 : vector<1x1x8x8xf32> to vector<8x8xf32>
    %c6_884 = arith.constant 6 : index
    %c4_885 = arith.constant 4 : index
    %c0_886 = arith.constant 0 : index
    %c0_887 = arith.constant 0 : index
    %859 = vector.load %arg4[%c6_884, %c4_885, %c0_886, %c0_887] : memref<8x5x8x8xf32, #tpu.memory_space<vmem>>, vector<1x1x8x8xf32>
    %860 = vector.shape_cast %859 : vector<1x1x8x8xf32> to vector<8x8xf32>
    %c6_888 = arith.constant 6 : index
    %c0_889 = arith.constant 0 : index
    %c0_890 = arith.constant 0 : index
    %861 = vector.load %arg2[%c6_888, %c0_889, %c0_890] : memref<8x8x1xf32, #tpu.memory_space<vmem>>, vector<1x8x1xf32>
    %862 = vector.shape_cast %861 : vector<1x8x1xf32> to vector<8x1xf32>
    %c6_891 = arith.constant 6 : index
    %c0_892 = arith.constant 0 : index
    %c0_893 = arith.constant 0 : index
    %863 = vector.load %arg3[%c6_891, %c0_892, %c0_893] : memref<8x8x1xf32, #tpu.memory_space<vmem>>, vector<1x8x1xf32>
    %864 = vector.shape_cast %863 : vector<1x8x1xf32> to vector<8x1xf32>
    %cst_894 = arith.constant 0.000000e+00 : f32
    %865 = vector.broadcast %cst_894 : f32 to vector<8x32xf32>
    %866 = arith.maximumf %850, %865 : vector<8x32xf32>
    %cst_895 = arith.constant 0.000000e+00 : f32
    %867 = vector.broadcast %cst_895 : f32 to vector<8x32xf32>
    %cst_896 = arith.constant dense<0.000000e+00> : vector<8x32xf32>
    %868 = tpu.matmul %852, %866, %cst_896 {dimension_numbers = #tpu.dot_dimension_numbers<[1], [0], [0], [1], [0, 0, 1, 1], [], []>} : vector<8x8xf32>, vector<8x32xf32>, vector<8x32xf32> -> vector<8x32xf32>
    %c0_897 = arith.constant 0 : index
    %c0_898 = arith.constant 0 : index
    %c0_899 = arith.constant 0 : index
    %869 = vector.load %arg16[%c0_897, %c0_898, %c0_899] : memref<5x32x32xf32, #tpu.memory_space<vmem>>, vector<1x32x32xf32>
    %870 = vector.shape_cast %869 : vector<1x32x32xf32> to vector<32x32xf32>
    %cst_900 = arith.constant dense<0.000000e+00> : vector<8x32xf32>
    %871 = tpu.matmul %868, %870, %cst_900 {dimension_numbers = #tpu.dot_dimension_numbers<[1], [0], [0], [1], [0, 0, 1, 1], [], []>} : vector<8x32xf32>, vector<32x32xf32>, vector<8x32xf32> -> vector<8x32xf32>
    %872 = arith.addf %867, %871 : vector<8x32xf32>
    %cst_901 = arith.constant dense<0.000000e+00> : vector<8x32xf32>
    %873 = tpu.matmul %854, %866, %cst_901 {dimension_numbers = #tpu.dot_dimension_numbers<[1], [0], [0], [1], [0, 0, 1, 1], [], []>} : vector<8x8xf32>, vector<8x32xf32>, vector<8x32xf32> -> vector<8x32xf32>
    %c1_902 = arith.constant 1 : index
    %c0_903 = arith.constant 0 : index
    %c0_904 = arith.constant 0 : index
    %874 = vector.load %arg16[%c1_902, %c0_903, %c0_904] : memref<5x32x32xf32, #tpu.memory_space<vmem>>, vector<1x32x32xf32>
    %875 = vector.shape_cast %874 : vector<1x32x32xf32> to vector<32x32xf32>
    %cst_905 = arith.constant dense<0.000000e+00> : vector<8x32xf32>
    %876 = tpu.matmul %873, %875, %cst_905 {dimension_numbers = #tpu.dot_dimension_numbers<[1], [0], [0], [1], [0, 0, 1, 1], [], []>} : vector<8x32xf32>, vector<32x32xf32>, vector<8x32xf32> -> vector<8x32xf32>
    %877 = arith.addf %872, %876 : vector<8x32xf32>
    %cst_906 = arith.constant dense<0.000000e+00> : vector<8x32xf32>
    %878 = tpu.matmul %856, %866, %cst_906 {dimension_numbers = #tpu.dot_dimension_numbers<[1], [0], [0], [1], [0, 0, 1, 1], [], []>} : vector<8x8xf32>, vector<8x32xf32>, vector<8x32xf32> -> vector<8x32xf32>
    %c2_907 = arith.constant 2 : index
    %c0_908 = arith.constant 0 : index
    %c0_909 = arith.constant 0 : index
    %879 = vector.load %arg16[%c2_907, %c0_908, %c0_909] : memref<5x32x32xf32, #tpu.memory_space<vmem>>, vector<1x32x32xf32>
    %880 = vector.shape_cast %879 : vector<1x32x32xf32> to vector<32x32xf32>
    %cst_910 = arith.constant dense<0.000000e+00> : vector<8x32xf32>
    %881 = tpu.matmul %878, %880, %cst_910 {dimension_numbers = #tpu.dot_dimension_numbers<[1], [0], [0], [1], [0, 0, 1, 1], [], []>} : vector<8x32xf32>, vector<32x32xf32>, vector<8x32xf32> -> vector<8x32xf32>
    %882 = arith.addf %877, %881 : vector<8x32xf32>
    %cst_911 = arith.constant dense<0.000000e+00> : vector<8x32xf32>
    %883 = tpu.matmul %858, %866, %cst_911 {dimension_numbers = #tpu.dot_dimension_numbers<[1], [0], [0], [1], [0, 0, 1, 1], [], []>} : vector<8x8xf32>, vector<8x32xf32>, vector<8x32xf32> -> vector<8x32xf32>
    %c3_912 = arith.constant 3 : index
    %c0_913 = arith.constant 0 : index
    %c0_914 = arith.constant 0 : index
    %884 = vector.load %arg16[%c3_912, %c0_913, %c0_914] : memref<5x32x32xf32, #tpu.memory_space<vmem>>, vector<1x32x32xf32>
    %885 = vector.shape_cast %884 : vector<1x32x32xf32> to vector<32x32xf32>
    %cst_915 = arith.constant dense<0.000000e+00> : vector<8x32xf32>
    %886 = tpu.matmul %883, %885, %cst_915 {dimension_numbers = #tpu.dot_dimension_numbers<[1], [0], [0], [1], [0, 0, 1, 1], [], []>} : vector<8x32xf32>, vector<32x32xf32>, vector<8x32xf32> -> vector<8x32xf32>
    %887 = arith.addf %882, %886 : vector<8x32xf32>
    %cst_916 = arith.constant dense<0.000000e+00> : vector<8x32xf32>
    %888 = tpu.matmul %860, %866, %cst_916 {dimension_numbers = #tpu.dot_dimension_numbers<[1], [0], [0], [1], [0, 0, 1, 1], [], []>} : vector<8x8xf32>, vector<8x32xf32>, vector<8x32xf32> -> vector<8x32xf32>
    %c4_917 = arith.constant 4 : index
    %c0_918 = arith.constant 0 : index
    %c0_919 = arith.constant 0 : index
    %889 = vector.load %arg16[%c4_917, %c0_918, %c0_919] : memref<5x32x32xf32, #tpu.memory_space<vmem>>, vector<1x32x32xf32>
    %890 = vector.shape_cast %889 : vector<1x32x32xf32> to vector<32x32xf32>
    %cst_920 = arith.constant dense<0.000000e+00> : vector<8x32xf32>
    %891 = tpu.matmul %888, %890, %cst_920 {dimension_numbers = #tpu.dot_dimension_numbers<[1], [0], [0], [1], [0, 0, 1, 1], [], []>} : vector<8x32xf32>, vector<32x32xf32>, vector<8x32xf32> -> vector<8x32xf32>
    %892 = arith.addf %887, %891 : vector<8x32xf32>
    %893 = vector.broadcast %862 : vector<8x1xf32> to vector<8x32xf32>
    %894 = arith.mulf %892, %893 : vector<8x32xf32>
    %895 = vector.broadcast %864 : vector<8x1xf32> to vector<8x32xf32>
    %896 = arith.addf %894, %895 : vector<8x32xf32>
    %c7 = arith.constant 7 : index
    %c0_921 = arith.constant 0 : index
    %c0_922 = arith.constant 0 : index
    %c0_923 = arith.constant 0 : index
    %897 = vector.load %arg4[%c7, %c0_921, %c0_922, %c0_923] : memref<8x5x8x8xf32, #tpu.memory_space<vmem>>, vector<1x1x8x8xf32>
    %898 = vector.shape_cast %897 : vector<1x1x8x8xf32> to vector<8x8xf32>
    %c7_924 = arith.constant 7 : index
    %c1_925 = arith.constant 1 : index
    %c0_926 = arith.constant 0 : index
    %c0_927 = arith.constant 0 : index
    %899 = vector.load %arg4[%c7_924, %c1_925, %c0_926, %c0_927] : memref<8x5x8x8xf32, #tpu.memory_space<vmem>>, vector<1x1x8x8xf32>
    %900 = vector.shape_cast %899 : vector<1x1x8x8xf32> to vector<8x8xf32>
    %c7_928 = arith.constant 7 : index
    %c2_929 = arith.constant 2 : index
    %c0_930 = arith.constant 0 : index
    %c0_931 = arith.constant 0 : index
    %901 = vector.load %arg4[%c7_928, %c2_929, %c0_930, %c0_931] : memref<8x5x8x8xf32, #tpu.memory_space<vmem>>, vector<1x1x8x8xf32>
    %902 = vector.shape_cast %901 : vector<1x1x8x8xf32> to vector<8x8xf32>
    %c7_932 = arith.constant 7 : index
    %c3_933 = arith.constant 3 : index
    %c0_934 = arith.constant 0 : index
    %c0_935 = arith.constant 0 : index
    %903 = vector.load %arg4[%c7_932, %c3_933, %c0_934, %c0_935] : memref<8x5x8x8xf32, #tpu.memory_space<vmem>>, vector<1x1x8x8xf32>
    %904 = vector.shape_cast %903 : vector<1x1x8x8xf32> to vector<8x8xf32>
    %c7_936 = arith.constant 7 : index
    %c4_937 = arith.constant 4 : index
    %c0_938 = arith.constant 0 : index
    %c0_939 = arith.constant 0 : index
    %905 = vector.load %arg4[%c7_936, %c4_937, %c0_938, %c0_939] : memref<8x5x8x8xf32, #tpu.memory_space<vmem>>, vector<1x1x8x8xf32>
    %906 = vector.shape_cast %905 : vector<1x1x8x8xf32> to vector<8x8xf32>
    %c7_940 = arith.constant 7 : index
    %c0_941 = arith.constant 0 : index
    %c0_942 = arith.constant 0 : index
    %907 = vector.load %arg2[%c7_940, %c0_941, %c0_942] : memref<8x8x1xf32, #tpu.memory_space<vmem>>, vector<1x8x1xf32>
    %908 = vector.shape_cast %907 : vector<1x8x1xf32> to vector<8x1xf32>
    %c7_943 = arith.constant 7 : index
    %c0_944 = arith.constant 0 : index
    %c0_945 = arith.constant 0 : index
    %909 = vector.load %arg3[%c7_943, %c0_944, %c0_945] : memref<8x8x1xf32, #tpu.memory_space<vmem>>, vector<1x8x1xf32>
    %910 = vector.shape_cast %909 : vector<1x8x1xf32> to vector<8x1xf32>
    %cst_946 = arith.constant 0.000000e+00 : f32
    %911 = vector.broadcast %cst_946 : f32 to vector<8x32xf32>
    %912 = arith.maximumf %896, %911 : vector<8x32xf32>
    %cst_947 = arith.constant 0.000000e+00 : f32
    %913 = vector.broadcast %cst_947 : f32 to vector<8x32xf32>
    %cst_948 = arith.constant dense<0.000000e+00> : vector<8x32xf32>
    %914 = tpu.matmul %898, %912, %cst_948 {dimension_numbers = #tpu.dot_dimension_numbers<[1], [0], [0], [1], [0, 0, 1, 1], [], []>} : vector<8x8xf32>, vector<8x32xf32>, vector<8x32xf32> -> vector<8x32xf32>
    %c0_949 = arith.constant 0 : index
    %c0_950 = arith.constant 0 : index
    %c0_951 = arith.constant 0 : index
    %915 = vector.load %arg16[%c0_949, %c0_950, %c0_951] : memref<5x32x32xf32, #tpu.memory_space<vmem>>, vector<1x32x32xf32>
    %916 = vector.shape_cast %915 : vector<1x32x32xf32> to vector<32x32xf32>
    %cst_952 = arith.constant dense<0.000000e+00> : vector<8x32xf32>
    %917 = tpu.matmul %914, %916, %cst_952 {dimension_numbers = #tpu.dot_dimension_numbers<[1], [0], [0], [1], [0, 0, 1, 1], [], []>} : vector<8x32xf32>, vector<32x32xf32>, vector<8x32xf32> -> vector<8x32xf32>
    %918 = arith.addf %913, %917 : vector<8x32xf32>
    %cst_953 = arith.constant dense<0.000000e+00> : vector<8x32xf32>
    %919 = tpu.matmul %900, %912, %cst_953 {dimension_numbers = #tpu.dot_dimension_numbers<[1], [0], [0], [1], [0, 0, 1, 1], [], []>} : vector<8x8xf32>, vector<8x32xf32>, vector<8x32xf32> -> vector<8x32xf32>
    %c1_954 = arith.constant 1 : index
    %c0_955 = arith.constant 0 : index
    %c0_956 = arith.constant 0 : index
    %920 = vector.load %arg16[%c1_954, %c0_955, %c0_956] : memref<5x32x32xf32, #tpu.memory_space<vmem>>, vector<1x32x32xf32>
    %921 = vector.shape_cast %920 : vector<1x32x32xf32> to vector<32x32xf32>
    %cst_957 = arith.constant dense<0.000000e+00> : vector<8x32xf32>
    %922 = tpu.matmul %919, %921, %cst_957 {dimension_numbers = #tpu.dot_dimension_numbers<[1], [0], [0], [1], [0, 0, 1, 1], [], []>} : vector<8x32xf32>, vector<32x32xf32>, vector<8x32xf32> -> vector<8x32xf32>
    %923 = arith.addf %918, %922 : vector<8x32xf32>
    %cst_958 = arith.constant dense<0.000000e+00> : vector<8x32xf32>
    %924 = tpu.matmul %902, %912, %cst_958 {dimension_numbers = #tpu.dot_dimension_numbers<[1], [0], [0], [1], [0, 0, 1, 1], [], []>} : vector<8x8xf32>, vector<8x32xf32>, vector<8x32xf32> -> vector<8x32xf32>
    %c2_959 = arith.constant 2 : index
    %c0_960 = arith.constant 0 : index
    %c0_961 = arith.constant 0 : index
    %925 = vector.load %arg16[%c2_959, %c0_960, %c0_961] : memref<5x32x32xf32, #tpu.memory_space<vmem>>, vector<1x32x32xf32>
    %926 = vector.shape_cast %925 : vector<1x32x32xf32> to vector<32x32xf32>
    %cst_962 = arith.constant dense<0.000000e+00> : vector<8x32xf32>
    %927 = tpu.matmul %924, %926, %cst_962 {dimension_numbers = #tpu.dot_dimension_numbers<[1], [0], [0], [1], [0, 0, 1, 1], [], []>} : vector<8x32xf32>, vector<32x32xf32>, vector<8x32xf32> -> vector<8x32xf32>
    %928 = arith.addf %923, %927 : vector<8x32xf32>
    %cst_963 = arith.constant dense<0.000000e+00> : vector<8x32xf32>
    %929 = tpu.matmul %904, %912, %cst_963 {dimension_numbers = #tpu.dot_dimension_numbers<[1], [0], [0], [1], [0, 0, 1, 1], [], []>} : vector<8x8xf32>, vector<8x32xf32>, vector<8x32xf32> -> vector<8x32xf32>
    %c3_964 = arith.constant 3 : index
    %c0_965 = arith.constant 0 : index
    %c0_966 = arith.constant 0 : index
    %930 = vector.load %arg16[%c3_964, %c0_965, %c0_966] : memref<5x32x32xf32, #tpu.memory_space<vmem>>, vector<1x32x32xf32>
    %931 = vector.shape_cast %930 : vector<1x32x32xf32> to vector<32x32xf32>
    %cst_967 = arith.constant dense<0.000000e+00> : vector<8x32xf32>
    %932 = tpu.matmul %929, %931, %cst_967 {dimension_numbers = #tpu.dot_dimension_numbers<[1], [0], [0], [1], [0, 0, 1, 1], [], []>} : vector<8x32xf32>, vector<32x32xf32>, vector<8x32xf32> -> vector<8x32xf32>
    %933 = arith.addf %928, %932 : vector<8x32xf32>
    %cst_968 = arith.constant dense<0.000000e+00> : vector<8x32xf32>
    %934 = tpu.matmul %906, %912, %cst_968 {dimension_numbers = #tpu.dot_dimension_numbers<[1], [0], [0], [1], [0, 0, 1, 1], [], []>} : vector<8x8xf32>, vector<8x32xf32>, vector<8x32xf32> -> vector<8x32xf32>
    %c4_969 = arith.constant 4 : index
    %c0_970 = arith.constant 0 : index
    %c0_971 = arith.constant 0 : index
    %935 = vector.load %arg16[%c4_969, %c0_970, %c0_971] : memref<5x32x32xf32, #tpu.memory_space<vmem>>, vector<1x32x32xf32>
    %936 = vector.shape_cast %935 : vector<1x32x32xf32> to vector<32x32xf32>
    %cst_972 = arith.constant dense<0.000000e+00> : vector<8x32xf32>
    %937 = tpu.matmul %934, %936, %cst_972 {dimension_numbers = #tpu.dot_dimension_numbers<[1], [0], [0], [1], [0, 0, 1, 1], [], []>} : vector<8x32xf32>, vector<32x32xf32>, vector<8x32xf32> -> vector<8x32xf32>
    %938 = arith.addf %933, %937 : vector<8x32xf32>
    %939 = vector.broadcast %908 : vector<8x1xf32> to vector<8x32xf32>
    %940 = arith.mulf %938, %939 : vector<8x32xf32>
    %941 = vector.broadcast %910 : vector<8x1xf32> to vector<8x32xf32>
    %942 = arith.addf %940, %941 : vector<8x32xf32>
    %943 = arith.addf %942, %896 : vector<8x32xf32>
    %c0_973 = arith.constant 0 : index
    %c0_974 = arith.constant 0 : index
    %c0_975 = arith.constant 0 : index
    %944 = vector.load %arg34[%c0_973, %c0_974, %c0_975] : memref<5x3x8xf32, #tpu.memory_space<vmem>>, vector<1x3x8xf32>
    %945 = vector.shape_cast %944 : vector<1x3x8xf32> to vector<3x8xf32>
    %c1_976 = arith.constant 1 : index
    %c0_977 = arith.constant 0 : index
    %c0_978 = arith.constant 0 : index
    %946 = vector.load %arg34[%c1_976, %c0_977, %c0_978] : memref<5x3x8xf32, #tpu.memory_space<vmem>>, vector<1x3x8xf32>
    %947 = vector.shape_cast %946 : vector<1x3x8xf32> to vector<3x8xf32>
    %c2_979 = arith.constant 2 : index
    %c0_980 = arith.constant 0 : index
    %c0_981 = arith.constant 0 : index
    %948 = vector.load %arg34[%c2_979, %c0_980, %c0_981] : memref<5x3x8xf32, #tpu.memory_space<vmem>>, vector<1x3x8xf32>
    %949 = vector.shape_cast %948 : vector<1x3x8xf32> to vector<3x8xf32>
    %c3_982 = arith.constant 3 : index
    %c0_983 = arith.constant 0 : index
    %c0_984 = arith.constant 0 : index
    %950 = vector.load %arg34[%c3_982, %c0_983, %c0_984] : memref<5x3x8xf32, #tpu.memory_space<vmem>>, vector<1x3x8xf32>
    %951 = vector.shape_cast %950 : vector<1x3x8xf32> to vector<3x8xf32>
    %c4_985 = arith.constant 4 : index
    %c0_986 = arith.constant 0 : index
    %c0_987 = arith.constant 0 : index
    %952 = vector.load %arg34[%c4_985, %c0_986, %c0_987] : memref<5x3x8xf32, #tpu.memory_space<vmem>>, vector<1x3x8xf32>
    %953 = vector.shape_cast %952 : vector<1x3x8xf32> to vector<3x8xf32>
    %c0_988 = arith.constant 0 : index
    %c0_989 = arith.constant 0 : index
    %954 = vector.load %arg32[%c0_988, %c0_989] : memref<3x1xf32, #tpu.memory_space<vmem>>, vector<3x1xf32>
    %c0_990 = arith.constant 0 : index
    %c0_991 = arith.constant 0 : index
    %955 = vector.load %arg33[%c0_990, %c0_991] : memref<3x1xf32, #tpu.memory_space<vmem>>, vector<3x1xf32>
    %cst_992 = arith.constant 0.000000e+00 : f32
    %956 = vector.broadcast %cst_992 : f32 to vector<8x32xf32>
    %957 = arith.maximumf %943, %956 : vector<8x32xf32>
    %cst_993 = arith.constant 0.000000e+00 : f32
    %958 = vector.broadcast %cst_993 : f32 to vector<3x32xf32>
    %cst_994 = arith.constant dense<0.000000e+00> : vector<3x32xf32>
    %959 = tpu.matmul %945, %957, %cst_994 {dimension_numbers = #tpu.dot_dimension_numbers<[1], [0], [0], [1], [0, 0, 1, 1], [], []>} : vector<3x8xf32>, vector<8x32xf32>, vector<3x32xf32> -> vector<3x32xf32>
    %c0_995 = arith.constant 0 : index
    %c0_996 = arith.constant 0 : index
    %c0_997 = arith.constant 0 : index
    %960 = vector.load %arg16[%c0_995, %c0_996, %c0_997] : memref<5x32x32xf32, #tpu.memory_space<vmem>>, vector<1x32x32xf32>
    %961 = vector.shape_cast %960 : vector<1x32x32xf32> to vector<32x32xf32>
    %cst_998 = arith.constant dense<0.000000e+00> : vector<3x32xf32>
    %962 = tpu.matmul %959, %961, %cst_998 {dimension_numbers = #tpu.dot_dimension_numbers<[1], [0], [0], [1], [0, 0, 1, 1], [], []>} : vector<3x32xf32>, vector<32x32xf32>, vector<3x32xf32> -> vector<3x32xf32>
    %963 = arith.addf %958, %962 : vector<3x32xf32>
    %cst_999 = arith.constant dense<0.000000e+00> : vector<3x32xf32>
    %964 = tpu.matmul %947, %957, %cst_999 {dimension_numbers = #tpu.dot_dimension_numbers<[1], [0], [0], [1], [0, 0, 1, 1], [], []>} : vector<3x8xf32>, vector<8x32xf32>, vector<3x32xf32> -> vector<3x32xf32>
    %c1_1000 = arith.constant 1 : index
    %c0_1001 = arith.constant 0 : index
    %c0_1002 = arith.constant 0 : index
    %965 = vector.load %arg16[%c1_1000, %c0_1001, %c0_1002] : memref<5x32x32xf32, #tpu.memory_space<vmem>>, vector<1x32x32xf32>
    %966 = vector.shape_cast %965 : vector<1x32x32xf32> to vector<32x32xf32>
    %cst_1003 = arith.constant dense<0.000000e+00> : vector<3x32xf32>
    %967 = tpu.matmul %964, %966, %cst_1003 {dimension_numbers = #tpu.dot_dimension_numbers<[1], [0], [0], [1], [0, 0, 1, 1], [], []>} : vector<3x32xf32>, vector<32x32xf32>, vector<3x32xf32> -> vector<3x32xf32>
    %968 = arith.addf %963, %967 : vector<3x32xf32>
    %cst_1004 = arith.constant dense<0.000000e+00> : vector<3x32xf32>
    %969 = tpu.matmul %949, %957, %cst_1004 {dimension_numbers = #tpu.dot_dimension_numbers<[1], [0], [0], [1], [0, 0, 1, 1], [], []>} : vector<3x8xf32>, vector<8x32xf32>, vector<3x32xf32> -> vector<3x32xf32>
    %c2_1005 = arith.constant 2 : index
    %c0_1006 = arith.constant 0 : index
    %c0_1007 = arith.constant 0 : index
    %970 = vector.load %arg16[%c2_1005, %c0_1006, %c0_1007] : memref<5x32x32xf32, #tpu.memory_space<vmem>>, vector<1x32x32xf32>
    %971 = vector.shape_cast %970 : vector<1x32x32xf32> to vector<32x32xf32>
    %cst_1008 = arith.constant dense<0.000000e+00> : vector<3x32xf32>
    %972 = tpu.matmul %969, %971, %cst_1008 {dimension_numbers = #tpu.dot_dimension_numbers<[1], [0], [0], [1], [0, 0, 1, 1], [], []>} : vector<3x32xf32>, vector<32x32xf32>, vector<3x32xf32> -> vector<3x32xf32>
    %973 = arith.addf %968, %972 : vector<3x32xf32>
    %cst_1009 = arith.constant dense<0.000000e+00> : vector<3x32xf32>
    %974 = tpu.matmul %951, %957, %cst_1009 {dimension_numbers = #tpu.dot_dimension_numbers<[1], [0], [0], [1], [0, 0, 1, 1], [], []>} : vector<3x8xf32>, vector<8x32xf32>, vector<3x32xf32> -> vector<3x32xf32>
    %c3_1010 = arith.constant 3 : index
    %c0_1011 = arith.constant 0 : index
    %c0_1012 = arith.constant 0 : index
    %975 = vector.load %arg16[%c3_1010, %c0_1011, %c0_1012] : memref<5x32x32xf32, #tpu.memory_space<vmem>>, vector<1x32x32xf32>
    %976 = vector.shape_cast %975 : vector<1x32x32xf32> to vector<32x32xf32>
    %cst_1013 = arith.constant dense<0.000000e+00> : vector<3x32xf32>
    %977 = tpu.matmul %974, %976, %cst_1013 {dimension_numbers = #tpu.dot_dimension_numbers<[1], [0], [0], [1], [0, 0, 1, 1], [], []>} : vector<3x32xf32>, vector<32x32xf32>, vector<3x32xf32> -> vector<3x32xf32>
    %978 = arith.addf %973, %977 : vector<3x32xf32>
    %cst_1014 = arith.constant dense<0.000000e+00> : vector<3x32xf32>
    %979 = tpu.matmul %953, %957, %cst_1014 {dimension_numbers = #tpu.dot_dimension_numbers<[1], [0], [0], [1], [0, 0, 1, 1], [], []>} : vector<3x8xf32>, vector<8x32xf32>, vector<3x32xf32> -> vector<3x32xf32>
    %c4_1015 = arith.constant 4 : index
    %c0_1016 = arith.constant 0 : index
    %c0_1017 = arith.constant 0 : index
    %980 = vector.load %arg16[%c4_1015, %c0_1016, %c0_1017] : memref<5x32x32xf32, #tpu.memory_space<vmem>>, vector<1x32x32xf32>
    %981 = vector.shape_cast %980 : vector<1x32x32xf32> to vector<32x32xf32>
    %cst_1018 = arith.constant dense<0.000000e+00> : vector<3x32xf32>
    %982 = tpu.matmul %979, %981, %cst_1018 {dimension_numbers = #tpu.dot_dimension_numbers<[1], [0], [0], [1], [0, 0, 1, 1], [], []>} : vector<3x32xf32>, vector<32x32xf32>, vector<3x32xf32> -> vector<3x32xf32>
    %983 = arith.addf %978, %982 : vector<3x32xf32>
    %984 = vector.broadcast %954 : vector<3x1xf32> to vector<3x32xf32>
    %985 = arith.mulf %983, %984 : vector<3x32xf32>
    %986 = vector.broadcast %955 : vector<3x1xf32> to vector<3x32xf32>
    %987 = arith.addf %985, %986 : vector<3x32xf32>
    %988 = vector.extract_strided_slice %987 {offsets = [0, 0], sizes = [3, 16], strides = [1, 1]} : vector<3x32xf32> to vector<3x16xf32>
    %c0_1019 = arith.constant 0 : index
    %c0_1020 = arith.constant 0 : index
    %c0_1021 = arith.constant 0 : index
    %989 = vector.load %arg38[%c0_1019, %c0_1020, %c0_1021] : memref<2x3x16xf32, #tpu.memory_space<vmem>>, vector<1x3x16xf32>
    %990 = vector.shape_cast %989 : vector<1x3x16xf32> to vector<3x16xf32>
    %991 = vector.shape_cast %988 : vector<3x16xf32> to vector<1x3x16xf32>
    tpu.vector_store %arg38[%c0_1019, %c0_1020, %c0_1021], %991 {strides = array<i32>} : memref<2x3x16xf32, #tpu.memory_space<vmem>>, vector<1x3x16xf32>,
    %992 = vector.extract_strided_slice %987 {offsets = [0, 16], sizes = [3, 16], strides = [1, 1]} : vector<3x32xf32> to vector<3x16xf32>
    %c1_1022 = arith.constant 1 : index
    %c0_1023 = arith.constant 0 : index
    %c0_1024 = arith.constant 0 : index
    %993 = vector.load %arg38[%c1_1022, %c0_1023, %c0_1024] : memref<2x3x16xf32, #tpu.memory_space<vmem>>, vector<1x3x16xf32>
    %994 = vector.shape_cast %993 : vector<1x3x16xf32> to vector<3x16xf32>
    %995 = vector.shape_cast %992 : vector<3x16xf32> to vector<1x3x16xf32>
    tpu.vector_store %arg38[%c1_1022, %c0_1023, %c0_1024], %995 {strides = array<i32>} : memref<2x3x16xf32, #tpu.memory_space<vmem>>, vector<1x3x16xf32>,
    return
  }
}

</mosaic_0001>

<llo_original>
// kernel: generator_forward.1
$region0: #{generator_forward.1}
  #allocation0 [shape = 'u32[]', space=smem, size = 0x4, offset = 0x4, fixed_abs, tag = 'smem constant byte address 0x4 - core index']
  #allocation1 [shape = 'u32[72,128]{1,0:T(1,128)}', space=vmem, size = 0x9000, scoped, tag = 'internal scratch']
  %s0 = inlined_call_operand.smem [shape: u32[39], index: -1, kind: input, shape index: {}]
  %s1 = sld [smem:[%s0]]
  %s2 = scalar_lea.smem %s0, 1
  %s3 = sld [smem:[%s2]]
  %s4 = scalar_lea.smem %s0, 2
  %s5 = sld [smem:[%s4]]
  %s6 = scalar_lea.smem %s0, 3
  %s7 = sld [smem:[%s6]]
  %s8 = scalar_lea.smem %s0, 4
  %s9 = sld [smem:[%s8]]
  %s10 = scalar_lea.smem %s0, 5
  %s11 = sld [smem:[%s10]]
  %s12 = scalar_lea.smem %s0, 6
  %s13 = sld [smem:[%s12]]
  %s14 = scalar_lea.smem %s0, 7
  %s15 = sld [smem:[%s14]]
  %s16 = scalar_lea.smem %s0, 8
  %s17 = sld [smem:[%s16]]
  %s18 = scalar_lea.smem %s0, 9
  %s19 = sld [smem:[%s18]]
  %s20 = scalar_lea.smem %s0, 10
  %s21 = sld [smem:[%s20]]
  %s22 = scalar_lea.smem %s0, 11
  %s23 = sld [smem:[%s22]]
  %s24 = scalar_lea.smem %s0, 12
  %s25 = sld [smem:[%s24]]
  %s26 = scalar_lea.smem %s0, 13
  %s27 = sld [smem:[%s26]]
  %s28 = scalar_lea.smem %s0, 14
  %s29 = sld [smem:[%s28]]
  %s30 = scalar_lea.smem %s0, 15
  %s31 = sld [smem:[%s30]]
  %s32 = scalar_lea.smem %s0, 16
  %s33 = sld [smem:[%s32]]
  %s34 = scalar_lea.smem %s0, 17
  %s35 = sld [smem:[%s34]]
  %s36 = scalar_lea.smem %s0, 18
  %s37 = sld [smem:[%s36]]
  %s38 = scalar_lea.smem %s0, 19
  %s39 = sld [smem:[%s38]]
  %s40 = scalar_lea.smem %s0, 20
  %s41 = sld [smem:[%s40]]
  %s42 = scalar_lea.smem %s0, 21
  %s43 = sld [smem:[%s42]]
  %s44 = scalar_lea.smem %s0, 22
  %s45 = sld [smem:[%s44]]
  %s46 = scalar_lea.smem %s0, 23
  %s47 = sld [smem:[%s46]]
  %s48 = scalar_lea.smem %s0, 24
  %s49 = sld [smem:[%s48]]
  %s50 = scalar_lea.smem %s0, 25
  %s51 = sld [smem:[%s50]]
  %s52 = scalar_lea.smem %s0, 26
  %s53 = sld [smem:[%s52]]
  %s54 = scalar_lea.smem %s0, 27
  %s55 = sld [smem:[%s54]]
  %s56 = scalar_lea.smem %s0, 28
  %s57 = sld [smem:[%s56]]
  %s58 = scalar_lea.smem %s0, 29
  %s59 = sld [smem:[%s58]]
  %s60 = scalar_lea.smem %s0, 30
  %s61 = sld [smem:[%s60]]
  %s62 = scalar_lea.smem %s0, 31
  %s63 = sld [smem:[%s62]]
  %s64 = scalar_lea.smem %s0, 32
  %s65 = sld [smem:[%s64]]
  %s66 = scalar_lea.smem %s0, 33
  %s67 = sld [smem:[%s66]]
  %s68 = scalar_lea.smem %s0, 34
  %s69 = sld [smem:[%s68]]
  %s70 = scalar_lea.smem %s0, 35
  %s71 = sld [smem:[%s70]]
  %s72 = scalar_lea.smem %s0, 36
  %s73 = sld [smem:[%s72]]
  %s74 = scalar_lea.smem %s0, 37
  %s75 = sld [smem:[%s74]]
  %s76 = scalar_lea.smem %s0, 38
  %s77 = sld [smem:[%s76]]
  %s78 = sld [smem:[#allocation0]]
  $region294: #{generator_forward.1} parent=0
    _
  %s80 = ssub.s32 1, %s78
  %s81 = scalar_select 0, %s80, %s78
  $region1: #{generator_forward.1} parent=0
    #allocation2 [shape = 'u8[32768]{0}', space=vmem, size = 0x8000, scoped, tag = 'input window, operand 2, single buffered']
    #allocation3 [shape = 's32[1]{0}', space=sflag, size = 0x4, scoped, tag = 'scoped memory for generator_forward.1']
    #allocation4 [shape = 'u8[32768]{0}', space=vmem, size = 0x8000, scoped, tag = 'input window, operand 3, single buffered']
    #allocation5 [shape = 's32[1]{0}', space=sflag, size = 0x4, scoped, tag = 'scoped memory for generator_forward.1']
    #allocation6 [shape = 'u8[163840]{0}', space=vmem, size = 0x28000, scoped, tag = 'input window, operand 4, single buffered']
    #allocation7 [shape = 'u8[4096]{0}', space=vmem, size = 0x1000, scoped, tag = 'input window, operand 5, single buffered']
    #allocation8 [shape = 's32[1]{0}', space=sflag, size = 0x4, scoped, tag = 'scoped memory for generator_forward.1']
    #allocation9 [shape = 'u8[4096]{0}', space=vmem, size = 0x1000, scoped, tag = 'input window, operand 6, single buffered']
    #allocation10 [shape = 'u8[20480]{0}', space=vmem, size = 0x5000, scoped, tag = 'input window, operand 7, single buffered']
    #allocation11 [shape = 's32[1]{0}', space=sflag, size = 0x4, scoped, tag = 'scoped memory for generator_forward.1']
    #allocation12 [shape = 'u8[20480]{0}', space=vmem, size = 0x5000, scoped, tag = 'input window, operand 8, single buffered']
    #allocation13 [shape = 'u8[4096]{0}', space=vmem, size = 0x1000, scoped, tag = 'input window, operand 9, single buffered']
    #allocation14 [shape = 's32[1]{0}', space=sflag, size = 0x4, scoped, tag = 'scoped memory for generator_forward.1']
    #allocation15 [shape = 'u8[4096]{0}', space=vmem, size = 0x1000, scoped, tag = 'input window, operand 10, single buffered']
    #allocation16 [shape = 'u8[20480]{0}', space=vmem, size = 0x5000, scoped, tag = 'input window, operand 11, single buffered']
    #allocation17 [shape = 's32[1]{0}', space=sflag, size = 0x4, scoped, tag = 'scoped memory for generator_forward.1']
    #allocation18 [shape = 'u8[4096]{0}', space=vmem, size = 0x1000, scoped, tag = 'input window, operand 12, single buffered']
    #allocation19 [shape = 'u8[16384]{0}', space=vmem, size = 0x4000, scoped, tag = 'input window, operand 13, single buffered']
    #allocation20 [shape = 's32[1]{0}', space=sflag, size = 0x4, scoped, tag = 'scoped memory for generator_forward.1']
    #allocation21 [shape = 'u8[32768]{0}', space=vmem, size = 0x8000, scoped, tag = 'input window, operand 14, single buffered']
    #allocation22 [shape = 'u8[40960]{0}', space=vmem, size = 0xa000, scoped, tag = 'input window, operand 15, single buffered']
    #allocation23 [shape = 's32[1]{0}', space=sflag, size = 0x4, scoped, tag = 'scoped memory for generator_forward.1']
    #allocation24 [shape = 'u8[81920]{0}', space=vmem, size = 0x14000, scoped, tag = 'input window, operand 16, single buffered']
    #allocation25 [shape = 'u8[20480]{0}', space=vmem, size = 0x5000, scoped, tag = 'input window, operand 17, single buffered']
    #allocation26 [shape = 's32[1]{0}', space=sflag, size = 0x4, scoped, tag = 'scoped memory for generator_forward.1']
    #allocation27 [shape = 'u8[8192]{0}', space=vmem, size = 0x2000, scoped, tag = 'input window, operand 18, single buffered']
    #allocation28 [shape = 'u8[4096]{0}', space=vmem, size = 0x1000, scoped, tag = 'input window, operand 19, single buffered']
    #allocation29 [shape = 's32[1]{0}', space=sflag, size = 0x4, scoped, tag = 'scoped memory for generator_forward.1']
    #allocation30 [shape = 'u8[8192]{0}', space=vmem, size = 0x2000, scoped, tag = 'input window, operand 20, single buffered']
    #allocation31 [shape = 'u8[8192]{0}', space=vmem, size = 0x2000, scoped, tag = 'input window, operand 21, single buffered']
    #allocation32 [shape = 's32[1]{0}', space=sflag, size = 0x4, scoped, tag = 'scoped memory for generator_forward.1']
    #allocation33 [shape = 'u8[8192]{0}', space=vmem, size = 0x2000, scoped, tag = 'input window, operand 22, single buffered']
    #allocation34 [shape = 'u8[16384]{0}', space=vmem, size = 0x4000, scoped, tag = 'input window, operand 23, single buffered']
    #allocation35 [shape = 's32[1]{0}', space=sflag, size = 0x4, scoped, tag = 'scoped memory for generator_forward.1']
    #allocation36 [shape = 'u8[16384]{0}', space=vmem, size = 0x4000, scoped, tag = 'input window, operand 24, single buffered']
    #allocation37 [shape = 'u8[16384]{0}', space=vmem, size = 0x4000, scoped, tag = 'input window, operand 25, single buffered']
    #allocation38 [shape = 's32[1]{0}', space=sflag, size = 0x4, scoped, tag = 'scoped memory for generator_forward.1']
    #allocation39 [shape = 'u8[8192]{0}', space=vmem, size = 0x2000, scoped, tag = 'input window, operand 26, single buffered']
    #allocation40 [shape = 'u8[40960]{0}', space=vmem, size = 0xa000, scoped, tag = 'input window, operand 28, single buffered']
    #allocation41 [shape = 's32[1]{0}', space=sflag, size = 0x4, scoped, tag = 'scoped memory for generator_forward.1']
    #allocation42 [shape = 'u8[4096]{0}', space=vmem, size = 0x1000, scoped, tag = 'input window, operand 29, single buffered']
    #allocation43 [shape = 'u8[4096]{0}', space=vmem, size = 0x1000, scoped, tag = 'input window, operand 30, single buffered']
    #allocation44 [shape = 's32[1]{0}', space=sflag, size = 0x4, scoped, tag = 'scoped memory for generator_forward.1']
    #allocation45 [shape = 'u8[20480]{0}', space=vmem, size = 0x5000, scoped, tag = 'input window, operand 31, single buffered']
    #allocation46 [shape = 'u8[2048]{0}', space=vmem, size = 0x800, scoped, tag = 'input window, operand 33, single buffered']
    #allocation47 [shape = 's32[1]{0}', space=sflag, size = 0x4, scoped, tag = 'scoped memory for generator_forward.1']
    #allocation48 [shape = 'u8[10240]{0}', space=vmem, size = 0x2800, scoped, tag = 'input window, operand 34, single buffered']
    #allocation49 [shape = 'u8[16384]{0}', space=vmem, size = 0x4000, scoped, tag = 'input window, operand 35, single buffered']
    #allocation50 [shape = 's32[1]{0}', space=sflag, size = 0x4, scoped, tag = 'scoped memory for generator_forward.1']
    #allocation51 [shape = 'u8[81920]{0}', space=vmem, size = 0x14000, scoped, tag = 'input window, operand 37, single buffered']
    %82 = vsyncpa [#allocation3], 0
    %83 = vsyncpa [#allocation5], 0
    %84 = vsyncpa [#allocation8], 0
    %85 = vsyncpa [#allocation11], 0
    %86 = vsyncpa [#allocation14], 0
    %87 = vsyncpa [#allocation17], 0
    %88 = vsyncpa [#allocation20], 0
    %89 = vsyncpa [#allocation23], 0
    %90 = vsyncpa [#allocation26], 0
    %91 = vsyncpa [#allocation29], 0
    %92 = vsyncpa [#allocation32], 0
    %93 = vsyncpa [#allocation35], 0
    %94 = vsyncpa [#allocation38], 0
    %95 = vsyncpa [#allocation41], 0
    %96 = vsyncpa [#allocation44], 0
    %97 = vsyncpa [#allocation47], 0
    %98 = vsyncpa [#allocation50], 0
    // Predicated region
    $region2: #{generator_forward.1} parent=1 // pred_check
      _
    $region3: #{generator_forward.1} parent=1 // pred_check_branch
      %100 = sbr.rel (0) target = $region5
    $region4: #{generator_forward.1} parent=1 // pred_region
      _
    $region5: #{generator_forward.1} parent=1 // pred_fallthru
      _
    // Predicated region
    $region6: #{generator_forward.1} parent=1 // pred_check
      _
    $region7: #{generator_forward.1} parent=1 // pred_check_branch
      %102 = sbr.rel (0) target = $region9
    $region8: #{generator_forward.1} parent=1 // pred_region
      _
    $region9: #{generator_forward.1} parent=1 // pred_fallthru
      _
    // Predicated region
    $region10: #{generator_forward.1} parent=1 // pred_check
      _
    $region11: #{generator_forward.1} parent=1 // pred_check_branch
      %104 = sbr.rel (0) target = $region13
    $region12: #{generator_forward.1} parent=1 // pred_region
      %106 = vsyncadd [#allocation3], 0
      %s107 = sshll.u32 %s5, 4
      %s108 = int_to_ptr.hbm [resolvable:$true] %s107
      %s109 = sshll.u32 [#allocation2], 4
      %s110 = int_to_ptr.vmem [resolvable:$true] %s109
      %115 = dma.hbm_to_vmem [thread:$0]  %s108, 1024, %s110, [#allocation3], 128, 128, 8
    $region13: #{generator_forward.1} parent=1 // pred_fallthru
      _
    // Predicated region
    $region14: #{generator_forward.1} parent=1 // pred_check
      _
    $region15: #{generator_forward.1} parent=1 // pred_check_branch
      %117 = sbr.rel (0) target = $region17
    $region16: #{generator_forward.1} parent=1 // pred_region
      %119 = vsyncadd [#allocation5], 0
      %s120 = sshll.u32 %s7, 4
      %s121 = int_to_ptr.hbm [resolvable:$true] %s120
      %s122 = sshll.u32 [#allocation4], 4
      %s123 = int_to_ptr.vmem [resolvable:$true] %s122
      %128 = dma.hbm_to_vmem [thread:$0]  %s121, 1024, %s123, [#allocation5], 128, 128, 8
    $region17: #{generator_forward.1} parent=1 // pred_fallthru
      _
    // Predicated region
    $region18: #{generator_forward.1} parent=1 // pred_check
      _
    $region19: #{generator_forward.1} parent=1 // pred_check_branch
      %130 = sbr.rel (0) target = $region21
    $region20: #{generator_forward.1} parent=1 // pred_region
      %132 = vsyncadd [#allocation5], 0
      %s133 = sshll.u32 %s9, 4
      %s134 = int_to_ptr.hbm [resolvable:$true] %s133
      %s135 = sshll.u32 [#allocation6], 4
      %s136 = int_to_ptr.vmem [resolvable:$true] %s135
      %141 = dma.hbm_to_vmem [thread:$0]  %s134, 5120, %s136, [#allocation5], 128, 128, 8
    $region21: #{generator_forward.1} parent=1 // pred_fallthru
      _
    // Predicated region
    $region22: #{generator_forward.1} parent=1 // pred_check
      _
    $region23: #{generator_forward.1} parent=1 // pred_check_branch
      %143 = sbr.rel (0) target = $region25
    $region24: #{generator_forward.1} parent=1 // pred_region
      %145 = vsyncadd [#allocation8], 0
      %s147 = sshll.u32 %s11, 4
      %s148 = int_to_ptr.hbm [resolvable:$true] %s147
      %s149 = sshll.u32 [#allocation7], 4
      %s150 = int_to_ptr.vmem [resolvable:$true] %s149
      %152 = dma.hbm_to_vmem [thread:$0]  %s148, 128, %s150, [#allocation8]
    $region25: #{generator_forward.1} parent=1 // pred_fallthru
      _
    // Predicated region
    $region26: #{generator_forward.1} parent=1 // pred_check
      _
    $region27: #{generator_forward.1} parent=1 // pred_check_branch
      %154 = sbr.rel (0) target = $region29
    $region28: #{generator_forward.1} parent=1 // pred_region
      %156 = vsyncadd [#allocation8], 0
      %s158 = sshll.u32 %s13, 4
      %s159 = int_to_ptr.hbm [resolvable:$true] %s158
      %s160 = sshll.u32 [#allocation9], 4
      %s161 = int_to_ptr.vmem [resolvable:$true] %s160
      %163 = dma.hbm_to_vmem [thread:$0]  %s159, 128, %s161, [#allocation8]
    $region29: #{generator_forward.1} parent=1 // pred_fallthru
      _
    // Predicated region
    $region30: #{generator_forward.1} parent=1 // pred_check
      _
    $region31: #{generator_forward.1} parent=1 // pred_check_branch
      %165 = sbr.rel (0) target = $region33
    $region32: #{generator_forward.1} parent=1 // pred_region
      %167 = vsyncadd [#allocation11], 0
      %s168 = sshll.u32 %s15, 4
      %s169 = int_to_ptr.hbm [resolvable:$true] %s168
      %s170 = sshll.u32 [#allocation10], 4
      %s171 = int_to_ptr.vmem [resolvable:$true] %s170
      %176 = dma.hbm_to_vmem [thread:$0]  %s169, 640, %s171, [#allocation11], 128, 128, 8
    $region33: #{generator_forward.1} parent=1 // pred_fallthru
      _
    // Predicated region
    $region34: #{generator_forward.1} parent=1 // pred_check
      _
    $region35: #{generator_forward.1} parent=1 // pred_check_branch
      %178 = sbr.rel (0) target = $region37
    $region36: #{generator_forward.1} parent=1 // pred_region
      %180 = vsyncadd [#allocation11], 0
      %s181 = sshll.u32 %s17, 4
      %s182 = int_to_ptr.hbm [resolvable:$true] %s181
      %s183 = sshll.u32 [#allocation12], 4
      %s184 = int_to_ptr.vmem [resolvable:$true] %s183
      %189 = dma.hbm_to_vmem [thread:$0]  %s182, 640, %s184, [#allocation11], 128, 128, 8
    $region37: #{generator_forward.1} parent=1 // pred_fallthru
      _
    // Predicated region
    $region38: #{generator_forward.1} parent=1 // pred_check
      _
    $region39: #{generator_forward.1} parent=1 // pred_check_branch
      %191 = sbr.rel (0) target = $region41
    $region40: #{generator_forward.1} parent=1 // pred_region
      %193 = vsyncadd [#allocation14], 0
      %s195 = sshll.u32 %s19, 4
      %s196 = int_to_ptr.hbm [resolvable:$true] %s195
      %s197 = sshll.u32 [#allocation13], 4
      %s198 = int_to_ptr.vmem [resolvable:$true] %s197
      %200 = dma.hbm_to_vmem [thread:$0]  %s196, 128, %s198, [#allocation14]
    $region41: #{generator_forward.1} parent=1 // pred_fallthru
      _
    // Predicated region
    $region42: #{generator_forward.1} parent=1 // pred_check
      _
    $region43: #{generator_forward.1} parent=1 // pred_check_branch
      %202 = sbr.rel (0) target = $region45
    $region44: #{generator_forward.1} parent=1 // pred_region
      %204 = vsyncadd [#allocation14], 0
      %s206 = sshll.u32 %s21, 4
      %s207 = int_to_ptr.hbm [resolvable:$true] %s206
      %s208 = sshll.u32 [#allocation15], 4
      %s209 = int_to_ptr.vmem [resolvable:$true] %s208
      %211 = dma.hbm_to_vmem [thread:$0]  %s207, 128, %s209, [#allocation14]
    $region45: #{generator_forward.1} parent=1 // pred_fallthru
      _
    // Predicated region
    $region46: #{generator_forward.1} parent=1 // pred_check
      _
    $region47: #{generator_forward.1} parent=1 // pred_check_branch
      %213 = sbr.rel (0) target = $region49
    $region48: #{generator_forward.1} parent=1 // pred_region
      %215 = vsyncadd [#allocation17], 0
      %s216 = sshll.u32 %s23, 4
      %s217 = int_to_ptr.hbm [resolvable:$true] %s216
      %s218 = sshll.u32 [#allocation16], 4
      %s219 = int_to_ptr.vmem [resolvable:$true] %s218
      %224 = dma.hbm_to_vmem [thread:$0]  %s217, 640, %s219, [#allocation17], 128, 128, 8
    $region49: #{generator_forward.1} parent=1 // pred_fallthru
      _
    // Predicated region
    $region50: #{generator_forward.1} parent=1 // pred_check
      _
    $region51: #{generator_forward.1} parent=1 // pred_check_branch
      %226 = sbr.rel (0) target = $region53
    $region52: #{generator_forward.1} parent=1 // pred_region
      %228 = vsyncadd [#allocation17], 0
      %s229 = sshll.u32 %s25, 4
      %s230 = int_to_ptr.hbm [resolvable:$true] %s229
      %s231 = sshll.u32 [#allocation18], 4
      %s232 = int_to_ptr.vmem [resolvable:$true] %s231
      %237 = dma.hbm_to_vmem [thread:$0]  %s230, 128, %s232, [#allocation17], 32, 32, 2
    $region53: #{generator_forward.1} parent=1 // pred_fallthru
      _
    // Predicated region
    $region54: #{generator_forward.1} parent=1 // pred_check
      _
    $region55: #{generator_forward.1} parent=1 // pred_check_branch
      %239 = sbr.rel (0) target = $region57
    $region56: #{generator_forward.1} parent=1 // pred_region
      %241 = vsyncadd [#allocation20], 0
      %s242 = sshll.u32 %s27, 4
      %s243 = int_to_ptr.hbm [resolvable:$true] %s242
      %s244 = sshll.u32 [#allocation19], 4
      %s245 = int_to_ptr.vmem [resolvable:$true] %s244
      %250 = dma.hbm_to_vmem [thread:$0]  %s243, 512, %s245, [#allocation20], 128, 128, 8
    $region57: #{generator_forward.1} parent=1 // pred_fallthru
      _
    // Predicated region
    $region58: #{generator_forward.1} parent=1 // pred_check
      _
    $region59: #{generator_forward.1} parent=1 // pred_check_branch
      %252 = sbr.rel (0) target = $region61
    $region60: #{generator_forward.1} parent=1 // pred_region
      %254 = vsyncadd [#allocation20], 0
      %s255 = sshll.u32 %s29, 4
      %s256 = int_to_ptr.hbm [resolvable:$true] %s255
      %s257 = sshll.u32 [#allocation21], 4
      %s258 = int_to_ptr.vmem [resolvable:$true] %s257
      %263 = dma.hbm_to_vmem [thread:$0]  %s256, 1024, %s258, [#allocation20], 128, 128, 8
    $region61: #{generator_forward.1} parent=1 // pred_fallthru
      _
    // Predicated region
    $region62: #{generator_forward.1} parent=1 // pred_check
      _
    $region63: #{generator_forward.1} parent=1 // pred_check_branch
      %265 = sbr.rel (0) target = $region65
    $region64: #{generator_forward.1} parent=1 // pred_region
      %267 = vsyncadd [#allocation23], 0
      %s268 = sshll.u32 %s31, 4
      %s269 = int_to_ptr.hbm [resolvable:$true] %s268
      %s270 = sshll.u32 [#allocation22], 4
      %s271 = int_to_ptr.vmem [resolvable:$true] %s270
      %276 = dma.hbm_to_vmem [thread:$0]  %s269, 1280, %s271, [#allocation23], 128, 128, 8
    $region65: #{generator_forward.1} parent=1 // pred_fallthru
      _
    // Predicated region
    $region66: #{generator_forward.1} parent=1 // pred_check
      _
    $region67: #{generator_forward.1} parent=1 // pred_check_branch
      %278 = sbr.rel (0) target = $region69
    $region68: #{generator_forward.1} parent=1 // pred_region
      %280 = vsyncadd [#allocation23], 0
      %s281 = sshll.u32 %s33, 4
      %s282 = int_to_ptr.hbm [resolvable:$true] %s281
      %s283 = sshll.u32 [#allocation24], 4
      %s284 = int_to_ptr.vmem [resolvable:$true] %s283
      %289 = dma.hbm_to_vmem [thread:$0]  %s282, 2560, %s284, [#allocation23], 128, 128, 8
    $region69: #{generator_forward.1} parent=1 // pred_fallthru
      _
    // Predicated region
    $region70: #{generator_forward.1} parent=1 // pred_check
      _
    $region71: #{generator_forward.1} parent=1 // pred_check_branch
      %291 = sbr.rel (0) target = $region73
    $region72: #{generator_forward.1} parent=1 // pred_region
      %293 = vsyncadd [#allocation26], 0
      %s294 = sshll.u32 %s35, 4
      %s295 = int_to_ptr.hbm [resolvable:$true] %s294
      %s296 = sshll.u32 [#allocation25], 4
      %s297 = int_to_ptr.vmem [resolvable:$true] %s296
      %302 = dma.hbm_to_vmem [thread:$0]  %s295, 640, %s297, [#allocation26], 128, 128, 8
    $region73: #{generator_forward.1} parent=1 // pred_fallthru
      _
    // Predicated region
    $region74: #{generator_forward.1} parent=1 // pred_check
      _
    $region75: #{generator_forward.1} parent=1 // pred_check_branch
      %304 = sbr.rel (0) target = $region77
    $region76: #{generator_forward.1} parent=1 // pred_region
      %306 = vsyncadd [#allocation26], 0
      %s307 = sshll.u32 %s37, 4
      %s308 = int_to_ptr.hbm [resolvable:$true] %s307
      %s309 = sshll.u32 [#allocation27], 4
      %s310 = int_to_ptr.vmem [resolvable:$true] %s309
      %315 = dma.hbm_to_vmem [thread:$0]  %s308, 256, %s310, [#allocation26], 128, 128, 8
    $region77: #{generator_forward.1} parent=1 // pred_fallthru
      _
    // Predicated region
    $region78: #{generator_forward.1} parent=1 // pred_check
      _
    $region79: #{generator_forward.1} parent=1 // pred_check_branch
      %317 = sbr.rel (0) target = $region81
    $region80: #{generator_forward.1} parent=1 // pred_region
      %319 = vsyncadd [#allocation29], 0
      %s321 = sshll.u32 %s39, 4
      %s322 = int_to_ptr.hbm [resolvable:$true] %s321
      %s323 = sshll.u32 [#allocation28], 4
      %s324 = int_to_ptr.vmem [resolvable:$true] %s323
      %326 = dma.hbm_to_vmem [thread:$0]  %s322, 128, %s324, [#allocation29]
    $region81: #{generator_forward.1} parent=1 // pred_fallthru
      _
    // Predicated region
    $region82: #{generator_forward.1} parent=1 // pred_check
      _
    $region83: #{generator_forward.1} parent=1 // pred_check_branch
      %328 = sbr.rel (0) target = $region85
    $region84: #{generator_forward.1} parent=1 // pred_region
      %330 = vsyncadd [#allocation29], 0
      %s331 = sshll.u32 %s41, 4
      %s332 = int_to_ptr.hbm [resolvable:$true] %s331
      %s333 = sshll.u32 [#allocation30], 4
      %s334 = int_to_ptr.vmem [resolvable:$true] %s333
      %339 = dma.hbm_to_vmem [thread:$0]  %s332, 256, %s334, [#allocation29], 128, 128, 8
    $region85: #{generator_forward.1} parent=1 // pred_fallthru
      _
    // Predicated region
    $region86: #{generator_forward.1} parent=1 // pred_check
      _
    $region87: #{generator_forward.1} parent=1 // pred_check_branch
      %341 = sbr.rel (0) target = $region89
    $region88: #{generator_forward.1} parent=1 // pred_region
      %343 = vsyncadd [#allocation32], 0
      %s344 = sshll.u32 %s43, 4
      %s345 = int_to_ptr.hbm [resolvable:$true] %s344
      %s346 = sshll.u32 [#allocation31], 4
      %s347 = int_to_ptr.vmem [resolvable:$true] %s346
      %352 = dma.hbm_to_vmem [thread:$0]  %s345, 256, %s347, [#allocation32], 128, 128, 8
    $region89: #{generator_forward.1} parent=1 // pred_fallthru
      _
    // Predicated region
    $region90: #{generator_forward.1} parent=1 // pred_check
      _
    $region91: #{generator_forward.1} parent=1 // pred_check_branch
      %354 = sbr.rel (0) target = $region93
    $region92: #{generator_forward.1} parent=1 // pred_region
      %356 = vsyncadd [#allocation32], 0
      %s357 = sshll.u32 %s45, 4
      %s358 = int_to_ptr.hbm [resolvable:$true] %s357
      %s359 = sshll.u32 [#allocation33], 4
      %s360 = int_to_ptr.vmem [resolvable:$true] %s359
      %365 = dma.hbm_to_vmem [thread:$0]  %s358, 256, %s360, [#allocation32], 128, 128, 8
    $region93: #{generator_forward.1} parent=1 // pred_fallthru
      _
    // Predicated region
    $region94: #{generator_forward.1} parent=1 // pred_check
      _
    $region95: #{generator_forward.1} parent=1 // pred_check_branch
      %367 = sbr.rel (0) target = $region97
    $region96: #{generator_forward.1} parent=1 // pred_region
      %369 = vsyncadd [#allocation35], 0
      %s370 = sshll.u32 %s47, 4
      %s371 = int_to_ptr.hbm [resolvable:$true] %s370
      %s372 = sshll.u32 [#allocation34], 4
      %s373 = int_to_ptr.vmem [resolvable:$true] %s372
      %378 = dma.hbm_to_vmem [thread:$0]  %s371, 512, %s373, [#allocation35], 128, 128, 8
    $region97: #{generator_forward.1} parent=1 // pred_fallthru
      _
    // Predicated region
    $region98: #{generator_forward.1} parent=1 // pred_check
      _
    $region99: #{generator_forward.1} parent=1 // pred_check_branch
      %380 = sbr.rel (0) target = $region101
    $region100: #{generator_forward.1} parent=1 // pred_region
      %382 = vsyncadd [#allocation35], 0
      %s383 = sshll.u32 %s49, 4
      %s384 = int_to_ptr.hbm [resolvable:$true] %s383
      %s385 = sshll.u32 [#allocation36], 4
      %s386 = int_to_ptr.vmem [resolvable:$true] %s385
      %391 = dma.hbm_to_vmem [thread:$0]  %s384, 512, %s386, [#allocation35], 128, 128, 8
    $region101: #{generator_forward.1} parent=1 // pred_fallthru
      _
    // Predicated region
    $region102: #{generator_forward.1} parent=1 // pred_check
      _
    $region103: #{generator_forward.1} parent=1 // pred_check_branch
      %393 = sbr.rel (0) target = $region105
    $region104: #{generator_forward.1} parent=1 // pred_region
      %395 = vsyncadd [#allocation38], 0
      %s396 = sshll.u32 %s51, 4
      %s397 = int_to_ptr.hbm [resolvable:$true] %s396
      %s398 = sshll.u32 [#allocation37], 4
      %s399 = int_to_ptr.vmem [resolvable:$true] %s398
      %404 = dma.hbm_to_vmem [thread:$0]  %s397, 512, %s399, [#allocation38], 128, 128, 8
    $region105: #{generator_forward.1} parent=1 // pred_fallthru
      _
    // Predicated region
    $region106: #{generator_forward.1} parent=1 // pred_check
      _
    $region107: #{generator_forward.1} parent=1 // pred_check_branch
      %406 = sbr.rel (0) target = $region109
    $region108: #{generator_forward.1} parent=1 // pred_region
      %408 = vsyncadd [#allocation38], 0
      %s409 = sshll.u32 %s53, 4
      %s410 = int_to_ptr.hbm [resolvable:$true] %s409
      %s411 = sshll.u32 [#allocation39], 4
      %s412 = int_to_ptr.vmem [resolvable:$true] %s411
      %417 = dma.hbm_to_vmem [thread:$0]  %s410, 256, %s412, [#allocation38], 128, 128, 8
    $region109: #{generator_forward.1} parent=1 // pred_fallthru
      _
    // Predicated region
    $region110: #{generator_forward.1} parent=1 // pred_check
      _
    $region111: #{generator_forward.1} parent=1 // pred_check_branch
      %419 = sbr.rel (0) target = $region113
    $region112: #{generator_forward.1} parent=1 // pred_region
      _
    $region113: #{generator_forward.1} parent=1 // pred_fallthru
      _
    // Predicated region
    $region114: #{generator_forward.1} parent=1 // pred_check
      _
    $region115: #{generator_forward.1} parent=1 // pred_check_branch
      %421 = sbr.rel (0) target = $region117
    $region116: #{generator_forward.1} parent=1 // pred_region
      %423 = vsyncadd [#allocation41], 0
      %s424 = sshll.u32 %s57, 4
      %s425 = int_to_ptr.hbm [resolvable:$true] %s424
      %s426 = sshll.u32 [#allocation40], 4
      %s427 = int_to_ptr.vmem [resolvable:$true] %s426
      %432 = dma.hbm_to_vmem [thread:$0]  %s425, 1280, %s427, [#allocation41], 128, 128, 8
    $region117: #{generator_forward.1} parent=1 // pred_fallthru
      _
    // Predicated region
    $region118: #{generator_forward.1} parent=1 // pred_check
      _
    $region119: #{generator_forward.1} parent=1 // pred_check_branch
      %434 = sbr.rel (0) target = $region121
    $region120: #{generator_forward.1} parent=1 // pred_region
      %436 = vsyncadd [#allocation41], 0
      %s438 = sshll.u32 %s59, 4
      %s439 = int_to_ptr.hbm [resolvable:$true] %s438
      %s440 = sshll.u32 [#allocation42], 4
      %s441 = int_to_ptr.vmem [resolvable:$true] %s440
      %443 = dma.hbm_to_vmem [thread:$0]  %s439, 128, %s441, [#allocation41]
    $region121: #{generator_forward.1} parent=1 // pred_fallthru
      _
    // Predicated region
    $region122: #{generator_forward.1} parent=1 // pred_check
      _
    $region123: #{generator_forward.1} parent=1 // pred_check_branch
      %445 = sbr.rel (0) target = $region125
    $region124: #{generator_forward.1} parent=1 // pred_region
      %447 = vsyncadd [#allocation44], 0
      %s449 = sshll.u32 %s61, 4
      %s450 = int_to_ptr.hbm [resolvable:$true] %s449
      %s451 = sshll.u32 [#allocation43], 4
      %s452 = int_to_ptr.vmem [resolvable:$true] %s451
      %454 = dma.hbm_to_vmem [thread:$0]  %s450, 128, %s452, [#allocation44]
    $region125: #{generator_forward.1} parent=1 // pred_fallthru
      _
    // Predicated region
    $region126: #{generator_forward.1} parent=1 // pred_check
      _
    $region127: #{generator_forward.1} parent=1 // pred_check_branch
      %456 = sbr.rel (0) target = $region129
    $region128: #{generator_forward.1} parent=1 // pred_region
      %458 = vsyncadd [#allocation44], 0
      %s459 = sshll.u32 %s63, 4
      %s460 = int_to_ptr.hbm [resolvable:$true] %s459
      %s461 = sshll.u32 [#allocation45], 4
      %s462 = int_to_ptr.vmem [resolvable:$true] %s461
      %467 = dma.hbm_to_vmem [thread:$0]  %s460, 640, %s462, [#allocation44], 128, 128, 8
    $region129: #{generator_forward.1} parent=1 // pred_fallthru
      _
    // Predicated region
    $region130: #{generator_forward.1} parent=1 // pred_check
      _
    $region131: #{generator_forward.1} parent=1 // pred_check_branch
      %469 = sbr.rel (0) target = $region133
    $region132: #{generator_forward.1} parent=1 // pred_region
      _
    $region133: #{generator_forward.1} parent=1 // pred_fallthru
      _
    // Predicated region
    $region134: #{generator_forward.1} parent=1 // pred_check
      _
    $region135: #{generator_forward.1} parent=1 // pred_check_branch
      %471 = sbr.rel (0) target = $region137
    $region136: #{generator_forward.1} parent=1 // pred_region
      %473 = vsyncadd [#allocation47], 0
      %s475 = sshll.u32 %s67, 4
      %s476 = int_to_ptr.hbm [resolvable:$true] %s475
      %s477 = sshll.u32 [#allocation46], 4
      %s478 = int_to_ptr.vmem [resolvable:$true] %s477
      %480 = dma.hbm_to_vmem [thread:$0]  %s476, 64, %s478, [#allocation47]
    $region137: #{generator_forward.1} parent=1 // pred_fallthru
      _
    // Predicated region
    $region138: #{generator_forward.1} parent=1 // pred_check
      _
    $region139: #{generator_forward.1} parent=1 // pred_check_branch
      %482 = sbr.rel (0) target = $region141
    $region140: #{generator_forward.1} parent=1 // pred_region
      %484 = vsyncadd [#allocation47], 0
      %s485 = sshll.u32 %s69, 4
      %s486 = int_to_ptr.hbm [resolvable:$true] %s485
      %s487 = sshll.u32 [#allocation48], 4
      %s488 = int_to_ptr.vmem [resolvable:$true] %s487
      %493 = dma.hbm_to_vmem [thread:$0]  %s486, 320, %s488, [#allocation47], 64, 64, 4
    $region141: #{generator_forward.1} parent=1 // pred_fallthru
      _
    // Predicated region
    $region142: #{generator_forward.1} parent=1 // pred_check
      _
    $region143: #{generator_forward.1} parent=1 // pred_check_branch
      %495 = sbr.rel (0) target = $region145
    $region144: #{generator_forward.1} parent=1 // pred_region
      %497 = vsyncadd [#allocation50], 0
      %s498 = sshll.u32 %s71, 4
      %s499 = int_to_ptr.hbm [resolvable:$true] %s498
      %s500 = sshll.u32 [#allocation49], 4
      %s501 = int_to_ptr.vmem [resolvable:$true] %s500
      %506 = dma.hbm_to_vmem [thread:$0]  %s499, 512, %s501, [#allocation50], 128, 128, 8
    $region145: #{generator_forward.1} parent=1 // pred_fallthru
      _
    // Predicated region
    $region146: #{generator_forward.1} parent=1 // pred_check
      _
    $region147: #{generator_forward.1} parent=1 // pred_check_branch
      %508 = sbr.rel (0) target = $region149
    $region148: #{generator_forward.1} parent=1 // pred_region
      _
    $region149: #{generator_forward.1} parent=1 // pred_fallthru
      _
    // Predicated region
    $region150: #{generator_forward.1} parent=1 // pred_check
      _
    $region151: #{generator_forward.1} parent=1 // pred_check_branch
      %510 = sbr.rel (0) target = $region153
    $region152: #{generator_forward.1} parent=1 // pred_region
      %512 = vsyncadd [#allocation50], 0
      %s513 = sshll.u32 %s75, 4
      %s514 = int_to_ptr.hbm [resolvable:$true] %s513
      %s515 = sshll.u32 [#allocation51], 4
      %s516 = int_to_ptr.vmem [resolvable:$true] %s515
      %521 = dma.hbm_to_vmem [thread:$0]  %s514, 2560, %s516, [#allocation50], 128, 128, 8
    $region153: #{generator_forward.1} parent=1 // pred_fallthru
      _
    // Predicated region
    $region154: #{generator_forward.1} parent=1 // pred_check
      _
    $region155: #{generator_forward.1} parent=1 // pred_check_branch
      %523 = sbr.rel (0) target = $region157
    $region156: #{generator_forward.1} parent=1 // pred_region
      %525 = dma.done [#allocation3], 1024
    $region157: #{generator_forward.1} parent=1 // pred_fallthru
      _
    // Predicated region
    $region158: #{generator_forward.1} parent=1 // pred_check
      _
    $region159: #{generator_forward.1} parent=1 // pred_check_branch
      %527 = sbr.rel (0) target = $region161
    $region160: #{generator_forward.1} parent=1 // pred_region
      %529 = dma.done [#allocation5], 1024
    $region161: #{generator_forward.1} parent=1 // pred_fallthru
      _
    // Predicated region
    $region162: #{generator_forward.1} parent=1 // pred_check
      _
    $region163: #{generator_forward.1} parent=1 // pred_check_branch
      %531 = sbr.rel (0) target = $region165
    $region164: #{generator_forward.1} parent=1 // pred_region
      %533 = dma.done [#allocation5], 5120
    $region165: #{generator_forward.1} parent=1 // pred_fallthru
      _
    // Predicated region
    $region166: #{generator_forward.1} parent=1 // pred_check
      _
    $region167: #{generator_forward.1} parent=1 // pred_check_branch
      %535 = sbr.rel (0) target = $region169
    $region168: #{generator_forward.1} parent=1 // pred_region
      %537 = dma.done [#allocation8], 128
    $region169: #{generator_forward.1} parent=1 // pred_fallthru
      _
    // Predicated region
    $region170: #{generator_forward.1} parent=1 // pred_check
      _
    $region171: #{generator_forward.1} parent=1 // pred_check_branch
      %539 = sbr.rel (0) target = $region173
    $region172: #{generator_forward.1} parent=1 // pred_region
      %541 = dma.done [#allocation8], 128
    $region173: #{generator_forward.1} parent=1 // pred_fallthru
      _
    // Predicated region
    $region174: #{generator_forward.1} parent=1 // pred_check
      _
    $region175: #{generator_forward.1} parent=1 // pred_check_branch
      %543 = sbr.rel (0) target = $region177
    $region176: #{generator_forward.1} parent=1 // pred_region
      %545 = dma.done [#allocation11], 640
    $region177: #{generator_forward.1} parent=1 // pred_fallthru
      _
    // Predicated region
    $region178: #{generator_forward.1} parent=1 // pred_check
      _
    $region179: #{generator_forward.1} parent=1 // pred_check_branch
      %547 = sbr.rel (0) target = $region181
    $region180: #{generator_forward.1} parent=1 // pred_region
      %549 = dma.done [#allocation11], 640
    $region181: #{generator_forward.1} parent=1 // pred_fallthru
      _
    // Predicated region
    $region182: #{generator_forward.1} parent=1 // pred_check
      _
    $region183: #{generator_forward.1} parent=1 // pred_check_branch
      %551 = sbr.rel (0) target = $region185
    $region184: #{generator_forward.1} parent=1 // pred_region
      %553 = dma.done [#allocation14], 128
    $region185: #{generator_forward.1} parent=1 // pred_fallthru
      _
    // Predicated region
    $region186: #{generator_forward.1} parent=1 // pred_check
      _
    $region187: #{generator_forward.1} parent=1 // pred_check_branch
      %555 = sbr.rel (0) target = $region189
    $region188: #{generator_forward.1} parent=1 // pred_region
      %557 = dma.done [#allocation14], 128
    $region189: #{generator_forward.1} parent=1 // pred_fallthru
      _
    // Predicated region
    $region190: #{generator_forward.1} parent=1 // pred_check
      _
    $region191: #{generator_forward.1} parent=1 // pred_check_branch
      %559 = sbr.rel (0) target = $region193
    $region192: #{generator_forward.1} parent=1 // pred_region
      %561 = dma.done [#allocation17], 640
    $region193: #{generator_forward.1} parent=1 // pred_fallthru
      _
    // Predicated region
    $region194: #{generator_forward.1} parent=1 // pred_check
      _
    $region195: #{generator_forward.1} parent=1 // pred_check_branch
      %563 = sbr.rel (0) target = $region197
    $region196: #{generator_forward.1} parent=1 // pred_region
      %565 = dma.done [#allocation17], 128
    $region197: #{generator_forward.1} parent=1 // pred_fallthru
      _
    // Predicated region
    $region198: #{generator_forward.1} parent=1 // pred_check
      _
    $region199: #{generator_forward.1} parent=1 // pred_check_branch
      %567 = sbr.rel (0) target = $region201
    $region200: #{generator_forward.1} parent=1 // pred_region
      %569 = dma.done [#allocation20], 512
    $region201: #{generator_forward.1} parent=1 // pred_fallthru
      _
    // Predicated region
    $region202: #{generator_forward.1} parent=1 // pred_check
      _
    $region203: #{generator_forward.1} parent=1 // pred_check_branch
      %571 = sbr.rel (0) target = $region205
    $region204: #{generator_forward.1} parent=1 // pred_region
      %573 = dma.done [#allocation20], 1024
    $region205: #{generator_forward.1} parent=1 // pred_fallthru
      _
    // Predicated region
    $region206: #{generator_forward.1} parent=1 // pred_check
      _
    $region207: #{generator_forward.1} parent=1 // pred_check_branch
      %575 = sbr.rel (0) target = $region209
    $region208: #{generator_forward.1} parent=1 // pred_region
      %577 = dma.done [#allocation23], 1280
    $region209: #{generator_forward.1} parent=1 // pred_fallthru
      _
    // Predicated region
    $region210: #{generator_forward.1} parent=1 // pred_check
      _
    $region211: #{generator_forward.1} parent=1 // pred_check_branch
      %579 = sbr.rel (0) target = $region213
    $region212: #{generator_forward.1} parent=1 // pred_region
      %581 = dma.done [#allocation23], 2560
    $region213: #{generator_forward.1} parent=1 // pred_fallthru
      _
    // Predicated region
    $region214: #{generator_forward.1} parent=1 // pred_check
      _
    $region215: #{generator_forward.1} parent=1 // pred_check_branch
      %583 = sbr.rel (0) target = $region217
    $region216: #{generator_forward.1} parent=1 // pred_region
      %585 = dma.done [#allocation26], 640
    $region217: #{generator_forward.1} parent=1 // pred_fallthru
      _
    // Predicated region
    $region218: #{generator_forward.1} parent=1 // pred_check
      _
    $region219: #{generator_forward.1} parent=1 // pred_check_branch
      %587 = sbr.rel (0) target = $region221
    $region220: #{generator_forward.1} parent=1 // pred_region
      %589 = dma.done [#allocation26], 256
    $region221: #{generator_forward.1} parent=1 // pred_fallthru
      _
    // Predicated region
    $region222: #{generator_forward.1} parent=1 // pred_check
      _
    $region223: #{generator_forward.1} parent=1 // pred_check_branch
      %591 = sbr.rel (0) target = $region225
    $region224: #{generator_forward.1} parent=1 // pred_region
      %593 = dma.done [#allocation29], 128
    $region225: #{generator_forward.1} parent=1 // pred_fallthru
      _
    // Predicated region
    $region226: #{generator_forward.1} parent=1 // pred_check
      _
    $region227: #{generator_forward.1} parent=1 // pred_check_branch
      %595 = sbr.rel (0) target = $region229
    $region228: #{generator_forward.1} parent=1 // pred_region
      %597 = dma.done [#allocation29], 256
    $region229: #{generator_forward.1} parent=1 // pred_fallthru
      _
    // Predicated region
    $region230: #{generator_forward.1} parent=1 // pred_check
      _
    $region231: #{generator_forward.1} parent=1 // pred_check_branch
      %599 = sbr.rel (0) target = $region233
    $region232: #{generator_forward.1} parent=1 // pred_region
      %601 = dma.done [#allocation32], 256
    $region233: #{generator_forward.1} parent=1 // pred_fallthru
      _
    // Predicated region
    $region234: #{generator_forward.1} parent=1 // pred_check
      _
    $region235: #{generator_forward.1} parent=1 // pred_check_branch
      %603 = sbr.rel (0) target = $region237
    $region236: #{generator_forward.1} parent=1 // pred_region
      %605 = dma.done [#allocation32], 256
    $region237: #{generator_forward.1} parent=1 // pred_fallthru
      _
    // Predicated region
    $region238: #{generator_forward.1} parent=1 // pred_check
      _
    $region239: #{generator_forward.1} parent=1 // pred_check_branch
      %607 = sbr.rel (0) target = $region241
    $region240: #{generator_forward.1} parent=1 // pred_region
      %609 = dma.done [#allocation35], 512
    $region241: #{generator_forward.1} parent=1 // pred_fallthru
      _
    // Predicated region
    $region242: #{generator_forward.1} parent=1 // pred_check
      _
    $region243: #{generator_forward.1} parent=1 // pred_check_branch
      %611 = sbr.rel (0) target = $region245
    $region244: #{generator_forward.1} parent=1 // pred_region
      %613 = dma.done [#allocation35], 512
    $region245: #{generator_forward.1} parent=1 // pred_fallthru
      _
    // Predicated region
    $region246: #{generator_forward.1} parent=1 // pred_check
      _
    $region247: #{generator_forward.1} parent=1 // pred_check_branch
      %615 = sbr.rel (0) target = $region249
    $region248: #{generator_forward.1} parent=1 // pred_region
      %617 = dma.done [#allocation38], 512
    $region249: #{generator_forward.1} parent=1 // pred_fallthru
      _
    // Predicated region
    $region250: #{generator_forward.1} parent=1 // pred_check
      _
    $region251: #{generator_forward.1} parent=1 // pred_check_branch
      %619 = sbr.rel (0) target = $region253
    $region252: #{generator_forward.1} parent=1 // pred_region
      %621 = dma.done [#allocation38], 256
    $region253: #{generator_forward.1} parent=1 // pred_fallthru
      _
    // Predicated region
    $region254: #{generator_forward.1} parent=1 // pred_check
      _
    $region255: #{generator_forward.1} parent=1 // pred_check_branch
      %623 = sbr.rel (0) target = $region257
    $region256: #{generator_forward.1} parent=1 // pred_region
      %625 = dma.done [#allocation41], 1280
    $region257: #{generator_forward.1} parent=1 // pred_fallthru
      _
    // Predicated region
    $region258: #{generator_forward.1} parent=1 // pred_check
      _
    $region259: #{generator_forward.1} parent=1 // pred_check_branch
      %627 = sbr.rel (0) target = $region261
    $region260: #{generator_forward.1} parent=1 // pred_region
      %629 = dma.done [#allocation41], 128
    $region261: #{generator_forward.1} parent=1 // pred_fallthru
      _
    // Predicated region
    $region262: #{generator_forward.1} parent=1 // pred_check
      _
    $region263: #{generator_forward.1} parent=1 // pred_check_branch
      %631 = sbr.rel (0) target = $region265
    $region264: #{generator_forward.1} parent=1 // pred_region
      %633 = dma.done [#allocation44], 128
    $region265: #{generator_forward.1} parent=1 // pred_fallthru
      _
    // Predicated region
    $region266: #{generator_forward.1} parent=1 // pred_check
      _
    $region267: #{generator_forward.1} parent=1 // pred_check_branch
      %635 = sbr.rel (0) target = $region269
    $region268: #{generator_forward.1} parent=1 // pred_region
      %637 = dma.done [#allocation44], 640
    $region269: #{generator_forward.1} parent=1 // pred_fallthru
      _
    // Predicated region
    $region270: #{generator_forward.1} parent=1 // pred_check
      _
    $region271: #{generator_forward.1} parent=1 // pred_check_branch
      %639 = sbr.rel (0) target = $region273
    $region272: #{generator_forward.1} parent=1 // pred_region
      %641 = dma.done [#allocation47], 64
    $region273: #{generator_forward.1} parent=1 // pred_fallthru
      _
    // Predicated region
    $region274: #{generator_forward.1} parent=1 // pred_check
      _
    $region275: #{generator_forward.1} parent=1 // pred_check_branch
      %643 = sbr.rel (0) target = $region277
    $region276: #{generator_forward.1} parent=1 // pred_region
      %645 = dma.done [#allocation47], 320
    $region277: #{generator_forward.1} parent=1 // pred_fallthru
      _
    // Predicated region
    $region278: #{generator_forward.1} parent=1 // pred_check
      _
    $region279: #{generator_forward.1} parent=1 // pred_check_branch
      %647 = sbr.rel (0) target = $region281
    $region280: #{generator_forward.1} parent=1 // pred_region
      %649 = dma.done [#allocation50], 512
    $region281: #{generator_forward.1} parent=1 // pred_fallthru
      _
    // Predicated region
    $region282: #{generator_forward.1} parent=1 // pred_check
      _
    $region283: #{generator_forward.1} parent=1 // pred_check_branch
      %651 = sbr.rel (0) target = $region285
    $region284: #{generator_forward.1} parent=1 // pred_region
      %653 = dma.done [#allocation50], 2560
    $region285: #{generator_forward.1} parent=1 // pred_fallthru
      _
    %v654 = vld [vmem:[%s1] sm:$0xff]
    %v655 = vld [vmem:[#allocation33] sm:$0xff]
    %v656 = vld [vmem:[#allocation33 + $0x8] sm:$0xff]
    %vm657 = vcmask 64512
    %v659 = vsel %vm657, %v655, 0
    %v662 = vsel %vm657, %v656, 0
    %664 = vmatpush.msra.mxu0 0.0
    %665 = vmatpush.msra.mxu0 0.0
    %666 = vmatpush.msra.mxu0 0.0
    %667 = vmatpush.msra.mxu0 0.0
    %668 = vmatpush.msra.mxu0 0.0
    %669 = vmatpush.msra.mxu0 0.0
    %670 = vmatpush.msra.mxu0 0.0
    %671 = vmatpush.msra.mxu0 0.0
    %672 = vmatpush.msra.mxu0 0.0
    %673 = vmatpush.msra.mxu0 0.0
    %674 = vmatpush.msra.mxu0 0.0
    %675 = vmatpush.msra.mxu0 0.0
    %676 = vmatpush.msra.mxu0 0.0
    %677 = vmatpush.msra.mxu0 0.0
    %678 = vmatpush.msra.mxu0 0.0
    %679 = vmatpush.msra.mxu0 %v654
    %680 = vmatmul.f32.gmra.mxu0 %v659
    %v681 = vpop.f32.mrf.mxu0
    %v682 = vadd.f32 0.0, %v681
    %683 = vmatmul.f32.gmra.mxu0 %v662
    %v684 = vpop.f32.mrf.mxu0
    %v685 = vadd.f32 0.0, %v684
    %686 = vdwg.mxu0
    %v687 = vld [vmem:[#allocation30] sm:$0xff]
    %v688 = vld [vmem:[#allocation30 + $0x8] sm:$0xff]
    %690 = vset.pattern.permute.xlu0 0
    %691 = vperm.xlu0 %690, %v687
    %v692 = vpop.permute.xlu0 %691
    %695 = vset.pattern.permute.xlu0 0
    %696 = vperm.xlu0 %695, %v688
    %v697 = vpop.permute.xlu0 %696
    %v699 = vmul.f32 %v682, %v692
    %v700 = vmul.f32 %v685, %v697
    %v701 = vld [vmem:[#allocation31] sm:$0xff]
    %v702 = vld [vmem:[#allocation31 + $0x8] sm:$0xff]
    %704 = vset.pattern.permute.xlu0 0
    %705 = vperm.xlu0 %704, %v701
    %v706 = vpop.permute.xlu0 %705
    %709 = vset.pattern.permute.xlu0 0
    %710 = vperm.xlu0 %709, %v702
    %v711 = vpop.permute.xlu0 %710
    %v713 = vadd.f32 %v699, %v706
    %v714 = vadd.f32 %v700, %v711
    %v715 = vmax.f32 %v713, 0.0
    %v716 = vmax.f32 %v714, 0.0
    %v717 = vld [vmem:[#allocation37] sm:$0xff]
    %vm718 = vcmask 130048
    %v720 = vsel %vm718, %v717, 0
    %722 = vmatpush.msra.mxu0 0.0
    %723 = vmatpush.msra.mxu0 0.0
    %724 = vmatpush.msra.mxu0 0.0
    %725 = vmatpush.msra.mxu0 0.0
    %726 = vmatpush.msra.mxu0 0.0
    %727 = vmatpush.msra.mxu0 0.0
    %728 = vmatpush.msra.mxu0 0.0
    %729 = vmatpush.msra.mxu0 0.0
    %730 = vmatpush.msra.mxu0 0.0
    %731 = vmatpush.msra.mxu0 0.0
    %732 = vmatpush.msra.mxu0 0.0
    %733 = vmatpush.msra.mxu0 0.0
    %734 = vmatpush.msra.mxu0 0.0
    %735 = vmatpush.msra.mxu0 0.0
    %736 = vmatpush.msra.mxu0 %v716
    %737 = vmatpush.msra.mxu0 %v715
    %738 = vmatmul.f32.gmra.mxu0 %v720
    %v739 = vpop.f32.mrf.mxu0
    %v740 = vadd.f32 0.0, %v739
    %741 = vdwg.mxu0
    %v742 = vld [vmem:[#allocation34] sm:$0xff]
    %744 = vset.pattern.permute.xlu0 0
    %745 = vperm.xlu0 %744, %v742
    %v746 = vpop.permute.xlu0 %745
    %v748 = vmul.f32 %v740, %v746
    %v749 = vld [vmem:[#allocation36] sm:$0xff]
    %751 = vset.pattern.permute.xlu0 0
    %752 = vperm.xlu0 %751, %v749
    %v753 = vpop.permute.xlu0 %752
    %v755 = vadd.f32 %v748, %v753
    %v756 = vld [vmem:[#allocation18] sm:$0x3]
    %758 = vset.pattern.permute.xlu0 0
    %759 = vperm.xlu0 %758, %v755
    %v760 = vpop.permute.xlu0 %759
    %v762 = vperm.slane %v756, 0
    %v763 = vmul.f32 %v760, %v762
    %v764 = vadd.f32 %v763, 0.0
    %765 = vset.pattern.permute.xlu0 1
    %766 = vperm.xlu0 %765, %v755
    %v767 = vpop.permute.xlu0 %766
    %v769 = vperm.slane %v756, 1
    %v770 = vmul.f32 %v767, %v769
    %v771 = vadd.f32 %v764, %v770
    %s772 = scalar_lea.vmem [#allocation37], 8
    %v773 = vld [vmem:[%s772] sm:$0xff]
    %v775 = vsel %vm718, %v773, 0
    %777 = vmatpush.msra.mxu0 0.0
    %778 = vmatpush.msra.mxu0 0.0
    %779 = vmatpush.msra.mxu0 0.0
    %780 = vmatpush.msra.mxu0 0.0
    %781 = vmatpush.msra.mxu0 0.0
    %782 = vmatpush.msra.mxu0 0.0
    %783 = vmatpush.msra.mxu0 0.0
    %784 = vmatpush.msra.mxu0 0.0
    %785 = vmatpush.msra.mxu0 0.0
    %786 = vmatpush.msra.mxu0 0.0
    %787 = vmatpush.msra.mxu0 0.0
    %788 = vmatpush.msra.mxu0 0.0
    %789 = vmatpush.msra.mxu0 0.0
    %790 = vmatpush.msra.mxu0 0.0
    %791 = vmatpush.msra.mxu0 %v716
    %792 = vmatpush.msra.mxu0 %v715
    %793 = vmatmul.f32.gmra.mxu0 %v775
    %v794 = vpop.f32.mrf.mxu0
    %v795 = vadd.f32 0.0, %v794
    %796 = vdwg.mxu0
    %s797 = scalar_lea.vmem [#allocation34], 8
    %v798 = vld [vmem:[%s797] sm:$0xff]
    %800 = vset.pattern.permute.xlu0 0
    %801 = vperm.xlu0 %800, %v798
    %v802 = vpop.permute.xlu0 %801
    %v804 = vmul.f32 %v795, %v802
    %s805 = scalar_lea.vmem [#allocation36], 8
    %v806 = vld [vmem:[%s805] sm:$0xff]
    %808 = vset.pattern.permute.xlu0 0
    %809 = vperm.xlu0 %808, %v806
    %v810 = vpop.permute.xlu0 %809
    %v812 = vadd.f32 %v804, %v810
    %s813 = scalar_lea.vmem [#allocation18], 2
    %v814 = vld [vmem:[%s813] sm:$0x3]
    %816 = vset.pattern.permute.xlu0 0
    %817 = vperm.xlu0 %816, %v812
    %v818 = vpop.permute.xlu0 %817
    %v820 = vperm.slane %v814, 0
    %v821 = vmul.f32 %v818, %v820
    %v822 = vadd.f32 %v771, %v821
    %823 = vset.pattern.permute.xlu0 1
    %824 = vperm.xlu0 %823, %v812
    %v825 = vpop.permute.xlu0 %824
    %v827 = vperm.slane %v814, 1
    %v828 = vmul.f32 %v825, %v827
    %v829 = vadd.f32 %v822, %v828
    %s830 = scalar_lea.vmem [#allocation37], 16
    %v831 = vld [vmem:[%s830] sm:$0xff]
    %v833 = vsel %vm718, %v831, 0
    %835 = vmatpush.msra.mxu0 0.0
    %836 = vmatpush.msra.mxu0 0.0
    %837 = vmatpush.msra.mxu0 0.0
    %838 = vmatpush.msra.mxu0 0.0
    %839 = vmatpush.msra.mxu0 0.0
    %840 = vmatpush.msra.mxu0 0.0
    %841 = vmatpush.msra.mxu0 0.0
    %842 = vmatpush.msra.mxu0 0.0
    %843 = vmatpush.msra.mxu0 0.0
    %844 = vmatpush.msra.mxu0 0.0
    %845 = vmatpush.msra.mxu0 0.0
    %846 = vmatpush.msra.mxu0 0.0
    %847 = vmatpush.msra.mxu0 0.0
    %848 = vmatpush.msra.mxu0 0.0
    %849 = vmatpush.msra.mxu0 %v716
    %850 = vmatpush.msra.mxu0 %v715
    %851 = vmatmul.f32.gmra.mxu0 %v833
    %v852 = vpop.f32.mrf.mxu0
    %v853 = vadd.f32 0.0, %v852
    %854 = vdwg.mxu0
    %s855 = scalar_lea.vmem [#allocation34], 16
    %v856 = vld [vmem:[%s855] sm:$0xff]
    %858 = vset.pattern.permute.xlu0 0
    %859 = vperm.xlu0 %858, %v856
    %v860 = vpop.permute.xlu0 %859
    %v862 = vmul.f32 %v853, %v860
    %s863 = scalar_lea.vmem [#allocation36], 16
    %v864 = vld [vmem:[%s863] sm:$0xff]
    %866 = vset.pattern.permute.xlu0 0
    %867 = vperm.xlu0 %866, %v864
    %v868 = vpop.permute.xlu0 %867
    %v870 = vadd.f32 %v862, %v868
    %s871 = scalar_lea.vmem [#allocation18], 4
    %v872 = vld [vmem:[%s871] sm:$0x3]
    %874 = vset.pattern.permute.xlu0 0
    %875 = vperm.xlu0 %874, %v870
    %v876 = vpop.permute.xlu0 %875
    %v878 = vperm.slane %v872, 0
    %v879 = vmul.f32 %v876, %v878
    %v880 = vadd.f32 %v829, %v879
    %881 = vset.pattern.permute.xlu0 1
    %882 = vperm.xlu0 %881, %v870
    %v883 = vpop.permute.xlu0 %882
    %v885 = vperm.slane %v872, 1
    %v886 = vmul.f32 %v883, %v885
    %v887 = vadd.f32 %v880, %v886
    %s888 = scalar_lea.vmem [#allocation37], 24
    %v889 = vld [vmem:[%s888] sm:$0xff]
    %v891 = vsel %vm718, %v889, 0
    %893 = vmatpush.msra.mxu0 0.0
    %894 = vmatpush.msra.mxu0 0.0
    %895 = vmatpush.msra.mxu0 0.0
    %896 = vmatpush.msra.mxu0 0.0
    %897 = vmatpush.msra.mxu0 0.0
    %898 = vmatpush.msra.mxu0 0.0
    %899 = vmatpush.msra.mxu0 0.0
    %900 = vmatpush.msra.mxu0 0.0
    %901 = vmatpush.msra.mxu0 0.0
    %902 = vmatpush.msra.mxu0 0.0
    %903 = vmatpush.msra.mxu0 0.0
    %904 = vmatpush.msra.mxu0 0.0
    %905 = vmatpush.msra.mxu0 0.0
    %906 = vmatpush.msra.mxu0 0.0
    %907 = vmatpush.msra.mxu0 %v716
    %908 = vmatpush.msra.mxu0 %v715
    %909 = vmatmul.f32.gmra.mxu0 %v891
    %v910 = vpop.f32.mrf.mxu0
    %v911 = vadd.f32 0.0, %v910
    %912 = vdwg.mxu0
    %s913 = scalar_lea.vmem [#allocation34], 24
    %v914 = vld [vmem:[%s913] sm:$0xff]
    %916 = vset.pattern.permute.xlu0 0
    %917 = vperm.xlu0 %916, %v914
    %v918 = vpop.permute.xlu0 %917
    %v920 = vmul.f32 %v911, %v918
    %s921 = scalar_lea.vmem [#allocation36], 24
    %v922 = vld [vmem:[%s921] sm:$0xff]
    %924 = vset.pattern.permute.xlu0 0
    %925 = vperm.xlu0 %924, %v922
    %v926 = vpop.permute.xlu0 %925
    %v928 = vadd.f32 %v920, %v926
    %s929 = scalar_lea.vmem [#allocation18], 6
    %v930 = vld [vmem:[%s929] sm:$0x3]
    %932 = vset.pattern.permute.xlu0 0
    %933 = vperm.xlu0 %932, %v928
    %v934 = vpop.permute.xlu0 %933
    %v936 = vperm.slane %v930, 0
    %v937 = vmul.f32 %v934, %v936
    %v938 = vadd.f32 %v887, %v937
    %939 = vset.pattern.permute.xlu0 1
    %940 = vperm.xlu0 %939, %v928
    %v941 = vpop.permute.xlu0 %940
    %v943 = vperm.slane %v930, 1
    %v944 = vmul.f32 %v941, %v943
    %v945 = vadd.f32 %v938, %v944
    %v946 = vld [vmem:[#allocation51] sm:$0xff]
    %s947 = scalar_lea.vmem [#allocation51], 8
    %v948 = vld [vmem:[%s947] sm:$0xff]
    %s949 = scalar_lea.vmem [#allocation51], 16
    %v950 = vld [vmem:[%s949] sm:$0xff]
    %s951 = scalar_lea.vmem [#allocation51], 24
    %v952 = vld [vmem:[%s951] sm:$0xff]
    %s953 = scalar_lea.vmem [#allocation51], 32
    %v954 = vld [vmem:[%s953] sm:$0xff]
    %v955 = vld [vmem:[#allocation49] sm:$0xff]
    %v956 = vld [vmem:[%s73] sm:$0xff]
    %v957 = vmax.f32 %v945, 0.0
    %v959 = vsel %vm657, %v946, 0
    %961 = vmatpush.msra.mxu0 0.0
    %962 = vmatpush.msra.mxu0 0.0
    %963 = vmatpush.msra.mxu0 0.0
    %964 = vmatpush.msra.mxu0 0.0
    %965 = vmatpush.msra.mxu0 0.0
    %966 = vmatpush.msra.mxu0 0.0
    %967 = vmatpush.msra.mxu0 0.0
    %968 = vmatpush.msra.mxu0 0.0
    %969 = vmatpush.msra.mxu0 0.0
    %970 = vmatpush.msra.mxu0 0.0
    %971 = vmatpush.msra.mxu0 0.0
    %972 = vmatpush.msra.mxu0 0.0
    %973 = vmatpush.msra.mxu0 0.0
    %974 = vmatpush.msra.mxu0 0.0
    %975 = vmatpush.msra.mxu0 0.0
    %976 = vmatpush.msra.mxu0 %v957
    %977 = vmatmul.f32.gmra.mxu0 %v959
    %v978 = vpop.f32.mrf.mxu0
    %v979 = vadd.f32 0.0, %v978
    %980 = vdwg.mxu0
    %v981 = vld [vmem:[#allocation25] sm:$0xff]
    %v983 = vsel %vm657, %v948, 0
    %985 = vmatpush.msra.mxu0 0.0
    %986 = vmatpush.msra.mxu0 0.0
    %987 = vmatpush.msra.mxu0 0.0
    %988 = vmatpush.msra.mxu0 0.0
    %989 = vmatpush.msra.mxu0 0.0
    %990 = vmatpush.msra.mxu0 0.0
    %991 = vmatpush.msra.mxu0 0.0
    %992 = vmatpush.msra.mxu0 0.0
    %993 = vmatpush.msra.mxu0 0.0
    %994 = vmatpush.msra.mxu0 0.0
    %995 = vmatpush.msra.mxu0 0.0
    %996 = vmatpush.msra.mxu0 0.0
    %997 = vmatpush.msra.mxu0 0.0
    %998 = vmatpush.msra.mxu0 0.0
    %999 = vmatpush.msra.mxu0 0.0
    %1000 = vmatpush.msra.mxu0 %v957
    %1001 = vmatmul.f32.gmra.mxu0 %v983
    %v1002 = vpop.f32.mrf.mxu0
    %v1003 = vadd.f32 0.0, %v1002
    %1004 = vdwg.mxu0
    %s1005 = scalar_lea.vmem [#allocation25], 8
    %v1006 = vld [vmem:[%s1005] sm:$0xff]
    %v1008 = vsel %vm657, %v1003, 0
    %1010 = vmatpush.msra.mxu0 0.0
    %1011 = vmatpush.msra.mxu0 0.0
    %1012 = vmatpush.msra.mxu0 0.0
    %1013 = vmatpush.msra.mxu0 0.0
    %1014 = vmatpush.msra.mxu0 0.0
    %1015 = vmatpush.msra.mxu0 0.0
    %1016 = vmatpush.msra.mxu0 0.0
    %1017 = vmatpush.msra.mxu0 0.0
    %1018 = vmatpush.msra.mxu0 0.0
    %1019 = vmatpush.msra.mxu0 0.0
    %1020 = vmatpush.msra.mxu0 0.0
    %1021 = vmatpush.msra.mxu0 0.0
    %1022 = vmatpush.msra.mxu0 0.0
    %1023 = vmatpush.msra.mxu0 0.0
    %1024 = vmatpush.msra.mxu0 0.0
    %1025 = vmatpush.msra.mxu0 %v1006
    %1026 = vmatmul.f32.gmra.mxu0 %v1008
    %v1027 = vpop.f32.mrf.mxu0
    %v1028 = vadd.f32 0.0, %v1027
    %1029 = vdwg.mxu0
    %v1031 = vsel %vm657, %v979, 0
    %1033 = vmatpush.msra.mxu0 0.0
    %1034 = vmatpush.msra.mxu0 0.0
    %1035 = vmatpush.msra.mxu0 0.0
    %1036 = vmatpush.msra.mxu0 0.0
    %1037 = vmatpush.msra.mxu0 0.0
    %1038 = vmatpush.msra.mxu0 0.0
    %1039 = vmatpush.msra.mxu0 0.0
    %1040 = vmatpush.msra.mxu0 0.0
    %1041 = vmatpush.msra.mxu0 0.0
    %1042 = vmatpush.msra.mxu0 0.0
    %1043 = vmatpush.msra.mxu0 0.0
    %1044 = vmatpush.msra.mxu0 0.0
    %1045 = vmatpush.msra.mxu0 0.0
    %1046 = vmatpush.msra.mxu0 0.0
    %1047 = vmatpush.msra.mxu0 0.0
    %1048 = vmatpush.msra.mxu0 %v981
    %1049 = vmatmul.f32.gmra.mxu0 %v1031
    %v1050 = vpop.f32.mrf.mxu0
    %v1051 = vadd.f32 %v1028, %v1050
    %1052 = vdwg.mxu0
    %v1054 = vsel %vm657, %v950, 0
    %1056 = vmatpush.msra.mxu0 0.0
    %1057 = vmatpush.msra.mxu0 0.0
    %1058 = vmatpush.msra.mxu0 0.0
    %1059 = vmatpush.msra.mxu0 0.0
    %1060 = vmatpush.msra.mxu0 0.0
    %1061 = vmatpush.msra.mxu0 0.0
    %1062 = vmatpush.msra.mxu0 0.0
    %1063 = vmatpush.msra.mxu0 0.0
    %1064 = vmatpush.msra.mxu0 0.0
    %1065 = vmatpush.msra.mxu0 0.0
    %1066 = vmatpush.msra.mxu0 0.0
    %1067 = vmatpush.msra.mxu0 0.0
    %1068 = vmatpush.msra.mxu0 0.0
    %1069 = vmatpush.msra.mxu0 0.0
    %1070 = vmatpush.msra.mxu0 0.0
    %1071 = vmatpush.msra.mxu0 %v957
    %1072 = vmatmul.f32.gmra.mxu0 %v1054
    %v1073 = vpop.f32.mrf.mxu0
    %v1074 = vadd.f32 0.0, %v1073
    %1075 = vdwg.mxu0
    %s1076 = scalar_lea.vmem [#allocation25], 16
    %v1077 = vld [vmem:[%s1076] sm:$0xff]
    %v1079 = vsel %vm657, %v1074, 0
    %1081 = vmatpush.msra.mxu0 0.0
    %1082 = vmatpush.msra.mxu0 0.0
    %1083 = vmatpush.msra.mxu0 0.0
    %1084 = vmatpush.msra.mxu0 0.0
    %1085 = vmatpush.msra.mxu0 0.0
    %1086 = vmatpush.msra.mxu0 0.0
    %1087 = vmatpush.msra.mxu0 0.0
    %1088 = vmatpush.msra.mxu0 0.0
    %1089 = vmatpush.msra.mxu0 0.0
    %1090 = vmatpush.msra.mxu0 0.0
    %1091 = vmatpush.msra.mxu0 0.0
    %1092 = vmatpush.msra.mxu0 0.0
    %1093 = vmatpush.msra.mxu0 0.0
    %1094 = vmatpush.msra.mxu0 0.0
    %1095 = vmatpush.msra.mxu0 0.0
    %1096 = vmatpush.msra.mxu0 %v1077
    %1097 = vmatmul.f32.gmra.mxu0 %v1079
    %v1098 = vpop.f32.mrf.mxu0
    %v1099 = vadd.f32 0.0, %v1098
    %1100 = vdwg.mxu0
    %v1101 = vadd.f32 %v1051, %v1099
    %v1103 = vsel %vm657, %v952, 0
    %1105 = vmatpush.msra.mxu0 0.0
    %1106 = vmatpush.msra.mxu0 0.0
    %1107 = vmatpush.msra.mxu0 0.0
    %1108 = vmatpush.msra.mxu0 0.0
    %1109 = vmatpush.msra.mxu0 0.0
    %1110 = vmatpush.msra.mxu0 0.0
    %1111 = vmatpush.msra.mxu0 0.0
    %1112 = vmatpush.msra.mxu0 0.0
    %1113 = vmatpush.msra.mxu0 0.0
    %1114 = vmatpush.msra.mxu0 0.0
    %1115 = vmatpush.msra.mxu0 0.0
    %1116 = vmatpush.msra.mxu0 0.0
    %1117 = vmatpush.msra.mxu0 0.0
    %1118 = vmatpush.msra.mxu0 0.0
    %1119 = vmatpush.msra.mxu0 0.0
    %1120 = vmatpush.msra.mxu0 %v957
    %1121 = vmatmul.f32.gmra.mxu0 %v1103
    %v1122 = vpop.f32.mrf.mxu0
    %v1123 = vadd.f32 0.0, %v1122
    %1124 = vdwg.mxu0
    %s1125 = scalar_lea.vmem [#allocation25], 24
    %v1126 = vld [vmem:[%s1125] sm:$0xff]
    %v1128 = vsel %vm657, %v1123, 0
    %1130 = vmatpush.msra.mxu0 0.0
    %1131 = vmatpush.msra.mxu0 0.0
    %1132 = vmatpush.msra.mxu0 0.0
    %1133 = vmatpush.msra.mxu0 0.0
    %1134 = vmatpush.msra.mxu0 0.0
    %1135 = vmatpush.msra.mxu0 0.0
    %1136 = vmatpush.msra.mxu0 0.0
    %1137 = vmatpush.msra.mxu0 0.0
    %1138 = vmatpush.msra.mxu0 0.0
    %1139 = vmatpush.msra.mxu0 0.0
    %1140 = vmatpush.msra.mxu0 0.0
    %1141 = vmatpush.msra.mxu0 0.0
    %1142 = vmatpush.msra.mxu0 0.0
    %1143 = vmatpush.msra.mxu0 0.0
    %1144 = vmatpush.msra.mxu0 0.0
    %1145 = vmatpush.msra.mxu0 %v1126
    %1146 = vmatmul.f32.gmra.mxu0 %v1128
    %v1147 = vpop.f32.mrf.mxu0
    %v1148 = vadd.f32 0.0, %v1147
    %1149 = vdwg.mxu0
    %v1150 = vadd.f32 %v1101, %v1148
    %v1152 = vsel %vm657, %v954, 0
    %1154 = vmatpush.msra.mxu0 0.0
    %1155 = vmatpush.msra.mxu0 0.0
    %1156 = vmatpush.msra.mxu0 0.0
    %1157 = vmatpush.msra.mxu0 0.0
    %1158 = vmatpush.msra.mxu0 0.0
    %1159 = vmatpush.msra.mxu0 0.0
    %1160 = vmatpush.msra.mxu0 0.0
    %1161 = vmatpush.msra.mxu0 0.0
    %1162 = vmatpush.msra.mxu0 0.0
    %1163 = vmatpush.msra.mxu0 0.0
    %1164 = vmatpush.msra.mxu0 0.0
    %1165 = vmatpush.msra.mxu0 0.0
    %1166 = vmatpush.msra.mxu0 0.0
    %1167 = vmatpush.msra.mxu0 0.0
    %1168 = vmatpush.msra.mxu0 0.0
    %1169 = vmatpush.msra.mxu0 %v957
    %1170 = vmatmul.f32.gmra.mxu0 %v1152
    %v1171 = vpop.f32.mrf.mxu0
    %v1172 = vadd.f32 0.0, %v1171
    %1173 = vdwg.mxu0
    %s1174 = scalar_lea.vmem [#allocation25], 32
    %v1175 = vld [vmem:[%s1174] sm:$0xff]
    %v1177 = vsel %vm657, %v1172, 0
    %1179 = vmatpush.msra.mxu0 0.0
    %1180 = vmatpush.msra.mxu0 0.0
    %1181 = vmatpush.msra.mxu0 0.0
    %1182 = vmatpush.msra.mxu0 0.0
    %1183 = vmatpush.msra.mxu0 0.0
    %1184 = vmatpush.msra.mxu0 0.0
    %1185 = vmatpush.msra.mxu0 0.0
    %1186 = vmatpush.msra.mxu0 0.0
    %1187 = vmatpush.msra.mxu0 0.0
    %1188 = vmatpush.msra.mxu0 0.0
    %1189 = vmatpush.msra.mxu0 0.0
    %1190 = vmatpush.msra.mxu0 0.0
    %1191 = vmatpush.msra.mxu0 0.0
    %1192 = vmatpush.msra.mxu0 0.0
    %1193 = vmatpush.msra.mxu0 0.0
    %1194 = vmatpush.msra.mxu0 %v1175
    %1195 = vmatmul.f32.gmra.mxu0 %v1177
    %v1196 = vpop.f32.mrf.mxu0
    %v1197 = vadd.f32 0.0, %v1196
    %1198 = vdwg.mxu0
    %v1199 = vadd.f32 %v1150, %v1197
    %1201 = vset.pattern.permute.xlu0 0
    %1202 = vperm.xlu0 %1201, %v955
    %v1203 = vpop.permute.xlu0 %1202
    %v1205 = vmul.f32 %v1199, %v1203
    %1207 = vset.pattern.permute.xlu0 0
    %1208 = vperm.xlu0 %1207, %v956
    %v1209 = vpop.permute.xlu0 %1208
    %v1211 = vadd.f32 %v1205, %v1209
    %s1212 = scalar_lea.vmem [#allocation51], 40
    %v1213 = vld [vmem:[%s1212] sm:$0xff]
    %s1214 = scalar_lea.vmem [#allocation51], 48
    %v1215 = vld [vmem:[%s1214] sm:$0xff]
    %s1216 = scalar_lea.vmem [#allocation51], 56
    %v1217 = vld [vmem:[%s1216] sm:$0xff]
    %s1218 = scalar_lea.vmem [#allocation51], 64
    %v1219 = vld [vmem:[%s1218] sm:$0xff]
    %s1220 = scalar_lea.vmem [#allocation51], 72
    %v1221 = vld [vmem:[%s1220] sm:$0xff]
    %s1222 = scalar_lea.vmem [#allocation49], 8
    %v1223 = vld [vmem:[%s1222] sm:$0xff]
    %s1224 = scalar_lea.vmem %s73, 8
    %v1225 = vld [vmem:[%s1224] sm:$0xff]
    %v1226 = vmax.f32 %v1211, 0.0
    %v1228 = vsel %vm657, %v1213, 0
    %1230 = vmatpush.msra.mxu0 0.0
    %1231 = vmatpush.msra.mxu0 0.0
    %1232 = vmatpush.msra.mxu0 0.0
    %1233 = vmatpush.msra.mxu0 0.0
    %1234 = vmatpush.msra.mxu0 0.0
    %1235 = vmatpush.msra.mxu0 0.0
    %1236 = vmatpush.msra.mxu0 0.0
    %1237 = vmatpush.msra.mxu0 0.0
    %1238 = vmatpush.msra.mxu0 0.0
    %1239 = vmatpush.msra.mxu0 0.0
    %1240 = vmatpush.msra.mxu0 0.0
    %1241 = vmatpush.msra.mxu0 0.0
    %1242 = vmatpush.msra.mxu0 0.0
    %1243 = vmatpush.msra.mxu0 0.0
    %1244 = vmatpush.msra.mxu0 0.0
    %1245 = vmatpush.msra.mxu0 %v1226
    %1246 = vmatmul.f32.gmra.mxu0 %v1228
    %v1247 = vpop.f32.mrf.mxu0
    %v1248 = vadd.f32 0.0, %v1247
    %1249 = vdwg.mxu0
    %v1251 = vsel %vm657, %v1215, 0
    %1253 = vmatpush.msra.mxu0 0.0
    %1254 = vmatpush.msra.mxu0 0.0
    %1255 = vmatpush.msra.mxu0 0.0
    %1256 = vmatpush.msra.mxu0 0.0
    %1257 = vmatpush.msra.mxu0 0.0
    %1258 = vmatpush.msra.mxu0 0.0
    %1259 = vmatpush.msra.mxu0 0.0
    %1260 = vmatpush.msra.mxu0 0.0
    %1261 = vmatpush.msra.mxu0 0.0
    %1262 = vmatpush.msra.mxu0 0.0
    %1263 = vmatpush.msra.mxu0 0.0
    %1264 = vmatpush.msra.mxu0 0.0
    %1265 = vmatpush.msra.mxu0 0.0
    %1266 = vmatpush.msra.mxu0 0.0
    %1267 = vmatpush.msra.mxu0 0.0
    %1268 = vmatpush.msra.mxu0 %v1226
    %1269 = vmatmul.f32.gmra.mxu0 %v1251
    %v1270 = vpop.f32.mrf.mxu0
    %v1271 = vadd.f32 0.0, %v1270
    %1272 = vdwg.mxu0
    %v1274 = vsel %vm657, %v1271, 0
    %1276 = vmatpush.msra.mxu0 0.0
    %1277 = vmatpush.msra.mxu0 0.0
    %1278 = vmatpush.msra.mxu0 0.0
    %1279 = vmatpush.msra.mxu0 0.0
    %1280 = vmatpush.msra.mxu0 0.0
    %1281 = vmatpush.msra.mxu0 0.0
    %1282 = vmatpush.msra.mxu0 0.0
    %1283 = vmatpush.msra.mxu0 0.0
    %1284 = vmatpush.msra.mxu0 0.0
    %1285 = vmatpush.msra.mxu0 0.0
    %1286 = vmatpush.msra.mxu0 0.0
    %1287 = vmatpush.msra.mxu0 0.0
    %1288 = vmatpush.msra.mxu0 0.0
    %1289 = vmatpush.msra.mxu0 0.0
    %1290 = vmatpush.msra.mxu0 0.0
    %1291 = vmatpush.msra.mxu0 %v1006
    %1292 = vmatmul.f32.gmra.mxu0 %v1274
    %v1293 = vpop.f32.mrf.mxu0
    %v1294 = vadd.f32 0.0, %v1293
    %1295 = vdwg.mxu0
    %v1297 = vsel %vm657, %v1248, 0
    %1299 = vmatpush.msra.mxu0 0.0
    %1300 = vmatpush.msra.mxu0 0.0
    %1301 = vmatpush.msra.mxu0 0.0
    %1302 = vmatpush.msra.mxu0 0.0
    %1303 = vmatpush.msra.mxu0 0.0
    %1304 = vmatpush.msra.mxu0 0.0
    %1305 = vmatpush.msra.mxu0 0.0
    %1306 = vmatpush.msra.mxu0 0.0
    %1307 = vmatpush.msra.mxu0 0.0
    %1308 = vmatpush.msra.mxu0 0.0
    %1309 = vmatpush.msra.mxu0 0.0
    %1310 = vmatpush.msra.mxu0 0.0
    %1311 = vmatpush.msra.mxu0 0.0
    %1312 = vmatpush.msra.mxu0 0.0
    %1313 = vmatpush.msra.mxu0 0.0
    %1314 = vmatpush.msra.mxu0 %v981
    %1315 = vmatmul.f32.gmra.mxu0 %v1297
    %v1316 = vpop.f32.mrf.mxu0
    %v1317 = vadd.f32 %v1294, %v1316
    %1318 = vdwg.mxu0
    %v1320 = vsel %vm657, %v1217, 0
    %1322 = vmatpush.msra.mxu0 0.0
    %1323 = vmatpush.msra.mxu0 0.0
    %1324 = vmatpush.msra.mxu0 0.0
    %1325 = vmatpush.msra.mxu0 0.0
    %1326 = vmatpush.msra.mxu0 0.0
    %1327 = vmatpush.msra.mxu0 0.0
    %1328 = vmatpush.msra.mxu0 0.0
    %1329 = vmatpush.msra.mxu0 0.0
    %1330 = vmatpush.msra.mxu0 0.0
    %1331 = vmatpush.msra.mxu0 0.0
    %1332 = vmatpush.msra.mxu0 0.0
    %1333 = vmatpush.msra.mxu0 0.0
    %1334 = vmatpush.msra.mxu0 0.0
    %1335 = vmatpush.msra.mxu0 0.0
    %1336 = vmatpush.msra.mxu0 0.0
    %1337 = vmatpush.msra.mxu0 %v1226
    %1338 = vmatmul.f32.gmra.mxu0 %v1320
    %v1339 = vpop.f32.mrf.mxu0
    %v1340 = vadd.f32 0.0, %v1339
    %1341 = vdwg.mxu0
    %v1343 = vsel %vm657, %v1340, 0
    %1345 = vmatpush.msra.mxu0 0.0
    %1346 = vmatpush.msra.mxu0 0.0
    %1347 = vmatpush.msra.mxu0 0.0
    %1348 = vmatpush.msra.mxu0 0.0
    %1349 = vmatpush.msra.mxu0 0.0
    %1350 = vmatpush.msra.mxu0 0.0
    %1351 = vmatpush.msra.mxu0 0.0
    %1352 = vmatpush.msra.mxu0 0.0
    %1353 = vmatpush.msra.mxu0 0.0
    %1354 = vmatpush.msra.mxu0 0.0
    %1355 = vmatpush.msra.mxu0 0.0
    %1356 = vmatpush.msra.mxu0 0.0
    %1357 = vmatpush.msra.mxu0 0.0
    %1358 = vmatpush.msra.mxu0 0.0
    %1359 = vmatpush.msra.mxu0 0.0
    %1360 = vmatpush.msra.mxu0 %v1077
    %1361 = vmatmul.f32.gmra.mxu0 %v1343
    %v1362 = vpop.f32.mrf.mxu0
    %v1363 = vadd.f32 0.0, %v1362
    %1364 = vdwg.mxu0
    %v1365 = vadd.f32 %v1317, %v1363
    %v1367 = vsel %vm657, %v1219, 0
    %1369 = vmatpush.msra.mxu0 0.0
    %1370 = vmatpush.msra.mxu0 0.0
    %1371 = vmatpush.msra.mxu0 0.0
    %1372 = vmatpush.msra.mxu0 0.0
    %1373 = vmatpush.msra.mxu0 0.0
    %1374 = vmatpush.msra.mxu0 0.0
    %1375 = vmatpush.msra.mxu0 0.0
    %1376 = vmatpush.msra.mxu0 0.0
    %1377 = vmatpush.msra.mxu0 0.0
    %1378 = vmatpush.msra.mxu0 0.0
    %1379 = vmatpush.msra.mxu0 0.0
    %1380 = vmatpush.msra.mxu0 0.0
    %1381 = vmatpush.msra.mxu0 0.0
    %1382 = vmatpush.msra.mxu0 0.0
    %1383 = vmatpush.msra.mxu0 0.0
    %1384 = vmatpush.msra.mxu0 %v1226
    %1385 = vmatmul.f32.gmra.mxu0 %v1367
    %v1386 = vpop.f32.mrf.mxu0
    %v1387 = vadd.f32 0.0, %v1386
    %1388 = vdwg.mxu0
    %v1390 = vsel %vm657, %v1387, 0
    %1392 = vmatpush.msra.mxu0 0.0
    %1393 = vmatpush.msra.mxu0 0.0
    %1394 = vmatpush.msra.mxu0 0.0
    %1395 = vmatpush.msra.mxu0 0.0
    %1396 = vmatpush.msra.mxu0 0.0
    %1397 = vmatpush.msra.mxu0 0.0
    %1398 = vmatpush.msra.mxu0 0.0
    %1399 = vmatpush.msra.mxu0 0.0
    %1400 = vmatpush.msra.mxu0 0.0
    %1401 = vmatpush.msra.mxu0 0.0
    %1402 = vmatpush.msra.mxu0 0.0
    %1403 = vmatpush.msra.mxu0 0.0
    %1404 = vmatpush.msra.mxu0 0.0
    %1405 = vmatpush.msra.mxu0 0.0
    %1406 = vmatpush.msra.mxu0 0.0
    %1407 = vmatpush.msra.mxu0 %v1126
    %1408 = vmatmul.f32.gmra.mxu0 %v1390
    %v1409 = vpop.f32.mrf.mxu0
    %v1410 = vadd.f32 0.0, %v1409
    %1411 = vdwg.mxu0
    %v1412 = vadd.f32 %v1365, %v1410
    %v1414 = vsel %vm657, %v1221, 0
    %1416 = vmatpush.msra.mxu0 0.0
    %1417 = vmatpush.msra.mxu0 0.0
    %1418 = vmatpush.msra.mxu0 0.0
    %1419 = vmatpush.msra.mxu0 0.0
    %1420 = vmatpush.msra.mxu0 0.0
    %1421 = vmatpush.msra.mxu0 0.0
    %1422 = vmatpush.msra.mxu0 0.0
    %1423 = vmatpush.msra.mxu0 0.0
    %1424 = vmatpush.msra.mxu0 0.0
    %1425 = vmatpush.msra.mxu0 0.0
    %1426 = vmatpush.msra.mxu0 0.0
    %1427 = vmatpush.msra.mxu0 0.0
    %1428 = vmatpush.msra.mxu0 0.0
    %1429 = vmatpush.msra.mxu0 0.0
    %1430 = vmatpush.msra.mxu0 0.0
    %1431 = vmatpush.msra.mxu0 %v1226
    %1432 = vmatmul.f32.gmra.mxu0 %v1414
    %v1433 = vpop.f32.mrf.mxu0
    %v1434 = vadd.f32 0.0, %v1433
    %1435 = vdwg.mxu0
    %v1437 = vsel %vm657, %v1434, 0
    %1439 = vmatpush.msra.mxu0 0.0
    %1440 = vmatpush.msra.mxu0 0.0
    %1441 = vmatpush.msra.mxu0 0.0
    %1442 = vmatpush.msra.mxu0 0.0
    %1443 = vmatpush.msra.mxu0 0.0
    %1444 = vmatpush.msra.mxu0 0.0
    %1445 = vmatpush.msra.mxu0 0.0
    %1446 = vmatpush.msra.mxu0 0.0
    %1447 = vmatpush.msra.mxu0 0.0
    %1448 = vmatpush.msra.mxu0 0.0
    %1449 = vmatpush.msra.mxu0 0.0
    %1450 = vmatpush.msra.mxu0 0.0
    %1451 = vmatpush.msra.mxu0 0.0
    %1452 = vmatpush.msra.mxu0 0.0
    %1453 = vmatpush.msra.mxu0 0.0
    %1454 = vmatpush.msra.mxu0 %v1175
    %1455 = vmatmul.f32.gmra.mxu0 %v1437
    %v1456 = vpop.f32.mrf.mxu0
    %v1457 = vadd.f32 0.0, %v1456
    %1458 = vdwg.mxu0
    %v1459 = vadd.f32 %v1412, %v1457
    %1461 = vset.pattern.permute.xlu0 0
    %1462 = vperm.xlu0 %1461, %v1223
    %v1463 = vpop.permute.xlu0 %1462
    %v1465 = vmul.f32 %v1459, %v1463
    %1467 = vset.pattern.permute.xlu0 0
    %1468 = vperm.xlu0 %1467, %v1225
    %v1469 = vpop.permute.xlu0 %1468
    %v1471 = vadd.f32 %v1465, %v1469
    %v1472 = vadd.f32 %v1471, %v1211
    %s1473 = scalar_lea.vmem [#allocation51], 80
    %v1474 = vld [vmem:[%s1473] sm:$0xff]
    %s1475 = scalar_lea.vmem [#allocation51], 88
    %v1476 = vld [vmem:[%s1475] sm:$0xff]
    %s1477 = scalar_lea.vmem [#allocation51], 96
    %v1478 = vld [vmem:[%s1477] sm:$0xff]
    %s1479 = scalar_lea.vmem [#allocation51], 104
    %v1480 = vld [vmem:[%s1479] sm:$0xff]
    %s1481 = scalar_lea.vmem [#allocation51], 112
    %v1482 = vld [vmem:[%s1481] sm:$0xff]
    %s1483 = scalar_lea.vmem [#allocation49], 16
    %v1484 = vld [vmem:[%s1483] sm:$0xff]
    %s1485 = scalar_lea.vmem %s73, 16
    %v1486 = vld [vmem:[%s1485] sm:$0xff]
    %v1487 = vmax.f32 %v1472, 0.0
    %v1489 = vsel %vm657, %v1474, 0
    %1491 = vmatpush.msra.mxu0 0.0
    %1492 = vmatpush.msra.mxu0 0.0
    %1493 = vmatpush.msra.mxu0 0.0
    %1494 = vmatpush.msra.mxu0 0.0
    %1495 = vmatpush.msra.mxu0 0.0
    %1496 = vmatpush.msra.mxu0 0.0
    %1497 = vmatpush.msra.mxu0 0.0
    %1498 = vmatpush.msra.mxu0 0.0
    %1499 = vmatpush.msra.mxu0 0.0
    %1500 = vmatpush.msra.mxu0 0.0
    %1501 = vmatpush.msra.mxu0 0.0
    %1502 = vmatpush.msra.mxu0 0.0
    %1503 = vmatpush.msra.mxu0 0.0
    %1504 = vmatpush.msra.mxu0 0.0
    %1505 = vmatpush.msra.mxu0 0.0
    %1506 = vmatpush.msra.mxu0 %v1487
    %1507 = vmatmul.f32.gmra.mxu0 %v1489
    %v1508 = vpop.f32.mrf.mxu0
    %v1509 = vadd.f32 0.0, %v1508
    %1510 = vdwg.mxu0
    %v1512 = vsel %vm657, %v1476, 0
    %1514 = vmatpush.msra.mxu0 0.0
    %1515 = vmatpush.msra.mxu0 0.0
    %1516 = vmatpush.msra.mxu0 0.0
    %1517 = vmatpush.msra.mxu0 0.0
    %1518 = vmatpush.msra.mxu0 0.0
    %1519 = vmatpush.msra.mxu0 0.0
    %1520 = vmatpush.msra.mxu0 0.0
    %1521 = vmatpush.msra.mxu0 0.0
    %1522 = vmatpush.msra.mxu0 0.0
    %1523 = vmatpush.msra.mxu0 0.0
    %1524 = vmatpush.msra.mxu0 0.0
    %1525 = vmatpush.msra.mxu0 0.0
    %1526 = vmatpush.msra.mxu0 0.0
    %1527 = vmatpush.msra.mxu0 0.0
    %1528 = vmatpush.msra.mxu0 0.0
    %1529 = vmatpush.msra.mxu0 %v1487
    %1530 = vmatmul.f32.gmra.mxu0 %v1512
    %v1531 = vpop.f32.mrf.mxu0
    %v1532 = vadd.f32 0.0, %v1531
    %1533 = vdwg.mxu0
    %v1535 = vsel %vm657, %v1532, 0
    %1537 = vmatpush.msra.mxu0 0.0
    %1538 = vmatpush.msra.mxu0 0.0
    %1539 = vmatpush.msra.mxu0 0.0
    %1540 = vmatpush.msra.mxu0 0.0
    %1541 = vmatpush.msra.mxu0 0.0
    %1542 = vmatpush.msra.mxu0 0.0
    %1543 = vmatpush.msra.mxu0 0.0
    %1544 = vmatpush.msra.mxu0 0.0
    %1545 = vmatpush.msra.mxu0 0.0
    %1546 = vmatpush.msra.mxu0 0.0
    %1547 = vmatpush.msra.mxu0 0.0
    %1548 = vmatpush.msra.mxu0 0.0
    %1549 = vmatpush.msra.mxu0 0.0
    %1550 = vmatpush.msra.mxu0 0.0
    %1551 = vmatpush.msra.mxu0 0.0
    %1552 = vmatpush.msra.mxu0 %v1006
    %1553 = vmatmul.f32.gmra.mxu0 %v1535
    %v1554 = vpop.f32.mrf.mxu0
    %v1555 = vadd.f32 0.0, %v1554
    %1556 = vdwg.mxu0
    %v1558 = vsel %vm657, %v1509, 0
    %1560 = vmatpush.msra.mxu0 0.0
    %1561 = vmatpush.msra.mxu0 0.0
    %1562 = vmatpush.msra.mxu0 0.0
    %1563 = vmatpush.msra.mxu0 0.0
    %1564 = vmatpush.msra.mxu0 0.0
    %1565 = vmatpush.msra.mxu0 0.0
    %1566 = vmatpush.msra.mxu0 0.0
    %1567 = vmatpush.msra.mxu0 0.0
    %1568 = vmatpush.msra.mxu0 0.0
    %1569 = vmatpush.msra.mxu0 0.0
    %1570 = vmatpush.msra.mxu0 0.0
    %1571 = vmatpush.msra.mxu0 0.0
    %1572 = vmatpush.msra.mxu0 0.0
    %1573 = vmatpush.msra.mxu0 0.0
    %1574 = vmatpush.msra.mxu0 0.0
    %1575 = vmatpush.msra.mxu0 %v981
    %1576 = vmatmul.f32.gmra.mxu0 %v1558
    %v1577 = vpop.f32.mrf.mxu0
    %v1578 = vadd.f32 %v1555, %v1577
    %1579 = vdwg.mxu0
    %v1581 = vsel %vm657, %v1478, 0
    %1583 = vmatpush.msra.mxu0 0.0
    %1584 = vmatpush.msra.mxu0 0.0
    %1585 = vmatpush.msra.mxu0 0.0
    %1586 = vmatpush.msra.mxu0 0.0
    %1587 = vmatpush.msra.mxu0 0.0
    %1588 = vmatpush.msra.mxu0 0.0
    %1589 = vmatpush.msra.mxu0 0.0
    %1590 = vmatpush.msra.mxu0 0.0
    %1591 = vmatpush.msra.mxu0 0.0
    %1592 = vmatpush.msra.mxu0 0.0
    %1593 = vmatpush.msra.mxu0 0.0
    %1594 = vmatpush.msra.mxu0 0.0
    %1595 = vmatpush.msra.mxu0 0.0
    %1596 = vmatpush.msra.mxu0 0.0
    %1597 = vmatpush.msra.mxu0 0.0
    %1598 = vmatpush.msra.mxu0 %v1487
    %1599 = vmatmul.f32.gmra.mxu0 %v1581
    %v1600 = vpop.f32.mrf.mxu0
    %v1601 = vadd.f32 0.0, %v1600
    %1602 = vdwg.mxu0
    %v1604 = vsel %vm657, %v1601, 0
    %1606 = vmatpush.msra.mxu0 0.0
    %1607 = vmatpush.msra.mxu0 0.0
    %1608 = vmatpush.msra.mxu0 0.0
    %1609 = vmatpush.msra.mxu0 0.0
    %1610 = vmatpush.msra.mxu0 0.0
    %1611 = vmatpush.msra.mxu0 0.0
    %1612 = vmatpush.msra.mxu0 0.0
    %1613 = vmatpush.msra.mxu0 0.0
    %1614 = vmatpush.msra.mxu0 0.0
    %1615 = vmatpush.msra.mxu0 0.0
    %1616 = vmatpush.msra.mxu0 0.0
    %1617 = vmatpush.msra.mxu0 0.0
    %1618 = vmatpush.msra.mxu0 0.0
    %1619 = vmatpush.msra.mxu0 0.0
    %1620 = vmatpush.msra.mxu0 0.0
    %1621 = vmatpush.msra.mxu0 %v1077
    %1622 = vmatmul.f32.gmra.mxu0 %v1604
    %v1623 = vpop.f32.mrf.mxu0
    %v1624 = vadd.f32 0.0, %v1623
    %1625 = vdwg.mxu0
    %v1626 = vadd.f32 %v1578, %v1624
    %v1628 = vsel %vm657, %v1480, 0
    %1630 = vmatpush.msra.mxu0 0.0
    %1631 = vmatpush.msra.mxu0 0.0
    %1632 = vmatpush.msra.mxu0 0.0
    %1633 = vmatpush.msra.mxu0 0.0
    %1634 = vmatpush.msra.mxu0 0.0
    %1635 = vmatpush.msra.mxu0 0.0
    %1636 = vmatpush.msra.mxu0 0.0
    %1637 = vmatpush.msra.mxu0 0.0
    %1638 = vmatpush.msra.mxu0 0.0
    %1639 = vmatpush.msra.mxu0 0.0
    %1640 = vmatpush.msra.mxu0 0.0
    %1641 = vmatpush.msra.mxu0 0.0
    %1642 = vmatpush.msra.mxu0 0.0
    %1643 = vmatpush.msra.mxu0 0.0
    %1644 = vmatpush.msra.mxu0 0.0
    %1645 = vmatpush.msra.mxu0 %v1487
    %1646 = vmatmul.f32.gmra.mxu0 %v1628
    %v1647 = vpop.f32.mrf.mxu0
    %v1648 = vadd.f32 0.0, %v1647
    %1649 = vdwg.mxu0
    %v1651 = vsel %vm657, %v1648, 0
    %1653 = vmatpush.msra.mxu0 0.0
    %1654 = vmatpush.msra.mxu0 0.0
    %1655 = vmatpush.msra.mxu0 0.0
    %1656 = vmatpush.msra.mxu0 0.0
    %1657 = vmatpush.msra.mxu0 0.0
    %1658 = vmatpush.msra.mxu0 0.0
    %1659 = vmatpush.msra.mxu0 0.0
    %1660 = vmatpush.msra.mxu0 0.0
    %1661 = vmatpush.msra.mxu0 0.0
    %1662 = vmatpush.msra.mxu0 0.0
    %1663 = vmatpush.msra.mxu0 0.0
    %1664 = vmatpush.msra.mxu0 0.0
    %1665 = vmatpush.msra.mxu0 0.0
    %1666 = vmatpush.msra.mxu0 0.0
    %1667 = vmatpush.msra.mxu0 0.0
    %1668 = vmatpush.msra.mxu0 %v1126
    %1669 = vmatmul.f32.gmra.mxu0 %v1651
    %v1670 = vpop.f32.mrf.mxu0
    %v1671 = vadd.f32 0.0, %v1670
    %1672 = vdwg.mxu0
    %v1673 = vadd.f32 %v1626, %v1671
    %v1675 = vsel %vm657, %v1482, 0
    %1677 = vmatpush.msra.mxu0 0.0
    %1678 = vmatpush.msra.mxu0 0.0
    %1679 = vmatpush.msra.mxu0 0.0
    %1680 = vmatpush.msra.mxu0 0.0
    %1681 = vmatpush.msra.mxu0 0.0
    %1682 = vmatpush.msra.mxu0 0.0
    %1683 = vmatpush.msra.mxu0 0.0
    %1684 = vmatpush.msra.mxu0 0.0
    %1685 = vmatpush.msra.mxu0 0.0
    %1686 = vmatpush.msra.mxu0 0.0
    %1687 = vmatpush.msra.mxu0 0.0
    %1688 = vmatpush.msra.mxu0 0.0
    %1689 = vmatpush.msra.mxu0 0.0
    %1690 = vmatpush.msra.mxu0 0.0
    %1691 = vmatpush.msra.mxu0 0.0
    %1692 = vmatpush.msra.mxu0 %v1487
    %1693 = vmatmul.f32.gmra.mxu0 %v1675
    %v1694 = vpop.f32.mrf.mxu0
    %v1695 = vadd.f32 0.0, %v1694
    %1696 = vdwg.mxu0
    %v1698 = vsel %vm657, %v1695, 0
    %1700 = vmatpush.msra.mxu0 0.0
    %1701 = vmatpush.msra.mxu0 0.0
    %1702 = vmatpush.msra.mxu0 0.0
    %1703 = vmatpush.msra.mxu0 0.0
    %1704 = vmatpush.msra.mxu0 0.0
    %1705 = vmatpush.msra.mxu0 0.0
    %1706 = vmatpush.msra.mxu0 0.0
    %1707 = vmatpush.msra.mxu0 0.0
    %1708 = vmatpush.msra.mxu0 0.0
    %1709 = vmatpush.msra.mxu0 0.0
    %1710 = vmatpush.msra.mxu0 0.0
    %1711 = vmatpush.msra.mxu0 0.0
    %1712 = vmatpush.msra.mxu0 0.0
    %1713 = vmatpush.msra.mxu0 0.0
    %1714 = vmatpush.msra.mxu0 0.0
    %1715 = vmatpush.msra.mxu0 %v1175
    %1716 = vmatmul.f32.gmra.mxu0 %v1698
    %v1717 = vpop.f32.mrf.mxu0
    %v1718 = vadd.f32 0.0, %v1717
    %1719 = vdwg.mxu0
    %v1720 = vadd.f32 %v1673, %v1718
    %1722 = vset.pattern.permute.xlu0 0
    %1723 = vperm.xlu0 %1722, %v1484
    %v1724 = vpop.permute.xlu0 %1723
    %v1726 = vmul.f32 %v1720, %v1724
    %1728 = vset.pattern.permute.xlu0 0
    %1729 = vperm.xlu0 %1728, %v1486
    %v1730 = vpop.permute.xlu0 %1729
    %v1732 = vadd.f32 %v1726, %v1730
    %s1733 = scalar_lea.vmem [#allocation51], 120
    %v1734 = vld [vmem:[%s1733] sm:$0xff]
    %s1735 = scalar_lea.vmem [#allocation51], 128
    %v1736 = vld [vmem:[%s1735] sm:$0xff]
    %s1737 = scalar_lea.vmem [#allocation51], 136
    %v1738 = vld [vmem:[%s1737] sm:$0xff]
    %s1739 = scalar_lea.vmem [#allocation51], 144
    %v1740 = vld [vmem:[%s1739] sm:$0xff]
    %s1741 = scalar_lea.vmem [#allocation51], 152
    %v1742 = vld [vmem:[%s1741] sm:$0xff]
    %s1743 = scalar_lea.vmem [#allocation49], 24
    %v1744 = vld [vmem:[%s1743] sm:$0xff]
    %s1745 = scalar_lea.vmem %s73, 24
    %v1746 = vld [vmem:[%s1745] sm:$0xff]
    %v1747 = vmax.f32 %v1732, 0.0
    %v1749 = vsel %vm657, %v1734, 0
    %1751 = vmatpush.msra.mxu0 0.0
    %1752 = vmatpush.msra.mxu0 0.0
    %1753 = vmatpush.msra.mxu0 0.0
    %1754 = vmatpush.msra.mxu0 0.0
    %1755 = vmatpush.msra.mxu0 0.0
    %1756 = vmatpush.msra.mxu0 0.0
    %1757 = vmatpush.msra.mxu0 0.0
    %1758 = vmatpush.msra.mxu0 0.0
    %1759 = vmatpush.msra.mxu0 0.0
    %1760 = vmatpush.msra.mxu0 0.0
    %1761 = vmatpush.msra.mxu0 0.0
    %1762 = vmatpush.msra.mxu0 0.0
    %1763 = vmatpush.msra.mxu0 0.0
    %1764 = vmatpush.msra.mxu0 0.0
    %1765 = vmatpush.msra.mxu0 0.0
    %1766 = vmatpush.msra.mxu0 %v1747
    %1767 = vmatmul.f32.gmra.mxu0 %v1749
    %v1768 = vpop.f32.mrf.mxu0
    %v1769 = vadd.f32 0.0, %v1768
    %1770 = vdwg.mxu0
    %v1772 = vsel %vm657, %v1736, 0
    %1774 = vmatpush.msra.mxu0 0.0
    %1775 = vmatpush.msra.mxu0 0.0
    %1776 = vmatpush.msra.mxu0 0.0
    %1777 = vmatpush.msra.mxu0 0.0
    %1778 = vmatpush.msra.mxu0 0.0
    %1779 = vmatpush.msra.mxu0 0.0
    %1780 = vmatpush.msra.mxu0 0.0
    %1781 = vmatpush.msra.mxu0 0.0
    %1782 = vmatpush.msra.mxu0 0.0
    %1783 = vmatpush.msra.mxu0 0.0
    %1784 = vmatpush.msra.mxu0 0.0
    %1785 = vmatpush.msra.mxu0 0.0
    %1786 = vmatpush.msra.mxu0 0.0
    %1787 = vmatpush.msra.mxu0 0.0
    %1788 = vmatpush.msra.mxu0 0.0
    %1789 = vmatpush.msra.mxu0 %v1747
    %1790 = vmatmul.f32.gmra.mxu0 %v1772
    %v1791 = vpop.f32.mrf.mxu0
    %v1792 = vadd.f32 0.0, %v1791
    %1793 = vdwg.mxu0
    %v1795 = vsel %vm657, %v1792, 0
    %1797 = vmatpush.msra.mxu0 0.0
    %1798 = vmatpush.msra.mxu0 0.0
    %1799 = vmatpush.msra.mxu0 0.0
    %1800 = vmatpush.msra.mxu0 0.0
    %1801 = vmatpush.msra.mxu0 0.0
    %1802 = vmatpush.msra.mxu0 0.0
    %1803 = vmatpush.msra.mxu0 0.0
    %1804 = vmatpush.msra.mxu0 0.0
    %1805 = vmatpush.msra.mxu0 0.0
    %1806 = vmatpush.msra.mxu0 0.0
    %1807 = vmatpush.msra.mxu0 0.0
    %1808 = vmatpush.msra.mxu0 0.0
    %1809 = vmatpush.msra.mxu0 0.0
    %1810 = vmatpush.msra.mxu0 0.0
    %1811 = vmatpush.msra.mxu0 0.0
    %1812 = vmatpush.msra.mxu0 %v1006
    %1813 = vmatmul.f32.gmra.mxu0 %v1795
    %v1814 = vpop.f32.mrf.mxu0
    %v1815 = vadd.f32 0.0, %v1814
    %1816 = vdwg.mxu0
    %v1818 = vsel %vm657, %v1769, 0
    %1820 = vmatpush.msra.mxu0 0.0
    %1821 = vmatpush.msra.mxu0 0.0
    %1822 = vmatpush.msra.mxu0 0.0
    %1823 = vmatpush.msra.mxu0 0.0
    %1824 = vmatpush.msra.mxu0 0.0
    %1825 = vmatpush.msra.mxu0 0.0
    %1826 = vmatpush.msra.mxu0 0.0
    %1827 = vmatpush.msra.mxu0 0.0
    %1828 = vmatpush.msra.mxu0 0.0
    %1829 = vmatpush.msra.mxu0 0.0
    %1830 = vmatpush.msra.mxu0 0.0
    %1831 = vmatpush.msra.mxu0 0.0
    %1832 = vmatpush.msra.mxu0 0.0
    %1833 = vmatpush.msra.mxu0 0.0
    %1834 = vmatpush.msra.mxu0 0.0
    %1835 = vmatpush.msra.mxu0 %v981
    %1836 = vmatmul.f32.gmra.mxu0 %v1818
    %v1837 = vpop.f32.mrf.mxu0
    %v1838 = vadd.f32 %v1815, %v1837
    %1839 = vdwg.mxu0
    %v1841 = vsel %vm657, %v1738, 0
    %1843 = vmatpush.msra.mxu0 0.0
    %1844 = vmatpush.msra.mxu0 0.0
    %1845 = vmatpush.msra.mxu0 0.0
    %1846 = vmatpush.msra.mxu0 0.0
    %1847 = vmatpush.msra.mxu0 0.0
    %1848 = vmatpush.msra.mxu0 0.0
    %1849 = vmatpush.msra.mxu0 0.0
    %1850 = vmatpush.msra.mxu0 0.0
    %1851 = vmatpush.msra.mxu0 0.0
    %1852 = vmatpush.msra.mxu0 0.0
    %1853 = vmatpush.msra.mxu0 0.0
    %1854 = vmatpush.msra.mxu0 0.0
    %1855 = vmatpush.msra.mxu0 0.0
    %1856 = vmatpush.msra.mxu0 0.0
    %1857 = vmatpush.msra.mxu0 0.0
    %1858 = vmatpush.msra.mxu0 %v1747
    %1859 = vmatmul.f32.gmra.mxu0 %v1841
    %v1860 = vpop.f32.mrf.mxu0
    %v1861 = vadd.f32 0.0, %v1860
    %1862 = vdwg.mxu0
    %v1864 = vsel %vm657, %v1861, 0
    %1866 = vmatpush.msra.mxu0 0.0
    %1867 = vmatpush.msra.mxu0 0.0
    %1868 = vmatpush.msra.mxu0 0.0
    %1869 = vmatpush.msra.mxu0 0.0
    %1870 = vmatpush.msra.mxu0 0.0
    %1871 = vmatpush.msra.mxu0 0.0
    %1872 = vmatpush.msra.mxu0 0.0
    %1873 = vmatpush.msra.mxu0 0.0
    %1874 = vmatpush.msra.mxu0 0.0
    %1875 = vmatpush.msra.mxu0 0.0
    %1876 = vmatpush.msra.mxu0 0.0
    %1877 = vmatpush.msra.mxu0 0.0
    %1878 = vmatpush.msra.mxu0 0.0
    %1879 = vmatpush.msra.mxu0 0.0
    %1880 = vmatpush.msra.mxu0 0.0
    %1881 = vmatpush.msra.mxu0 %v1077
    %1882 = vmatmul.f32.gmra.mxu0 %v1864
    %v1883 = vpop.f32.mrf.mxu0
    %v1884 = vadd.f32 0.0, %v1883
    %1885 = vdwg.mxu0
    %v1886 = vadd.f32 %v1838, %v1884
    %v1888 = vsel %vm657, %v1740, 0
    %1890 = vmatpush.msra.mxu0 0.0
    %1891 = vmatpush.msra.mxu0 0.0
    %1892 = vmatpush.msra.mxu0 0.0
    %1893 = vmatpush.msra.mxu0 0.0
    %1894 = vmatpush.msra.mxu0 0.0
    %1895 = vmatpush.msra.mxu0 0.0
    %1896 = vmatpush.msra.mxu0 0.0
    %1897 = vmatpush.msra.mxu0 0.0
    %1898 = vmatpush.msra.mxu0 0.0
    %1899 = vmatpush.msra.mxu0 0.0
    %1900 = vmatpush.msra.mxu0 0.0
    %1901 = vmatpush.msra.mxu0 0.0
    %1902 = vmatpush.msra.mxu0 0.0
    %1903 = vmatpush.msra.mxu0 0.0
    %1904 = vmatpush.msra.mxu0 0.0
    %1905 = vmatpush.msra.mxu0 %v1747
    %1906 = vmatmul.f32.gmra.mxu0 %v1888
    %v1907 = vpop.f32.mrf.mxu0
    %v1908 = vadd.f32 0.0, %v1907
    %1909 = vdwg.mxu0
    %v1911 = vsel %vm657, %v1908, 0
    %1913 = vmatpush.msra.mxu0 0.0
    %1914 = vmatpush.msra.mxu0 0.0
    %1915 = vmatpush.msra.mxu0 0.0
    %1916 = vmatpush.msra.mxu0 0.0
    %1917 = vmatpush.msra.mxu0 0.0
    %1918 = vmatpush.msra.mxu0 0.0
    %1919 = vmatpush.msra.mxu0 0.0
    %1920 = vmatpush.msra.mxu0 0.0
    %1921 = vmatpush.msra.mxu0 0.0
    %1922 = vmatpush.msra.mxu0 0.0
    %1923 = vmatpush.msra.mxu0 0.0
    %1924 = vmatpush.msra.mxu0 0.0
    %1925 = vmatpush.msra.mxu0 0.0
    %1926 = vmatpush.msra.mxu0 0.0
    %1927 = vmatpush.msra.mxu0 0.0
    %1928 = vmatpush.msra.mxu0 %v1126
    %1929 = vmatmul.f32.gmra.mxu0 %v1911
    %v1930 = vpop.f32.mrf.mxu0
    %v1931 = vadd.f32 0.0, %v1930
    %1932 = vdwg.mxu0
    %v1933 = vadd.f32 %v1886, %v1931
    %v1935 = vsel %vm657, %v1742, 0
    %1937 = vmatpush.msra.mxu0 0.0
    %1938 = vmatpush.msra.mxu0 0.0
    %1939 = vmatpush.msra.mxu0 0.0
    %1940 = vmatpush.msra.mxu0 0.0
    %1941 = vmatpush.msra.mxu0 0.0
    %1942 = vmatpush.msra.mxu0 0.0
    %1943 = vmatpush.msra.mxu0 0.0
    %1944 = vmatpush.msra.mxu0 0.0
    %1945 = vmatpush.msra.mxu0 0.0
    %1946 = vmatpush.msra.mxu0 0.0
    %1947 = vmatpush.msra.mxu0 0.0
    %1948 = vmatpush.msra.mxu0 0.0
    %1949 = vmatpush.msra.mxu0 0.0
    %1950 = vmatpush.msra.mxu0 0.0
    %1951 = vmatpush.msra.mxu0 0.0
    %1952 = vmatpush.msra.mxu0 %v1747
    %1953 = vmatmul.f32.gmra.mxu0 %v1935
    %v1954 = vpop.f32.mrf.mxu0
    %v1955 = vadd.f32 0.0, %v1954
    %1956 = vdwg.mxu0
    %v1958 = vsel %vm657, %v1955, 0
    %1960 = vmatpush.msra.mxu0 0.0
    %1961 = vmatpush.msra.mxu0 0.0
    %1962 = vmatpush.msra.mxu0 0.0
    %1963 = vmatpush.msra.mxu0 0.0
    %1964 = vmatpush.msra.mxu0 0.0
    %1965 = vmatpush.msra.mxu0 0.0
    %1966 = vmatpush.msra.mxu0 0.0
    %1967 = vmatpush.msra.mxu0 0.0
    %1968 = vmatpush.msra.mxu0 0.0
    %1969 = vmatpush.msra.mxu0 0.0
    %1970 = vmatpush.msra.mxu0 0.0
    %1971 = vmatpush.msra.mxu0 0.0
    %1972 = vmatpush.msra.mxu0 0.0
    %1973 = vmatpush.msra.mxu0 0.0
    %1974 = vmatpush.msra.mxu0 0.0
    %1975 = vmatpush.msra.mxu0 %v1175
    %1976 = vmatmul.f32.gmra.mxu0 %v1958
    %v1977 = vpop.f32.mrf.mxu0
    %v1978 = vadd.f32 0.0, %v1977
    %1979 = vdwg.mxu0
    %v1980 = vadd.f32 %v1933, %v1978
    %1982 = vset.pattern.permute.xlu0 0
    %1983 = vperm.xlu0 %1982, %v1744
    %v1984 = vpop.permute.xlu0 %1983
    %v1986 = vmul.f32 %v1980, %v1984
    %1988 = vset.pattern.permute.xlu0 0
    %1989 = vperm.xlu0 %1988, %v1746
    %v1990 = vpop.permute.xlu0 %1989
    %v1992 = vadd.f32 %v1986, %v1990
    %v1993 = vadd.f32 %v1992, %v1732
    %v1994 = vld [vmem:[%s3] sm:$0x1]
    %v1995 = vld [vmem:[#allocation45] sm:$0xff]
    %s1996 = scalar_lea.vmem [#allocation45], 8
    %v1997 = vld [vmem:[%s1996] sm:$0xff]
    %s1998 = scalar_lea.vmem [#allocation45], 16
    %v1999 = vld [vmem:[%s1998] sm:$0xff]
    %s2000 = scalar_lea.vmem [#allocation45], 24
    %v2001 = vld [vmem:[%s2000] sm:$0xff]
    %s2002 = scalar_lea.vmem [#allocation45], 32
    %v2003 = vld [vmem:[%s2002] sm:$0xff]
    %v2004 = vld [vmem:[#allocation42] sm:$0xff]
    %v2005 = vld [vmem:[#allocation43] sm:$0xff]
    %2007 = vset.pattern.permute.xlu0 0
    %2008 = vperm.xlu0 %2007, %v1995
    %v2009 = vpop.permute.xlu0 %2008
    %v2012 = vperm.slane %v1994, 0
    %v2014 = vmul.f32 %v2009, %v2012
    %v2015 = vld [vmem:[#allocation24] sm:$0xff]
    %v2016 = vld [vmem:[#allocation24 + $0x8] sm:$0xff]
    %v2017 = vld [vmem:[#allocation24 + $0x10] sm:$0xff]
    %v2018 = vld [vmem:[#allocation24 + $0x18] sm:$0xff]
    %2020 = vset.pattern.permute.xlu0 0
    %2021 = vperm.xlu0 %2020, %v1997
    %v2022 = vpop.permute.xlu0 %2021
    %v2024 = vmul.f32 %v2022, %v2012
    %s2025 = scalar_lea.vmem [#allocation24], 32
    %v2026 = vld [vmem:[%s2025] sm:$0xff]
    %v2027 = vld [vmem:[%s2025 + $0x8] sm:$0xff]
    %v2028 = vld [vmem:[%s2025 + $0x10] sm:$0xff]
    %v2029 = vld [vmem:[%s2025 + $0x18] sm:$0xff]
    %vm2030 = vcmask 261120
    %v2032 = vsel %vm2030, %v2024, 0
    %2034 = vmatpush.msra.mxu0 0.0
    %2035 = vmatpush.msra.mxu0 0.0
    %2036 = vmatpush.msra.mxu0 0.0
    %2037 = vmatpush.msra.mxu0 0.0
    %2038 = vmatpush.msra.mxu0 0.0
    %2039 = vmatpush.msra.mxu0 0.0
    %2040 = vmatpush.msra.mxu0 0.0
    %2041 = vmatpush.msra.mxu0 0.0
    %2042 = vmatpush.msra.mxu0 0.0
    %2043 = vmatpush.msra.mxu0 0.0
    %2044 = vmatpush.msra.mxu0 0.0
    %2045 = vmatpush.msra.mxu0 0.0
    %2046 = vmatpush.msra.mxu0 %v2029
    %2047 = vmatpush.msra.mxu0 %v2028
    %2048 = vmatpush.msra.mxu0 %v2027
    %2049 = vmatpush.msra.mxu0 %v2026
    %2050 = vmatmul.f32.gmra.mxu0 %v2032
    %v2051 = vpop.f32.mrf.mxu0
    %v2052 = vadd.f32 0.0, %v2051
    %2053 = vdwg.mxu0
    %v2055 = vsel %vm2030, %v2014, 0
    %2057 = vmatpush.msra.mxu0 0.0
    %2058 = vmatpush.msra.mxu0 0.0
    %2059 = vmatpush.msra.mxu0 0.0
    %2060 = vmatpush.msra.mxu0 0.0
    %2061 = vmatpush.msra.mxu0 0.0
    %2062 = vmatpush.msra.mxu0 0.0
    %2063 = vmatpush.msra.mxu0 0.0
    %2064 = vmatpush.msra.mxu0 0.0
    %2065 = vmatpush.msra.mxu0 0.0
    %2066 = vmatpush.msra.mxu0 0.0
    %2067 = vmatpush.msra.mxu0 0.0
    %2068 = vmatpush.msra.mxu0 0.0
    %2069 = vmatpush.msra.mxu0 %v2018
    %2070 = vmatpush.msra.mxu0 %v2017
    %2071 = vmatpush.msra.mxu0 %v2016
    %2072 = vmatpush.msra.mxu0 %v2015
    %2073 = vmatmul.f32.gmra.mxu0 %v2055
    %v2074 = vpop.f32.mrf.mxu0
    %v2075 = vadd.f32 %v2052, %v2074
    %2076 = vdwg.mxu0
    %2078 = vset.pattern.permute.xlu0 0
    %2079 = vperm.xlu0 %2078, %v1999
    %v2080 = vpop.permute.xlu0 %2079
    %v2082 = vmul.f32 %v2080, %v2012
    %s2083 = scalar_lea.vmem [#allocation24], 64
    %v2084 = vld [vmem:[%s2083] sm:$0xff]
    %v2085 = vld [vmem:[%s2083 + $0x8] sm:$0xff]
    %v2086 = vld [vmem:[%s2083 + $0x10] sm:$0xff]
    %v2087 = vld [vmem:[%s2083 + $0x18] sm:$0xff]
    %v2089 = vsel %vm2030, %v2082, 0
    %2091 = vmatpush.msra.mxu0 0.0
    %2092 = vmatpush.msra.mxu0 0.0
    %2093 = vmatpush.msra.mxu0 0.0
    %2094 = vmatpush.msra.mxu0 0.0
    %2095 = vmatpush.msra.mxu0 0.0
    %2096 = vmatpush.msra.mxu0 0.0
    %2097 = vmatpush.msra.mxu0 0.0
    %2098 = vmatpush.msra.mxu0 0.0
    %2099 = vmatpush.msra.mxu0 0.0
    %2100 = vmatpush.msra.mxu0 0.0
    %2101 = vmatpush.msra.mxu0 0.0
    %2102 = vmatpush.msra.mxu0 0.0
    %2103 = vmatpush.msra.mxu0 %v2087
    %2104 = vmatpush.msra.mxu0 %v2086
    %2105 = vmatpush.msra.mxu0 %v2085
    %2106 = vmatpush.msra.mxu0 %v2084
    %2107 = vmatmul.f32.gmra.mxu0 %v2089
    %v2108 = vpop.f32.mrf.mxu0
    %v2109 = vadd.f32 0.0, %v2108
    %2110 = vdwg.mxu0
    %v2111 = vadd.f32 %v2075, %v2109
    %2113 = vset.pattern.permute.xlu0 0
    %2114 = vperm.xlu0 %2113, %v2001
    %v2115 = vpop.permute.xlu0 %2114
    %v2117 = vmul.f32 %v2115, %v2012
    %s2118 = scalar_lea.vmem [#allocation24], 96
    %v2119 = vld [vmem:[%s2118] sm:$0xff]
    %v2120 = vld [vmem:[%s2118 + $0x8] sm:$0xff]
    %v2121 = vld [vmem:[%s2118 + $0x10] sm:$0xff]
    %v2122 = vld [vmem:[%s2118 + $0x18] sm:$0xff]
    %v2124 = vsel %vm2030, %v2117, 0
    %2126 = vmatpush.msra.mxu0 0.0
    %2127 = vmatpush.msra.mxu0 0.0
    %2128 = vmatpush.msra.mxu0 0.0
    %2129 = vmatpush.msra.mxu0 0.0
    %2130 = vmatpush.msra.mxu0 0.0
    %2131 = vmatpush.msra.mxu0 0.0
    %2132 = vmatpush.msra.mxu0 0.0
    %2133 = vmatpush.msra.mxu0 0.0
    %2134 = vmatpush.msra.mxu0 0.0
    %2135 = vmatpush.msra.mxu0 0.0
    %2136 = vmatpush.msra.mxu0 0.0
    %2137 = vmatpush.msra.mxu0 0.0
    %2138 = vmatpush.msra.mxu0 %v2122
    %2139 = vmatpush.msra.mxu0 %v2121
    %2140 = vmatpush.msra.mxu0 %v2120
    %2141 = vmatpush.msra.mxu0 %v2119
    %2142 = vmatmul.f32.gmra.mxu0 %v2124
    %v2143 = vpop.f32.mrf.mxu0
    %v2144 = vadd.f32 0.0, %v2143
    %2145 = vdwg.mxu0
    %v2146 = vadd.f32 %v2111, %v2144
    %2148 = vset.pattern.permute.xlu0 0
    %2149 = vperm.xlu0 %2148, %v2003
    %v2150 = vpop.permute.xlu0 %2149
    %v2152 = vmul.f32 %v2150, %v2012
    %s2153 = scalar_lea.vmem [#allocation24], 128
    %v2154 = vld [vmem:[%s2153] sm:$0xff]
    %v2155 = vld [vmem:[%s2153 + $0x8] sm:$0xff]
    %v2156 = vld [vmem:[%s2153 + $0x10] sm:$0xff]
    %v2157 = vld [vmem:[%s2153 + $0x18] sm:$0xff]
    %v2159 = vsel %vm2030, %v2152, 0
    %2161 = vmatpush.msra.mxu0 0.0
    %2162 = vmatpush.msra.mxu0 0.0
    %2163 = vmatpush.msra.mxu0 0.0
    %2164 = vmatpush.msra.mxu0 0.0
    %2165 = vmatpush.msra.mxu0 0.0
    %2166 = vmatpush.msra.mxu0 0.0
    %2167 = vmatpush.msra.mxu0 0.0
    %2168 = vmatpush.msra.mxu0 0.0
    %2169 = vmatpush.msra.mxu0 0.0
    %2170 = vmatpush.msra.mxu0 0.0
    %2171 = vmatpush.msra.mxu0 0.0
    %2172 = vmatpush.msra.mxu0 0.0
    %2173 = vmatpush.msra.mxu0 %v2157
    %2174 = vmatpush.msra.mxu0 %v2156
    %2175 = vmatpush.msra.mxu0 %v2155
    %2176 = vmatpush.msra.mxu0 %v2154
    %2177 = vmatmul.f32.gmra.mxu0 %v2159
    %v2178 = vpop.f32.mrf.mxu0
    %v2179 = vadd.f32 0.0, %v2178
    %2180 = vdwg.mxu0
    %v2181 = vadd.f32 %v2146, %v2179
    %2183 = vset.pattern.permute.xlu0 0
    %2184 = vperm.xlu0 %2183, %v2004
    %v2185 = vpop.permute.xlu0 %2184
    %v2187 = vmul.f32 %v2181, %v2185
    %2189 = vset.pattern.permute.xlu0 0
    %2190 = vperm.xlu0 %2189, %v2005
    %v2191 = vpop.permute.xlu0 %2190
    %v2193 = vadd.f32 %v2187, %v2191
    %v2194 = vld [vmem:[#allocation40] sm:$0xff]
    %s2195 = scalar_lea.vmem [#allocation40], 8
    %v2196 = vld [vmem:[%s2195] sm:$0xff]
    %s2197 = scalar_lea.vmem [#allocation40], 16
    %v2198 = vld [vmem:[%s2197] sm:$0xff]
    %s2199 = scalar_lea.vmem [#allocation40], 24
    %v2200 = vld [vmem:[%s2199] sm:$0xff]
    %s2201 = scalar_lea.vmem [#allocation40], 32
    %v2202 = vld [vmem:[%s2201] sm:$0xff]
    %v2203 = vld [vmem:[#allocation39] sm:$0xff]
    %v2204 = vld [vmem:[%s55] sm:$0xff]
    %v2205 = vmax.f32 %v2193, 0.0
    %v2207 = vsel %vm657, %v2194, 0
    %2209 = vmatpush.msra.mxu0 0.0
    %2210 = vmatpush.msra.mxu0 0.0
    %2211 = vmatpush.msra.mxu0 0.0
    %2212 = vmatpush.msra.mxu0 0.0
    %2213 = vmatpush.msra.mxu0 0.0
    %2214 = vmatpush.msra.mxu0 0.0
    %2215 = vmatpush.msra.mxu0 0.0
    %2216 = vmatpush.msra.mxu0 0.0
    %2217 = vmatpush.msra.mxu0 0.0
    %2218 = vmatpush.msra.mxu0 0.0
    %2219 = vmatpush.msra.mxu0 0.0
    %2220 = vmatpush.msra.mxu0 0.0
    %2221 = vmatpush.msra.mxu0 0.0
    %2222 = vmatpush.msra.mxu0 0.0
    %2223 = vmatpush.msra.mxu0 0.0
    %2224 = vmatpush.msra.mxu0 %v2205
    %2225 = vmatmul.f32.gmra.mxu0 %v2207
    %v2226 = vpop.f32.mrf.mxu0
    %v2227 = vadd.f32 0.0, %v2226
    %2228 = vdwg.mxu0
    %v2230 = vsel %vm657, %v2196, 0
    %2232 = vmatpush.msra.mxu0 0.0
    %2233 = vmatpush.msra.mxu0 0.0
    %2234 = vmatpush.msra.mxu0 0.0
    %2235 = vmatpush.msra.mxu0 0.0
    %2236 = vmatpush.msra.mxu0 0.0
    %2237 = vmatpush.msra.mxu0 0.0
    %2238 = vmatpush.msra.mxu0 0.0
    %2239 = vmatpush.msra.mxu0 0.0
    %2240 = vmatpush.msra.mxu0 0.0
    %2241 = vmatpush.msra.mxu0 0.0
    %2242 = vmatpush.msra.mxu0 0.0
    %2243 = vmatpush.msra.mxu0 0.0
    %2244 = vmatpush.msra.mxu0 0.0
    %2245 = vmatpush.msra.mxu0 0.0
    %2246 = vmatpush.msra.mxu0 0.0
    %2247 = vmatpush.msra.mxu0 %v2205
    %2248 = vmatmul.f32.gmra.mxu0 %v2230
    %v2249 = vpop.f32.mrf.mxu0
    %v2250 = vadd.f32 0.0, %v2249
    %2251 = vdwg.mxu0
    %v2253 = vsel %vm2030, %v2250, 0
    %2255 = vmatpush.msra.mxu0 0.0
    %2256 = vmatpush.msra.mxu0 0.0
    %2257 = vmatpush.msra.mxu0 0.0
    %2258 = vmatpush.msra.mxu0 0.0
    %2259 = vmatpush.msra.mxu0 0.0
    %2260 = vmatpush.msra.mxu0 0.0
    %2261 = vmatpush.msra.mxu0 0.0
    %2262 = vmatpush.msra.mxu0 0.0
    %2263 = vmatpush.msra.mxu0 0.0
    %2264 = vmatpush.msra.mxu0 0.0
    %2265 = vmatpush.msra.mxu0 0.0
    %2266 = vmatpush.msra.mxu0 0.0
    %2267 = vmatpush.msra.mxu0 %v2029
    %2268 = vmatpush.msra.mxu0 %v2028
    %2269 = vmatpush.msra.mxu0 %v2027
    %2270 = vmatpush.msra.mxu0 %v2026
    %2271 = vmatmul.f32.gmra.mxu0 %v2253
    %v2272 = vpop.f32.mrf.mxu0
    %v2273 = vadd.f32 0.0, %v2272
    %2274 = vdwg.mxu0
    %v2276 = vsel %vm2030, %v2227, 0
    %2278 = vmatpush.msra.mxu0 0.0
    %2279 = vmatpush.msra.mxu0 0.0
    %2280 = vmatpush.msra.mxu0 0.0
    %2281 = vmatpush.msra.mxu0 0.0
    %2282 = vmatpush.msra.mxu0 0.0
    %2283 = vmatpush.msra.mxu0 0.0
    %2284 = vmatpush.msra.mxu0 0.0
    %2285 = vmatpush.msra.mxu0 0.0
    %2286 = vmatpush.msra.mxu0 0.0
    %2287 = vmatpush.msra.mxu0 0.0
    %2288 = vmatpush.msra.mxu0 0.0
    %2289 = vmatpush.msra.mxu0 0.0
    %2290 = vmatpush.msra.mxu0 %v2018
    %2291 = vmatpush.msra.mxu0 %v2017
    %2292 = vmatpush.msra.mxu0 %v2016
    %2293 = vmatpush.msra.mxu0 %v2015
    %2294 = vmatmul.f32.gmra.mxu0 %v2276
    %v2295 = vpop.f32.mrf.mxu0
    %v2296 = vadd.f32 %v2273, %v2295
    %2297 = vdwg.mxu0
    %v2299 = vsel %vm657, %v2198, 0
    %2301 = vmatpush.msra.mxu0 0.0
    %2302 = vmatpush.msra.mxu0 0.0
    %2303 = vmatpush.msra.mxu0 0.0
    %2304 = vmatpush.msra.mxu0 0.0
    %2305 = vmatpush.msra.mxu0 0.0
    %2306 = vmatpush.msra.mxu0 0.0
    %2307 = vmatpush.msra.mxu0 0.0
    %2308 = vmatpush.msra.mxu0 0.0
    %2309 = vmatpush.msra.mxu0 0.0
    %2310 = vmatpush.msra.mxu0 0.0
    %2311 = vmatpush.msra.mxu0 0.0
    %2312 = vmatpush.msra.mxu0 0.0
    %2313 = vmatpush.msra.mxu0 0.0
    %2314 = vmatpush.msra.mxu0 0.0
    %2315 = vmatpush.msra.mxu0 0.0
    %2316 = vmatpush.msra.mxu0 %v2205
    %2317 = vmatmul.f32.gmra.mxu0 %v2299
    %v2318 = vpop.f32.mrf.mxu0
    %v2319 = vadd.f32 0.0, %v2318
    %2320 = vdwg.mxu0
    %v2322 = vsel %vm2030, %v2319, 0
    %2324 = vmatpush.msra.mxu0 0.0
    %2325 = vmatpush.msra.mxu0 0.0
    %2326 = vmatpush.msra.mxu0 0.0
    %2327 = vmatpush.msra.mxu0 0.0
    %2328 = vmatpush.msra.mxu0 0.0
    %2329 = vmatpush.msra.mxu0 0.0
    %2330 = vmatpush.msra.mxu0 0.0
    %2331 = vmatpush.msra.mxu0 0.0
    %2332 = vmatpush.msra.mxu0 0.0
    %2333 = vmatpush.msra.mxu0 0.0
    %2334 = vmatpush.msra.mxu0 0.0
    %2335 = vmatpush.msra.mxu0 0.0
    %2336 = vmatpush.msra.mxu0 %v2087
    %2337 = vmatpush.msra.mxu0 %v2086
    %2338 = vmatpush.msra.mxu0 %v2085
    %2339 = vmatpush.msra.mxu0 %v2084
    %2340 = vmatmul.f32.gmra.mxu0 %v2322
    %v2341 = vpop.f32.mrf.mxu0
    %v2342 = vadd.f32 0.0, %v2341
    %2343 = vdwg.mxu0
    %v2344 = vadd.f32 %v2296, %v2342
    %v2346 = vsel %vm657, %v2200, 0
    %2348 = vmatpush.msra.mxu0 0.0
    %2349 = vmatpush.msra.mxu0 0.0
    %2350 = vmatpush.msra.mxu0 0.0
    %2351 = vmatpush.msra.mxu0 0.0
    %2352 = vmatpush.msra.mxu0 0.0
    %2353 = vmatpush.msra.mxu0 0.0
    %2354 = vmatpush.msra.mxu0 0.0
    %2355 = vmatpush.msra.mxu0 0.0
    %2356 = vmatpush.msra.mxu0 0.0
    %2357 = vmatpush.msra.mxu0 0.0
    %2358 = vmatpush.msra.mxu0 0.0
    %2359 = vmatpush.msra.mxu0 0.0
    %2360 = vmatpush.msra.mxu0 0.0
    %2361 = vmatpush.msra.mxu0 0.0
    %2362 = vmatpush.msra.mxu0 0.0
    %2363 = vmatpush.msra.mxu0 %v2205
    %2364 = vmatmul.f32.gmra.mxu0 %v2346
    %v2365 = vpop.f32.mrf.mxu0
    %v2366 = vadd.f32 0.0, %v2365
    %2367 = vdwg.mxu0
    %v2369 = vsel %vm2030, %v2366, 0
    %2371 = vmatpush.msra.mxu0 0.0
    %2372 = vmatpush.msra.mxu0 0.0
    %2373 = vmatpush.msra.mxu0 0.0
    %2374 = vmatpush.msra.mxu0 0.0
    %2375 = vmatpush.msra.mxu0 0.0
    %2376 = vmatpush.msra.mxu0 0.0
    %2377 = vmatpush.msra.mxu0 0.0
    %2378 = vmatpush.msra.mxu0 0.0
    %2379 = vmatpush.msra.mxu0 0.0
    %2380 = vmatpush.msra.mxu0 0.0
    %2381 = vmatpush.msra.mxu0 0.0
    %2382 = vmatpush.msra.mxu0 0.0
    %2383 = vmatpush.msra.mxu0 %v2122
    %2384 = vmatpush.msra.mxu0 %v2121
    %2385 = vmatpush.msra.mxu0 %v2120
    %2386 = vmatpush.msra.mxu0 %v2119
    %2387 = vmatmul.f32.gmra.mxu0 %v2369
    %v2388 = vpop.f32.mrf.mxu0
    %v2389 = vadd.f32 0.0, %v2388
    %2390 = vdwg.mxu0
    %v2391 = vadd.f32 %v2344, %v2389
    %v2393 = vsel %vm657, %v2202, 0
    %2395 = vmatpush.msra.mxu0 0.0
    %2396 = vmatpush.msra.mxu0 0.0
    %2397 = vmatpush.msra.mxu0 0.0
    %2398 = vmatpush.msra.mxu0 0.0
    %2399 = vmatpush.msra.mxu0 0.0
    %2400 = vmatpush.msra.mxu0 0.0
    %2401 = vmatpush.msra.mxu0 0.0
    %2402 = vmatpush.msra.mxu0 0.0
    %2403 = vmatpush.msra.mxu0 0.0
    %2404 = vmatpush.msra.mxu0 0.0
    %2405 = vmatpush.msra.mxu0 0.0
    %2406 = vmatpush.msra.mxu0 0.0
    %2407 = vmatpush.msra.mxu0 0.0
    %2408 = vmatpush.msra.mxu0 0.0
    %2409 = vmatpush.msra.mxu0 0.0
    %2410 = vmatpush.msra.mxu0 %v2205
    %2411 = vmatmul.f32.gmra.mxu0 %v2393
    %v2412 = vpop.f32.mrf.mxu0
    %v2413 = vadd.f32 0.0, %v2412
    %2414 = vdwg.mxu0
    %v2416 = vsel %vm2030, %v2413, 0
    %2418 = vmatpush.msra.mxu0 0.0
    %2419 = vmatpush.msra.mxu0 0.0
    %2420 = vmatpush.msra.mxu0 0.0
    %2421 = vmatpush.msra.mxu0 0.0
    %2422 = vmatpush.msra.mxu0 0.0
    %2423 = vmatpush.msra.mxu0 0.0
    %2424 = vmatpush.msra.mxu0 0.0
    %2425 = vmatpush.msra.mxu0 0.0
    %2426 = vmatpush.msra.mxu0 0.0
    %2427 = vmatpush.msra.mxu0 0.0
    %2428 = vmatpush.msra.mxu0 0.0
    %2429 = vmatpush.msra.mxu0 0.0
    %2430 = vmatpush.msra.mxu0 %v2157
    %2431 = vmatpush.msra.mxu0 %v2156
    %2432 = vmatpush.msra.mxu0 %v2155
    %2433 = vmatpush.msra.mxu0 %v2154
    %2434 = vmatmul.f32.gmra.mxu0 %v2416
    %v2435 = vpop.f32.mrf.mxu0
    %v2436 = vadd.f32 0.0, %v2435
    %2437 = vdwg.mxu0
    %v2438 = vadd.f32 %v2391, %v2436
    %2440 = vset.pattern.permute.xlu0 0
    %2441 = vperm.xlu0 %2440, %v2203
    %v2442 = vpop.permute.xlu0 %2441
    %v2444 = vmul.f32 %v2438, %v2442
    %2446 = vset.pattern.permute.xlu0 0
    %2447 = vperm.xlu0 %2446, %v2204
    %v2448 = vpop.permute.xlu0 %2447
    %v2450 = vadd.f32 %v2444, %v2448
    %v2451 = vld [vmem:[#allocation21] sm:$0xff]
    %v2452 = vld [vmem:[#allocation21 + $0x8] sm:$0xff]
    %v2453 = vld [vmem:[#allocation21 + $0x10] sm:$0xff]
    %v2454 = vld [vmem:[#allocation21 + $0x18] sm:$0xff]
    %v2456 = vsel %vm2030, %v2450, 0
    %2458 = vmatpush.msra.mxu0 0.0
    %2459 = vmatpush.msra.mxu0 0.0
    %2460 = vmatpush.msra.mxu0 0.0
    %2461 = vmatpush.msra.mxu0 0.0
    %2462 = vmatpush.msra.mxu0 0.0
    %2463 = vmatpush.msra.mxu0 0.0
    %2464 = vmatpush.msra.mxu0 0.0
    %2465 = vmatpush.msra.mxu0 0.0
    %2466 = vmatpush.msra.mxu0 0.0
    %2467 = vmatpush.msra.mxu0 0.0
    %2468 = vmatpush.msra.mxu0 0.0
    %2469 = vmatpush.msra.mxu0 0.0
    %2470 = vmatpush.msra.mxu0 %v2454
    %2471 = vmatpush.msra.mxu0 %v2453
    %2472 = vmatpush.msra.mxu0 %v2452
    %2473 = vmatpush.msra.mxu0 %v2451
    %2474 = vmatmul.f32.gmra.mxu0 %v2456
    %v2475 = vpop.f32.mrf.mxu0
    %v2476 = vadd.f32 0.0, %v2475
    %2477 = vdwg.mxu0
    %s2478 = scalar_lea.vmem [#allocation21], 32
    %v2479 = vld [vmem:[%s2478] sm:$0xff]
    %v2480 = vld [vmem:[%s2478 + $0x8] sm:$0xff]
    %v2481 = vld [vmem:[%s2478 + $0x10] sm:$0xff]
    %v2482 = vld [vmem:[%s2478 + $0x18] sm:$0xff]
    %2483 = vmatpush.msra.mxu0 0.0
    %2484 = vmatpush.msra.mxu0 0.0
    %2485 = vmatpush.msra.mxu0 0.0
    %2486 = vmatpush.msra.mxu0 0.0
    %2487 = vmatpush.msra.mxu0 0.0
    %2488 = vmatpush.msra.mxu0 0.0
    %2489 = vmatpush.msra.mxu0 0.0
    %2490 = vmatpush.msra.mxu0 0.0
    %2491 = vmatpush.msra.mxu0 0.0
    %2492 = vmatpush.msra.mxu0 0.0
    %2493 = vmatpush.msra.mxu0 0.0
    %2494 = vmatpush.msra.mxu0 0.0
    %2495 = vmatpush.msra.mxu0 %v2482
    %2496 = vmatpush.msra.mxu0 %v2481
    %2497 = vmatpush.msra.mxu0 %v2480
    %2498 = vmatpush.msra.mxu0 %v2479
    %2499 = vmatmul.f32.gmra.mxu0 %v2456
    %v2500 = vpop.f32.mrf.mxu0
    %v2501 = vadd.f32 0.0, %v2500
    %2502 = vdwg.mxu0
    %v2503 = vmax.f32 %v2476, %v2501
    %s2504 = scalar_lea.vmem [#allocation40], 40
    %v2505 = vld [vmem:[%s2504] sm:$0xff]
    %s2506 = scalar_lea.vmem [#allocation40], 48
    %v2507 = vld [vmem:[%s2506] sm:$0xff]
    %s2508 = scalar_lea.vmem [#allocation40], 56
    %v2509 = vld [vmem:[%s2508] sm:$0xff]
    %s2510 = scalar_lea.vmem [#allocation40], 64
    %v2511 = vld [vmem:[%s2510] sm:$0xff]
    %s2512 = scalar_lea.vmem [#allocation40], 72
    %v2513 = vld [vmem:[%s2512] sm:$0xff]
    %s2514 = scalar_lea.vmem [#allocation39], 8
    %v2515 = vld [vmem:[%s2514] sm:$0xff]
    %s2516 = scalar_lea.vmem %s55, 8
    %v2517 = vld [vmem:[%s2516] sm:$0xff]
    %v2518 = vmax.f32 %v2503, 0.0
    %v2520 = vsel %vm657, %v2505, 0
    %2522 = vmatpush.msra.mxu0 0.0
    %2523 = vmatpush.msra.mxu0 0.0
    %2524 = vmatpush.msra.mxu0 0.0
    %2525 = vmatpush.msra.mxu0 0.0
    %2526 = vmatpush.msra.mxu0 0.0
    %2527 = vmatpush.msra.mxu0 0.0
    %2528 = vmatpush.msra.mxu0 0.0
    %2529 = vmatpush.msra.mxu0 0.0
    %2530 = vmatpush.msra.mxu0 0.0
    %2531 = vmatpush.msra.mxu0 0.0
    %2532 = vmatpush.msra.mxu0 0.0
    %2533 = vmatpush.msra.mxu0 0.0
    %2534 = vmatpush.msra.mxu0 0.0
    %2535 = vmatpush.msra.mxu0 0.0
    %2536 = vmatpush.msra.mxu0 0.0
    %2537 = vmatpush.msra.mxu0 %v2518
    %2538 = vmatmul.f32.gmra.mxu0 %v2520
    %v2539 = vpop.f32.mrf.mxu0
    %v2540 = vadd.f32 0.0, %v2539
    %2541 = vdwg.mxu0
    %v2542 = vld [vmem:[#allocation22] sm:$0xff]
    %v2543 = vld [vmem:[#allocation22 + $0x8] sm:$0xff]
    %v2545 = vsel %vm657, %v2507, 0
    %2547 = vmatpush.msra.mxu0 0.0
    %2548 = vmatpush.msra.mxu0 0.0
    %2549 = vmatpush.msra.mxu0 0.0
    %2550 = vmatpush.msra.mxu0 0.0
    %2551 = vmatpush.msra.mxu0 0.0
    %2552 = vmatpush.msra.mxu0 0.0
    %2553 = vmatpush.msra.mxu0 0.0
    %2554 = vmatpush.msra.mxu0 0.0
    %2555 = vmatpush.msra.mxu0 0.0
    %2556 = vmatpush.msra.mxu0 0.0
    %2557 = vmatpush.msra.mxu0 0.0
    %2558 = vmatpush.msra.mxu0 0.0
    %2559 = vmatpush.msra.mxu0 0.0
    %2560 = vmatpush.msra.mxu0 0.0
    %2561 = vmatpush.msra.mxu0 0.0
    %2562 = vmatpush.msra.mxu0 %v2518
    %2563 = vmatmul.f32.gmra.mxu0 %v2545
    %v2564 = vpop.f32.mrf.mxu0
    %v2565 = vadd.f32 0.0, %v2564
    %2566 = vdwg.mxu0
    %s2567 = scalar_lea.vmem [#allocation22], 16
    %v2568 = vld [vmem:[%s2567] sm:$0xff]
    %v2569 = vld [vmem:[%s2567 + $0x8] sm:$0xff]
    %v2571 = vsel %vm718, %v2565, 0
    %2573 = vmatpush.msra.mxu0 0.0
    %2574 = vmatpush.msra.mxu0 0.0
    %2575 = vmatpush.msra.mxu0 0.0
    %2576 = vmatpush.msra.mxu0 0.0
    %2577 = vmatpush.msra.mxu0 0.0
    %2578 = vmatpush.msra.mxu0 0.0
    %2579 = vmatpush.msra.mxu0 0.0
    %2580 = vmatpush.msra.mxu0 0.0
    %2581 = vmatpush.msra.mxu0 0.0
    %2582 = vmatpush.msra.mxu0 0.0
    %2583 = vmatpush.msra.mxu0 0.0
    %2584 = vmatpush.msra.mxu0 0.0
    %2585 = vmatpush.msra.mxu0 0.0
    %2586 = vmatpush.msra.mxu0 0.0
    %2587 = vmatpush.msra.mxu0 %v2569
    %2588 = vmatpush.msra.mxu0 %v2568
    %2589 = vmatmul.f32.gmra.mxu0 %v2571
    %v2590 = vpop.f32.mrf.mxu0
    %v2591 = vadd.f32 0.0, %v2590
    %2592 = vdwg.mxu0
    %v2594 = vsel %vm718, %v2540, 0
    %2596 = vmatpush.msra.mxu0 0.0
    %2597 = vmatpush.msra.mxu0 0.0
    %2598 = vmatpush.msra.mxu0 0.0
    %2599 = vmatpush.msra.mxu0 0.0
    %2600 = vmatpush.msra.mxu0 0.0
    %2601 = vmatpush.msra.mxu0 0.0
    %2602 = vmatpush.msra.mxu0 0.0
    %2603 = vmatpush.msra.mxu0 0.0
    %2604 = vmatpush.msra.mxu0 0.0
    %2605 = vmatpush.msra.mxu0 0.0
    %2606 = vmatpush.msra.mxu0 0.0
    %2607 = vmatpush.msra.mxu0 0.0
    %2608 = vmatpush.msra.mxu0 0.0
    %2609 = vmatpush.msra.mxu0 0.0
    %2610 = vmatpush.msra.mxu0 %v2543
    %2611 = vmatpush.msra.mxu0 %v2542
    %2612 = vmatmul.f32.gmra.mxu0 %v2594
    %v2613 = vpop.f32.mrf.mxu0
    %v2614 = vadd.f32 %v2591, %v2613
    %2615 = vdwg.mxu0
    %v2617 = vsel %vm657, %v2509, 0
    %2619 = vmatpush.msra.mxu0 0.0
    %2620 = vmatpush.msra.mxu0 0.0
    %2621 = vmatpush.msra.mxu0 0.0
    %2622 = vmatpush.msra.mxu0 0.0
    %2623 = vmatpush.msra.mxu0 0.0
    %2624 = vmatpush.msra.mxu0 0.0
    %2625 = vmatpush.msra.mxu0 0.0
    %2626 = vmatpush.msra.mxu0 0.0
    %2627 = vmatpush.msra.mxu0 0.0
    %2628 = vmatpush.msra.mxu0 0.0
    %2629 = vmatpush.msra.mxu0 0.0
    %2630 = vmatpush.msra.mxu0 0.0
    %2631 = vmatpush.msra.mxu0 0.0
    %2632 = vmatpush.msra.mxu0 0.0
    %2633 = vmatpush.msra.mxu0 0.0
    %2634 = vmatpush.msra.mxu0 %v2518
    %2635 = vmatmul.f32.gmra.mxu0 %v2617
    %v2636 = vpop.f32.mrf.mxu0
    %v2637 = vadd.f32 0.0, %v2636
    %2638 = vdwg.mxu0
    %s2639 = scalar_lea.vmem [#allocation22], 32
    %v2640 = vld [vmem:[%s2639] sm:$0xff]
    %v2641 = vld [vmem:[%s2639 + $0x8] sm:$0xff]
    %v2643 = vsel %vm718, %v2637, 0
    %2645 = vmatpush.msra.mxu0 0.0
    %2646 = vmatpush.msra.mxu0 0.0
    %2647 = vmatpush.msra.mxu0 0.0
    %2648 = vmatpush.msra.mxu0 0.0
    %2649 = vmatpush.msra.mxu0 0.0
    %2650 = vmatpush.msra.mxu0 0.0
    %2651 = vmatpush.msra.mxu0 0.0
    %2652 = vmatpush.msra.mxu0 0.0
    %2653 = vmatpush.msra.mxu0 0.0
    %2654 = vmatpush.msra.mxu0 0.0
    %2655 = vmatpush.msra.mxu0 0.0
    %2656 = vmatpush.msra.mxu0 0.0
    %2657 = vmatpush.msra.mxu0 0.0
    %2658 = vmatpush.msra.mxu0 0.0
    %2659 = vmatpush.msra.mxu0 %v2641
    %2660 = vmatpush.msra.mxu0 %v2640
    %2661 = vmatmul.f32.gmra.mxu0 %v2643
    %v2662 = vpop.f32.mrf.mxu0
    %v2663 = vadd.f32 0.0, %v2662
    %2664 = vdwg.mxu0
    %v2665 = vadd.f32 %v2614, %v2663
    %v2667 = vsel %vm657, %v2511, 0
    %2669 = vmatpush.msra.mxu0 0.0
    %2670 = vmatpush.msra.mxu0 0.0
    %2671 = vmatpush.msra.mxu0 0.0
    %2672 = vmatpush.msra.mxu0 0.0
    %2673 = vmatpush.msra.mxu0 0.0
    %2674 = vmatpush.msra.mxu0 0.0
    %2675 = vmatpush.msra.mxu0 0.0
    %2676 = vmatpush.msra.mxu0 0.0
    %2677 = vmatpush.msra.mxu0 0.0
    %2678 = vmatpush.msra.mxu0 0.0
    %2679 = vmatpush.msra.mxu0 0.0
    %2680 = vmatpush.msra.mxu0 0.0
    %2681 = vmatpush.msra.mxu0 0.0
    %2682 = vmatpush.msra.mxu0 0.0
    %2683 = vmatpush.msra.mxu0 0.0
    %2684 = vmatpush.msra.mxu0 %v2518
    %2685 = vmatmul.f32.gmra.mxu0 %v2667
    %v2686 = vpop.f32.mrf.mxu0
    %v2687 = vadd.f32 0.0, %v2686
    %2688 = vdwg.mxu0
    %s2689 = scalar_lea.vmem [#allocation22], 48
    %v2690 = vld [vmem:[%s2689] sm:$0xff]
    %v2691 = vld [vmem:[%s2689 + $0x8] sm:$0xff]
    %v2693 = vsel %vm718, %v2687, 0
    %2695 = vmatpush.msra.mxu0 0.0
    %2696 = vmatpush.msra.mxu0 0.0
    %2697 = vmatpush.msra.mxu0 0.0
    %2698 = vmatpush.msra.mxu0 0.0
    %2699 = vmatpush.msra.mxu0 0.0
    %2700 = vmatpush.msra.mxu0 0.0
    %2701 = vmatpush.msra.mxu0 0.0
    %2702 = vmatpush.msra.mxu0 0.0
    %2703 = vmatpush.msra.mxu0 0.0
    %2704 = vmatpush.msra.mxu0 0.0
    %2705 = vmatpush.msra.mxu0 0.0
    %2706 = vmatpush.msra.mxu0 0.0
    %2707 = vmatpush.msra.mxu0 0.0
    %2708 = vmatpush.msra.mxu0 0.0
    %2709 = vmatpush.msra.mxu0 %v2691
    %2710 = vmatpush.msra.mxu0 %v2690
    %2711 = vmatmul.f32.gmra.mxu0 %v2693
    %v2712 = vpop.f32.mrf.mxu0
    %v2713 = vadd.f32 0.0, %v2712
    %2714 = vdwg.mxu0
    %v2715 = vadd.f32 %v2665, %v2713
    %v2717 = vsel %vm657, %v2513, 0
    %2719 = vmatpush.msra.mxu0 0.0
    %2720 = vmatpush.msra.mxu0 0.0
    %2721 = vmatpush.msra.mxu0 0.0
    %2722 = vmatpush.msra.mxu0 0.0
    %2723 = vmatpush.msra.mxu0 0.0
    %2724 = vmatpush.msra.mxu0 0.0
    %2725 = vmatpush.msra.mxu0 0.0
    %2726 = vmatpush.msra.mxu0 0.0
    %2727 = vmatpush.msra.mxu0 0.0
    %2728 = vmatpush.msra.mxu0 0.0
    %2729 = vmatpush.msra.mxu0 0.0
    %2730 = vmatpush.msra.mxu0 0.0
    %2731 = vmatpush.msra.mxu0 0.0
    %2732 = vmatpush.msra.mxu0 0.0
    %2733 = vmatpush.msra.mxu0 0.0
    %2734 = vmatpush.msra.mxu0 %v2518
    %2735 = vmatmul.f32.gmra.mxu0 %v2717
    %v2736 = vpop.f32.mrf.mxu0
    %v2737 = vadd.f32 0.0, %v2736
    %2738 = vdwg.mxu0
    %s2739 = scalar_lea.vmem [#allocation22], 64
    %v2740 = vld [vmem:[%s2739] sm:$0xff]
    %v2741 = vld [vmem:[%s2739 + $0x8] sm:$0xff]
    %v2743 = vsel %vm718, %v2737, 0
    %2745 = vmatpush.msra.mxu0 0.0
    %2746 = vmatpush.msra.mxu0 0.0
    %2747 = vmatpush.msra.mxu0 0.0
    %2748 = vmatpush.msra.mxu0 0.0
    %2749 = vmatpush.msra.mxu0 0.0
    %2750 = vmatpush.msra.mxu0 0.0
    %2751 = vmatpush.msra.mxu0 0.0
    %2752 = vmatpush.msra.mxu0 0.0
    %2753 = vmatpush.msra.mxu0 0.0
    %2754 = vmatpush.msra.mxu0 0.0
    %2755 = vmatpush.msra.mxu0 0.0
    %2756 = vmatpush.msra.mxu0 0.0
    %2757 = vmatpush.msra.mxu0 0.0
    %2758 = vmatpush.msra.mxu0 0.0
    %2759 = vmatpush.msra.mxu0 %v2741
    %2760 = vmatpush.msra.mxu0 %v2740
    %2761 = vmatmul.f32.gmra.mxu0 %v2743
    %v2762 = vpop.f32.mrf.mxu0
    %v2763 = vadd.f32 0.0, %v2762
    %2764 = vdwg.mxu0
    %v2765 = vadd.f32 %v2715, %v2763
    %2767 = vset.pattern.permute.xlu0 0
    %2768 = vperm.xlu0 %2767, %v2515
    %v2769 = vpop.permute.xlu0 %2768
    %v2771 = vmul.f32 %v2765, %v2769
    %2773 = vset.pattern.permute.xlu0 0
    %2774 = vperm.xlu0 %2773, %v2517
    %v2775 = vpop.permute.xlu0 %2774
    %v2777 = vadd.f32 %v2771, %v2775
    %v2778 = vld [vmem:[#allocation19] sm:$0xff]
    %v2779 = vld [vmem:[#allocation19 + $0x8] sm:$0xff]
    %v2781 = vsel %vm718, %v2777, 0
    %2783 = vmatpush.msra.mxu0 0.0
    %2784 = vmatpush.msra.mxu0 0.0
    %2785 = vmatpush.msra.mxu0 0.0
    %2786 = vmatpush.msra.mxu0 0.0
    %2787 = vmatpush.msra.mxu0 0.0
    %2788 = vmatpush.msra.mxu0 0.0
    %2789 = vmatpush.msra.mxu0 0.0
    %2790 = vmatpush.msra.mxu0 0.0
    %2791 = vmatpush.msra.mxu0 0.0
    %2792 = vmatpush.msra.mxu0 0.0
    %2793 = vmatpush.msra.mxu0 0.0
    %2794 = vmatpush.msra.mxu0 0.0
    %2795 = vmatpush.msra.mxu0 0.0
    %2796 = vmatpush.msra.mxu0 0.0
    %2797 = vmatpush.msra.mxu0 %v2779
    %2798 = vmatpush.msra.mxu0 %v2778
    %2799 = vmatmul.f32.gmra.mxu0 %v2781
    %v2800 = vpop.f32.mrf.mxu0
    %v2801 = vadd.f32 0.0, %v2800
    %2802 = vdwg.mxu0
    %s2803 = scalar_lea.vmem [#allocation19], 16
    %v2804 = vld [vmem:[%s2803] sm:$0xff]
    %v2805 = vld [vmem:[%s2803 + $0x8] sm:$0xff]
    %2806 = vmatpush.msra.mxu0 0.0
    %2807 = vmatpush.msra.mxu0 0.0
    %2808 = vmatpush.msra.mxu0 0.0
    %2809 = vmatpush.msra.mxu0 0.0
    %2810 = vmatpush.msra.mxu0 0.0
    %2811 = vmatpush.msra.mxu0 0.0
    %2812 = vmatpush.msra.mxu0 0.0
    %2813 = vmatpush.msra.mxu0 0.0
    %2814 = vmatpush.msra.mxu0 0.0
    %2815 = vmatpush.msra.mxu0 0.0
    %2816 = vmatpush.msra.mxu0 0.0
    %2817 = vmatpush.msra.mxu0 0.0
    %2818 = vmatpush.msra.mxu0 0.0
    %2819 = vmatpush.msra.mxu0 0.0
    %2820 = vmatpush.msra.mxu0 %v2805
    %2821 = vmatpush.msra.mxu0 %v2804
    %2822 = vmatmul.f32.gmra.mxu0 %v2781
    %v2823 = vpop.f32.mrf.mxu0
    %v2824 = vadd.f32 0.0, %v2823
    %2825 = vdwg.mxu0
    %v2826 = vmax.f32 %v2801, %v2824
    %v2827 = vld [vmem:[#allocation12] sm:$0xff]
    %s2828 = scalar_lea.vmem [#allocation12], 8
    %v2829 = vld [vmem:[%s2828] sm:$0xff]
    %s2830 = scalar_lea.vmem [#allocation12], 16
    %v2831 = vld [vmem:[%s2830] sm:$0xff]
    %s2832 = scalar_lea.vmem [#allocation12], 24
    %v2833 = vld [vmem:[%s2832] sm:$0xff]
    %s2834 = scalar_lea.vmem [#allocation12], 32
    %v2835 = vld [vmem:[%s2834] sm:$0xff]
    %v2836 = vld [vmem:[#allocation10] sm:$0xff]
    %s2837 = scalar_lea.vmem [#allocation10], 8
    %v2838 = vld [vmem:[%s2837] sm:$0xff]
    %s2839 = scalar_lea.vmem [#allocation10], 16
    %v2840 = vld [vmem:[%s2839] sm:$0xff]
    %s2841 = scalar_lea.vmem [#allocation10], 24
    %v2842 = vld [vmem:[%s2841] sm:$0xff]
    %s2843 = scalar_lea.vmem [#allocation10], 32
    %v2844 = vld [vmem:[%s2843] sm:$0xff]
    %v2845 = vld [vmem:[#allocation7] sm:$0xff]
    %v2846 = vld [vmem:[#allocation9] sm:$0xff]
    %v2847 = vmax.f32 %v1993, 0.0
    %v2848 = vmax.f32 %v2826, 0.0
    %v2850 = vsel %vm657, %v2836, 0
    %2852 = vmatpush.msra.mxu0 0.0
    %2853 = vmatpush.msra.mxu0 0.0
    %2854 = vmatpush.msra.mxu0 0.0
    %2855 = vmatpush.msra.mxu0 0.0
    %2856 = vmatpush.msra.mxu0 0.0
    %2857 = vmatpush.msra.mxu0 0.0
    %2858 = vmatpush.msra.mxu0 0.0
    %2859 = vmatpush.msra.mxu0 0.0
    %2860 = vmatpush.msra.mxu0 0.0
    %2861 = vmatpush.msra.mxu0 0.0
    %2862 = vmatpush.msra.mxu0 0.0
    %2863 = vmatpush.msra.mxu0 0.0
    %2864 = vmatpush.msra.mxu0 0.0
    %2865 = vmatpush.msra.mxu0 0.0
    %2866 = vmatpush.msra.mxu0 0.0
    %2867 = vmatpush.msra.mxu0 %v2848
    %2868 = vmatmul.f32.gmra.mxu0 %v2850
    %v2869 = vpop.f32.mrf.mxu0
    %v2870 = vadd.f32 0.0, %v2869
    %2871 = vdwg.mxu0
    %v2873 = vsel %vm657, %v2827, 0
    %2875 = vmatpush.msra.mxu0 0.0
    %2876 = vmatpush.msra.mxu0 0.0
    %2877 = vmatpush.msra.mxu0 0.0
    %2878 = vmatpush.msra.mxu0 0.0
    %2879 = vmatpush.msra.mxu0 0.0
    %2880 = vmatpush.msra.mxu0 0.0
    %2881 = vmatpush.msra.mxu0 0.0
    %2882 = vmatpush.msra.mxu0 0.0
    %2883 = vmatpush.msra.mxu0 0.0
    %2884 = vmatpush.msra.mxu0 0.0
    %2885 = vmatpush.msra.mxu0 0.0
    %2886 = vmatpush.msra.mxu0 0.0
    %2887 = vmatpush.msra.mxu0 0.0
    %2888 = vmatpush.msra.mxu0 0.0
    %2889 = vmatpush.msra.mxu0 0.0
    %2890 = vmatpush.msra.mxu0 %v2847
    %2891 = vmatmul.f32.gmra.mxu0 %v2873
    %v2892 = vpop.f32.mrf.mxu0
    %v2893 = vadd.f32 %v2870, %v2892
    %2894 = vdwg.mxu0
    %v2896 = vsel %vm657, %v2838, 0
    %2898 = vmatpush.msra.mxu0 0.0
    %2899 = vmatpush.msra.mxu0 0.0
    %2900 = vmatpush.msra.mxu0 0.0
    %2901 = vmatpush.msra.mxu0 0.0
    %2902 = vmatpush.msra.mxu0 0.0
    %2903 = vmatpush.msra.mxu0 0.0
    %2904 = vmatpush.msra.mxu0 0.0
    %2905 = vmatpush.msra.mxu0 0.0
    %2906 = vmatpush.msra.mxu0 0.0
    %2907 = vmatpush.msra.mxu0 0.0
    %2908 = vmatpush.msra.mxu0 0.0
    %2909 = vmatpush.msra.mxu0 0.0
    %2910 = vmatpush.msra.mxu0 0.0
    %2911 = vmatpush.msra.mxu0 0.0
    %2912 = vmatpush.msra.mxu0 0.0
    %2913 = vmatpush.msra.mxu0 %v2848
    %2914 = vmatmul.f32.gmra.mxu0 %v2896
    %v2915 = vpop.f32.mrf.mxu0
    %v2916 = vadd.f32 0.0, %v2915
    %2917 = vdwg.mxu0
    %v2919 = vsel %vm657, %v2829, 0
    %2921 = vmatpush.msra.mxu0 0.0
    %2922 = vmatpush.msra.mxu0 0.0
    %2923 = vmatpush.msra.mxu0 0.0
    %2924 = vmatpush.msra.mxu0 0.0
    %2925 = vmatpush.msra.mxu0 0.0
    %2926 = vmatpush.msra.mxu0 0.0
    %2927 = vmatpush.msra.mxu0 0.0
    %2928 = vmatpush.msra.mxu0 0.0
    %2929 = vmatpush.msra.mxu0 0.0
    %2930 = vmatpush.msra.mxu0 0.0
    %2931 = vmatpush.msra.mxu0 0.0
    %2932 = vmatpush.msra.mxu0 0.0
    %2933 = vmatpush.msra.mxu0 0.0
    %2934 = vmatpush.msra.mxu0 0.0
    %2935 = vmatpush.msra.mxu0 0.0
    %2936 = vmatpush.msra.mxu0 %v2847
    %2937 = vmatmul.f32.gmra.mxu0 %v2919
    %v2938 = vpop.f32.mrf.mxu0
    %v2939 = vadd.f32 %v2916, %v2938
    %2940 = vdwg.mxu0
    %v2942 = vsel %vm657, %v2939, 0
    %2944 = vmatpush.msra.mxu0 0.0
    %2945 = vmatpush.msra.mxu0 0.0
    %2946 = vmatpush.msra.mxu0 0.0
    %2947 = vmatpush.msra.mxu0 0.0
    %2948 = vmatpush.msra.mxu0 0.0
    %2949 = vmatpush.msra.mxu0 0.0
    %2950 = vmatpush.msra.mxu0 0.0
    %2951 = vmatpush.msra.mxu0 0.0
    %2952 = vmatpush.msra.mxu0 0.0
    %2953 = vmatpush.msra.mxu0 0.0
    %2954 = vmatpush.msra.mxu0 0.0
    %2955 = vmatpush.msra.mxu0 0.0
    %2956 = vmatpush.msra.mxu0 0.0
    %2957 = vmatpush.msra.mxu0 0.0
    %2958 = vmatpush.msra.mxu0 0.0
    %2959 = vmatpush.msra.mxu0 %v1006
    %2960 = vmatmul.f32.gmra.mxu0 %v2942
    %v2961 = vpop.f32.mrf.mxu0
    %v2962 = vadd.f32 0.0, %v2961
    %2963 = vdwg.mxu0
    %v2965 = vsel %vm657, %v2893, 0
    %2967 = vmatpush.msra.mxu0 0.0
    %2968 = vmatpush.msra.mxu0 0.0
    %2969 = vmatpush.msra.mxu0 0.0
    %2970 = vmatpush.msra.mxu0 0.0
    %2971 = vmatpush.msra.mxu0 0.0
    %2972 = vmatpush.msra.mxu0 0.0
    %2973 = vmatpush.msra.mxu0 0.0
    %2974 = vmatpush.msra.mxu0 0.0
    %2975 = vmatpush.msra.mxu0 0.0
    %2976 = vmatpush.msra.mxu0 0.0
    %2977 = vmatpush.msra.mxu0 0.0
    %2978 = vmatpush.msra.mxu0 0.0
    %2979 = vmatpush.msra.mxu0 0.0
    %2980 = vmatpush.msra.mxu0 0.0
    %2981 = vmatpush.msra.mxu0 0.0
    %2982 = vmatpush.msra.mxu0 %v981
    %2983 = vmatmul.f32.gmra.mxu0 %v2965
    %v2984 = vpop.f32.mrf.mxu0
    %v2985 = vadd.f32 %v2962, %v2984
    %2986 = vdwg.mxu0
    %v2988 = vsel %vm657, %v2840, 0
    %2990 = vmatpush.msra.mxu0 0.0
    %2991 = vmatpush.msra.mxu0 0.0
    %2992 = vmatpush.msra.mxu0 0.0
    %2993 = vmatpush.msra.mxu0 0.0
    %2994 = vmatpush.msra.mxu0 0.0
    %2995 = vmatpush.msra.mxu0 0.0
    %2996 = vmatpush.msra.mxu0 0.0
    %2997 = vmatpush.msra.mxu0 0.0
    %2998 = vmatpush.msra.mxu0 0.0
    %2999 = vmatpush.msra.mxu0 0.0
    %3000 = vmatpush.msra.mxu0 0.0
    %3001 = vmatpush.msra.mxu0 0.0
    %3002 = vmatpush.msra.mxu0 0.0
    %3003 = vmatpush.msra.mxu0 0.0
    %3004 = vmatpush.msra.mxu0 0.0
    %3005 = vmatpush.msra.mxu0 %v2848
    %3006 = vmatmul.f32.gmra.mxu0 %v2988
    %v3007 = vpop.f32.mrf.mxu0
    %v3008 = vadd.f32 0.0, %v3007
    %3009 = vdwg.mxu0
    %v3011 = vsel %vm657, %v2831, 0
    %3013 = vmatpush.msra.mxu0 0.0
    %3014 = vmatpush.msra.mxu0 0.0
    %3015 = vmatpush.msra.mxu0 0.0
    %3016 = vmatpush.msra.mxu0 0.0
    %3017 = vmatpush.msra.mxu0 0.0
    %3018 = vmatpush.msra.mxu0 0.0
    %3019 = vmatpush.msra.mxu0 0.0
    %3020 = vmatpush.msra.mxu0 0.0
    %3021 = vmatpush.msra.mxu0 0.0
    %3022 = vmatpush.msra.mxu0 0.0
    %3023 = vmatpush.msra.mxu0 0.0
    %3024 = vmatpush.msra.mxu0 0.0
    %3025 = vmatpush.msra.mxu0 0.0
    %3026 = vmatpush.msra.mxu0 0.0
    %3027 = vmatpush.msra.mxu0 0.0
    %3028 = vmatpush.msra.mxu0 %v2847
    %3029 = vmatmul.f32.gmra.mxu0 %v3011
    %v3030 = vpop.f32.mrf.mxu0
    %v3031 = vadd.f32 %v3008, %v3030
    %3032 = vdwg.mxu0
    %v3034 = vsel %vm657, %v3031, 0
    %3036 = vmatpush.msra.mxu0 0.0
    %3037 = vmatpush.msra.mxu0 0.0
    %3038 = vmatpush.msra.mxu0 0.0
    %3039 = vmatpush.msra.mxu0 0.0
    %3040 = vmatpush.msra.mxu0 0.0
    %3041 = vmatpush.msra.mxu0 0.0
    %3042 = vmatpush.msra.mxu0 0.0
    %3043 = vmatpush.msra.mxu0 0.0
    %3044 = vmatpush.msra.mxu0 0.0
    %3045 = vmatpush.msra.mxu0 0.0
    %3046 = vmatpush.msra.mxu0 0.0
    %3047 = vmatpush.msra.mxu0 0.0
    %3048 = vmatpush.msra.mxu0 0.0
    %3049 = vmatpush.msra.mxu0 0.0
    %3050 = vmatpush.msra.mxu0 0.0
    %3051 = vmatpush.msra.mxu0 %v1077
    %3052 = vmatmul.f32.gmra.mxu0 %v3034
    %v3053 = vpop.f32.mrf.mxu0
    %v3054 = vadd.f32 0.0, %v3053
    %3055 = vdwg.mxu0
    %v3056 = vadd.f32 %v2985, %v3054
    %v3058 = vsel %vm657, %v2842, 0
    %3060 = vmatpush.msra.mxu0 0.0
    %3061 = vmatpush.msra.mxu0 0.0
    %3062 = vmatpush.msra.mxu0 0.0
    %3063 = vmatpush.msra.mxu0 0.0
    %3064 = vmatpush.msra.mxu0 0.0
    %3065 = vmatpush.msra.mxu0 0.0
    %3066 = vmatpush.msra.mxu0 0.0
    %3067 = vmatpush.msra.mxu0 0.0
    %3068 = vmatpush.msra.mxu0 0.0
    %3069 = vmatpush.msra.mxu0 0.0
    %3070 = vmatpush.msra.mxu0 0.0
    %3071 = vmatpush.msra.mxu0 0.0
    %3072 = vmatpush.msra.mxu0 0.0
    %3073 = vmatpush.msra.mxu0 0.0
    %3074 = vmatpush.msra.mxu0 0.0
    %3075 = vmatpush.msra.mxu0 %v2848
    %3076 = vmatmul.f32.gmra.mxu0 %v3058
    %v3077 = vpop.f32.mrf.mxu0
    %v3078 = vadd.f32 0.0, %v3077
    %3079 = vdwg.mxu0
    %v3081 = vsel %vm657, %v2833, 0
    %3083 = vmatpush.msra.mxu0 0.0
    %3084 = vmatpush.msra.mxu0 0.0
    %3085 = vmatpush.msra.mxu0 0.0
    %3086 = vmatpush.msra.mxu0 0.0
    %3087 = vmatpush.msra.mxu0 0.0
    %3088 = vmatpush.msra.mxu0 0.0
    %3089 = vmatpush.msra.mxu0 0.0
    %3090 = vmatpush.msra.mxu0 0.0
    %3091 = vmatpush.msra.mxu0 0.0
    %3092 = vmatpush.msra.mxu0 0.0
    %3093 = vmatpush.msra.mxu0 0.0
    %3094 = vmatpush.msra.mxu0 0.0
    %3095 = vmatpush.msra.mxu0 0.0
    %3096 = vmatpush.msra.mxu0 0.0
    %3097 = vmatpush.msra.mxu0 0.0
    %3098 = vmatpush.msra.mxu0 %v2847
    %3099 = vmatmul.f32.gmra.mxu0 %v3081
    %v3100 = vpop.f32.mrf.mxu0
    %v3101 = vadd.f32 %v3078, %v3100
    %3102 = vdwg.mxu0
    %v3104 = vsel %vm657, %v3101, 0
    %3106 = vmatpush.msra.mxu0 0.0
    %3107 = vmatpush.msra.mxu0 0.0
    %3108 = vmatpush.msra.mxu0 0.0
    %3109 = vmatpush.msra.mxu0 0.0
    %3110 = vmatpush.msra.mxu0 0.0
    %3111 = vmatpush.msra.mxu0 0.0
    %3112 = vmatpush.msra.mxu0 0.0
    %3113 = vmatpush.msra.mxu0 0.0
    %3114 = vmatpush.msra.mxu0 0.0
    %3115 = vmatpush.msra.mxu0 0.0
    %3116 = vmatpush.msra.mxu0 0.0
    %3117 = vmatpush.msra.mxu0 0.0
    %3118 = vmatpush.msra.mxu0 0.0
    %3119 = vmatpush.msra.mxu0 0.0
    %3120 = vmatpush.msra.mxu0 0.0
    %3121 = vmatpush.msra.mxu0 %v1126
    %3122 = vmatmul.f32.gmra.mxu0 %v3104
    %v3123 = vpop.f32.mrf.mxu0
    %v3124 = vadd.f32 0.0, %v3123
    %3125 = vdwg.mxu0
    %v3126 = vadd.f32 %v3056, %v3124
    %v3128 = vsel %vm657, %v2844, 0
    %3130 = vmatpush.msra.mxu0 0.0
    %3131 = vmatpush.msra.mxu0 0.0
    %3132 = vmatpush.msra.mxu0 0.0
    %3133 = vmatpush.msra.mxu0 0.0
    %3134 = vmatpush.msra.mxu0 0.0
    %3135 = vmatpush.msra.mxu0 0.0
    %3136 = vmatpush.msra.mxu0 0.0
    %3137 = vmatpush.msra.mxu0 0.0
    %3138 = vmatpush.msra.mxu0 0.0
    %3139 = vmatpush.msra.mxu0 0.0
    %3140 = vmatpush.msra.mxu0 0.0
    %3141 = vmatpush.msra.mxu0 0.0
    %3142 = vmatpush.msra.mxu0 0.0
    %3143 = vmatpush.msra.mxu0 0.0
    %3144 = vmatpush.msra.mxu0 0.0
    %3145 = vmatpush.msra.mxu0 %v2848
    %3146 = vmatmul.f32.gmra.mxu0 %v3128
    %v3147 = vpop.f32.mrf.mxu0
    %v3148 = vadd.f32 0.0, %v3147
    %3149 = vdwg.mxu0
    %v3151 = vsel %vm657, %v2835, 0
    %3153 = vmatpush.msra.mxu0 0.0
    %3154 = vmatpush.msra.mxu0 0.0
    %3155 = vmatpush.msra.mxu0 0.0
    %3156 = vmatpush.msra.mxu0 0.0
    %3157 = vmatpush.msra.mxu0 0.0
    %3158 = vmatpush.msra.mxu0 0.0
    %3159 = vmatpush.msra.mxu0 0.0
    %3160 = vmatpush.msra.mxu0 0.0
    %3161 = vmatpush.msra.mxu0 0.0
    %3162 = vmatpush.msra.mxu0 0.0
    %3163 = vmatpush.msra.mxu0 0.0
    %3164 = vmatpush.msra.mxu0 0.0
    %3165 = vmatpush.msra.mxu0 0.0
    %3166 = vmatpush.msra.mxu0 0.0
    %3167 = vmatpush.msra.mxu0 0.0
    %3168 = vmatpush.msra.mxu0 %v2847
    %3169 = vmatmul.f32.gmra.mxu0 %v3151
    %v3170 = vpop.f32.mrf.mxu0
    %v3171 = vadd.f32 %v3148, %v3170
    %3172 = vdwg.mxu0
    %v3174 = vsel %vm657, %v3171, 0
    %3176 = vmatpush.msra.mxu0 0.0
    %3177 = vmatpush.msra.mxu0 0.0
    %3178 = vmatpush.msra.mxu0 0.0
    %3179 = vmatpush.msra.mxu0 0.0
    %3180 = vmatpush.msra.mxu0 0.0
    %3181 = vmatpush.msra.mxu0 0.0
    %3182 = vmatpush.msra.mxu0 0.0
    %3183 = vmatpush.msra.mxu0 0.0
    %3184 = vmatpush.msra.mxu0 0.0
    %3185 = vmatpush.msra.mxu0 0.0
    %3186 = vmatpush.msra.mxu0 0.0
    %3187 = vmatpush.msra.mxu0 0.0
    %3188 = vmatpush.msra.mxu0 0.0
    %3189 = vmatpush.msra.mxu0 0.0
    %3190 = vmatpush.msra.mxu0 0.0
    %3191 = vmatpush.msra.mxu0 %v1175
    %3192 = vmatmul.f32.gmra.mxu0 %v3174
    %v3193 = vpop.f32.mrf.mxu0
    %v3194 = vadd.f32 0.0, %v3193
    %3195 = vdwg.mxu0
    %v3196 = vadd.f32 %v3126, %v3194
    %3198 = vset.pattern.permute.xlu0 0
    %3199 = vperm.xlu0 %3198, %v2845
    %v3200 = vpop.permute.xlu0 %3199
    %v3202 = vmul.f32 %v3196, %v3200
    %3204 = vset.pattern.permute.xlu0 0
    %3205 = vperm.xlu0 %3204, %v2846
    %v3206 = vpop.permute.xlu0 %3205
    %v3208 = vadd.f32 %v3202, %v3206
    %v3209 = vld [vmem:[#allocation16] sm:$0xff]
    %s3210 = scalar_lea.vmem [#allocation16], 8
    %v3211 = vld [vmem:[%s3210] sm:$0xff]
    %s3212 = scalar_lea.vmem [#allocation16], 16
    %v3213 = vld [vmem:[%s3212] sm:$0xff]
    %s3214 = scalar_lea.vmem [#allocation16], 24
    %v3215 = vld [vmem:[%s3214] sm:$0xff]
    %s3216 = scalar_lea.vmem [#allocation16], 32
    %v3217 = vld [vmem:[%s3216] sm:$0xff]
    %v3218 = vld [vmem:[#allocation13] sm:$0xff]
    %v3219 = vld [vmem:[#allocation15] sm:$0xff]
    %v3220 = vmax.f32 %v3208, 0.0
    %v3222 = vsel %vm657, %v3209, 0
    %3224 = vmatpush.msra.mxu0 0.0
    %3225 = vmatpush.msra.mxu0 0.0
    %3226 = vmatpush.msra.mxu0 0.0
    %3227 = vmatpush.msra.mxu0 0.0
    %3228 = vmatpush.msra.mxu0 0.0
    %3229 = vmatpush.msra.mxu0 0.0
    %3230 = vmatpush.msra.mxu0 0.0
    %3231 = vmatpush.msra.mxu0 0.0
    %3232 = vmatpush.msra.mxu0 0.0
    %3233 = vmatpush.msra.mxu0 0.0
    %3234 = vmatpush.msra.mxu0 0.0
    %3235 = vmatpush.msra.mxu0 0.0
    %3236 = vmatpush.msra.mxu0 0.0
    %3237 = vmatpush.msra.mxu0 0.0
    %3238 = vmatpush.msra.mxu0 0.0
    %3239 = vmatpush.msra.mxu0 %v3220
    %3240 = vmatmul.f32.gmra.mxu0 %v3222
    %v3241 = vpop.f32.mrf.mxu0
    %v3242 = vadd.f32 0.0, %v3241
    %3243 = vdwg.mxu0
    %v3245 = vsel %vm657, %v3211, 0
    %3247 = vmatpush.msra.mxu0 0.0
    %3248 = vmatpush.msra.mxu0 0.0
    %3249 = vmatpush.msra.mxu0 0.0
    %3250 = vmatpush.msra.mxu0 0.0
    %3251 = vmatpush.msra.mxu0 0.0
    %3252 = vmatpush.msra.mxu0 0.0
    %3253 = vmatpush.msra.mxu0 0.0
    %3254 = vmatpush.msra.mxu0 0.0
    %3255 = vmatpush.msra.mxu0 0.0
    %3256 = vmatpush.msra.mxu0 0.0
    %3257 = vmatpush.msra.mxu0 0.0
    %3258 = vmatpush.msra.mxu0 0.0
    %3259 = vmatpush.msra.mxu0 0.0
    %3260 = vmatpush.msra.mxu0 0.0
    %3261 = vmatpush.msra.mxu0 0.0
    %3262 = vmatpush.msra.mxu0 %v3220
    %3263 = vmatmul.f32.gmra.mxu0 %v3245
    %v3264 = vpop.f32.mrf.mxu0
    %v3265 = vadd.f32 0.0, %v3264
    %3266 = vdwg.mxu0
    %v3268 = vsel %vm657, %v3265, 0
    %3270 = vmatpush.msra.mxu0 0.0
    %3271 = vmatpush.msra.mxu0 0.0
    %3272 = vmatpush.msra.mxu0 0.0
    %3273 = vmatpush.msra.mxu0 0.0
    %3274 = vmatpush.msra.mxu0 0.0
    %3275 = vmatpush.msra.mxu0 0.0
    %3276 = vmatpush.msra.mxu0 0.0
    %3277 = vmatpush.msra.mxu0 0.0
    %3278 = vmatpush.msra.mxu0 0.0
    %3279 = vmatpush.msra.mxu0 0.0
    %3280 = vmatpush.msra.mxu0 0.0
    %3281 = vmatpush.msra.mxu0 0.0
    %3282 = vmatpush.msra.mxu0 0.0
    %3283 = vmatpush.msra.mxu0 0.0
    %3284 = vmatpush.msra.mxu0 0.0
    %3285 = vmatpush.msra.mxu0 %v1006
    %3286 = vmatmul.f32.gmra.mxu0 %v3268
    %v3287 = vpop.f32.mrf.mxu0
    %v3288 = vadd.f32 0.0, %v3287
    %3289 = vdwg.mxu0
    %v3291 = vsel %vm657, %v3242, 0
    %3293 = vmatpush.msra.mxu0 0.0
    %3294 = vmatpush.msra.mxu0 0.0
    %3295 = vmatpush.msra.mxu0 0.0
    %3296 = vmatpush.msra.mxu0 0.0
    %3297 = vmatpush.msra.mxu0 0.0
    %3298 = vmatpush.msra.mxu0 0.0
    %3299 = vmatpush.msra.mxu0 0.0
    %3300 = vmatpush.msra.mxu0 0.0
    %3301 = vmatpush.msra.mxu0 0.0
    %3302 = vmatpush.msra.mxu0 0.0
    %3303 = vmatpush.msra.mxu0 0.0
    %3304 = vmatpush.msra.mxu0 0.0
    %3305 = vmatpush.msra.mxu0 0.0
    %3306 = vmatpush.msra.mxu0 0.0
    %3307 = vmatpush.msra.mxu0 0.0
    %3308 = vmatpush.msra.mxu0 %v981
    %3309 = vmatmul.f32.gmra.mxu0 %v3291
    %v3310 = vpop.f32.mrf.mxu0
    %v3311 = vadd.f32 %v3288, %v3310
    %3312 = vdwg.mxu0
    %v3314 = vsel %vm657, %v3213, 0
    %3316 = vmatpush.msra.mxu0 0.0
    %3317 = vmatpush.msra.mxu0 0.0
    %3318 = vmatpush.msra.mxu0 0.0
    %3319 = vmatpush.msra.mxu0 0.0
    %3320 = vmatpush.msra.mxu0 0.0
    %3321 = vmatpush.msra.mxu0 0.0
    %3322 = vmatpush.msra.mxu0 0.0
    %3323 = vmatpush.msra.mxu0 0.0
    %3324 = vmatpush.msra.mxu0 0.0
    %3325 = vmatpush.msra.mxu0 0.0
    %3326 = vmatpush.msra.mxu0 0.0
    %3327 = vmatpush.msra.mxu0 0.0
    %3328 = vmatpush.msra.mxu0 0.0
    %3329 = vmatpush.msra.mxu0 0.0
    %3330 = vmatpush.msra.mxu0 0.0
    %3331 = vmatpush.msra.mxu0 %v3220
    %3332 = vmatmul.f32.gmra.mxu0 %v3314
    %v3333 = vpop.f32.mrf.mxu0
    %v3334 = vadd.f32 0.0, %v3333
    %3335 = vdwg.mxu0
    %v3337 = vsel %vm657, %v3334, 0
    %3339 = vmatpush.msra.mxu0 0.0
    %3340 = vmatpush.msra.mxu0 0.0
    %3341 = vmatpush.msra.mxu0 0.0
    %3342 = vmatpush.msra.mxu0 0.0
    %3343 = vmatpush.msra.mxu0 0.0
    %3344 = vmatpush.msra.mxu0 0.0
    %3345 = vmatpush.msra.mxu0 0.0
    %3346 = vmatpush.msra.mxu0 0.0
    %3347 = vmatpush.msra.mxu0 0.0
    %3348 = vmatpush.msra.mxu0 0.0
    %3349 = vmatpush.msra.mxu0 0.0
    %3350 = vmatpush.msra.mxu0 0.0
    %3351 = vmatpush.msra.mxu0 0.0
    %3352 = vmatpush.msra.mxu0 0.0
    %3353 = vmatpush.msra.mxu0 0.0
    %3354 = vmatpush.msra.mxu0 %v1077
    %3355 = vmatmul.f32.gmra.mxu0 %v3337
    %v3356 = vpop.f32.mrf.mxu0
    %v3357 = vadd.f32 0.0, %v3356
    %3358 = vdwg.mxu0
    %v3359 = vadd.f32 %v3311, %v3357
    %v3361 = vsel %vm657, %v3215, 0
    %3363 = vmatpush.msra.mxu0 0.0
    %3364 = vmatpush.msra.mxu0 0.0
    %3365 = vmatpush.msra.mxu0 0.0
    %3366 = vmatpush.msra.mxu0 0.0
    %3367 = vmatpush.msra.mxu0 0.0
    %3368 = vmatpush.msra.mxu0 0.0
    %3369 = vmatpush.msra.mxu0 0.0
    %3370 = vmatpush.msra.mxu0 0.0
    %3371 = vmatpush.msra.mxu0 0.0
    %3372 = vmatpush.msra.mxu0 0.0
    %3373 = vmatpush.msra.mxu0 0.0
    %3374 = vmatpush.msra.mxu0 0.0
    %3375 = vmatpush.msra.mxu0 0.0
    %3376 = vmatpush.msra.mxu0 0.0
    %3377 = vmatpush.msra.mxu0 0.0
    %3378 = vmatpush.msra.mxu0 %v3220
    %3379 = vmatmul.f32.gmra.mxu0 %v3361
    %v3380 = vpop.f32.mrf.mxu0
    %v3381 = vadd.f32 0.0, %v3380
    %3382 = vdwg.mxu0
    %v3384 = vsel %vm657, %v3381, 0
    %3386 = vmatpush.msra.mxu0 0.0
    %3387 = vmatpush.msra.mxu0 0.0
    %3388 = vmatpush.msra.mxu0 0.0
    %3389 = vmatpush.msra.mxu0 0.0
    %3390 = vmatpush.msra.mxu0 0.0
    %3391 = vmatpush.msra.mxu0 0.0
    %3392 = vmatpush.msra.mxu0 0.0
    %3393 = vmatpush.msra.mxu0 0.0
    %3394 = vmatpush.msra.mxu0 0.0
    %3395 = vmatpush.msra.mxu0 0.0
    %3396 = vmatpush.msra.mxu0 0.0
    %3397 = vmatpush.msra.mxu0 0.0
    %3398 = vmatpush.msra.mxu0 0.0
    %3399 = vmatpush.msra.mxu0 0.0
    %3400 = vmatpush.msra.mxu0 0.0
    %3401 = vmatpush.msra.mxu0 %v1126
    %3402 = vmatmul.f32.gmra.mxu0 %v3384
    %v3403 = vpop.f32.mrf.mxu0
    %v3404 = vadd.f32 0.0, %v3403
    %3405 = vdwg.mxu0
    %v3406 = vadd.f32 %v3359, %v3404
    %v3408 = vsel %vm657, %v3217, 0
    %3410 = vmatpush.msra.mxu0 0.0
    %3411 = vmatpush.msra.mxu0 0.0
    %3412 = vmatpush.msra.mxu0 0.0
    %3413 = vmatpush.msra.mxu0 0.0
    %3414 = vmatpush.msra.mxu0 0.0
    %3415 = vmatpush.msra.mxu0 0.0
    %3416 = vmatpush.msra.mxu0 0.0
    %3417 = vmatpush.msra.mxu0 0.0
    %3418 = vmatpush.msra.mxu0 0.0
    %3419 = vmatpush.msra.mxu0 0.0
    %3420 = vmatpush.msra.mxu0 0.0
    %3421 = vmatpush.msra.mxu0 0.0
    %3422 = vmatpush.msra.mxu0 0.0
    %3423 = vmatpush.msra.mxu0 0.0
    %3424 = vmatpush.msra.mxu0 0.0
    %3425 = vmatpush.msra.mxu0 %v3220
    %3426 = vmatmul.f32.gmra.mxu0 %v3408
    %v3427 = vpop.f32.mrf.mxu0
    %v3428 = vadd.f32 0.0, %v3427
    %3429 = vdwg.mxu0
    %v3431 = vsel %vm657, %v3428, 0
    %3433 = vmatpush.msra.mxu0 0.0
    %3434 = vmatpush.msra.mxu0 0.0
    %3435 = vmatpush.msra.mxu0 0.0
    %3436 = vmatpush.msra.mxu0 0.0
    %3437 = vmatpush.msra.mxu0 0.0
    %3438 = vmatpush.msra.mxu0 0.0
    %3439 = vmatpush.msra.mxu0 0.0
    %3440 = vmatpush.msra.mxu0 0.0
    %3441 = vmatpush.msra.mxu0 0.0
    %3442 = vmatpush.msra.mxu0 0.0
    %3443 = vmatpush.msra.mxu0 0.0
    %3444 = vmatpush.msra.mxu0 0.0
    %3445 = vmatpush.msra.mxu0 0.0
    %3446 = vmatpush.msra.mxu0 0.0
    %3447 = vmatpush.msra.mxu0 0.0
    %3448 = vmatpush.msra.mxu0 %v1175
    %3449 = vmatmul.f32.gmra.mxu0 %v3431
    %v3450 = vpop.f32.mrf.mxu0
    %v3451 = vadd.f32 0.0, %v3450
    %3452 = vdwg.mxu0
    %v3453 = vadd.f32 %v3406, %v3451
    %3455 = vset.pattern.permute.xlu0 0
    %3456 = vperm.xlu0 %3455, %v3218
    %v3457 = vpop.permute.xlu0 %3456
    %v3459 = vmul.f32 %v3453, %v3457
    %3461 = vset.pattern.permute.xlu0 0
    %3462 = vperm.xlu0 %3461, %v3219
    %v3463 = vpop.permute.xlu0 %3462
    %v3465 = vadd.f32 %v3459, %v3463
    %v3466 = vadd.f32 %v3465, %v3208
    %v3467 = vld [vmem:[#allocation28] sm:$0xff]
    %v3469 = vsel %vm657, %v3466, 0
    %3471 = vmatpush.msra.mxu0 0.0
    %3472 = vmatpush.msra.mxu0 0.0
    %3473 = vmatpush.msra.mxu0 0.0
    %3474 = vmatpush.msra.mxu0 0.0
    %3475 = vmatpush.msra.mxu0 0.0
    %3476 = vmatpush.msra.mxu0 0.0
    %3477 = vmatpush.msra.mxu0 0.0
    %3478 = vmatpush.msra.mxu0 0.0
    %3479 = vmatpush.msra.mxu0 0.0
    %3480 = vmatpush.msra.mxu0 0.0
    %3481 = vmatpush.msra.mxu0 0.0
    %3482 = vmatpush.msra.mxu0 0.0
    %3483 = vmatpush.msra.mxu0 0.0
    %3484 = vmatpush.msra.mxu0 0.0
    %3485 = vmatpush.msra.mxu0 0.0
    %3486 = vmatpush.msra.mxu0 %v3467
    %3487 = vmatmul.f32.gmra.mxu0 %v3469
    %v3488 = vpop.f32.mrf.mxu0
    %v3489 = vadd.f32 0.0, %v3488
    %3490 = vdwg.mxu0
    %v3491 = vld [vmem:[#allocation6] sm:$0xff]
    %s3492 = scalar_lea.vmem [#allocation6], 8
    %v3493 = vld [vmem:[%s3492] sm:$0xff]
    %s3494 = scalar_lea.vmem [#allocation6], 16
    %v3495 = vld [vmem:[%s3494] sm:$0xff]
    %s3496 = scalar_lea.vmem [#allocation6], 24
    %v3497 = vld [vmem:[%s3496] sm:$0xff]
    %s3498 = scalar_lea.vmem [#allocation6], 32
    %v3499 = vld [vmem:[%s3498] sm:$0xff]
    %v3500 = vld [vmem:[#allocation2] sm:$0xff]
    %v3501 = vld [vmem:[#allocation4] sm:$0xff]
    %v3502 = vmax.f32 %v3489, 0.0
    %v3504 = vsel %vm657, %v3491, 0
    %3506 = vmatpush.msra.mxu0 0.0
    %3507 = vmatpush.msra.mxu0 0.0
    %3508 = vmatpush.msra.mxu0 0.0
    %3509 = vmatpush.msra.mxu0 0.0
    %3510 = vmatpush.msra.mxu0 0.0
    %3511 = vmatpush.msra.mxu0 0.0
    %3512 = vmatpush.msra.mxu0 0.0
    %3513 = vmatpush.msra.mxu0 0.0
    %3514 = vmatpush.msra.mxu0 0.0
    %3515 = vmatpush.msra.mxu0 0.0
    %3516 = vmatpush.msra.mxu0 0.0
    %3517 = vmatpush.msra.mxu0 0.0
    %3518 = vmatpush.msra.mxu0 0.0
    %3519 = vmatpush.msra.mxu0 0.0
    %3520 = vmatpush.msra.mxu0 0.0
    %3521 = vmatpush.msra.mxu0 %v3502
    %3522 = vmatmul.f32.gmra.mxu0 %v3504
    %v3523 = vpop.f32.mrf.mxu0
    %v3524 = vadd.f32 0.0, %v3523
    %3525 = vdwg.mxu0
    %v3527 = vsel %vm657, %v3493, 0
    %3529 = vmatpush.msra.mxu0 0.0
    %3530 = vmatpush.msra.mxu0 0.0
    %3531 = vmatpush.msra.mxu0 0.0
    %3532 = vmatpush.msra.mxu0 0.0
    %3533 = vmatpush.msra.mxu0 0.0
    %3534 = vmatpush.msra.mxu0 0.0
    %3535 = vmatpush.msra.mxu0 0.0
    %3536 = vmatpush.msra.mxu0 0.0
    %3537 = vmatpush.msra.mxu0 0.0
    %3538 = vmatpush.msra.mxu0 0.0
    %3539 = vmatpush.msra.mxu0 0.0
    %3540 = vmatpush.msra.mxu0 0.0
    %3541 = vmatpush.msra.mxu0 0.0
    %3542 = vmatpush.msra.mxu0 0.0
    %3543 = vmatpush.msra.mxu0 0.0
    %3544 = vmatpush.msra.mxu0 %v3502
    %3545 = vmatmul.f32.gmra.mxu0 %v3527
    %v3546 = vpop.f32.mrf.mxu0
    %v3547 = vadd.f32 0.0, %v3546
    %3548 = vdwg.mxu0
    %v3550 = vsel %vm718, %v3547, 0
    %3552 = vmatpush.msra.mxu0 0.0
    %3553 = vmatpush.msra.mxu0 0.0
    %3554 = vmatpush.msra.mxu0 0.0
    %3555 = vmatpush.msra.mxu0 0.0
    %3556 = vmatpush.msra.mxu0 0.0
    %3557 = vmatpush.msra.mxu0 0.0
    %3558 = vmatpush.msra.mxu0 0.0
    %3559 = vmatpush.msra.mxu0 0.0
    %3560 = vmatpush.msra.mxu0 0.0
    %3561 = vmatpush.msra.mxu0 0.0
    %3562 = vmatpush.msra.mxu0 0.0
    %3563 = vmatpush.msra.mxu0 0.0
    %3564 = vmatpush.msra.mxu0 0.0
    %3565 = vmatpush.msra.mxu0 0.0
    %3566 = vmatpush.msra.mxu0 %v2569
    %3567 = vmatpush.msra.mxu0 %v2568
    %3568 = vmatmul.f32.gmra.mxu0 %v3550
    %v3569 = vpop.f32.mrf.mxu0
    %v3570 = vadd.f32 0.0, %v3569
    %3571 = vdwg.mxu0
    %v3573 = vsel %vm718, %v3524, 0
    %3575 = vmatpush.msra.mxu0 0.0
    %3576 = vmatpush.msra.mxu0 0.0
    %3577 = vmatpush.msra.mxu0 0.0
    %3578 = vmatpush.msra.mxu0 0.0
    %3579 = vmatpush.msra.mxu0 0.0
    %3580 = vmatpush.msra.mxu0 0.0
    %3581 = vmatpush.msra.mxu0 0.0
    %3582 = vmatpush.msra.mxu0 0.0
    %3583 = vmatpush.msra.mxu0 0.0
    %3584 = vmatpush.msra.mxu0 0.0
    %3585 = vmatpush.msra.mxu0 0.0
    %3586 = vmatpush.msra.mxu0 0.0
    %3587 = vmatpush.msra.mxu0 0.0
    %3588 = vmatpush.msra.mxu0 0.0
    %3589 = vmatpush.msra.mxu0 %v2543
    %3590 = vmatpush.msra.mxu0 %v2542
    %3591 = vmatmul.f32.gmra.mxu0 %v3573
    %v3592 = vpop.f32.mrf.mxu0
    %v3593 = vadd.f32 %v3570, %v3592
    %3594 = vdwg.mxu0
    %v3596 = vsel %vm657, %v3495, 0
    %3598 = vmatpush.msra.mxu0 0.0
    %3599 = vmatpush.msra.mxu0 0.0
    %3600 = vmatpush.msra.mxu0 0.0
    %3601 = vmatpush.msra.mxu0 0.0
    %3602 = vmatpush.msra.mxu0 0.0
    %3603 = vmatpush.msra.mxu0 0.0
    %3604 = vmatpush.msra.mxu0 0.0
    %3605 = vmatpush.msra.mxu0 0.0
    %3606 = vmatpush.msra.mxu0 0.0
    %3607 = vmatpush.msra.mxu0 0.0
    %3608 = vmatpush.msra.mxu0 0.0
    %3609 = vmatpush.msra.mxu0 0.0
    %3610 = vmatpush.msra.mxu0 0.0
    %3611 = vmatpush.msra.mxu0 0.0
    %3612 = vmatpush.msra.mxu0 0.0
    %3613 = vmatpush.msra.mxu0 %v3502
    %3614 = vmatmul.f32.gmra.mxu0 %v3596
    %v3615 = vpop.f32.mrf.mxu0
    %v3616 = vadd.f32 0.0, %v3615
    %3617 = vdwg.mxu0
    %v3619 = vsel %vm718, %v3616, 0
    %3621 = vmatpush.msra.mxu0 0.0
    %3622 = vmatpush.msra.mxu0 0.0
    %3623 = vmatpush.msra.mxu0 0.0
    %3624 = vmatpush.msra.mxu0 0.0
    %3625 = vmatpush.msra.mxu0 0.0
    %3626 = vmatpush.msra.mxu0 0.0
    %3627 = vmatpush.msra.mxu0 0.0
    %3628 = vmatpush.msra.mxu0 0.0
    %3629 = vmatpush.msra.mxu0 0.0
    %3630 = vmatpush.msra.mxu0 0.0
    %3631 = vmatpush.msra.mxu0 0.0
    %3632 = vmatpush.msra.mxu0 0.0
    %3633 = vmatpush.msra.mxu0 0.0
    %3634 = vmatpush.msra.mxu0 0.0
    %3635 = vmatpush.msra.mxu0 %v2641
    %3636 = vmatpush.msra.mxu0 %v2640
    %3637 = vmatmul.f32.gmra.mxu0 %v3619
    %v3638 = vpop.f32.mrf.mxu0
    %v3639 = vadd.f32 0.0, %v3638
    %3640 = vdwg.mxu0
    %v3641 = vadd.f32 %v3593, %v3639
    %v3643 = vsel %vm657, %v3497, 0
    %3645 = vmatpush.msra.mxu0 0.0
    %3646 = vmatpush.msra.mxu0 0.0
    %3647 = vmatpush.msra.mxu0 0.0
    %3648 = vmatpush.msra.mxu0 0.0
    %3649 = vmatpush.msra.mxu0 0.0
    %3650 = vmatpush.msra.mxu0 0.0
    %3651 = vmatpush.msra.mxu0 0.0
    %3652 = vmatpush.msra.mxu0 0.0
    %3653 = vmatpush.msra.mxu0 0.0
    %3654 = vmatpush.msra.mxu0 0.0
    %3655 = vmatpush.msra.mxu0 0.0
    %3656 = vmatpush.msra.mxu0 0.0
    %3657 = vmatpush.msra.mxu0 0.0
    %3658 = vmatpush.msra.mxu0 0.0
    %3659 = vmatpush.msra.mxu0 0.0
    %3660 = vmatpush.msra.mxu0 %v3502
    %3661 = vmatmul.f32.gmra.mxu0 %v3643
    %v3662 = vpop.f32.mrf.mxu0
    %v3663 = vadd.f32 0.0, %v3662
    %3664 = vdwg.mxu0
    %v3666 = vsel %vm718, %v3663, 0
    %3668 = vmatpush.msra.mxu0 0.0
    %3669 = vmatpush.msra.mxu0 0.0
    %3670 = vmatpush.msra.mxu0 0.0
    %3671 = vmatpush.msra.mxu0 0.0
    %3672 = vmatpush.msra.mxu0 0.0
    %3673 = vmatpush.msra.mxu0 0.0
    %3674 = vmatpush.msra.mxu0 0.0
    %3675 = vmatpush.msra.mxu0 0.0
    %3676 = vmatpush.msra.mxu0 0.0
    %3677 = vmatpush.msra.mxu0 0.0
    %3678 = vmatpush.msra.mxu0 0.0
    %3679 = vmatpush.msra.mxu0 0.0
    %3680 = vmatpush.msra.mxu0 0.0
    %3681 = vmatpush.msra.mxu0 0.0
    %3682 = vmatpush.msra.mxu0 %v2691
    %3683 = vmatpush.msra.mxu0 %v2690
    %3684 = vmatmul.f32.gmra.mxu0 %v3666
    %v3685 = vpop.f32.mrf.mxu0
    %v3686 = vadd.f32 0.0, %v3685
    %3687 = vdwg.mxu0
    %v3688 = vadd.f32 %v3641, %v3686
    %v3690 = vsel %vm657, %v3499, 0
    %3692 = vmatpush.msra.mxu0 0.0
    %3693 = vmatpush.msra.mxu0 0.0
    %3694 = vmatpush.msra.mxu0 0.0
    %3695 = vmatpush.msra.mxu0 0.0
    %3696 = vmatpush.msra.mxu0 0.0
    %3697 = vmatpush.msra.mxu0 0.0
    %3698 = vmatpush.msra.mxu0 0.0
    %3699 = vmatpush.msra.mxu0 0.0
    %3700 = vmatpush.msra.mxu0 0.0
    %3701 = vmatpush.msra.mxu0 0.0
    %3702 = vmatpush.msra.mxu0 0.0
    %3703 = vmatpush.msra.mxu0 0.0
    %3704 = vmatpush.msra.mxu0 0.0
    %3705 = vmatpush.msra.mxu0 0.0
    %3706 = vmatpush.msra.mxu0 0.0
    %3707 = vmatpush.msra.mxu0 %v3502
    %3708 = vmatmul.f32.gmra.mxu0 %v3690
    %v3709 = vpop.f32.mrf.mxu0
    %v3710 = vadd.f32 0.0, %v3709
    %3711 = vdwg.mxu0
    %v3713 = vsel %vm718, %v3710, 0
    %3715 = vmatpush.msra.mxu0 0.0
    %3716 = vmatpush.msra.mxu0 0.0
    %3717 = vmatpush.msra.mxu0 0.0
    %3718 = vmatpush.msra.mxu0 0.0
    %3719 = vmatpush.msra.mxu0 0.0
    %3720 = vmatpush.msra.mxu0 0.0
    %3721 = vmatpush.msra.mxu0 0.0
    %3722 = vmatpush.msra.mxu0 0.0
    %3723 = vmatpush.msra.mxu0 0.0
    %3724 = vmatpush.msra.mxu0 0.0
    %3725 = vmatpush.msra.mxu0 0.0
    %3726 = vmatpush.msra.mxu0 0.0
    %3727 = vmatpush.msra.mxu0 0.0
    %3728 = vmatpush.msra.mxu0 0.0
    %3729 = vmatpush.msra.mxu0 %v2741
    %3730 = vmatpush.msra.mxu0 %v2740
    %3731 = vmatmul.f32.gmra.mxu0 %v3713
    %v3732 = vpop.f32.mrf.mxu0
    %v3733 = vadd.f32 0.0, %v3732
    %3734 = vdwg.mxu0
    %v3735 = vadd.f32 %v3688, %v3733
    %3737 = vset.pattern.permute.xlu0 0
    %3738 = vperm.xlu0 %3737, %v3500
    %v3739 = vpop.permute.xlu0 %3738
    %v3741 = vmul.f32 %v3735, %v3739
    %3743 = vset.pattern.permute.xlu0 0
    %3744 = vperm.xlu0 %3743, %v3501
    %v3745 = vpop.permute.xlu0 %3744
    %v3747 = vadd.f32 %v3741, %v3745
    %s3748 = scalar_lea.vmem [#allocation6], 40
    %v3749 = vld [vmem:[%s3748] sm:$0xff]
    %s3750 = scalar_lea.vmem [#allocation6], 48
    %v3751 = vld [vmem:[%s3750] sm:$0xff]
    %s3752 = scalar_lea.vmem [#allocation6], 56
    %v3753 = vld [vmem:[%s3752] sm:$0xff]
    %s3754 = scalar_lea.vmem [#allocation6], 64
    %v3755 = vld [vmem:[%s3754] sm:$0xff]
    %s3756 = scalar_lea.vmem [#allocation6], 72
    %v3757 = vld [vmem:[%s3756] sm:$0xff]
    %s3758 = scalar_lea.vmem [#allocation2], 8
    %v3759 = vld [vmem:[%s3758] sm:$0xff]
    %s3760 = scalar_lea.vmem [#allocation4], 8
    %v3761 = vld [vmem:[%s3760] sm:$0xff]
    %v3762 = vmax.f32 %v3747, 0.0
    %v3764 = vsel %vm657, %v3749, 0
    %3766 = vmatpush.msra.mxu0 0.0
    %3767 = vmatpush.msra.mxu0 0.0
    %3768 = vmatpush.msra.mxu0 0.0
    %3769 = vmatpush.msra.mxu0 0.0
    %3770 = vmatpush.msra.mxu0 0.0
    %3771 = vmatpush.msra.mxu0 0.0
    %3772 = vmatpush.msra.mxu0 0.0
    %3773 = vmatpush.msra.mxu0 0.0
    %3774 = vmatpush.msra.mxu0 0.0
    %3775 = vmatpush.msra.mxu0 0.0
    %3776 = vmatpush.msra.mxu0 0.0
    %3777 = vmatpush.msra.mxu0 0.0
    %3778 = vmatpush.msra.mxu0 0.0
    %3779 = vmatpush.msra.mxu0 0.0
    %3780 = vmatpush.msra.mxu0 0.0
    %3781 = vmatpush.msra.mxu0 %v3762
    %3782 = vmatmul.f32.gmra.mxu0 %v3764
    %v3783 = vpop.f32.mrf.mxu0
    %v3784 = vadd.f32 0.0, %v3783
    %3785 = vdwg.mxu0
    %v3787 = vsel %vm657, %v3751, 0
    %3789 = vmatpush.msra.mxu0 0.0
    %3790 = vmatpush.msra.mxu0 0.0
    %3791 = vmatpush.msra.mxu0 0.0
    %3792 = vmatpush.msra.mxu0 0.0
    %3793 = vmatpush.msra.mxu0 0.0
    %3794 = vmatpush.msra.mxu0 0.0
    %3795 = vmatpush.msra.mxu0 0.0
    %3796 = vmatpush.msra.mxu0 0.0
    %3797 = vmatpush.msra.mxu0 0.0
    %3798 = vmatpush.msra.mxu0 0.0
    %3799 = vmatpush.msra.mxu0 0.0
    %3800 = vmatpush.msra.mxu0 0.0
    %3801 = vmatpush.msra.mxu0 0.0
    %3802 = vmatpush.msra.mxu0 0.0
    %3803 = vmatpush.msra.mxu0 0.0
    %3804 = vmatpush.msra.mxu0 %v3762
    %3805 = vmatmul.f32.gmra.mxu0 %v3787
    %v3806 = vpop.f32.mrf.mxu0
    %v3807 = vadd.f32 0.0, %v3806
    %3808 = vdwg.mxu0
    %v3810 = vsel %vm718, %v3807, 0
    %3812 = vmatpush.msra.mxu0 0.0
    %3813 = vmatpush.msra.mxu0 0.0
    %3814 = vmatpush.msra.mxu0 0.0
    %3815 = vmatpush.msra.mxu0 0.0
    %3816 = vmatpush.msra.mxu0 0.0
    %3817 = vmatpush.msra.mxu0 0.0
    %3818 = vmatpush.msra.mxu0 0.0
    %3819 = vmatpush.msra.mxu0 0.0
    %3820 = vmatpush.msra.mxu0 0.0
    %3821 = vmatpush.msra.mxu0 0.0
    %3822 = vmatpush.msra.mxu0 0.0
    %3823 = vmatpush.msra.mxu0 0.0
    %3824 = vmatpush.msra.mxu0 0.0
    %3825 = vmatpush.msra.mxu0 0.0
    %3826 = vmatpush.msra.mxu0 %v2569
    %3827 = vmatpush.msra.mxu0 %v2568
    %3828 = vmatmul.f32.gmra.mxu0 %v3810
    %v3829 = vpop.f32.mrf.mxu0
    %v3830 = vadd.f32 0.0, %v3829
    %3831 = vdwg.mxu0
    %v3833 = vsel %vm718, %v3784, 0
    %3835 = vmatpush.msra.mxu0 0.0
    %3836 = vmatpush.msra.mxu0 0.0
    %3837 = vmatpush.msra.mxu0 0.0
    %3838 = vmatpush.msra.mxu0 0.0
    %3839 = vmatpush.msra.mxu0 0.0
    %3840 = vmatpush.msra.mxu0 0.0
    %3841 = vmatpush.msra.mxu0 0.0
    %3842 = vmatpush.msra.mxu0 0.0
    %3843 = vmatpush.msra.mxu0 0.0
    %3844 = vmatpush.msra.mxu0 0.0
    %3845 = vmatpush.msra.mxu0 0.0
    %3846 = vmatpush.msra.mxu0 0.0
    %3847 = vmatpush.msra.mxu0 0.0
    %3848 = vmatpush.msra.mxu0 0.0
    %3849 = vmatpush.msra.mxu0 %v2543
    %3850 = vmatpush.msra.mxu0 %v2542
    %3851 = vmatmul.f32.gmra.mxu0 %v3833
    %v3852 = vpop.f32.mrf.mxu0
    %v3853 = vadd.f32 %v3830, %v3852
    %3854 = vdwg.mxu0
    %v3856 = vsel %vm657, %v3753, 0
    %3858 = vmatpush.msra.mxu0 0.0
    %3859 = vmatpush.msra.mxu0 0.0
    %3860 = vmatpush.msra.mxu0 0.0
    %3861 = vmatpush.msra.mxu0 0.0
    %3862 = vmatpush.msra.mxu0 0.0
    %3863 = vmatpush.msra.mxu0 0.0
    %3864 = vmatpush.msra.mxu0 0.0
    %3865 = vmatpush.msra.mxu0 0.0
    %3866 = vmatpush.msra.mxu0 0.0
    %3867 = vmatpush.msra.mxu0 0.0
    %3868 = vmatpush.msra.mxu0 0.0
    %3869 = vmatpush.msra.mxu0 0.0
    %3870 = vmatpush.msra.mxu0 0.0
    %3871 = vmatpush.msra.mxu0 0.0
    %3872 = vmatpush.msra.mxu0 0.0
    %3873 = vmatpush.msra.mxu0 %v3762
    %3874 = vmatmul.f32.gmra.mxu0 %v3856
    %v3875 = vpop.f32.mrf.mxu0
    %v3876 = vadd.f32 0.0, %v3875
    %3877 = vdwg.mxu0
    %v3879 = vsel %vm718, %v3876, 0
    %3881 = vmatpush.msra.mxu0 0.0
    %3882 = vmatpush.msra.mxu0 0.0
    %3883 = vmatpush.msra.mxu0 0.0
    %3884 = vmatpush.msra.mxu0 0.0
    %3885 = vmatpush.msra.mxu0 0.0
    %3886 = vmatpush.msra.mxu0 0.0
    %3887 = vmatpush.msra.mxu0 0.0
    %3888 = vmatpush.msra.mxu0 0.0
    %3889 = vmatpush.msra.mxu0 0.0
    %3890 = vmatpush.msra.mxu0 0.0
    %3891 = vmatpush.msra.mxu0 0.0
    %3892 = vmatpush.msra.mxu0 0.0
    %3893 = vmatpush.msra.mxu0 0.0
    %3894 = vmatpush.msra.mxu0 0.0
    %3895 = vmatpush.msra.mxu0 %v2641
    %3896 = vmatpush.msra.mxu0 %v2640
    %3897 = vmatmul.f32.gmra.mxu0 %v3879
    %v3898 = vpop.f32.mrf.mxu0
    %v3899 = vadd.f32 0.0, %v3898
    %3900 = vdwg.mxu0
    %v3901 = vadd.f32 %v3853, %v3899
    %v3903 = vsel %vm657, %v3755, 0
    %3905 = vmatpush.msra.mxu0 0.0
    %3906 = vmatpush.msra.mxu0 0.0
    %3907 = vmatpush.msra.mxu0 0.0
    %3908 = vmatpush.msra.mxu0 0.0
    %3909 = vmatpush.msra.mxu0 0.0
    %3910 = vmatpush.msra.mxu0 0.0
    %3911 = vmatpush.msra.mxu0 0.0
    %3912 = vmatpush.msra.mxu0 0.0
    %3913 = vmatpush.msra.mxu0 0.0
    %3914 = vmatpush.msra.mxu0 0.0
    %3915 = vmatpush.msra.mxu0 0.0
    %3916 = vmatpush.msra.mxu0 0.0
    %3917 = vmatpush.msra.mxu0 0.0
    %3918 = vmatpush.msra.mxu0 0.0
    %3919 = vmatpush.msra.mxu0 0.0
    %3920 = vmatpush.msra.mxu0 %v3762
    %3921 = vmatmul.f32.gmra.mxu0 %v3903
    %v3922 = vpop.f32.mrf.mxu0
    %v3923 = vadd.f32 0.0, %v3922
    %3924 = vdwg.mxu0
    %v3926 = vsel %vm718, %v3923, 0
    %3928 = vmatpush.msra.mxu0 0.0
    %3929 = vmatpush.msra.mxu0 0.0
    %3930 = vmatpush.msra.mxu0 0.0
    %3931 = vmatpush.msra.mxu0 0.0
    %3932 = vmatpush.msra.mxu0 0.0
    %3933 = vmatpush.msra.mxu0 0.0
    %3934 = vmatpush.msra.mxu0 0.0
    %3935 = vmatpush.msra.mxu0 0.0
    %3936 = vmatpush.msra.mxu0 0.0
    %3937 = vmatpush.msra.mxu0 0.0
    %3938 = vmatpush.msra.mxu0 0.0
    %3939 = vmatpush.msra.mxu0 0.0
    %3940 = vmatpush.msra.mxu0 0.0
    %3941 = vmatpush.msra.mxu0 0.0
    %3942 = vmatpush.msra.mxu0 %v2691
    %3943 = vmatpush.msra.mxu0 %v2690
    %3944 = vmatmul.f32.gmra.mxu0 %v3926
    %v3945 = vpop.f32.mrf.mxu0
    %v3946 = vadd.f32 0.0, %v3945
    %3947 = vdwg.mxu0
    %v3948 = vadd.f32 %v3901, %v3946
    %v3950 = vsel %vm657, %v3757, 0
    %3952 = vmatpush.msra.mxu0 0.0
    %3953 = vmatpush.msra.mxu0 0.0
    %3954 = vmatpush.msra.mxu0 0.0
    %3955 = vmatpush.msra.mxu0 0.0
    %3956 = vmatpush.msra.mxu0 0.0
    %3957 = vmatpush.msra.mxu0 0.0
    %3958 = vmatpush.msra.mxu0 0.0
    %3959 = vmatpush.msra.mxu0 0.0
    %3960 = vmatpush.msra.mxu0 0.0
    %3961 = vmatpush.msra.mxu0 0.0
    %3962 = vmatpush.msra.mxu0 0.0
    %3963 = vmatpush.msra.mxu0 0.0
    %3964 = vmatpush.msra.mxu0 0.0
    %3965 = vmatpush.msra.mxu0 0.0
    %3966 = vmatpush.msra.mxu0 0.0
    %3967 = vmatpush.msra.mxu0 %v3762
    %3968 = vmatmul.f32.gmra.mxu0 %v3950
    %v3969 = vpop.f32.mrf.mxu0
    %v3970 = vadd.f32 0.0, %v3969
    %3971 = vdwg.mxu0
    %v3973 = vsel %vm718, %v3970, 0
    %3975 = vmatpush.msra.mxu0 0.0
    %3976 = vmatpush.msra.mxu0 0.0
    %3977 = vmatpush.msra.mxu0 0.0
    %3978 = vmatpush.msra.mxu0 0.0
    %3979 = vmatpush.msra.mxu0 0.0
    %3980 = vmatpush.msra.mxu0 0.0
    %3981 = vmatpush.msra.mxu0 0.0
    %3982 = vmatpush.msra.mxu0 0.0
    %3983 = vmatpush.msra.mxu0 0.0
    %3984 = vmatpush.msra.mxu0 0.0
    %3985 = vmatpush.msra.mxu0 0.0
    %3986 = vmatpush.msra.mxu0 0.0
    %3987 = vmatpush.msra.mxu0 0.0
    %3988 = vmatpush.msra.mxu0 0.0
    %3989 = vmatpush.msra.mxu0 %v2741
    %3990 = vmatpush.msra.mxu0 %v2740
    %3991 = vmatmul.f32.gmra.mxu0 %v3973
    %v3992 = vpop.f32.mrf.mxu0
    %v3993 = vadd.f32 0.0, %v3992
    %3994 = vdwg.mxu0
    %v3995 = vadd.f32 %v3948, %v3993
    %3997 = vset.pattern.permute.xlu0 0
    %3998 = vperm.xlu0 %3997, %v3759
    %v3999 = vpop.permute.xlu0 %3998
    %v4001 = vmul.f32 %v3995, %v3999
    %4003 = vset.pattern.permute.xlu0 0
    %4004 = vperm.xlu0 %4003, %v3761
    %v4005 = vpop.permute.xlu0 %4004
    %v4007 = vadd.f32 %v4001, %v4005
    %v4008 = vadd.f32 %v4007, %v3747
    %s4009 = scalar_lea.vmem [#allocation6], 80
    %v4010 = vld [vmem:[%s4009] sm:$0xff]
    %s4011 = scalar_lea.vmem [#allocation6], 88
    %v4012 = vld [vmem:[%s4011] sm:$0xff]
    %s4013 = scalar_lea.vmem [#allocation6], 96
    %v4014 = vld [vmem:[%s4013] sm:$0xff]
    %s4015 = scalar_lea.vmem [#allocation6], 104
    %v4016 = vld [vmem:[%s4015] sm:$0xff]
    %s4017 = scalar_lea.vmem [#allocation6], 112
    %v4018 = vld [vmem:[%s4017] sm:$0xff]
    %s4019 = scalar_lea.vmem [#allocation2], 16
    %v4020 = vld [vmem:[%s4019] sm:$0xff]
    %s4021 = scalar_lea.vmem [#allocation4], 16
    %v4022 = vld [vmem:[%s4021] sm:$0xff]
    %v4023 = vmax.f32 %v4008, 0.0
    %v4025 = vsel %vm657, %v4010, 0
    %4027 = vmatpush.msra.mxu0 0.0
    %4028 = vmatpush.msra.mxu0 0.0
    %4029 = vmatpush.msra.mxu0 0.0
    %4030 = vmatpush.msra.mxu0 0.0
    %4031 = vmatpush.msra.mxu0 0.0
    %4032 = vmatpush.msra.mxu0 0.0
    %4033 = vmatpush.msra.mxu0 0.0
    %4034 = vmatpush.msra.mxu0 0.0
    %4035 = vmatpush.msra.mxu0 0.0
    %4036 = vmatpush.msra.mxu0 0.0
    %4037 = vmatpush.msra.mxu0 0.0
    %4038 = vmatpush.msra.mxu0 0.0
    %4039 = vmatpush.msra.mxu0 0.0
    %4040 = vmatpush.msra.mxu0 0.0
    %4041 = vmatpush.msra.mxu0 0.0
    %4042 = vmatpush.msra.mxu0 %v4023
    %4043 = vmatmul.f32.gmra.mxu0 %v4025
    %v4044 = vpop.f32.mrf.mxu0
    %v4045 = vadd.f32 0.0, %v4044
    %4046 = vdwg.mxu0
    %v4048 = vsel %vm657, %v4012, 0
    %4050 = vmatpush.msra.mxu0 0.0
    %4051 = vmatpush.msra.mxu0 0.0
    %4052 = vmatpush.msra.mxu0 0.0
    %4053 = vmatpush.msra.mxu0 0.0
    %4054 = vmatpush.msra.mxu0 0.0
    %4055 = vmatpush.msra.mxu0 0.0
    %4056 = vmatpush.msra.mxu0 0.0
    %4057 = vmatpush.msra.mxu0 0.0
    %4058 = vmatpush.msra.mxu0 0.0
    %4059 = vmatpush.msra.mxu0 0.0
    %4060 = vmatpush.msra.mxu0 0.0
    %4061 = vmatpush.msra.mxu0 0.0
    %4062 = vmatpush.msra.mxu0 0.0
    %4063 = vmatpush.msra.mxu0 0.0
    %4064 = vmatpush.msra.mxu0 0.0
    %4065 = vmatpush.msra.mxu0 %v4023
    %4066 = vmatmul.f32.gmra.mxu0 %v4048
    %v4067 = vpop.f32.mrf.mxu0
    %v4068 = vadd.f32 0.0, %v4067
    %4069 = vdwg.mxu0
    %v4071 = vsel %vm718, %v4068, 0
    %4073 = vmatpush.msra.mxu0 0.0
    %4074 = vmatpush.msra.mxu0 0.0
    %4075 = vmatpush.msra.mxu0 0.0
    %4076 = vmatpush.msra.mxu0 0.0
    %4077 = vmatpush.msra.mxu0 0.0
    %4078 = vmatpush.msra.mxu0 0.0
    %4079 = vmatpush.msra.mxu0 0.0
    %4080 = vmatpush.msra.mxu0 0.0
    %4081 = vmatpush.msra.mxu0 0.0
    %4082 = vmatpush.msra.mxu0 0.0
    %4083 = vmatpush.msra.mxu0 0.0
    %4084 = vmatpush.msra.mxu0 0.0
    %4085 = vmatpush.msra.mxu0 0.0
    %4086 = vmatpush.msra.mxu0 0.0
    %4087 = vmatpush.msra.mxu0 %v2569
    %4088 = vmatpush.msra.mxu0 %v2568
    %4089 = vmatmul.f32.gmra.mxu0 %v4071
    %v4090 = vpop.f32.mrf.mxu0
    %v4091 = vadd.f32 0.0, %v4090
    %4092 = vdwg.mxu0
    %v4094 = vsel %vm718, %v4045, 0
    %4096 = vmatpush.msra.mxu0 0.0
    %4097 = vmatpush.msra.mxu0 0.0
    %4098 = vmatpush.msra.mxu0 0.0
    %4099 = vmatpush.msra.mxu0 0.0
    %4100 = vmatpush.msra.mxu0 0.0
    %4101 = vmatpush.msra.mxu0 0.0
    %4102 = vmatpush.msra.mxu0 0.0
    %4103 = vmatpush.msra.mxu0 0.0
    %4104 = vmatpush.msra.mxu0 0.0
    %4105 = vmatpush.msra.mxu0 0.0
    %4106 = vmatpush.msra.mxu0 0.0
    %4107 = vmatpush.msra.mxu0 0.0
    %4108 = vmatpush.msra.mxu0 0.0
    %4109 = vmatpush.msra.mxu0 0.0
    %4110 = vmatpush.msra.mxu0 %v2543
    %4111 = vmatpush.msra.mxu0 %v2542
    %4112 = vmatmul.f32.gmra.mxu0 %v4094
    %v4113 = vpop.f32.mrf.mxu0
    %v4114 = vadd.f32 %v4091, %v4113
    %4115 = vdwg.mxu0
    %v4117 = vsel %vm657, %v4014, 0
    %4119 = vmatpush.msra.mxu0 0.0
    %4120 = vmatpush.msra.mxu0 0.0
    %4121 = vmatpush.msra.mxu0 0.0
    %4122 = vmatpush.msra.mxu0 0.0
    %4123 = vmatpush.msra.mxu0 0.0
    %4124 = vmatpush.msra.mxu0 0.0
    %4125 = vmatpush.msra.mxu0 0.0
    %4126 = vmatpush.msra.mxu0 0.0
    %4127 = vmatpush.msra.mxu0 0.0
    %4128 = vmatpush.msra.mxu0 0.0
    %4129 = vmatpush.msra.mxu0 0.0
    %4130 = vmatpush.msra.mxu0 0.0
    %4131 = vmatpush.msra.mxu0 0.0
    %4132 = vmatpush.msra.mxu0 0.0
    %4133 = vmatpush.msra.mxu0 0.0
    %4134 = vmatpush.msra.mxu0 %v4023
    %4135 = vmatmul.f32.gmra.mxu0 %v4117
    %v4136 = vpop.f32.mrf.mxu0
    %v4137 = vadd.f32 0.0, %v4136
    %4138 = vdwg.mxu0
    %v4140 = vsel %vm718, %v4137, 0
    %4142 = vmatpush.msra.mxu0 0.0
    %4143 = vmatpush.msra.mxu0 0.0
    %4144 = vmatpush.msra.mxu0 0.0
    %4145 = vmatpush.msra.mxu0 0.0
    %4146 = vmatpush.msra.mxu0 0.0
    %4147 = vmatpush.msra.mxu0 0.0
    %4148 = vmatpush.msra.mxu0 0.0
    %4149 = vmatpush.msra.mxu0 0.0
    %4150 = vmatpush.msra.mxu0 0.0
    %4151 = vmatpush.msra.mxu0 0.0
    %4152 = vmatpush.msra.mxu0 0.0
    %4153 = vmatpush.msra.mxu0 0.0
    %4154 = vmatpush.msra.mxu0 0.0
    %4155 = vmatpush.msra.mxu0 0.0
    %4156 = vmatpush.msra.mxu0 %v2641
    %4157 = vmatpush.msra.mxu0 %v2640
    %4158 = vmatmul.f32.gmra.mxu0 %v4140
    %v4159 = vpop.f32.mrf.mxu0
    %v4160 = vadd.f32 0.0, %v4159
    %4161 = vdwg.mxu0
    %v4162 = vadd.f32 %v4114, %v4160
    %v4164 = vsel %vm657, %v4016, 0
    %4166 = vmatpush.msra.mxu0 0.0
    %4167 = vmatpush.msra.mxu0 0.0
    %4168 = vmatpush.msra.mxu0 0.0
    %4169 = vmatpush.msra.mxu0 0.0
    %4170 = vmatpush.msra.mxu0 0.0
    %4171 = vmatpush.msra.mxu0 0.0
    %4172 = vmatpush.msra.mxu0 0.0
    %4173 = vmatpush.msra.mxu0 0.0
    %4174 = vmatpush.msra.mxu0 0.0
    %4175 = vmatpush.msra.mxu0 0.0
    %4176 = vmatpush.msra.mxu0 0.0
    %4177 = vmatpush.msra.mxu0 0.0
    %4178 = vmatpush.msra.mxu0 0.0
    %4179 = vmatpush.msra.mxu0 0.0
    %4180 = vmatpush.msra.mxu0 0.0
    %4181 = vmatpush.msra.mxu0 %v4023
    %4182 = vmatmul.f32.gmra.mxu0 %v4164
    %v4183 = vpop.f32.mrf.mxu0
    %v4184 = vadd.f32 0.0, %v4183
    %4185 = vdwg.mxu0
    %v4187 = vsel %vm718, %v4184, 0
    %4189 = vmatpush.msra.mxu0 0.0
    %4190 = vmatpush.msra.mxu0 0.0
    %4191 = vmatpush.msra.mxu0 0.0
    %4192 = vmatpush.msra.mxu0 0.0
    %4193 = vmatpush.msra.mxu0 0.0
    %4194 = vmatpush.msra.mxu0 0.0
    %4195 = vmatpush.msra.mxu0 0.0
    %4196 = vmatpush.msra.mxu0 0.0
    %4197 = vmatpush.msra.mxu0 0.0
    %4198 = vmatpush.msra.mxu0 0.0
    %4199 = vmatpush.msra.mxu0 0.0
    %4200 = vmatpush.msra.mxu0 0.0
    %4201 = vmatpush.msra.mxu0 0.0
    %4202 = vmatpush.msra.mxu0 0.0
    %4203 = vmatpush.msra.mxu0 %v2691
    %4204 = vmatpush.msra.mxu0 %v2690
    %4205 = vmatmul.f32.gmra.mxu0 %v4187
    %v4206 = vpop.f32.mrf.mxu0
    %v4207 = vadd.f32 0.0, %v4206
    %4208 = vdwg.mxu0
    %v4209 = vadd.f32 %v4162, %v4207
    %v4211 = vsel %vm657, %v4018, 0
    %4213 = vmatpush.msra.mxu0 0.0
    %4214 = vmatpush.msra.mxu0 0.0
    %4215 = vmatpush.msra.mxu0 0.0
    %4216 = vmatpush.msra.mxu0 0.0
    %4217 = vmatpush.msra.mxu0 0.0
    %4218 = vmatpush.msra.mxu0 0.0
    %4219 = vmatpush.msra.mxu0 0.0
    %4220 = vmatpush.msra.mxu0 0.0
    %4221 = vmatpush.msra.mxu0 0.0
    %4222 = vmatpush.msra.mxu0 0.0
    %4223 = vmatpush.msra.mxu0 0.0
    %4224 = vmatpush.msra.mxu0 0.0
    %4225 = vmatpush.msra.mxu0 0.0
    %4226 = vmatpush.msra.mxu0 0.0
    %4227 = vmatpush.msra.mxu0 0.0
    %4228 = vmatpush.msra.mxu0 %v4023
    %4229 = vmatmul.f32.gmra.mxu0 %v4211
    %v4230 = vpop.f32.mrf.mxu0
    %v4231 = vadd.f32 0.0, %v4230
    %4232 = vdwg.mxu0
    %v4234 = vsel %vm718, %v4231, 0
    %4236 = vmatpush.msra.mxu0 0.0
    %4237 = vmatpush.msra.mxu0 0.0
    %4238 = vmatpush.msra.mxu0 0.0
    %4239 = vmatpush.msra.mxu0 0.0
    %4240 = vmatpush.msra.mxu0 0.0
    %4241 = vmatpush.msra.mxu0 0.0
    %4242 = vmatpush.msra.mxu0 0.0
    %4243 = vmatpush.msra.mxu0 0.0
    %4244 = vmatpush.msra.mxu0 0.0
    %4245 = vmatpush.msra.mxu0 0.0
    %4246 = vmatpush.msra.mxu0 0.0
    %4247 = vmatpush.msra.mxu0 0.0
    %4248 = vmatpush.msra.mxu0 0.0
    %4249 = vmatpush.msra.mxu0 0.0
    %4250 = vmatpush.msra.mxu0 %v2741
    %4251 = vmatpush.msra.mxu0 %v2740
    %4252 = vmatmul.f32.gmra.mxu0 %v4234
    %v4253 = vpop.f32.mrf.mxu0
    %v4254 = vadd.f32 0.0, %v4253
    %4255 = vdwg.mxu0
    %v4256 = vadd.f32 %v4209, %v4254
    %4258 = vset.pattern.permute.xlu0 0
    %4259 = vperm.xlu0 %4258, %v4020
    %v4260 = vpop.permute.xlu0 %4259
    %v4262 = vmul.f32 %v4256, %v4260
    %4264 = vset.pattern.permute.xlu0 0
    %4265 = vperm.xlu0 %4264, %v4022
    %v4266 = vpop.permute.xlu0 %4265
    %v4268 = vadd.f32 %v4262, %v4266
    %s4269 = scalar_lea.vmem [#allocation6], 120
    %v4270 = vld [vmem:[%s4269] sm:$0xff]
    %s4271 = scalar_lea.vmem [#allocation6], 128
    %v4272 = vld [vmem:[%s4271] sm:$0xff]
    %s4273 = scalar_lea.vmem [#allocation6], 136
    %v4274 = vld [vmem:[%s4273] sm:$0xff]
    %s4275 = scalar_lea.vmem [#allocation6], 144
    %v4276 = vld [vmem:[%s4275] sm:$0xff]
    %s4277 = scalar_lea.vmem [#allocation6], 152
    %v4278 = vld [vmem:[%s4277] sm:$0xff]
    %s4279 = scalar_lea.vmem [#allocation2], 24
    %v4280 = vld [vmem:[%s4279] sm:$0xff]
    %s4281 = scalar_lea.vmem [#allocation4], 24
    %v4282 = vld [vmem:[%s4281] sm:$0xff]
    %v4283 = vmax.f32 %v4268, 0.0
    %v4285 = vsel %vm657, %v4270, 0
    %4287 = vmatpush.msra.mxu0 0.0
    %4288 = vmatpush.msra.mxu0 0.0
    %4289 = vmatpush.msra.mxu0 0.0
    %4290 = vmatpush.msra.mxu0 0.0
    %4291 = vmatpush.msra.mxu0 0.0
    %4292 = vmatpush.msra.mxu0 0.0
    %4293 = vmatpush.msra.mxu0 0.0
    %4294 = vmatpush.msra.mxu0 0.0
    %4295 = vmatpush.msra.mxu0 0.0
    %4296 = vmatpush.msra.mxu0 0.0
    %4297 = vmatpush.msra.mxu0 0.0
    %4298 = vmatpush.msra.mxu0 0.0
    %4299 = vmatpush.msra.mxu0 0.0
    %4300 = vmatpush.msra.mxu0 0.0
    %4301 = vmatpush.msra.mxu0 0.0
    %4302 = vmatpush.msra.mxu0 %v4283
    %4303 = vmatmul.f32.gmra.mxu0 %v4285
    %v4304 = vpop.f32.mrf.mxu0
    %v4305 = vadd.f32 0.0, %v4304
    %4306 = vdwg.mxu0
    %v4308 = vsel %vm657, %v4272, 0
    %4310 = vmatpush.msra.mxu0 0.0
    %4311 = vmatpush.msra.mxu0 0.0
    %4312 = vmatpush.msra.mxu0 0.0
    %4313 = vmatpush.msra.mxu0 0.0
    %4314 = vmatpush.msra.mxu0 0.0
    %4315 = vmatpush.msra.mxu0 0.0
    %4316 = vmatpush.msra.mxu0 0.0
    %4317 = vmatpush.msra.mxu0 0.0
    %4318 = vmatpush.msra.mxu0 0.0
    %4319 = vmatpush.msra.mxu0 0.0
    %4320 = vmatpush.msra.mxu0 0.0
    %4321 = vmatpush.msra.mxu0 0.0
    %4322 = vmatpush.msra.mxu0 0.0
    %4323 = vmatpush.msra.mxu0 0.0
    %4324 = vmatpush.msra.mxu0 0.0
    %4325 = vmatpush.msra.mxu0 %v4283
    %4326 = vmatmul.f32.gmra.mxu0 %v4308
    %v4327 = vpop.f32.mrf.mxu0
    %v4328 = vadd.f32 0.0, %v4327
    %4329 = vdwg.mxu0
    %v4331 = vsel %vm718, %v4328, 0
    %4333 = vmatpush.msra.mxu0 0.0
    %4334 = vmatpush.msra.mxu0 0.0
    %4335 = vmatpush.msra.mxu0 0.0
    %4336 = vmatpush.msra.mxu0 0.0
    %4337 = vmatpush.msra.mxu0 0.0
    %4338 = vmatpush.msra.mxu0 0.0
    %4339 = vmatpush.msra.mxu0 0.0
    %4340 = vmatpush.msra.mxu0 0.0
    %4341 = vmatpush.msra.mxu0 0.0
    %4342 = vmatpush.msra.mxu0 0.0
    %4343 = vmatpush.msra.mxu0 0.0
    %4344 = vmatpush.msra.mxu0 0.0
    %4345 = vmatpush.msra.mxu0 0.0
    %4346 = vmatpush.msra.mxu0 0.0
    %4347 = vmatpush.msra.mxu0 %v2569
    %4348 = vmatpush.msra.mxu0 %v2568
    %4349 = vmatmul.f32.gmra.mxu0 %v4331
    %v4350 = vpop.f32.mrf.mxu0
    %v4351 = vadd.f32 0.0, %v4350
    %4352 = vdwg.mxu0
    %v4354 = vsel %vm718, %v4305, 0
    %4356 = vmatpush.msra.mxu0 0.0
    %4357 = vmatpush.msra.mxu0 0.0
    %4358 = vmatpush.msra.mxu0 0.0
    %4359 = vmatpush.msra.mxu0 0.0
    %4360 = vmatpush.msra.mxu0 0.0
    %4361 = vmatpush.msra.mxu0 0.0
    %4362 = vmatpush.msra.mxu0 0.0
    %4363 = vmatpush.msra.mxu0 0.0
    %4364 = vmatpush.msra.mxu0 0.0
    %4365 = vmatpush.msra.mxu0 0.0
    %4366 = vmatpush.msra.mxu0 0.0
    %4367 = vmatpush.msra.mxu0 0.0
    %4368 = vmatpush.msra.mxu0 0.0
    %4369 = vmatpush.msra.mxu0 0.0
    %4370 = vmatpush.msra.mxu0 %v2543
    %4371 = vmatpush.msra.mxu0 %v2542
    %4372 = vmatmul.f32.gmra.mxu0 %v4354
    %v4373 = vpop.f32.mrf.mxu0
    %v4374 = vadd.f32 %v4351, %v4373
    %4375 = vdwg.mxu0
    %v4377 = vsel %vm657, %v4274, 0
    %4379 = vmatpush.msra.mxu0 0.0
    %4380 = vmatpush.msra.mxu0 0.0
    %4381 = vmatpush.msra.mxu0 0.0
    %4382 = vmatpush.msra.mxu0 0.0
    %4383 = vmatpush.msra.mxu0 0.0
    %4384 = vmatpush.msra.mxu0 0.0
    %4385 = vmatpush.msra.mxu0 0.0
    %4386 = vmatpush.msra.mxu0 0.0
    %4387 = vmatpush.msra.mxu0 0.0
    %4388 = vmatpush.msra.mxu0 0.0
    %4389 = vmatpush.msra.mxu0 0.0
    %4390 = vmatpush.msra.mxu0 0.0
    %4391 = vmatpush.msra.mxu0 0.0
    %4392 = vmatpush.msra.mxu0 0.0
    %4393 = vmatpush.msra.mxu0 0.0
    %4394 = vmatpush.msra.mxu0 %v4283
    %4395 = vmatmul.f32.gmra.mxu0 %v4377
    %v4396 = vpop.f32.mrf.mxu0
    %v4397 = vadd.f32 0.0, %v4396
    %4398 = vdwg.mxu0
    %v4400 = vsel %vm718, %v4397, 0
    %4402 = vmatpush.msra.mxu0 0.0
    %4403 = vmatpush.msra.mxu0 0.0
    %4404 = vmatpush.msra.mxu0 0.0
    %4405 = vmatpush.msra.mxu0 0.0
    %4406 = vmatpush.msra.mxu0 0.0
    %4407 = vmatpush.msra.mxu0 0.0
    %4408 = vmatpush.msra.mxu0 0.0
    %4409 = vmatpush.msra.mxu0 0.0
    %4410 = vmatpush.msra.mxu0 0.0
    %4411 = vmatpush.msra.mxu0 0.0
    %4412 = vmatpush.msra.mxu0 0.0
    %4413 = vmatpush.msra.mxu0 0.0
    %4414 = vmatpush.msra.mxu0 0.0
    %4415 = vmatpush.msra.mxu0 0.0
    %4416 = vmatpush.msra.mxu0 %v2641
    %4417 = vmatpush.msra.mxu0 %v2640
    %4418 = vmatmul.f32.gmra.mxu0 %v4400
    %v4419 = vpop.f32.mrf.mxu0
    %v4420 = vadd.f32 0.0, %v4419
    %4421 = vdwg.mxu0
    %v4422 = vadd.f32 %v4374, %v4420
    %v4424 = vsel %vm657, %v4276, 0
    %4426 = vmatpush.msra.mxu0 0.0
    %4427 = vmatpush.msra.mxu0 0.0
    %4428 = vmatpush.msra.mxu0 0.0
    %4429 = vmatpush.msra.mxu0 0.0
    %4430 = vmatpush.msra.mxu0 0.0
    %4431 = vmatpush.msra.mxu0 0.0
    %4432 = vmatpush.msra.mxu0 0.0
    %4433 = vmatpush.msra.mxu0 0.0
    %4434 = vmatpush.msra.mxu0 0.0
    %4435 = vmatpush.msra.mxu0 0.0
    %4436 = vmatpush.msra.mxu0 0.0
    %4437 = vmatpush.msra.mxu0 0.0
    %4438 = vmatpush.msra.mxu0 0.0
    %4439 = vmatpush.msra.mxu0 0.0
    %4440 = vmatpush.msra.mxu0 0.0
    %4441 = vmatpush.msra.mxu0 %v4283
    %4442 = vmatmul.f32.gmra.mxu0 %v4424
    %v4443 = vpop.f32.mrf.mxu0
    %v4444 = vadd.f32 0.0, %v4443
    %4445 = vdwg.mxu0
    %v4447 = vsel %vm718, %v4444, 0
    %4449 = vmatpush.msra.mxu0 0.0
    %4450 = vmatpush.msra.mxu0 0.0
    %4451 = vmatpush.msra.mxu0 0.0
    %4452 = vmatpush.msra.mxu0 0.0
    %4453 = vmatpush.msra.mxu0 0.0
    %4454 = vmatpush.msra.mxu0 0.0
    %4455 = vmatpush.msra.mxu0 0.0
    %4456 = vmatpush.msra.mxu0 0.0
    %4457 = vmatpush.msra.mxu0 0.0
    %4458 = vmatpush.msra.mxu0 0.0
    %4459 = vmatpush.msra.mxu0 0.0
    %4460 = vmatpush.msra.mxu0 0.0
    %4461 = vmatpush.msra.mxu0 0.0
    %4462 = vmatpush.msra.mxu0 0.0
    %4463 = vmatpush.msra.mxu0 %v2691
    %4464 = vmatpush.msra.mxu0 %v2690
    %4465 = vmatmul.f32.gmra.mxu0 %v4447
    %v4466 = vpop.f32.mrf.mxu0
    %v4467 = vadd.f32 0.0, %v4466
    %4468 = vdwg.mxu0
    %v4469 = vadd.f32 %v4422, %v4467
    %v4471 = vsel %vm657, %v4278, 0
    %4473 = vmatpush.msra.mxu0 0.0
    %4474 = vmatpush.msra.mxu0 0.0
    %4475 = vmatpush.msra.mxu0 0.0
    %4476 = vmatpush.msra.mxu0 0.0
    %4477 = vmatpush.msra.mxu0 0.0
    %4478 = vmatpush.msra.mxu0 0.0
    %4479 = vmatpush.msra.mxu0 0.0
    %4480 = vmatpush.msra.mxu0 0.0
    %4481 = vmatpush.msra.mxu0 0.0
    %4482 = vmatpush.msra.mxu0 0.0
    %4483 = vmatpush.msra.mxu0 0.0
    %4484 = vmatpush.msra.mxu0 0.0
    %4485 = vmatpush.msra.mxu0 0.0
    %4486 = vmatpush.msra.mxu0 0.0
    %4487 = vmatpush.msra.mxu0 0.0
    %4488 = vmatpush.msra.mxu0 %v4283
    %4489 = vmatmul.f32.gmra.mxu0 %v4471
    %v4490 = vpop.f32.mrf.mxu0
    %v4491 = vadd.f32 0.0, %v4490
    %4492 = vdwg.mxu0
    %v4494 = vsel %vm718, %v4491, 0
    %4496 = vmatpush.msra.mxu0 0.0
    %4497 = vmatpush.msra.mxu0 0.0
    %4498 = vmatpush.msra.mxu0 0.0
    %4499 = vmatpush.msra.mxu0 0.0
    %4500 = vmatpush.msra.mxu0 0.0
    %4501 = vmatpush.msra.mxu0 0.0
    %4502 = vmatpush.msra.mxu0 0.0
    %4503 = vmatpush.msra.mxu0 0.0
    %4504 = vmatpush.msra.mxu0 0.0
    %4505 = vmatpush.msra.mxu0 0.0
    %4506 = vmatpush.msra.mxu0 0.0
    %4507 = vmatpush.msra.mxu0 0.0
    %4508 = vmatpush.msra.mxu0 0.0
    %4509 = vmatpush.msra.mxu0 0.0
    %4510 = vmatpush.msra.mxu0 %v2741
    %4511 = vmatpush.msra.mxu0 %v2740
    %4512 = vmatmul.f32.gmra.mxu0 %v4494
    %v4513 = vpop.f32.mrf.mxu0
    %v4514 = vadd.f32 0.0, %v4513
    %4515 = vdwg.mxu0
    %v4516 = vadd.f32 %v4469, %v4514
    %4518 = vset.pattern.permute.xlu0 0
    %4519 = vperm.xlu0 %4518, %v4280
    %v4520 = vpop.permute.xlu0 %4519
    %v4522 = vmul.f32 %v4516, %v4520
    %4524 = vset.pattern.permute.xlu0 0
    %4525 = vperm.xlu0 %4524, %v4282
    %v4526 = vpop.permute.xlu0 %4525
    %v4528 = vadd.f32 %v4522, %v4526
    %v4529 = vadd.f32 %v4528, %v4268
    %v4530 = vld [vmem:[#allocation27] sm:$0xff]
    %v4531 = vld [vmem:[#allocation27 + $0x8] sm:$0xff]
    %v4533 = vsel %vm718, %v4529, 0
    %4535 = vmatpush.msra.mxu0 0.0
    %4536 = vmatpush.msra.mxu0 0.0
    %4537 = vmatpush.msra.mxu0 0.0
    %4538 = vmatpush.msra.mxu0 0.0
    %4539 = vmatpush.msra.mxu0 0.0
    %4540 = vmatpush.msra.mxu0 0.0
    %4541 = vmatpush.msra.mxu0 0.0
    %4542 = vmatpush.msra.mxu0 0.0
    %4543 = vmatpush.msra.mxu0 0.0
    %4544 = vmatpush.msra.mxu0 0.0
    %4545 = vmatpush.msra.mxu0 0.0
    %4546 = vmatpush.msra.mxu0 0.0
    %4547 = vmatpush.msra.mxu0 0.0
    %4548 = vmatpush.msra.mxu0 0.0
    %4549 = vmatpush.msra.mxu0 %v4531
    %4550 = vmatpush.msra.mxu0 %v4530
    %4551 = vmatmul.f32.gmra.mxu0 %v4533
    %v4552 = vpop.f32.mrf.mxu0
    %v4553 = vadd.f32 0.0, %v4552
    %4554 = vdwg.mxu0
    %s4555 = scalar_lea.vmem [#allocation6], 160
    %v4556 = vld [vmem:[%s4555] sm:$0xff]
    %s4557 = scalar_lea.vmem [#allocation6], 168
    %v4558 = vld [vmem:[%s4557] sm:$0xff]
    %s4559 = scalar_lea.vmem [#allocation6], 176
    %v4560 = vld [vmem:[%s4559] sm:$0xff]
    %s4561 = scalar_lea.vmem [#allocation6], 184
    %v4562 = vld [vmem:[%s4561] sm:$0xff]
    %s4563 = scalar_lea.vmem [#allocation6], 192
    %v4564 = vld [vmem:[%s4563] sm:$0xff]
    %s4565 = scalar_lea.vmem [#allocation2], 32
    %v4566 = vld [vmem:[%s4565] sm:$0xff]
    %s4567 = scalar_lea.vmem [#allocation4], 32
    %v4568 = vld [vmem:[%s4567] sm:$0xff]
    %v4569 = vmax.f32 %v4553, 0.0
    %v4571 = vsel %vm657, %v4556, 0
    %4573 = vmatpush.msra.mxu0 0.0
    %4574 = vmatpush.msra.mxu0 0.0
    %4575 = vmatpush.msra.mxu0 0.0
    %4576 = vmatpush.msra.mxu0 0.0
    %4577 = vmatpush.msra.mxu0 0.0
    %4578 = vmatpush.msra.mxu0 0.0
    %4579 = vmatpush.msra.mxu0 0.0
    %4580 = vmatpush.msra.mxu0 0.0
    %4581 = vmatpush.msra.mxu0 0.0
    %4582 = vmatpush.msra.mxu0 0.0
    %4583 = vmatpush.msra.mxu0 0.0
    %4584 = vmatpush.msra.mxu0 0.0
    %4585 = vmatpush.msra.mxu0 0.0
    %4586 = vmatpush.msra.mxu0 0.0
    %4587 = vmatpush.msra.mxu0 0.0
    %4588 = vmatpush.msra.mxu0 %v4569
    %4589 = vmatmul.f32.gmra.mxu0 %v4571
    %v4590 = vpop.f32.mrf.mxu0
    %v4591 = vadd.f32 0.0, %v4590
    %4592 = vdwg.mxu0
    %v4594 = vsel %vm657, %v4558, 0
    %4596 = vmatpush.msra.mxu0 0.0
    %4597 = vmatpush.msra.mxu0 0.0
    %4598 = vmatpush.msra.mxu0 0.0
    %4599 = vmatpush.msra.mxu0 0.0
    %4600 = vmatpush.msra.mxu0 0.0
    %4601 = vmatpush.msra.mxu0 0.0
    %4602 = vmatpush.msra.mxu0 0.0
    %4603 = vmatpush.msra.mxu0 0.0
    %4604 = vmatpush.msra.mxu0 0.0
    %4605 = vmatpush.msra.mxu0 0.0
    %4606 = vmatpush.msra.mxu0 0.0
    %4607 = vmatpush.msra.mxu0 0.0
    %4608 = vmatpush.msra.mxu0 0.0
    %4609 = vmatpush.msra.mxu0 0.0
    %4610 = vmatpush.msra.mxu0 0.0
    %4611 = vmatpush.msra.mxu0 %v4569
    %4612 = vmatmul.f32.gmra.mxu0 %v4594
    %v4613 = vpop.f32.mrf.mxu0
    %v4614 = vadd.f32 0.0, %v4613
    %4615 = vdwg.mxu0
    %v4617 = vsel %vm2030, %v4614, 0
    %4619 = vmatpush.msra.mxu0 0.0
    %4620 = vmatpush.msra.mxu0 0.0
    %4621 = vmatpush.msra.mxu0 0.0
    %4622 = vmatpush.msra.mxu0 0.0
    %4623 = vmatpush.msra.mxu0 0.0
    %4624 = vmatpush.msra.mxu0 0.0
    %4625 = vmatpush.msra.mxu0 0.0
    %4626 = vmatpush.msra.mxu0 0.0
    %4627 = vmatpush.msra.mxu0 0.0
    %4628 = vmatpush.msra.mxu0 0.0
    %4629 = vmatpush.msra.mxu0 0.0
    %4630 = vmatpush.msra.mxu0 0.0
    %4631 = vmatpush.msra.mxu0 %v2029
    %4632 = vmatpush.msra.mxu0 %v2028
    %4633 = vmatpush.msra.mxu0 %v2027
    %4634 = vmatpush.msra.mxu0 %v2026
    %4635 = vmatmul.f32.gmra.mxu0 %v4617
    %v4636 = vpop.f32.mrf.mxu0
    %v4637 = vadd.f32 0.0, %v4636
    %4638 = vdwg.mxu0
    %v4640 = vsel %vm2030, %v4591, 0
    %4642 = vmatpush.msra.mxu0 0.0
    %4643 = vmatpush.msra.mxu0 0.0
    %4644 = vmatpush.msra.mxu0 0.0
    %4645 = vmatpush.msra.mxu0 0.0
    %4646 = vmatpush.msra.mxu0 0.0
    %4647 = vmatpush.msra.mxu0 0.0
    %4648 = vmatpush.msra.mxu0 0.0
    %4649 = vmatpush.msra.mxu0 0.0
    %4650 = vmatpush.msra.mxu0 0.0
    %4651 = vmatpush.msra.mxu0 0.0
    %4652 = vmatpush.msra.mxu0 0.0
    %4653 = vmatpush.msra.mxu0 0.0
    %4654 = vmatpush.msra.mxu0 %v2018
    %4655 = vmatpush.msra.mxu0 %v2017
    %4656 = vmatpush.msra.mxu0 %v2016
    %4657 = vmatpush.msra.mxu0 %v2015
    %4658 = vmatmul.f32.gmra.mxu0 %v4640
    %v4659 = vpop.f32.mrf.mxu0
    %v4660 = vadd.f32 %v4637, %v4659
    %4661 = vdwg.mxu0
    %v4663 = vsel %vm657, %v4560, 0
    %4665 = vmatpush.msra.mxu0 0.0
    %4666 = vmatpush.msra.mxu0 0.0
    %4667 = vmatpush.msra.mxu0 0.0
    %4668 = vmatpush.msra.mxu0 0.0
    %4669 = vmatpush.msra.mxu0 0.0
    %4670 = vmatpush.msra.mxu0 0.0
    %4671 = vmatpush.msra.mxu0 0.0
    %4672 = vmatpush.msra.mxu0 0.0
    %4673 = vmatpush.msra.mxu0 0.0
    %4674 = vmatpush.msra.mxu0 0.0
    %4675 = vmatpush.msra.mxu0 0.0
    %4676 = vmatpush.msra.mxu0 0.0
    %4677 = vmatpush.msra.mxu0 0.0
    %4678 = vmatpush.msra.mxu0 0.0
    %4679 = vmatpush.msra.mxu0 0.0
    %4680 = vmatpush.msra.mxu0 %v4569
    %4681 = vmatmul.f32.gmra.mxu0 %v4663
    %v4682 = vpop.f32.mrf.mxu0
    %v4683 = vadd.f32 0.0, %v4682
    %4684 = vdwg.mxu0
    %v4686 = vsel %vm2030, %v4683, 0
    %4688 = vmatpush.msra.mxu0 0.0
    %4689 = vmatpush.msra.mxu0 0.0
    %4690 = vmatpush.msra.mxu0 0.0
    %4691 = vmatpush.msra.mxu0 0.0
    %4692 = vmatpush.msra.mxu0 0.0
    %4693 = vmatpush.msra.mxu0 0.0
    %4694 = vmatpush.msra.mxu0 0.0
    %4695 = vmatpush.msra.mxu0 0.0
    %4696 = vmatpush.msra.mxu0 0.0
    %4697 = vmatpush.msra.mxu0 0.0
    %4698 = vmatpush.msra.mxu0 0.0
    %4699 = vmatpush.msra.mxu0 0.0
    %4700 = vmatpush.msra.mxu0 %v2087
    %4701 = vmatpush.msra.mxu0 %v2086
    %4702 = vmatpush.msra.mxu0 %v2085
    %4703 = vmatpush.msra.mxu0 %v2084
    %4704 = vmatmul.f32.gmra.mxu0 %v4686
    %v4705 = vpop.f32.mrf.mxu0
    %v4706 = vadd.f32 0.0, %v4705
    %4707 = vdwg.mxu0
    %v4708 = vadd.f32 %v4660, %v4706
    %v4710 = vsel %vm657, %v4562, 0
    %4712 = vmatpush.msra.mxu0 0.0
    %4713 = vmatpush.msra.mxu0 0.0
    %4714 = vmatpush.msra.mxu0 0.0
    %4715 = vmatpush.msra.mxu0 0.0
    %4716 = vmatpush.msra.mxu0 0.0
    %4717 = vmatpush.msra.mxu0 0.0
    %4718 = vmatpush.msra.mxu0 0.0
    %4719 = vmatpush.msra.mxu0 0.0
    %4720 = vmatpush.msra.mxu0 0.0
    %4721 = vmatpush.msra.mxu0 0.0
    %4722 = vmatpush.msra.mxu0 0.0
    %4723 = vmatpush.msra.mxu0 0.0
    %4724 = vmatpush.msra.mxu0 0.0
    %4725 = vmatpush.msra.mxu0 0.0
    %4726 = vmatpush.msra.mxu0 0.0
    %4727 = vmatpush.msra.mxu0 %v4569
    %4728 = vmatmul.f32.gmra.mxu0 %v4710
    %v4729 = vpop.f32.mrf.mxu0
    %v4730 = vadd.f32 0.0, %v4729
    %4731 = vdwg.mxu0
    %v4733 = vsel %vm2030, %v4730, 0
    %4735 = vmatpush.msra.mxu0 0.0
    %4736 = vmatpush.msra.mxu0 0.0
    %4737 = vmatpush.msra.mxu0 0.0
    %4738 = vmatpush.msra.mxu0 0.0
    %4739 = vmatpush.msra.mxu0 0.0
    %4740 = vmatpush.msra.mxu0 0.0
    %4741 = vmatpush.msra.mxu0 0.0
    %4742 = vmatpush.msra.mxu0 0.0
    %4743 = vmatpush.msra.mxu0 0.0
    %4744 = vmatpush.msra.mxu0 0.0
    %4745 = vmatpush.msra.mxu0 0.0
    %4746 = vmatpush.msra.mxu0 0.0
    %4747 = vmatpush.msra.mxu0 %v2122
    %4748 = vmatpush.msra.mxu0 %v2121
    %4749 = vmatpush.msra.mxu0 %v2120
    %4750 = vmatpush.msra.mxu0 %v2119
    %4751 = vmatmul.f32.gmra.mxu0 %v4733
    %v4752 = vpop.f32.mrf.mxu0
    %v4753 = vadd.f32 0.0, %v4752
    %4754 = vdwg.mxu0
    %v4755 = vadd.f32 %v4708, %v4753
    %v4757 = vsel %vm657, %v4564, 0
    %4759 = vmatpush.msra.mxu0 0.0
    %4760 = vmatpush.msra.mxu0 0.0
    %4761 = vmatpush.msra.mxu0 0.0
    %4762 = vmatpush.msra.mxu0 0.0
    %4763 = vmatpush.msra.mxu0 0.0
    %4764 = vmatpush.msra.mxu0 0.0
    %4765 = vmatpush.msra.mxu0 0.0
    %4766 = vmatpush.msra.mxu0 0.0
    %4767 = vmatpush.msra.mxu0 0.0
    %4768 = vmatpush.msra.mxu0 0.0
    %4769 = vmatpush.msra.mxu0 0.0
    %4770 = vmatpush.msra.mxu0 0.0
    %4771 = vmatpush.msra.mxu0 0.0
    %4772 = vmatpush.msra.mxu0 0.0
    %4773 = vmatpush.msra.mxu0 0.0
    %4774 = vmatpush.msra.mxu0 %v4569
    %4775 = vmatmul.f32.gmra.mxu0 %v4757
    %v4776 = vpop.f32.mrf.mxu0
    %v4777 = vadd.f32 0.0, %v4776
    %4778 = vdwg.mxu0
    %v4780 = vsel %vm2030, %v4777, 0
    %4782 = vmatpush.msra.mxu0 0.0
    %4783 = vmatpush.msra.mxu0 0.0
    %4784 = vmatpush.msra.mxu0 0.0
    %4785 = vmatpush.msra.mxu0 0.0
    %4786 = vmatpush.msra.mxu0 0.0
    %4787 = vmatpush.msra.mxu0 0.0
    %4788 = vmatpush.msra.mxu0 0.0
    %4789 = vmatpush.msra.mxu0 0.0
    %4790 = vmatpush.msra.mxu0 0.0
    %4791 = vmatpush.msra.mxu0 0.0
    %4792 = vmatpush.msra.mxu0 0.0
    %4793 = vmatpush.msra.mxu0 0.0
    %4794 = vmatpush.msra.mxu0 %v2157
    %4795 = vmatpush.msra.mxu0 %v2156
    %4796 = vmatpush.msra.mxu0 %v2155
    %4797 = vmatpush.msra.mxu0 %v2154
    %4798 = vmatmul.f32.gmra.mxu0 %v4780
    %v4799 = vpop.f32.mrf.mxu0
    %v4800 = vadd.f32 0.0, %v4799
    %4801 = vdwg.mxu0
    %v4802 = vadd.f32 %v4755, %v4800
    %4804 = vset.pattern.permute.xlu0 0
    %4805 = vperm.xlu0 %4804, %v4566
    %v4806 = vpop.permute.xlu0 %4805
    %v4808 = vmul.f32 %v4802, %v4806
    %4810 = vset.pattern.permute.xlu0 0
    %4811 = vperm.xlu0 %4810, %v4568
    %v4812 = vpop.permute.xlu0 %4811
    %v4814 = vadd.f32 %v4808, %v4812
    %s4815 = scalar_lea.vmem [#allocation6], 200
    %v4816 = vld [vmem:[%s4815] sm:$0xff]
    %s4817 = scalar_lea.vmem [#allocation6], 208
    %v4818 = vld [vmem:[%s4817] sm:$0xff]
    %s4819 = scalar_lea.vmem [#allocation6], 216
    %v4820 = vld [vmem:[%s4819] sm:$0xff]
    %s4821 = scalar_lea.vmem [#allocation6], 224
    %v4822 = vld [vmem:[%s4821] sm:$0xff]
    %s4823 = scalar_lea.vmem [#allocation6], 232
    %v4824 = vld [vmem:[%s4823] sm:$0xff]
    %s4825 = scalar_lea.vmem [#allocation2], 40
    %v4826 = vld [vmem:[%s4825] sm:$0xff]
    %s4827 = scalar_lea.vmem [#allocation4], 40
    %v4828 = vld [vmem:[%s4827] sm:$0xff]
    %v4829 = vmax.f32 %v4814, 0.0
    %v4831 = vsel %vm657, %v4816, 0
    %4833 = vmatpush.msra.mxu0 0.0
    %4834 = vmatpush.msra.mxu0 0.0
    %4835 = vmatpush.msra.mxu0 0.0
    %4836 = vmatpush.msra.mxu0 0.0
    %4837 = vmatpush.msra.mxu0 0.0
    %4838 = vmatpush.msra.mxu0 0.0
    %4839 = vmatpush.msra.mxu0 0.0
    %4840 = vmatpush.msra.mxu0 0.0
    %4841 = vmatpush.msra.mxu0 0.0
    %4842 = vmatpush.msra.mxu0 0.0
    %4843 = vmatpush.msra.mxu0 0.0
    %4844 = vmatpush.msra.mxu0 0.0
    %4845 = vmatpush.msra.mxu0 0.0
    %4846 = vmatpush.msra.mxu0 0.0
    %4847 = vmatpush.msra.mxu0 0.0
    %4848 = vmatpush.msra.mxu0 %v4829
    %4849 = vmatmul.f32.gmra.mxu0 %v4831
    %v4850 = vpop.f32.mrf.mxu0
    %v4851 = vadd.f32 0.0, %v4850
    %4852 = vdwg.mxu0
    %v4854 = vsel %vm657, %v4818, 0
    %4856 = vmatpush.msra.mxu0 0.0
    %4857 = vmatpush.msra.mxu0 0.0
    %4858 = vmatpush.msra.mxu0 0.0
    %4859 = vmatpush.msra.mxu0 0.0
    %4860 = vmatpush.msra.mxu0 0.0
    %4861 = vmatpush.msra.mxu0 0.0
    %4862 = vmatpush.msra.mxu0 0.0
    %4863 = vmatpush.msra.mxu0 0.0
    %4864 = vmatpush.msra.mxu0 0.0
    %4865 = vmatpush.msra.mxu0 0.0
    %4866 = vmatpush.msra.mxu0 0.0
    %4867 = vmatpush.msra.mxu0 0.0
    %4868 = vmatpush.msra.mxu0 0.0
    %4869 = vmatpush.msra.mxu0 0.0
    %4870 = vmatpush.msra.mxu0 0.0
    %4871 = vmatpush.msra.mxu0 %v4829
    %4872 = vmatmul.f32.gmra.mxu0 %v4854
    %v4873 = vpop.f32.mrf.mxu0
    %v4874 = vadd.f32 0.0, %v4873
    %4875 = vdwg.mxu0
    %v4877 = vsel %vm2030, %v4874, 0
    %4879 = vmatpush.msra.mxu0 0.0
    %4880 = vmatpush.msra.mxu0 0.0
    %4881 = vmatpush.msra.mxu0 0.0
    %4882 = vmatpush.msra.mxu0 0.0
    %4883 = vmatpush.msra.mxu0 0.0
    %4884 = vmatpush.msra.mxu0 0.0
    %4885 = vmatpush.msra.mxu0 0.0
    %4886 = vmatpush.msra.mxu0 0.0
    %4887 = vmatpush.msra.mxu0 0.0
    %4888 = vmatpush.msra.mxu0 0.0
    %4889 = vmatpush.msra.mxu0 0.0
    %4890 = vmatpush.msra.mxu0 0.0
    %4891 = vmatpush.msra.mxu0 %v2029
    %4892 = vmatpush.msra.mxu0 %v2028
    %4893 = vmatpush.msra.mxu0 %v2027
    %4894 = vmatpush.msra.mxu0 %v2026
    %4895 = vmatmul.f32.gmra.mxu0 %v4877
    %v4896 = vpop.f32.mrf.mxu0
    %v4897 = vadd.f32 0.0, %v4896
    %4898 = vdwg.mxu0
    %v4900 = vsel %vm2030, %v4851, 0
    %4902 = vmatpush.msra.mxu0 0.0
    %4903 = vmatpush.msra.mxu0 0.0
    %4904 = vmatpush.msra.mxu0 0.0
    %4905 = vmatpush.msra.mxu0 0.0
    %4906 = vmatpush.msra.mxu0 0.0
    %4907 = vmatpush.msra.mxu0 0.0
    %4908 = vmatpush.msra.mxu0 0.0
    %4909 = vmatpush.msra.mxu0 0.0
    %4910 = vmatpush.msra.mxu0 0.0
    %4911 = vmatpush.msra.mxu0 0.0
    %4912 = vmatpush.msra.mxu0 0.0
    %4913 = vmatpush.msra.mxu0 0.0
    %4914 = vmatpush.msra.mxu0 %v2018
    %4915 = vmatpush.msra.mxu0 %v2017
    %4916 = vmatpush.msra.mxu0 %v2016
    %4917 = vmatpush.msra.mxu0 %v2015
    %4918 = vmatmul.f32.gmra.mxu0 %v4900
    %v4919 = vpop.f32.mrf.mxu0
    %v4920 = vadd.f32 %v4897, %v4919
    %4921 = vdwg.mxu0
    %v4923 = vsel %vm657, %v4820, 0
    %4925 = vmatpush.msra.mxu0 0.0
    %4926 = vmatpush.msra.mxu0 0.0
    %4927 = vmatpush.msra.mxu0 0.0
    %4928 = vmatpush.msra.mxu0 0.0
    %4929 = vmatpush.msra.mxu0 0.0
    %4930 = vmatpush.msra.mxu0 0.0
    %4931 = vmatpush.msra.mxu0 0.0
    %4932 = vmatpush.msra.mxu0 0.0
    %4933 = vmatpush.msra.mxu0 0.0
    %4934 = vmatpush.msra.mxu0 0.0
    %4935 = vmatpush.msra.mxu0 0.0
    %4936 = vmatpush.msra.mxu0 0.0
    %4937 = vmatpush.msra.mxu0 0.0
    %4938 = vmatpush.msra.mxu0 0.0
    %4939 = vmatpush.msra.mxu0 0.0
    %4940 = vmatpush.msra.mxu0 %v4829
    %4941 = vmatmul.f32.gmra.mxu0 %v4923
    %v4942 = vpop.f32.mrf.mxu0
    %v4943 = vadd.f32 0.0, %v4942
    %4944 = vdwg.mxu0
    %v4946 = vsel %vm2030, %v4943, 0
    %4948 = vmatpush.msra.mxu0 0.0
    %4949 = vmatpush.msra.mxu0 0.0
    %4950 = vmatpush.msra.mxu0 0.0
    %4951 = vmatpush.msra.mxu0 0.0
    %4952 = vmatpush.msra.mxu0 0.0
    %4953 = vmatpush.msra.mxu0 0.0
    %4954 = vmatpush.msra.mxu0 0.0
    %4955 = vmatpush.msra.mxu0 0.0
    %4956 = vmatpush.msra.mxu0 0.0
    %4957 = vmatpush.msra.mxu0 0.0
    %4958 = vmatpush.msra.mxu0 0.0
    %4959 = vmatpush.msra.mxu0 0.0
    %4960 = vmatpush.msra.mxu0 %v2087
    %4961 = vmatpush.msra.mxu0 %v2086
    %4962 = vmatpush.msra.mxu0 %v2085
    %4963 = vmatpush.msra.mxu0 %v2084
    %4964 = vmatmul.f32.gmra.mxu0 %v4946
    %v4965 = vpop.f32.mrf.mxu0
    %v4966 = vadd.f32 0.0, %v4965
    %4967 = vdwg.mxu0
    %v4968 = vadd.f32 %v4920, %v4966
    %v4970 = vsel %vm657, %v4822, 0
    %4972 = vmatpush.msra.mxu0 0.0
    %4973 = vmatpush.msra.mxu0 0.0
    %4974 = vmatpush.msra.mxu0 0.0
    %4975 = vmatpush.msra.mxu0 0.0
    %4976 = vmatpush.msra.mxu0 0.0
    %4977 = vmatpush.msra.mxu0 0.0
    %4978 = vmatpush.msra.mxu0 0.0
    %4979 = vmatpush.msra.mxu0 0.0
    %4980 = vmatpush.msra.mxu0 0.0
    %4981 = vmatpush.msra.mxu0 0.0
    %4982 = vmatpush.msra.mxu0 0.0
    %4983 = vmatpush.msra.mxu0 0.0
    %4984 = vmatpush.msra.mxu0 0.0
    %4985 = vmatpush.msra.mxu0 0.0
    %4986 = vmatpush.msra.mxu0 0.0
    %4987 = vmatpush.msra.mxu0 %v4829
    %4988 = vmatmul.f32.gmra.mxu0 %v4970
    %v4989 = vpop.f32.mrf.mxu0
    %v4990 = vadd.f32 0.0, %v4989
    %4991 = vdwg.mxu0
    %v4993 = vsel %vm2030, %v4990, 0
    %4995 = vmatpush.msra.mxu0 0.0
    %4996 = vmatpush.msra.mxu0 0.0
    %4997 = vmatpush.msra.mxu0 0.0
    %4998 = vmatpush.msra.mxu0 0.0
    %4999 = vmatpush.msra.mxu0 0.0
    %5000 = vmatpush.msra.mxu0 0.0
    %5001 = vmatpush.msra.mxu0 0.0
    %5002 = vmatpush.msra.mxu0 0.0
    %5003 = vmatpush.msra.mxu0 0.0
    %5004 = vmatpush.msra.mxu0 0.0
    %5005 = vmatpush.msra.mxu0 0.0
    %5006 = vmatpush.msra.mxu0 0.0
    %5007 = vmatpush.msra.mxu0 %v2122
    %5008 = vmatpush.msra.mxu0 %v2121
    %5009 = vmatpush.msra.mxu0 %v2120
    %5010 = vmatpush.msra.mxu0 %v2119
    %5011 = vmatmul.f32.gmra.mxu0 %v4993
    %v5012 = vpop.f32.mrf.mxu0
    %v5013 = vadd.f32 0.0, %v5012
    %5014 = vdwg.mxu0
    %v5015 = vadd.f32 %v4968, %v5013
    %v5017 = vsel %vm657, %v4824, 0
    %5019 = vmatpush.msra.mxu0 0.0
    %5020 = vmatpush.msra.mxu0 0.0
    %5021 = vmatpush.msra.mxu0 0.0
    %5022 = vmatpush.msra.mxu0 0.0
    %5023 = vmatpush.msra.mxu0 0.0
    %5024 = vmatpush.msra.mxu0 0.0
    %5025 = vmatpush.msra.mxu0 0.0
    %5026 = vmatpush.msra.mxu0 0.0
    %5027 = vmatpush.msra.mxu0 0.0
    %5028 = vmatpush.msra.mxu0 0.0
    %5029 = vmatpush.msra.mxu0 0.0
    %5030 = vmatpush.msra.mxu0 0.0
    %5031 = vmatpush.msra.mxu0 0.0
    %5032 = vmatpush.msra.mxu0 0.0
    %5033 = vmatpush.msra.mxu0 0.0
    %5034 = vmatpush.msra.mxu0 %v4829
    %5035 = vmatmul.f32.gmra.mxu0 %v5017
    %v5036 = vpop.f32.mrf.mxu0
    %v5037 = vadd.f32 0.0, %v5036
    %5038 = vdwg.mxu0
    %v5040 = vsel %vm2030, %v5037, 0
    %5042 = vmatpush.msra.mxu0 0.0
    %5043 = vmatpush.msra.mxu0 0.0
    %5044 = vmatpush.msra.mxu0 0.0
    %5045 = vmatpush.msra.mxu0 0.0
    %5046 = vmatpush.msra.mxu0 0.0
    %5047 = vmatpush.msra.mxu0 0.0
    %5048 = vmatpush.msra.mxu0 0.0
    %5049 = vmatpush.msra.mxu0 0.0
    %5050 = vmatpush.msra.mxu0 0.0
    %5051 = vmatpush.msra.mxu0 0.0
    %5052 = vmatpush.msra.mxu0 0.0
    %5053 = vmatpush.msra.mxu0 0.0
    %5054 = vmatpush.msra.mxu0 %v2157
    %5055 = vmatpush.msra.mxu0 %v2156
    %5056 = vmatpush.msra.mxu0 %v2155
    %5057 = vmatpush.msra.mxu0 %v2154
    %5058 = vmatmul.f32.gmra.mxu0 %v5040
    %v5059 = vpop.f32.mrf.mxu0
    %v5060 = vadd.f32 0.0, %v5059
    %5061 = vdwg.mxu0
    %v5062 = vadd.f32 %v5015, %v5060
    %5064 = vset.pattern.permute.xlu0 0
    %5065 = vperm.xlu0 %5064, %v4826
    %v5066 = vpop.permute.xlu0 %5065
    %v5068 = vmul.f32 %v5062, %v5066
    %5070 = vset.pattern.permute.xlu0 0
    %5071 = vperm.xlu0 %5070, %v4828
    %v5072 = vpop.permute.xlu0 %5071
    %v5074 = vadd.f32 %v5068, %v5072
    %v5075 = vadd.f32 %v5074, %v4814
    %s5076 = scalar_lea.vmem [#allocation6], 240
    %v5077 = vld [vmem:[%s5076] sm:$0xff]
    %s5078 = scalar_lea.vmem [#allocation6], 248
    %v5079 = vld [vmem:[%s5078] sm:$0xff]
    %s5080 = scalar_lea.vmem [#allocation6], 256
    %v5081 = vld [vmem:[%s5080] sm:$0xff]
    %s5082 = scalar_lea.vmem [#allocation6], 264
    %v5083 = vld [vmem:[%s5082] sm:$0xff]
    %s5084 = scalar_lea.vmem [#allocation6], 272
    %v5085 = vld [vmem:[%s5084] sm:$0xff]
    %s5086 = scalar_lea.vmem [#allocation2], 48
    %v5087 = vld [vmem:[%s5086] sm:$0xff]
    %s5088 = scalar_lea.vmem [#allocation4], 48
    %v5089 = vld [vmem:[%s5088] sm:$0xff]
    %v5090 = vmax.f32 %v5075, 0.0
    %v5092 = vsel %vm657, %v5077, 0
    %5094 = vmatpush.msra.mxu0 0.0
    %5095 = vmatpush.msra.mxu0 0.0
    %5096 = vmatpush.msra.mxu0 0.0
    %5097 = vmatpush.msra.mxu0 0.0
    %5098 = vmatpush.msra.mxu0 0.0
    %5099 = vmatpush.msra.mxu0 0.0
    %5100 = vmatpush.msra.mxu0 0.0
    %5101 = vmatpush.msra.mxu0 0.0
    %5102 = vmatpush.msra.mxu0 0.0
    %5103 = vmatpush.msra.mxu0 0.0
    %5104 = vmatpush.msra.mxu0 0.0
    %5105 = vmatpush.msra.mxu0 0.0
    %5106 = vmatpush.msra.mxu0 0.0
    %5107 = vmatpush.msra.mxu0 0.0
    %5108 = vmatpush.msra.mxu0 0.0
    %5109 = vmatpush.msra.mxu0 %v5090
    %5110 = vmatmul.f32.gmra.mxu0 %v5092
    %v5111 = vpop.f32.mrf.mxu0
    %v5112 = vadd.f32 0.0, %v5111
    %5113 = vdwg.mxu0
    %v5115 = vsel %vm657, %v5079, 0
    %5117 = vmatpush.msra.mxu0 0.0
    %5118 = vmatpush.msra.mxu0 0.0
    %5119 = vmatpush.msra.mxu0 0.0
    %5120 = vmatpush.msra.mxu0 0.0
    %5121 = vmatpush.msra.mxu0 0.0
    %5122 = vmatpush.msra.mxu0 0.0
    %5123 = vmatpush.msra.mxu0 0.0
    %5124 = vmatpush.msra.mxu0 0.0
    %5125 = vmatpush.msra.mxu0 0.0
    %5126 = vmatpush.msra.mxu0 0.0
    %5127 = vmatpush.msra.mxu0 0.0
    %5128 = vmatpush.msra.mxu0 0.0
    %5129 = vmatpush.msra.mxu0 0.0
    %5130 = vmatpush.msra.mxu0 0.0
    %5131 = vmatpush.msra.mxu0 0.0
    %5132 = vmatpush.msra.mxu0 %v5090
    %5133 = vmatmul.f32.gmra.mxu0 %v5115
    %v5134 = vpop.f32.mrf.mxu0
    %v5135 = vadd.f32 0.0, %v5134
    %5136 = vdwg.mxu0
    %v5138 = vsel %vm2030, %v5135, 0
    %5140 = vmatpush.msra.mxu0 0.0
    %5141 = vmatpush.msra.mxu0 0.0
    %5142 = vmatpush.msra.mxu0 0.0
    %5143 = vmatpush.msra.mxu0 0.0
    %5144 = vmatpush.msra.mxu0 0.0
    %5145 = vmatpush.msra.mxu0 0.0
    %5146 = vmatpush.msra.mxu0 0.0
    %5147 = vmatpush.msra.mxu0 0.0
    %5148 = vmatpush.msra.mxu0 0.0
    %5149 = vmatpush.msra.mxu0 0.0
    %5150 = vmatpush.msra.mxu0 0.0
    %5151 = vmatpush.msra.mxu0 0.0
    %5152 = vmatpush.msra.mxu0 %v2029
    %5153 = vmatpush.msra.mxu0 %v2028
    %5154 = vmatpush.msra.mxu0 %v2027
    %5155 = vmatpush.msra.mxu0 %v2026
    %5156 = vmatmul.f32.gmra.mxu0 %v5138
    %v5157 = vpop.f32.mrf.mxu0
    %v5158 = vadd.f32 0.0, %v5157
    %5159 = vdwg.mxu0
    %v5161 = vsel %vm2030, %v5112, 0
    %5163 = vmatpush.msra.mxu0 0.0
    %5164 = vmatpush.msra.mxu0 0.0
    %5165 = vmatpush.msra.mxu0 0.0
    %5166 = vmatpush.msra.mxu0 0.0
    %5167 = vmatpush.msra.mxu0 0.0
    %5168 = vmatpush.msra.mxu0 0.0
    %5169 = vmatpush.msra.mxu0 0.0
    %5170 = vmatpush.msra.mxu0 0.0
    %5171 = vmatpush.msra.mxu0 0.0
    %5172 = vmatpush.msra.mxu0 0.0
    %5173 = vmatpush.msra.mxu0 0.0
    %5174 = vmatpush.msra.mxu0 0.0
    %5175 = vmatpush.msra.mxu0 %v2018
    %5176 = vmatpush.msra.mxu0 %v2017
    %5177 = vmatpush.msra.mxu0 %v2016
    %5178 = vmatpush.msra.mxu0 %v2015
    %5179 = vmatmul.f32.gmra.mxu0 %v5161
    %v5180 = vpop.f32.mrf.mxu0
    %v5181 = vadd.f32 %v5158, %v5180
    %5182 = vdwg.mxu0
    %v5184 = vsel %vm657, %v5081, 0
    %5186 = vmatpush.msra.mxu0 0.0
    %5187 = vmatpush.msra.mxu0 0.0
    %5188 = vmatpush.msra.mxu0 0.0
    %5189 = vmatpush.msra.mxu0 0.0
    %5190 = vmatpush.msra.mxu0 0.0
    %5191 = vmatpush.msra.mxu0 0.0
    %5192 = vmatpush.msra.mxu0 0.0
    %5193 = vmatpush.msra.mxu0 0.0
    %5194 = vmatpush.msra.mxu0 0.0
    %5195 = vmatpush.msra.mxu0 0.0
    %5196 = vmatpush.msra.mxu0 0.0
    %5197 = vmatpush.msra.mxu0 0.0
    %5198 = vmatpush.msra.mxu0 0.0
    %5199 = vmatpush.msra.mxu0 0.0
    %5200 = vmatpush.msra.mxu0 0.0
    %5201 = vmatpush.msra.mxu0 %v5090
    %5202 = vmatmul.f32.gmra.mxu0 %v5184
    %v5203 = vpop.f32.mrf.mxu0
    %v5204 = vadd.f32 0.0, %v5203
    %5205 = vdwg.mxu0
    %v5207 = vsel %vm2030, %v5204, 0
    %5209 = vmatpush.msra.mxu0 0.0
    %5210 = vmatpush.msra.mxu0 0.0
    %5211 = vmatpush.msra.mxu0 0.0
    %5212 = vmatpush.msra.mxu0 0.0
    %5213 = vmatpush.msra.mxu0 0.0
    %5214 = vmatpush.msra.mxu0 0.0
    %5215 = vmatpush.msra.mxu0 0.0
    %5216 = vmatpush.msra.mxu0 0.0
    %5217 = vmatpush.msra.mxu0 0.0
    %5218 = vmatpush.msra.mxu0 0.0
    %5219 = vmatpush.msra.mxu0 0.0
    %5220 = vmatpush.msra.mxu0 0.0
    %5221 = vmatpush.msra.mxu0 %v2087
    %5222 = vmatpush.msra.mxu0 %v2086
    %5223 = vmatpush.msra.mxu0 %v2085
    %5224 = vmatpush.msra.mxu0 %v2084
    %5225 = vmatmul.f32.gmra.mxu0 %v5207
    %v5226 = vpop.f32.mrf.mxu0
    %v5227 = vadd.f32 0.0, %v5226
    %5228 = vdwg.mxu0
    %v5229 = vadd.f32 %v5181, %v5227
    %v5231 = vsel %vm657, %v5083, 0
    %5233 = vmatpush.msra.mxu0 0.0
    %5234 = vmatpush.msra.mxu0 0.0
    %5235 = vmatpush.msra.mxu0 0.0
    %5236 = vmatpush.msra.mxu0 0.0
    %5237 = vmatpush.msra.mxu0 0.0
    %5238 = vmatpush.msra.mxu0 0.0
    %5239 = vmatpush.msra.mxu0 0.0
    %5240 = vmatpush.msra.mxu0 0.0
    %5241 = vmatpush.msra.mxu0 0.0
    %5242 = vmatpush.msra.mxu0 0.0
    %5243 = vmatpush.msra.mxu0 0.0
    %5244 = vmatpush.msra.mxu0 0.0
    %5245 = vmatpush.msra.mxu0 0.0
    %5246 = vmatpush.msra.mxu0 0.0
    %5247 = vmatpush.msra.mxu0 0.0
    %5248 = vmatpush.msra.mxu0 %v5090
    %5249 = vmatmul.f32.gmra.mxu0 %v5231
    %v5250 = vpop.f32.mrf.mxu0
    %v5251 = vadd.f32 0.0, %v5250
    %5252 = vdwg.mxu0
    %v5254 = vsel %vm2030, %v5251, 0
    %5256 = vmatpush.msra.mxu0 0.0
    %5257 = vmatpush.msra.mxu0 0.0
    %5258 = vmatpush.msra.mxu0 0.0
    %5259 = vmatpush.msra.mxu0 0.0
    %5260 = vmatpush.msra.mxu0 0.0
    %5261 = vmatpush.msra.mxu0 0.0
    %5262 = vmatpush.msra.mxu0 0.0
    %5263 = vmatpush.msra.mxu0 0.0
    %5264 = vmatpush.msra.mxu0 0.0
    %5265 = vmatpush.msra.mxu0 0.0
    %5266 = vmatpush.msra.mxu0 0.0
    %5267 = vmatpush.msra.mxu0 0.0
    %5268 = vmatpush.msra.mxu0 %v2122
    %5269 = vmatpush.msra.mxu0 %v2121
    %5270 = vmatpush.msra.mxu0 %v2120
    %5271 = vmatpush.msra.mxu0 %v2119
    %5272 = vmatmul.f32.gmra.mxu0 %v5254
    %v5273 = vpop.f32.mrf.mxu0
    %v5274 = vadd.f32 0.0, %v5273
    %5275 = vdwg.mxu0
    %v5276 = vadd.f32 %v5229, %v5274
    %v5278 = vsel %vm657, %v5085, 0
    %5280 = vmatpush.msra.mxu0 0.0
    %5281 = vmatpush.msra.mxu0 0.0
    %5282 = vmatpush.msra.mxu0 0.0
    %5283 = vmatpush.msra.mxu0 0.0
    %5284 = vmatpush.msra.mxu0 0.0
    %5285 = vmatpush.msra.mxu0 0.0
    %5286 = vmatpush.msra.mxu0 0.0
    %5287 = vmatpush.msra.mxu0 0.0
    %5288 = vmatpush.msra.mxu0 0.0
    %5289 = vmatpush.msra.mxu0 0.0
    %5290 = vmatpush.msra.mxu0 0.0
    %5291 = vmatpush.msra.mxu0 0.0
    %5292 = vmatpush.msra.mxu0 0.0
    %5293 = vmatpush.msra.mxu0 0.0
    %5294 = vmatpush.msra.mxu0 0.0
    %5295 = vmatpush.msra.mxu0 %v5090
    %5296 = vmatmul.f32.gmra.mxu0 %v5278
    %v5297 = vpop.f32.mrf.mxu0
    %v5298 = vadd.f32 0.0, %v5297
    %5299 = vdwg.mxu0
    %v5301 = vsel %vm2030, %v5298, 0
    %5303 = vmatpush.msra.mxu0 0.0
    %5304 = vmatpush.msra.mxu0 0.0
    %5305 = vmatpush.msra.mxu0 0.0
    %5306 = vmatpush.msra.mxu0 0.0
    %5307 = vmatpush.msra.mxu0 0.0
    %5308 = vmatpush.msra.mxu0 0.0
    %5309 = vmatpush.msra.mxu0 0.0
    %5310 = vmatpush.msra.mxu0 0.0
    %5311 = vmatpush.msra.mxu0 0.0
    %5312 = vmatpush.msra.mxu0 0.0
    %5313 = vmatpush.msra.mxu0 0.0
    %5314 = vmatpush.msra.mxu0 0.0
    %5315 = vmatpush.msra.mxu0 %v2157
    %5316 = vmatpush.msra.mxu0 %v2156
    %5317 = vmatpush.msra.mxu0 %v2155
    %5318 = vmatpush.msra.mxu0 %v2154
    %5319 = vmatmul.f32.gmra.mxu0 %v5301
    %v5320 = vpop.f32.mrf.mxu0
    %v5321 = vadd.f32 0.0, %v5320
    %5322 = vdwg.mxu0
    %v5323 = vadd.f32 %v5276, %v5321
    %5325 = vset.pattern.permute.xlu0 0
    %5326 = vperm.xlu0 %5325, %v5087
    %v5327 = vpop.permute.xlu0 %5326
    %v5329 = vmul.f32 %v5323, %v5327
    %5331 = vset.pattern.permute.xlu0 0
    %5332 = vperm.xlu0 %5331, %v5089
    %v5333 = vpop.permute.xlu0 %5332
    %v5335 = vadd.f32 %v5329, %v5333
    %s5336 = scalar_lea.vmem [#allocation6], 280
    %v5337 = vld [vmem:[%s5336] sm:$0xff]
    %s5338 = scalar_lea.vmem [#allocation6], 288
    %v5339 = vld [vmem:[%s5338] sm:$0xff]
    %s5340 = scalar_lea.vmem [#allocation6], 296
    %v5341 = vld [vmem:[%s5340] sm:$0xff]
    %s5342 = scalar_lea.vmem [#allocation6], 304
    %v5343 = vld [vmem:[%s5342] sm:$0xff]
    %s5344 = scalar_lea.vmem [#allocation6], 312
    %v5345 = vld [vmem:[%s5344] sm:$0xff]
    %s5346 = scalar_lea.vmem [#allocation2], 56
    %v5347 = vld [vmem:[%s5346] sm:$0xff]
    %s5348 = scalar_lea.vmem [#allocation4], 56
    %v5349 = vld [vmem:[%s5348] sm:$0xff]
    %v5350 = vmax.f32 %v5335, 0.0
    %v5352 = vsel %vm657, %v5337, 0
    %5354 = vmatpush.msra.mxu0 0.0
    %5355 = vmatpush.msra.mxu0 0.0
    %5356 = vmatpush.msra.mxu0 0.0
    %5357 = vmatpush.msra.mxu0 0.0
    %5358 = vmatpush.msra.mxu0 0.0
    %5359 = vmatpush.msra.mxu0 0.0
    %5360 = vmatpush.msra.mxu0 0.0
    %5361 = vmatpush.msra.mxu0 0.0
    %5362 = vmatpush.msra.mxu0 0.0
    %5363 = vmatpush.msra.mxu0 0.0
    %5364 = vmatpush.msra.mxu0 0.0
    %5365 = vmatpush.msra.mxu0 0.0
    %5366 = vmatpush.msra.mxu0 0.0
    %5367 = vmatpush.msra.mxu0 0.0
    %5368 = vmatpush.msra.mxu0 0.0
    %5369 = vmatpush.msra.mxu0 %v5350
    %5370 = vmatmul.f32.gmra.mxu0 %v5352
    %v5371 = vpop.f32.mrf.mxu0
    %v5372 = vadd.f32 0.0, %v5371
    %5373 = vdwg.mxu0
    %v5375 = vsel %vm657, %v5339, 0
    %5377 = vmatpush.msra.mxu0 0.0
    %5378 = vmatpush.msra.mxu0 0.0
    %5379 = vmatpush.msra.mxu0 0.0
    %5380 = vmatpush.msra.mxu0 0.0
    %5381 = vmatpush.msra.mxu0 0.0
    %5382 = vmatpush.msra.mxu0 0.0
    %5383 = vmatpush.msra.mxu0 0.0
    %5384 = vmatpush.msra.mxu0 0.0
    %5385 = vmatpush.msra.mxu0 0.0
    %5386 = vmatpush.msra.mxu0 0.0
    %5387 = vmatpush.msra.mxu0 0.0
    %5388 = vmatpush.msra.mxu0 0.0
    %5389 = vmatpush.msra.mxu0 0.0
    %5390 = vmatpush.msra.mxu0 0.0
    %5391 = vmatpush.msra.mxu0 0.0
    %5392 = vmatpush.msra.mxu0 %v5350
    %5393 = vmatmul.f32.gmra.mxu0 %v5375
    %v5394 = vpop.f32.mrf.mxu0
    %v5395 = vadd.f32 0.0, %v5394
    %5396 = vdwg.mxu0
    %v5398 = vsel %vm2030, %v5395, 0
    %5400 = vmatpush.msra.mxu0 0.0
    %5401 = vmatpush.msra.mxu0 0.0
    %5402 = vmatpush.msra.mxu0 0.0
    %5403 = vmatpush.msra.mxu0 0.0
    %5404 = vmatpush.msra.mxu0 0.0
    %5405 = vmatpush.msra.mxu0 0.0
    %5406 = vmatpush.msra.mxu0 0.0
    %5407 = vmatpush.msra.mxu0 0.0
    %5408 = vmatpush.msra.mxu0 0.0
    %5409 = vmatpush.msra.mxu0 0.0
    %5410 = vmatpush.msra.mxu0 0.0
    %5411 = vmatpush.msra.mxu0 0.0
    %5412 = vmatpush.msra.mxu0 %v2029
    %5413 = vmatpush.msra.mxu0 %v2028
    %5414 = vmatpush.msra.mxu0 %v2027
    %5415 = vmatpush.msra.mxu0 %v2026
    %5416 = vmatmul.f32.gmra.mxu0 %v5398
    %v5417 = vpop.f32.mrf.mxu0
    %v5418 = vadd.f32 0.0, %v5417
    %5419 = vdwg.mxu0
    %v5421 = vsel %vm2030, %v5372, 0
    %5423 = vmatpush.msra.mxu0 0.0
    %5424 = vmatpush.msra.mxu0 0.0
    %5425 = vmatpush.msra.mxu0 0.0
    %5426 = vmatpush.msra.mxu0 0.0
    %5427 = vmatpush.msra.mxu0 0.0
    %5428 = vmatpush.msra.mxu0 0.0
    %5429 = vmatpush.msra.mxu0 0.0
    %5430 = vmatpush.msra.mxu0 0.0
    %5431 = vmatpush.msra.mxu0 0.0
    %5432 = vmatpush.msra.mxu0 0.0
    %5433 = vmatpush.msra.mxu0 0.0
    %5434 = vmatpush.msra.mxu0 0.0
    %5435 = vmatpush.msra.mxu0 %v2018
    %5436 = vmatpush.msra.mxu0 %v2017
    %5437 = vmatpush.msra.mxu0 %v2016
    %5438 = vmatpush.msra.mxu0 %v2015
    %5439 = vmatmul.f32.gmra.mxu0 %v5421
    %v5440 = vpop.f32.mrf.mxu0
    %v5441 = vadd.f32 %v5418, %v5440
    %5442 = vdwg.mxu0
    %v5444 = vsel %vm657, %v5341, 0
    %5446 = vmatpush.msra.mxu0 0.0
    %5447 = vmatpush.msra.mxu0 0.0
    %5448 = vmatpush.msra.mxu0 0.0
    %5449 = vmatpush.msra.mxu0 0.0
    %5450 = vmatpush.msra.mxu0 0.0
    %5451 = vmatpush.msra.mxu0 0.0
    %5452 = vmatpush.msra.mxu0 0.0
    %5453 = vmatpush.msra.mxu0 0.0
    %5454 = vmatpush.msra.mxu0 0.0
    %5455 = vmatpush.msra.mxu0 0.0
    %5456 = vmatpush.msra.mxu0 0.0
    %5457 = vmatpush.msra.mxu0 0.0
    %5458 = vmatpush.msra.mxu0 0.0
    %5459 = vmatpush.msra.mxu0 0.0
    %5460 = vmatpush.msra.mxu0 0.0
    %5461 = vmatpush.msra.mxu0 %v5350
    %5462 = vmatmul.f32.gmra.mxu0 %v5444
    %v5463 = vpop.f32.mrf.mxu0
    %v5464 = vadd.f32 0.0, %v5463
    %5465 = vdwg.mxu0
    %v5467 = vsel %vm2030, %v5464, 0
    %5469 = vmatpush.msra.mxu0 0.0
    %5470 = vmatpush.msra.mxu0 0.0
    %5471 = vmatpush.msra.mxu0 0.0
    %5472 = vmatpush.msra.mxu0 0.0
    %5473 = vmatpush.msra.mxu0 0.0
    %5474 = vmatpush.msra.mxu0 0.0
    %5475 = vmatpush.msra.mxu0 0.0
    %5476 = vmatpush.msra.mxu0 0.0
    %5477 = vmatpush.msra.mxu0 0.0
    %5478 = vmatpush.msra.mxu0 0.0
    %5479 = vmatpush.msra.mxu0 0.0
    %5480 = vmatpush.msra.mxu0 0.0
    %5481 = vmatpush.msra.mxu0 %v2087
    %5482 = vmatpush.msra.mxu0 %v2086
    %5483 = vmatpush.msra.mxu0 %v2085
    %5484 = vmatpush.msra.mxu0 %v2084
    %5485 = vmatmul.f32.gmra.mxu0 %v5467
    %v5486 = vpop.f32.mrf.mxu0
    %v5487 = vadd.f32 0.0, %v5486
    %5488 = vdwg.mxu0
    %v5489 = vadd.f32 %v5441, %v5487
    %v5491 = vsel %vm657, %v5343, 0
    %5493 = vmatpush.msra.mxu0 0.0
    %5494 = vmatpush.msra.mxu0 0.0
    %5495 = vmatpush.msra.mxu0 0.0
    %5496 = vmatpush.msra.mxu0 0.0
    %5497 = vmatpush.msra.mxu0 0.0
    %5498 = vmatpush.msra.mxu0 0.0
    %5499 = vmatpush.msra.mxu0 0.0
    %5500 = vmatpush.msra.mxu0 0.0
    %5501 = vmatpush.msra.mxu0 0.0
    %5502 = vmatpush.msra.mxu0 0.0
    %5503 = vmatpush.msra.mxu0 0.0
    %5504 = vmatpush.msra.mxu0 0.0
    %5505 = vmatpush.msra.mxu0 0.0
    %5506 = vmatpush.msra.mxu0 0.0
    %5507 = vmatpush.msra.mxu0 0.0
    %5508 = vmatpush.msra.mxu0 %v5350
    %5509 = vmatmul.f32.gmra.mxu0 %v5491
    %v5510 = vpop.f32.mrf.mxu0
    %v5511 = vadd.f32 0.0, %v5510
    %5512 = vdwg.mxu0
    %v5514 = vsel %vm2030, %v5511, 0
    %5516 = vmatpush.msra.mxu0 0.0
    %5517 = vmatpush.msra.mxu0 0.0
    %5518 = vmatpush.msra.mxu0 0.0
    %5519 = vmatpush.msra.mxu0 0.0
    %5520 = vmatpush.msra.mxu0 0.0
    %5521 = vmatpush.msra.mxu0 0.0
    %5522 = vmatpush.msra.mxu0 0.0
    %5523 = vmatpush.msra.mxu0 0.0
    %5524 = vmatpush.msra.mxu0 0.0
    %5525 = vmatpush.msra.mxu0 0.0
    %5526 = vmatpush.msra.mxu0 0.0
    %5527 = vmatpush.msra.mxu0 0.0
    %5528 = vmatpush.msra.mxu0 %v2122
    %5529 = vmatpush.msra.mxu0 %v2121
    %5530 = vmatpush.msra.mxu0 %v2120
    %5531 = vmatpush.msra.mxu0 %v2119
    %5532 = vmatmul.f32.gmra.mxu0 %v5514
    %v5533 = vpop.f32.mrf.mxu0
    %v5534 = vadd.f32 0.0, %v5533
    %5535 = vdwg.mxu0
    %v5536 = vadd.f32 %v5489, %v5534
    %v5538 = vsel %vm657, %v5345, 0
    %5540 = vmatpush.msra.mxu0 0.0
    %5541 = vmatpush.msra.mxu0 0.0
    %5542 = vmatpush.msra.mxu0 0.0
    %5543 = vmatpush.msra.mxu0 0.0
    %5544 = vmatpush.msra.mxu0 0.0
    %5545 = vmatpush.msra.mxu0 0.0
    %5546 = vmatpush.msra.mxu0 0.0
    %5547 = vmatpush.msra.mxu0 0.0
    %5548 = vmatpush.msra.mxu0 0.0
    %5549 = vmatpush.msra.mxu0 0.0
    %5550 = vmatpush.msra.mxu0 0.0
    %5551 = vmatpush.msra.mxu0 0.0
    %5552 = vmatpush.msra.mxu0 0.0
    %5553 = vmatpush.msra.mxu0 0.0
    %5554 = vmatpush.msra.mxu0 0.0
    %5555 = vmatpush.msra.mxu0 %v5350
    %5556 = vmatmul.f32.gmra.mxu0 %v5538
    %v5557 = vpop.f32.mrf.mxu0
    %v5558 = vadd.f32 0.0, %v5557
    %5559 = vdwg.mxu0
    %v5561 = vsel %vm2030, %v5558, 0
    %5563 = vmatpush.msra.mxu0 0.0
    %5564 = vmatpush.msra.mxu0 0.0
    %5565 = vmatpush.msra.mxu0 0.0
    %5566 = vmatpush.msra.mxu0 0.0
    %5567 = vmatpush.msra.mxu0 0.0
    %5568 = vmatpush.msra.mxu0 0.0
    %5569 = vmatpush.msra.mxu0 0.0
    %5570 = vmatpush.msra.mxu0 0.0
    %5571 = vmatpush.msra.mxu0 0.0
    %5572 = vmatpush.msra.mxu0 0.0
    %5573 = vmatpush.msra.mxu0 0.0
    %5574 = vmatpush.msra.mxu0 0.0
    %5575 = vmatpush.msra.mxu0 %v2157
    %5576 = vmatpush.msra.mxu0 %v2156
    %5577 = vmatpush.msra.mxu0 %v2155
    %5578 = vmatpush.msra.mxu0 %v2154
    %5579 = vmatmul.f32.gmra.mxu0 %v5561
    %v5580 = vpop.f32.mrf.mxu0
    %v5581 = vadd.f32 0.0, %v5580
    %5582 = vdwg.mxu0
    %v5583 = vadd.f32 %v5536, %v5581
    %5585 = vset.pattern.permute.xlu0 0
    %5586 = vperm.xlu0 %5585, %v5347
    %v5587 = vpop.permute.xlu0 %5586
    %v5589 = vmul.f32 %v5583, %v5587
    %5591 = vset.pattern.permute.xlu0 0
    %5592 = vperm.xlu0 %5591, %v5349
    %v5593 = vpop.permute.xlu0 %5592
    %v5595 = vadd.f32 %v5589, %v5593
    %v5596 = vadd.f32 %v5595, %v5335
    %v5597 = vld [vmem:[#allocation48] sm:$0x7]
    %s5598 = scalar_lea.vmem [#allocation48], 4
    %v5599 = vld [vmem:[%s5598] sm:$0x7]
    %s5600 = scalar_lea.vmem [#allocation48], 8
    %v5601 = vld [vmem:[%s5600] sm:$0x7]
    %s5602 = scalar_lea.vmem [#allocation48], 12
    %v5603 = vld [vmem:[%s5602] sm:$0x7]
    %s5604 = scalar_lea.vmem [#allocation48], 16
    %v5605 = vld [vmem:[%s5604] sm:$0x7]
    %v5606 = vld [vmem:[%s65] sm:$0x7]
    %v5607 = vld [vmem:[#allocation46] sm:$0x7]
    %v5608 = vmax.f32 %v5596, 0.0
    %v5610 = vsel %vm657, %v5597, 0
    %5612 = vmatpush.msra.mxu0 0.0
    %5613 = vmatpush.msra.mxu0 0.0
    %5614 = vmatpush.msra.mxu0 0.0
    %5615 = vmatpush.msra.mxu0 0.0
    %5616 = vmatpush.msra.mxu0 0.0
    %5617 = vmatpush.msra.mxu0 0.0
    %5618 = vmatpush.msra.mxu0 0.0
    %5619 = vmatpush.msra.mxu0 0.0
    %5620 = vmatpush.msra.mxu0 0.0
    %5621 = vmatpush.msra.mxu0 0.0
    %5622 = vmatpush.msra.mxu0 0.0
    %5623 = vmatpush.msra.mxu0 0.0
    %5624 = vmatpush.msra.mxu0 0.0
    %5625 = vmatpush.msra.mxu0 0.0
    %5626 = vmatpush.msra.mxu0 0.0
    %5627 = vmatpush.msra.mxu0 %v5608
    %5628 = vmatmul.f32.gmra.mxu0 %v5610
    %v5629 = vpop.f32.mrf.mxu0
    %v5630 = vadd.f32 0.0, %v5629
    %5631 = vdwg.mxu0
    %v5633 = vsel %vm657, %v5599, 0
    %5635 = vmatpush.msra.mxu0 0.0
    %5636 = vmatpush.msra.mxu0 0.0
    %5637 = vmatpush.msra.mxu0 0.0
    %5638 = vmatpush.msra.mxu0 0.0
    %5639 = vmatpush.msra.mxu0 0.0
    %5640 = vmatpush.msra.mxu0 0.0
    %5641 = vmatpush.msra.mxu0 0.0
    %5642 = vmatpush.msra.mxu0 0.0
    %5643 = vmatpush.msra.mxu0 0.0
    %5644 = vmatpush.msra.mxu0 0.0
    %5645 = vmatpush.msra.mxu0 0.0
    %5646 = vmatpush.msra.mxu0 0.0
    %5647 = vmatpush.msra.mxu0 0.0
    %5648 = vmatpush.msra.mxu0 0.0
    %5649 = vmatpush.msra.mxu0 0.0
    %5650 = vmatpush.msra.mxu0 %v5608
    %5651 = vmatmul.f32.gmra.mxu0 %v5633
    %v5652 = vpop.f32.mrf.mxu0
    %v5653 = vadd.f32 0.0, %v5652
    %5654 = vdwg.mxu0
    %v5656 = vsel %vm2030, %v5653, 0
    %5658 = vmatpush.msra.mxu0 0.0
    %5659 = vmatpush.msra.mxu0 0.0
    %5660 = vmatpush.msra.mxu0 0.0
    %5661 = vmatpush.msra.mxu0 0.0
    %5662 = vmatpush.msra.mxu0 0.0
    %5663 = vmatpush.msra.mxu0 0.0
    %5664 = vmatpush.msra.mxu0 0.0
    %5665 = vmatpush.msra.mxu0 0.0
    %5666 = vmatpush.msra.mxu0 0.0
    %5667 = vmatpush.msra.mxu0 0.0
    %5668 = vmatpush.msra.mxu0 0.0
    %5669 = vmatpush.msra.mxu0 0.0
    %5670 = vmatpush.msra.mxu0 %v2029
    %5671 = vmatpush.msra.mxu0 %v2028
    %5672 = vmatpush.msra.mxu0 %v2027
    %5673 = vmatpush.msra.mxu0 %v2026
    %5674 = vmatmul.f32.gmra.mxu0 %v5656
    %v5675 = vpop.f32.mrf.mxu0
    %v5676 = vadd.f32 0.0, %v5675
    %5677 = vdwg.mxu0
    %v5679 = vsel %vm2030, %v5630, 0
    %5681 = vmatpush.msra.mxu0 0.0
    %5682 = vmatpush.msra.mxu0 0.0
    %5683 = vmatpush.msra.mxu0 0.0
    %5684 = vmatpush.msra.mxu0 0.0
    %5685 = vmatpush.msra.mxu0 0.0
    %5686 = vmatpush.msra.mxu0 0.0
    %5687 = vmatpush.msra.mxu0 0.0
    %5688 = vmatpush.msra.mxu0 0.0
    %5689 = vmatpush.msra.mxu0 0.0
    %5690 = vmatpush.msra.mxu0 0.0
    %5691 = vmatpush.msra.mxu0 0.0
    %5692 = vmatpush.msra.mxu0 0.0
    %5693 = vmatpush.msra.mxu0 %v2018
    %5694 = vmatpush.msra.mxu0 %v2017
    %5695 = vmatpush.msra.mxu0 %v2016
    %5696 = vmatpush.msra.mxu0 %v2015
    %5697 = vmatmul.f32.gmra.mxu0 %v5679
    %v5698 = vpop.f32.mrf.mxu0
    %v5699 = vadd.f32 %v5676, %v5698
    %5700 = vdwg.mxu0
    %v5702 = vsel %vm657, %v5601, 0
    %5704 = vmatpush.msra.mxu0 0.0
    %5705 = vmatpush.msra.mxu0 0.0
    %5706 = vmatpush.msra.mxu0 0.0
    %5707 = vmatpush.msra.mxu0 0.0
    %5708 = vmatpush.msra.mxu0 0.0
    %5709 = vmatpush.msra.mxu0 0.0
    %5710 = vmatpush.msra.mxu0 0.0
    %5711 = vmatpush.msra.mxu0 0.0
    %5712 = vmatpush.msra.mxu0 0.0
    %5713 = vmatpush.msra.mxu0 0.0
    %5714 = vmatpush.msra.mxu0 0.0
    %5715 = vmatpush.msra.mxu0 0.0
    %5716 = vmatpush.msra.mxu0 0.0
    %5717 = vmatpush.msra.mxu0 0.0
    %5718 = vmatpush.msra.mxu0 0.0
    %5719 = vmatpush.msra.mxu0 %v5608
    %5720 = vmatmul.f32.gmra.mxu0 %v5702
    %v5721 = vpop.f32.mrf.mxu0
    %v5722 = vadd.f32 0.0, %v5721
    %5723 = vdwg.mxu0
    %v5725 = vsel %vm2030, %v5722, 0
    %5727 = vmatpush.msra.mxu0 0.0
    %5728 = vmatpush.msra.mxu0 0.0
    %5729 = vmatpush.msra.mxu0 0.0
    %5730 = vmatpush.msra.mxu0 0.0
    %5731 = vmatpush.msra.mxu0 0.0
    %5732 = vmatpush.msra.mxu0 0.0
    %5733 = vmatpush.msra.mxu0 0.0
    %5734 = vmatpush.msra.mxu0 0.0
    %5735 = vmatpush.msra.mxu0 0.0
    %5736 = vmatpush.msra.mxu0 0.0
    %5737 = vmatpush.msra.mxu0 0.0
    %5738 = vmatpush.msra.mxu0 0.0
    %5739 = vmatpush.msra.mxu0 %v2087
    %5740 = vmatpush.msra.mxu0 %v2086
    %5741 = vmatpush.msra.mxu0 %v2085
    %5742 = vmatpush.msra.mxu0 %v2084
    %5743 = vmatmul.f32.gmra.mxu0 %v5725
    %v5744 = vpop.f32.mrf.mxu0
    %v5745 = vadd.f32 0.0, %v5744
    %5746 = vdwg.mxu0
    %v5747 = vadd.f32 %v5699, %v5745
    %v5749 = vsel %vm657, %v5603, 0
    %5751 = vmatpush.msra.mxu0 0.0
    %5752 = vmatpush.msra.mxu0 0.0
    %5753 = vmatpush.msra.mxu0 0.0
    %5754 = vmatpush.msra.mxu0 0.0
    %5755 = vmatpush.msra.mxu0 0.0
    %5756 = vmatpush.msra.mxu0 0.0
    %5757 = vmatpush.msra.mxu0 0.0
    %5758 = vmatpush.msra.mxu0 0.0
    %5759 = vmatpush.msra.mxu0 0.0
    %5760 = vmatpush.msra.mxu0 0.0
    %5761 = vmatpush.msra.mxu0 0.0
    %5762 = vmatpush.msra.mxu0 0.0
    %5763 = vmatpush.msra.mxu0 0.0
    %5764 = vmatpush.msra.mxu0 0.0
    %5765 = vmatpush.msra.mxu0 0.0
    %5766 = vmatpush.msra.mxu0 %v5608
    %5767 = vmatmul.f32.gmra.mxu0 %v5749
    %v5768 = vpop.f32.mrf.mxu0
    %v5769 = vadd.f32 0.0, %v5768
    %5770 = vdwg.mxu0
    %v5772 = vsel %vm2030, %v5769, 0
    %5774 = vmatpush.msra.mxu0 0.0
    %5775 = vmatpush.msra.mxu0 0.0
    %5776 = vmatpush.msra.mxu0 0.0
    %5777 = vmatpush.msra.mxu0 0.0
    %5778 = vmatpush.msra.mxu0 0.0
    %5779 = vmatpush.msra.mxu0 0.0
    %5780 = vmatpush.msra.mxu0 0.0
    %5781 = vmatpush.msra.mxu0 0.0
    %5782 = vmatpush.msra.mxu0 0.0
    %5783 = vmatpush.msra.mxu0 0.0
    %5784 = vmatpush.msra.mxu0 0.0
    %5785 = vmatpush.msra.mxu0 0.0
    %5786 = vmatpush.msra.mxu0 %v2122
    %5787 = vmatpush.msra.mxu0 %v2121
    %5788 = vmatpush.msra.mxu0 %v2120
    %5789 = vmatpush.msra.mxu0 %v2119
    %5790 = vmatmul.f32.gmra.mxu0 %v5772
    %v5791 = vpop.f32.mrf.mxu0
    %v5792 = vadd.f32 0.0, %v5791
    %5793 = vdwg.mxu0
    %v5794 = vadd.f32 %v5747, %v5792
    %v5796 = vsel %vm657, %v5605, 0
    %5798 = vmatpush.msra.mxu0 0.0
    %5799 = vmatpush.msra.mxu0 0.0
    %5800 = vmatpush.msra.mxu0 0.0
    %5801 = vmatpush.msra.mxu0 0.0
    %5802 = vmatpush.msra.mxu0 0.0
    %5803 = vmatpush.msra.mxu0 0.0
    %5804 = vmatpush.msra.mxu0 0.0
    %5805 = vmatpush.msra.mxu0 0.0
    %5806 = vmatpush.msra.mxu0 0.0
    %5807 = vmatpush.msra.mxu0 0.0
    %5808 = vmatpush.msra.mxu0 0.0
    %5809 = vmatpush.msra.mxu0 0.0
    %5810 = vmatpush.msra.mxu0 0.0
    %5811 = vmatpush.msra.mxu0 0.0
    %5812 = vmatpush.msra.mxu0 0.0
    %5813 = vmatpush.msra.mxu0 %v5608
    %5814 = vmatmul.f32.gmra.mxu0 %v5796
    %v5815 = vpop.f32.mrf.mxu0
    %v5816 = vadd.f32 0.0, %v5815
    %5817 = vdwg.mxu0
    %v5819 = vsel %vm2030, %v5816, 0
    %5821 = vmatpush.msra.mxu0 0.0
    %5822 = vmatpush.msra.mxu0 0.0
    %5823 = vmatpush.msra.mxu0 0.0
    %5824 = vmatpush.msra.mxu0 0.0
    %5825 = vmatpush.msra.mxu0 0.0
    %5826 = vmatpush.msra.mxu0 0.0
    %5827 = vmatpush.msra.mxu0 0.0
    %5828 = vmatpush.msra.mxu0 0.0
    %5829 = vmatpush.msra.mxu0 0.0
    %5830 = vmatpush.msra.mxu0 0.0
    %5831 = vmatpush.msra.mxu0 0.0
    %5832 = vmatpush.msra.mxu0 0.0
    %5833 = vmatpush.msra.mxu0 %v2157
    %5834 = vmatpush.msra.mxu0 %v2156
    %5835 = vmatpush.msra.mxu0 %v2155
    %5836 = vmatpush.msra.mxu0 %v2154
    %5837 = vmatmul.f32.gmra.mxu0 %v5819
    %v5838 = vpop.f32.mrf.mxu0
    %v5839 = vadd.f32 0.0, %v5838
    %5840 = vdwg.mxu0
    %v5841 = vadd.f32 %v5794, %v5839
    %5843 = vset.pattern.permute.xlu0 0
    %5844 = vperm.xlu0 %5843, %v5606
    %v5845 = vpop.permute.xlu0 %5844
    %v5847 = vmul.f32 %v5841, %v5845
    %5849 = vset.pattern.permute.xlu0 0
    %5850 = vperm.xlu0 %5849, %v5607
    %v5851 = vpop.permute.xlu0 %5850
    %v5853 = vadd.f32 %v5847, %v5851
    %vm5854 = vcmask 124928
    %5855 = vst.msk [vmem:[%s77] sm:$0x7] %vm5854, %v5853
    %5857 = vrot.lane.b32.xlu0 %v5853, 112
    %v5858 = vpop.permute.xlu0 %5857
    %s5860 = scalar_lea.vmem %s77, 4
    %5861 = vst.msk [vmem:[%s5860] sm:$0x7] %vm5854, %v5858
    // Predicated region
    $region286: #{generator_forward.1} parent=1 // pred_check
      _
    $region287: #{generator_forward.1} parent=1 // pred_check_branch
      %5863 = sbr.rel (0) target = $region289
    $region288: #{generator_forward.1} parent=1 // pred_region
      _
    $region289: #{generator_forward.1} parent=1 // pred_fallthru
      _
    // Predicated region
    $region290: #{generator_forward.1} parent=1 // pred_check
      _
    $region291: #{generator_forward.1} parent=1 // pred_check_branch
      %5865 = sbr.rel (0) target = $region293
    $region292: #{generator_forward.1} parent=1 // pred_region
      _
    $region293: #{generator_forward.1} parent=1 // pred_fallthru
      _
    %5866 = vsyncpa [#allocation3], 1
    %5867 = vsyncpa [#allocation5], 1
    %5868 = vsyncpa [#allocation8], 1
    %5869 = vsyncpa [#allocation11], 1
    %5870 = vsyncpa [#allocation14], 1
    %5871 = vsyncpa [#allocation17], 1
    %5872 = vsyncpa [#allocation20], 1
    %5873 = vsyncpa [#allocation23], 1
    %5874 = vsyncpa [#allocation26], 1
    %5875 = vsyncpa [#allocation29], 1
    %5876 = vsyncpa [#allocation32], 1
    %5877 = vsyncpa [#allocation35], 1
    %5878 = vsyncpa [#allocation38], 1
    %5879 = vsyncpa [#allocation41], 1
    %5880 = vsyncpa [#allocation44], 1
    %5881 = vsyncpa [#allocation47], 1
    %5882 = vsyncpa [#allocation50], 1

</llo_original>
